<compile_context>
chip_gen: v7x
topology: tpu7x:2x2x1
jax: 0.10.0
libtpu: 0.0.40
codegen_flags: <defaults>
</compile_context>

<pallas_src>
import functools

import jax
import jax.numpy as jnp
from jax.experimental import pallas as pl
from jax.experimental.pallas import tpu as pltpu

_EPS = 1e-5
_VMEM_LIMIT = 32 * 1024 * 1024


def _round_up(x, m):
    return (x + m - 1) // m * m


# --------------------------------------------------------------------------
# Kernel 1: stage-1 3x3 conv + bias + per-image BN statistics.
# --------------------------------------------------------------------------
def _conv1_kernel(x_ref, w_ref, b_ref, mask_ref, c_ref, ssum_ref, ssq_ref,
                  *, H, W):
    """One image per grid step.

    x_ref:    (1, Pp, Cin)  zero-padded input, spatially flattened (stride W+2)
    w_ref:    (9, Cin, C)   one (Cin, C) weight matrix per tap (ky*3 + kx)
    b_ref:    (1, C)        conv bias
    mask_ref: (M, 1)        1.0 on valid output columns (w < W), else 0.0
    c_ref:    (1, M, C)     conv + bias over the (H, W+2)-flattened domain
    ssum_ref: (1, 1, C)     per-image masked channel sum
    ssq_ref:  (1, 1, C)     per-image masked channel sum of squares
    """
    Wp2 = W + 2
    M = H * Wp2
    acc = None
    for ky in range(3):
        for kx in range(3):
            # contiguous row window per tap -> direct MXU matmul, register acc
            slab = x_ref[0, pl.ds(ky * Wp2 + kx, M), :]            # (M, Cin)
            prod = jnp.dot(slab, w_ref[ky * 3 + kx],
                           preferred_element_type=jnp.float32)     # (M, C)
            acc = prod if acc is None else acc + prod
    y = acc + b_ref[...]                                           # (M, C)
    c_ref[0] = y
    ym = y * mask_ref[...]                                         # zero junk cols
    ssum_ref[0] = jnp.sum(ym, axis=0, keepdims=True)
    ssq_ref[0] = jnp.sum(ym * y, axis=0, keepdims=True)


# --------------------------------------------------------------------------
# Kernel 2: stage-1 BN apply + ReLU fused into the stage-2 conv prologue,
#           then stage-2 3x3 conv + bias + per-image BN statistics.
# --------------------------------------------------------------------------
def _conv2_kernel(c1_ref, mask_ref, scale_ref, shift_ref, w_ref, b_ref,
                  c_ref, ssum_ref, ssq_ref, zbuf_ref, *, H, W, lead):
    """One image per grid step.

    c1_ref:   (1, M, C1)   stage-1 conv output (flattened, junk at w >= W)
    mask_ref: (M, 1)       valid-column mask
    scale/shift: (1, C1)   folded stage-1 BN gamma/beta
    w_ref:    (9, C1, C)   stage-2 weights per tap
    b_ref:    (1, C)
    c_ref:    (1, M, C)    stage-2 conv + bias output (flattened)
    ssum/ssq: (1, 1, C)    per-image masked stats
    zbuf_ref: (Zp, C1)     VMEM scratch: zero-padded, BN'd stage-2 input
    """
    Wp2 = W + 2
    M = H * Wp2
    # Stage-1 BatchNorm (scale/shift) + ReLU, junk columns zeroed -> they become
    # exactly the zero padding required by the second conv.
    u = jnp.maximum(c1_ref[0] * scale_ref[...] + shift_ref[...], 0.0)
    u = u * mask_ref[...]
    # Build the zero-padded flattened image in VMEM; `lead` keeps the big store
    # 8-sublane aligned (borders come from the zero fill).
    zbuf_ref[...] = jnp.zeros_like(zbuf_ref)
    zbuf_ref[pl.ds(lead + Wp2 + 1, M), :] = u
    acc = None
    for ky in range(3):
        for kx in range(3):
            slab = zbuf_ref[pl.ds(lead + ky * Wp2 + kx, M), :]     # (M, C1)
            prod = jnp.dot(slab, w_ref[ky * 3 + kx],
                           preferred_element_type=jnp.float32)     # (M, C)
            acc = prod if acc is None else acc + prod
    y = acc + b_ref[...]
    c_ref[0] = y
    ym = y * mask_ref[...]
    ssum_ref[0] = jnp.sum(ym, axis=0, keepdims=True)
    ssq_ref[0] = jnp.sum(ym * y, axis=0, keepdims=True)


# --------------------------------------------------------------------------
# Wrapper: full conv_block forward (NCHW in / NCHW out, like PyTorch).
# --------------------------------------------------------------------------
@jax.jit
def conv_block_forward(x_nchw, params):
    N, Cin, H, W = x_nchw.shape
    Cout = params["b1"].shape[0]
    Wp2 = W + 2
    P = (H + 2) * Wp2                    # padded image, flattened
    M = H * Wp2                          # conv output domain (junk at w >= W)
    Pp = _round_up(P + 2, 8)             # + window overrun for the last taps
    lead = (-(Wp2 + 1)) % 8              # aligns kernel-2's interior store
    Zp = _round_up(lead + 2 * Wp2 + 2 + M, 8)
    nhw = float(N * H * W)

    # NCHW -> NHWC -> zero-pad -> flatten (one tiny fused XLA pass on the input;
    # the big intermediates never get an extra pad/relayout pass).
    x = jnp.transpose(x_nchw, (0, 2, 3, 1)).astype(jnp.float32)
    x = jnp.pad(x, ((0, 0), (1, 1), (1, 1), (0, 0))).reshape(N, P, Cin)
    x = jnp.pad(x, ((0, 0), (0, Pp - P), (0, 0)))

    # 1.0 where the flattened position is a real output column (w < W).
    mask = ((jnp.arange(M, dtype=jnp.int32) % Wp2) < W)
    mask = mask.astype(jnp.float32).reshape(M, 1)

    w1 = params["w1"].reshape(9, Cin, Cout)     # (ky,kx,Cin,Cout) -> (tap,...)
    w2 = params["w2"].reshape(9, Cout, Cout)
    b1 = params["b1"].reshape(1, Cout)
    b2 = params["b2"].reshape(1, Cout)

    cparams = pltpu.CompilerParams(dimension_semantics=("parallel",),
                                   vmem_limit_bytes=_VMEM_LIMIT)

    # ---------------- stage 1: conv + bias + stats ----------------
    k1 = functools.partial(_conv1_kernel, H=H, W=W)
    c1, s1, q1 = pl.pallas_call(
        k1,
        grid=(N,),
        in_specs=[
            pl.BlockSpec((1, Pp, Cin), lambda n: (n, 0, 0)),
            pl.BlockSpec((9, Cin, Cout), lambda n: (0, 0, 0)),
            pl.BlockSpec((1, Cout), lambda n: (0, 0)),
            pl.BlockSpec((M, 1), lambda n: (0, 0)),
        ],
        out_specs=(
            pl.BlockSpec((1, M, Cout), lambda n: (n, 0, 0)),
            pl.BlockSpec((1, 1, Cout), lambda n: (n, 0, 0)),
            pl.BlockSpec((1, 1, Cout), lambda n: (n, 0, 0)),
        ),
        out_shape=(
            jax.ShapeDtypeStruct((N, M, Cout), jnp.float32),
            jax.ShapeDtypeStruct((N, 1, Cout), jnp.float32),
            jax.ShapeDtypeStruct((N, 1, Cout), jnp.float32),
        ),
        compiler_params=cparams,
    )(x, w1, b1, mask)

    # Global training-mode batch statistics over N*H*W (biased variance).
    mean1 = jnp.sum(s1, axis=(0, 1)) / nhw
    var1 = jnp.maximum(jnp.sum(q1, axis=(0, 1)) / nhw - mean1 * mean1, 0.0)
    inv1 = jax.lax.rsqrt(var1 + _EPS)
    scale1 = (params["g1"] * inv1).reshape(1, Cout)
    shift1 = (params["beta1"] - mean1 * params["g1"] * inv1).reshape(1, Cout)

    # ---------------- stage 2: BN1+ReLU fused into conv2 + stats ----------------
    k2 = functools.partial(_conv2_kernel, H=H, W=W, lead=lead)
    c2, s2, q2 = pl.pallas_call(
        k2,
        grid=(N,),
        in_specs=[
            pl.BlockSpec((1, M, Cout), lambda n: (n, 0, 0)),
            pl.BlockSpec((M, 1), lambda n: (0, 0)),
            pl.BlockSpec((1, Cout), lambda n: (0, 0)),
            pl.BlockSpec((1, Cout), lambda n: (0, 0)),
            pl.BlockSpec((9, Cout, Cout), lambda n: (0, 0, 0)),
            pl.BlockSpec((1, Cout), lambda n: (0, 0)),
        ],
        out_specs=(
            pl.BlockSpec((1, M, Cout), lambda n: (n, 0, 0)),
            pl.BlockSpec((1, 1, Cout), lambda n: (n, 0, 0)),
            pl.BlockSpec((1, 1, Cout), lambda n: (n, 0, 0)),
        ),
        out_shape=(
            jax.ShapeDtypeStruct((N, M, Cout), jnp.float32),
            jax.ShapeDtypeStruct((N, 1, Cout), jnp.float32),
            jax.ShapeDtypeStruct((N, 1, Cout), jnp.float32),
        ),
        scratch_shapes=[pltpu.VMEM((Zp, Cout), jnp.float32)],
        compiler_params=cparams,
    )(c1, mask, scale1, shift1, w2, b2)

    mean2 = jnp.sum(s2, axis=(0, 1)) / nhw
    var2 = jnp.maximum(jnp.sum(q2, axis=(0, 1)) / nhw - mean2 * mean2, 0.0)
    inv2 = jax.lax.rsqrt(var2 + _EPS)
    scale2 = (params["g2"] * inv2).reshape(1, 1, Cout)
    shift2 = (params["beta2"] - mean2 * params["g2"] * inv2).reshape(1, 1, Cout)

    # Stage-2 BN apply + ReLU folded into the mandatory un-flatten / W-slice /
    # NHWC->NCHW epilogue: a single fused XLA pass over the small output.
    y = jnp.maximum(c2 * scale2 + shift2, 0.0)
    y = y.reshape(N, H, Wp2, Cout)[:, :, :W, :]
    return jnp.transpose(y, (0, 3, 1, 2))


# ---------------- pure-JAX reference (for correctness check only) ----------------
def _ref_stage(x, w, b, g, beta, eps=_EPS):
    y = jax.lax.conv_general_dilated(
        x, w, window_strides=(1, 1), padding="SAME",
        dimension_numbers=("NHWC", "HWIO", "NHWC")) + b
    mean = jnp.mean(y, axis=(0, 1, 2), keepdims=True)
    var = jnp.mean((y - mean) ** 2, axis=(0, 1, 2), keepdims=True)
    return jnp.maximum((y - mean) * jax.lax.rsqrt(var + eps) * g + beta, 0.0)


@jax.jit
def _ref_forward(x_nchw, p):
    x = jnp.transpose(x_nchw, (0, 2, 3, 1))
    x = _ref_stage(x, p["w1"], p["b1"], p["g1"], p["beta1"])
    x = _ref_stage(x, p["w2"], p["b2"], p["g2"], p["beta2"])
    return jnp.transpose(x, (0, 3, 1, 2))


if __name__ == "__main__":
    N, in_ch, out_ch, H, W = 2, 4, 8, 16, 16

    key = jax.random.PRNGKey(0)
    kx, kw1, kb1, kw2, kb2, kg1, kbt1, kg2, kbt2 = jax.random.split(key, 9)

    x = jax.random.normal(kx, (N, in_ch, H, W), jnp.float32)  # NCHW, like PyTorch

    # Conv weights in (kh, kw, Cin, Cout) layout (== PyTorch OIHW transposed (2,3,1,0)).
    params = {
        "w1": 0.1 * jax.random.normal(kw1, (3, 3, in_ch, out_ch), jnp.float32),
        "b1": 0.1 * jax.random.normal(kb1, (out_ch,), jnp.float32),
        "g1": 1.0 + 0.1 * jax.random.normal(kg1, (out_ch,), jnp.float32),
        "beta1": 0.1 * jax.random.normal(kbt1, (out_ch,), jnp.float32),
        "w2": 0.1 * jax.random.normal(kw2, (3, 3, out_ch, out_ch), jnp.float32),
        "b2": 0.1 * jax.random.normal(kb2, (out_ch,), jnp.float32),
        "g2": 1.0 + 0.1 * jax.random.normal(kg2, (out_ch,), jnp.float32),
        "beta2": 0.1 * jax.random.normal(kbt2, (out_ch,), jnp.float32),
    }

    out = jax.block_until_ready(conv_block_forward(x, params))
    ref = jax.block_until_ready(_ref_forward(x, params))

    assert out.shape == (N, out_ch, H, W), out.shape
    assert jnp.allclose(out, ref, atol=1e-3, rtol=1e-3), (
        float(jnp.max(jnp.abs(out - ref))))

    print("KERNEL_OK")
</pallas_src>

<mosaic_0001>
module attributes {stable_mosaic.version = 11 : i64} {
  func.func @_conv1_kernel(%arg0: i32, %arg1: memref<1x328x4xf32, #tpu.memory_space<vmem>>, %arg2: memref<9x4x8xf32, #tpu.memory_space<vmem>>, %arg3: memref<1x8xf32, #tpu.memory_space<vmem>>, %arg4: memref<288x1xf32, #tpu.memory_space<vmem>>, %arg5: memref<1x288x8xf32, #tpu.memory_space<vmem>>, %arg6: memref<1x1x8xf32, #tpu.memory_space<vmem>>, %arg7: memref<1x1x8xf32, #tpu.memory_space<vmem>>) attributes {dimension_semantics = [#tpu.dimension_semantics<parallel>], iteration_bounds = array<i64: 2>, scalar_prefetch = 0 : i64, scratch_operands = 0 : i64, tpu.core_type = #tpu.core_type<tc>, window_params = [{transform_indices = @transform_0, window_bounds = array<i64: 1, 328, 4>}, {pipeline_mode = #tpu.pipeline_mode<synchronous>, transform_indices = @transform_1, window_bounds = array<i64: 9, 4, 8>}, {pipeline_mode = #tpu.pipeline_mode<synchronous>, transform_indices = @transform_2, window_bounds = array<i64: 1, 8>}, {pipeline_mode = #tpu.pipeline_mode<synchronous>, transform_indices = @transform_3, window_bounds = array<i64: 288, 1>}, {transform_indices = @transform_4, window_bounds = array<i64: 1, 288, 8>}, {transform_indices = @transform_5, window_bounds = array<i64: 1, 1, 8>}, {transform_indices = @transform_6, window_bounds = array<i64: 1, 1, 8>}]} {
    %c0 = arith.constant 0 : index
    %c0_0 = arith.constant 0 : index
    %c0_1 = arith.constant 0 : index
    %0 = vector.load %arg1[%c0, %c0_0, %c0_1] : memref<1x328x4xf32, #tpu.memory_space<vmem>>, vector<1x288x4xf32>
    %1 = vector.shape_cast %0 : vector<1x288x4xf32> to vector<288x4xf32>
    %c0_2 = arith.constant 0 : index
    %c0_3 = arith.constant 0 : index
    %c0_4 = arith.constant 0 : index
    %2 = vector.load %arg2[%c0_2, %c0_3, %c0_4] : memref<9x4x8xf32, #tpu.memory_space<vmem>>, vector<1x4x8xf32>
    %3 = vector.shape_cast %2 : vector<1x4x8xf32> to vector<4x8xf32>
    %cst = arith.constant dense<0.000000e+00> : vector<288x8xf32>
    %4 = tpu.matmul %1, %3, %cst {dimension_numbers = #tpu.dot_dimension_numbers<[1], [0], [0], [1], [0, 0, 1, 1], [], []>} : vector<288x4xf32>, vector<4x8xf32>, vector<288x8xf32> -> vector<288x8xf32>
    %c0_5 = arith.constant 0 : index
    %c1 = arith.constant 1 : index
    %c0_6 = arith.constant 0 : index
    %5 = vector.load %arg1[%c0_5, %c1, %c0_6] : memref<1x328x4xf32, #tpu.memory_space<vmem>>, vector<1x288x4xf32>
    %6 = vector.shape_cast %5 : vector<1x288x4xf32> to vector<288x4xf32>
    %c1_7 = arith.constant 1 : index
    %c0_8 = arith.constant 0 : index
    %c0_9 = arith.constant 0 : index
    %7 = vector.load %arg2[%c1_7, %c0_8, %c0_9] : memref<9x4x8xf32, #tpu.memory_space<vmem>>, vector<1x4x8xf32>
    %8 = vector.shape_cast %7 : vector<1x4x8xf32> to vector<4x8xf32>
    %cst_10 = arith.constant dense<0.000000e+00> : vector<288x8xf32>
    %9 = tpu.matmul %6, %8, %cst_10 {dimension_numbers = #tpu.dot_dimension_numbers<[1], [0], [0], [1], [0, 0, 1, 1], [], []>} : vector<288x4xf32>, vector<4x8xf32>, vector<288x8xf32> -> vector<288x8xf32>
    %10 = arith.addf %4, %9 : vector<288x8xf32>
    %c0_11 = arith.constant 0 : index
    %c2 = arith.constant 2 : index
    %c0_12 = arith.constant 0 : index
    %11 = vector.load %arg1[%c0_11, %c2, %c0_12] : memref<1x328x4xf32, #tpu.memory_space<vmem>>, vector<1x288x4xf32>
    %12 = vector.shape_cast %11 : vector<1x288x4xf32> to vector<288x4xf32>
    %c2_13 = arith.constant 2 : index
    %c0_14 = arith.constant 0 : index
    %c0_15 = arith.constant 0 : index
    %13 = vector.load %arg2[%c2_13, %c0_14, %c0_15] : memref<9x4x8xf32, #tpu.memory_space<vmem>>, vector<1x4x8xf32>
    %14 = vector.shape_cast %13 : vector<1x4x8xf32> to vector<4x8xf32>
    %cst_16 = arith.constant dense<0.000000e+00> : vector<288x8xf32>
    %15 = tpu.matmul %12, %14, %cst_16 {dimension_numbers = #tpu.dot_dimension_numbers<[1], [0], [0], [1], [0, 0, 1, 1], [], []>} : vector<288x4xf32>, vector<4x8xf32>, vector<288x8xf32> -> vector<288x8xf32>
    %16 = arith.addf %10, %15 : vector<288x8xf32>
    %c0_17 = arith.constant 0 : index
    %c18 = arith.constant 18 : index
    %c0_18 = arith.constant 0 : index
    %17 = vector.load %arg1[%c0_17, %c18, %c0_18] : memref<1x328x4xf32, #tpu.memory_space<vmem>>, vector<1x288x4xf32>
    %18 = vector.shape_cast %17 : vector<1x288x4xf32> to vector<288x4xf32>
    %c3 = arith.constant 3 : index
    %c0_19 = arith.constant 0 : index
    %c0_20 = arith.constant 0 : index
    %19 = vector.load %arg2[%c3, %c0_19, %c0_20] : memref<9x4x8xf32, #tpu.memory_space<vmem>>, vector<1x4x8xf32>
    %20 = vector.shape_cast %19 : vector<1x4x8xf32> to vector<4x8xf32>
    %cst_21 = arith.constant dense<0.000000e+00> : vector<288x8xf32>
    %21 = tpu.matmul %18, %20, %cst_21 {dimension_numbers = #tpu.dot_dimension_numbers<[1], [0], [0], [1], [0, 0, 1, 1], [], []>} : vector<288x4xf32>, vector<4x8xf32>, vector<288x8xf32> -> vector<288x8xf32>
    %22 = arith.addf %16, %21 : vector<288x8xf32>
    %c0_22 = arith.constant 0 : index
    %c19 = arith.constant 19 : index
    %c0_23 = arith.constant 0 : index
    %23 = vector.load %arg1[%c0_22, %c19, %c0_23] : memref<1x328x4xf32, #tpu.memory_space<vmem>>, vector<1x288x4xf32>
    %24 = vector.shape_cast %23 : vector<1x288x4xf32> to vector<288x4xf32>
    %c4 = arith.constant 4 : index
    %c0_24 = arith.constant 0 : index
    %c0_25 = arith.constant 0 : index
    %25 = vector.load %arg2[%c4, %c0_24, %c0_25] : memref<9x4x8xf32, #tpu.memory_space<vmem>>, vector<1x4x8xf32>
    %26 = vector.shape_cast %25 : vector<1x4x8xf32> to vector<4x8xf32>
    %cst_26 = arith.constant dense<0.000000e+00> : vector<288x8xf32>
    %27 = tpu.matmul %24, %26, %cst_26 {dimension_numbers = #tpu.dot_dimension_numbers<[1], [0], [0], [1], [0, 0, 1, 1], [], []>} : vector<288x4xf32>, vector<4x8xf32>, vector<288x8xf32> -> vector<288x8xf32>
    %28 = arith.addf %22, %27 : vector<288x8xf32>
    %c0_27 = arith.constant 0 : index
    %c20 = arith.constant 20 : index
    %c0_28 = arith.constant 0 : index
    %29 = vector.load %arg1[%c0_27, %c20, %c0_28] : memref<1x328x4xf32, #tpu.memory_space<vmem>>, vector<1x288x4xf32>
    %30 = vector.shape_cast %29 : vector<1x288x4xf32> to vector<288x4xf32>
    %c5 = arith.constant 5 : index
    %c0_29 = arith.constant 0 : index
    %c0_30 = arith.constant 0 : index
    %31 = vector.load %arg2[%c5, %c0_29, %c0_30] : memref<9x4x8xf32, #tpu.memory_space<vmem>>, vector<1x4x8xf32>
    %32 = vector.shape_cast %31 : vector<1x4x8xf32> to vector<4x8xf32>
    %cst_31 = arith.constant dense<0.000000e+00> : vector<288x8xf32>
    %33 = tpu.matmul %30, %32, %cst_31 {dimension_numbers = #tpu.dot_dimension_numbers<[1], [0], [0], [1], [0, 0, 1, 1], [], []>} : vector<288x4xf32>, vector<4x8xf32>, vector<288x8xf32> -> vector<288x8xf32>
    %34 = arith.addf %28, %33 : vector<288x8xf32>
    %c0_32 = arith.constant 0 : index
    %c36 = arith.constant 36 : index
    %c0_33 = arith.constant 0 : index
    %35 = vector.load %arg1[%c0_32, %c36, %c0_33] : memref<1x328x4xf32, #tpu.memory_space<vmem>>, vector<1x288x4xf32>
    %36 = vector.shape_cast %35 : vector<1x288x4xf32> to vector<288x4xf32>
    %c6 = arith.constant 6 : index
    %c0_34 = arith.constant 0 : index
    %c0_35 = arith.constant 0 : index
    %37 = vector.load %arg2[%c6, %c0_34, %c0_35] : memref<9x4x8xf32, #tpu.memory_space<vmem>>, vector<1x4x8xf32>
    %38 = vector.shape_cast %37 : vector<1x4x8xf32> to vector<4x8xf32>
    %cst_36 = arith.constant dense<0.000000e+00> : vector<288x8xf32>
    %39 = tpu.matmul %36, %38, %cst_36 {dimension_numbers = #tpu.dot_dimension_numbers<[1], [0], [0], [1], [0, 0, 1, 1], [], []>} : vector<288x4xf32>, vector<4x8xf32>, vector<288x8xf32> -> vector<288x8xf32>
    %40 = arith.addf %34, %39 : vector<288x8xf32>
    %c0_37 = arith.constant 0 : index
    %c37 = arith.constant 37 : index
    %c0_38 = arith.constant 0 : index
    %41 = vector.load %arg1[%c0_37, %c37, %c0_38] : memref<1x328x4xf32, #tpu.memory_space<vmem>>, vector<1x288x4xf32>
    %42 = vector.shape_cast %41 : vector<1x288x4xf32> to vector<288x4xf32>
    %c7 = arith.constant 7 : index
    %c0_39 = arith.constant 0 : index
    %c0_40 = arith.constant 0 : index
    %43 = vector.load %arg2[%c7, %c0_39, %c0_40] : memref<9x4x8xf32, #tpu.memory_space<vmem>>, vector<1x4x8xf32>
    %44 = vector.shape_cast %43 : vector<1x4x8xf32> to vector<4x8xf32>
    %cst_41 = arith.constant dense<0.000000e+00> : vector<288x8xf32>
    %45 = tpu.matmul %42, %44, %cst_41 {dimension_numbers = #tpu.dot_dimension_numbers<[1], [0], [0], [1], [0, 0, 1, 1], [], []>} : vector<288x4xf32>, vector<4x8xf32>, vector<288x8xf32> -> vector<288x8xf32>
    %46 = arith.addf %40, %45 : vector<288x8xf32>
    %c0_42 = arith.constant 0 : index
    %c38 = arith.constant 38 : index
    %c0_43 = arith.constant 0 : index
    %47 = vector.load %arg1[%c0_42, %c38, %c0_43] : memref<1x328x4xf32, #tpu.memory_space<vmem>>, vector<1x288x4xf32>
    %48 = vector.shape_cast %47 : vector<1x288x4xf32> to vector<288x4xf32>
    %c8 = arith.constant 8 : index
    %c0_44 = arith.constant 0 : index
    %c0_45 = arith.constant 0 : index
    %49 = vector.load %arg2[%c8, %c0_44, %c0_45] : memref<9x4x8xf32, #tpu.memory_space<vmem>>, vector<1x4x8xf32>
    %50 = vector.shape_cast %49 : vector<1x4x8xf32> to vector<4x8xf32>
    %cst_46 = arith.constant dense<0.000000e+00> : vector<288x8xf32>
    %51 = tpu.matmul %48, %50, %cst_46 {dimension_numbers = #tpu.dot_dimension_numbers<[1], [0], [0], [1], [0, 0, 1, 1], [], []>} : vector<288x4xf32>, vector<4x8xf32>, vector<288x8xf32> -> vector<288x8xf32>
    %52 = arith.addf %46, %51 : vector<288x8xf32>
    %c0_47 = arith.constant 0 : index
    %c0_48 = arith.constant 0 : index
    %53 = vector.load %arg3[%c0_47, %c0_48] : memref<1x8xf32, #tpu.memory_space<vmem>>, vector<1x8xf32>
    %54 = vector.broadcast %53 : vector<1x8xf32> to vector<288x8xf32>
    %55 = arith.addf %52, %54 : vector<288x8xf32>
    %c0_49 = arith.constant 0 : index
    %c0_50 = arith.constant 0 : index
    %c0_51 = arith.constant 0 : index
    %56 = vector.load %arg5[%c0_49, %c0_50, %c0_51] : memref<1x288x8xf32, #tpu.memory_space<vmem>>, vector<1x288x8xf32>
    %57 = vector.shape_cast %56 : vector<1x288x8xf32> to vector<288x8xf32>
    %58 = vector.shape_cast %55 : vector<288x8xf32> to vector<1x288x8xf32>
    tpu.vector_store %arg5[%c0_49, %c0_50, %c0_51], %58 {strides = array<i32>} : memref<1x288x8xf32, #tpu.memory_space<vmem>>, vector<1x288x8xf32>,
    %c0_52 = arith.constant 0 : index
    %c0_53 = arith.constant 0 : index
    %59 = vector.load %arg4[%c0_52, %c0_53] : memref<288x1xf32, #tpu.memory_space<vmem>>, vector<288x1xf32>
    %60 = vector.broadcast %59 : vector<288x1xf32> to vector<288x8xf32>
    %61 = arith.mulf %55, %60 : vector<288x8xf32>
    %cst_54 = arith.constant dense<0.000000e+00> : vector<8xf32>
    %62 = vector.multi_reduction <add>, %61, %cst_54 [0] : vector<288x8xf32> to vector<8xf32>
    %63 = vector.shape_cast %62 : vector<8xf32> to vector<1x8xf32>
    %c0_55 = arith.constant 0 : index
    %c0_56 = arith.constant 0 : index
    %c0_57 = arith.constant 0 : index
    %64 = vector.load %arg6[%c0_55, %c0_56, %c0_57] : memref<1x1x8xf32, #tpu.memory_space<vmem>>, vector<1x1x8xf32>
    %65 = vector.shape_cast %64 : vector<1x1x8xf32> to vector<1x8xf32>
    %66 = vector.shape_cast %63 : vector<1x8xf32> to vector<1x1x8xf32>
    tpu.vector_store %arg6[%c0_55, %c0_56, %c0_57], %66 {strides = array<i32>} : memref<1x1x8xf32, #tpu.memory_space<vmem>>, vector<1x1x8xf32>,
    %67 = arith.mulf %61, %55 : vector<288x8xf32>
    %cst_58 = arith.constant dense<0.000000e+00> : vector<8xf32>
    %68 = vector.multi_reduction <add>, %67, %cst_58 [0] : vector<288x8xf32> to vector<8xf32>
    %69 = vector.shape_cast %68 : vector<8xf32> to vector<1x8xf32>
    %c0_59 = arith.constant 0 : index
    %c0_60 = arith.constant 0 : index
    %c0_61 = arith.constant 0 : index
    %70 = vector.load %arg7[%c0_59, %c0_60, %c0_61] : memref<1x1x8xf32, #tpu.memory_space<vmem>>, vector<1x1x8xf32>
    %71 = vector.shape_cast %70 : vector<1x1x8xf32> to vector<1x8xf32>
    %72 = vector.shape_cast %69 : vector<1x8xf32> to vector<1x1x8xf32>
    tpu.vector_store %arg7[%c0_59, %c0_60, %c0_61], %72 {strides = array<i32>} : memref<1x1x8xf32, #tpu.memory_space<vmem>>, vector<1x1x8xf32>,
    return
  }
  func.func @transform_0(%arg0: i32) -> (i32, i32, i32) {
    %c0_i32 = arith.constant 0 : i32
    %c0_i32_0 = arith.constant 0 : i32
    %c0_i32_1 = arith.constant 0 : i32
    return %arg0, %c0_i32, %c0_i32_0 : i32, i32, i32
  }
  func.func @transform_1(%arg0: i32) -> (i32, i32, i32) {
    %c0_i32 = arith.constant 0 : i32
    %c0_i32_0 = arith.constant 0 : i32
    %c0_i32_1 = arith.constant 0 : i32
    %c0_i32_2 = arith.constant 0 : i32
    return %c0_i32, %c0_i32_0, %c0_i32_1 : i32, i32, i32
  }
  func.func @transform_2(%arg0: i32) -> (i32, i32) {
    %c0_i32 = arith.constant 0 : i32
    %c0_i32_0 = arith.constant 0 : i32
    %c0_i32_1 = arith.constant 0 : i32
    return %c0_i32, %c0_i32_0 : i32, i32
  }
  func.func @transform_3(%arg0: i32) -> (i32, i32) {
    %c0_i32 = arith.constant 0 : i32
    %c0_i32_0 = arith.constant 0 : i32
    %c0_i32_1 = arith.constant 0 : i32
    return %c0_i32, %c0_i32_0 : i32, i32
  }
  func.func @transform_4(%arg0: i32) -> (i32, i32, i32) {
    %c0_i32 = arith.constant 0 : i32
    %c0_i32_0 = arith.constant 0 : i32
    %c0_i32_1 = arith.constant 0 : i32
    return %arg0, %c0_i32, %c0_i32_0 : i32, i32, i32
  }
  func.func @transform_5(%arg0: i32) -> (i32, i32, i32) {
    %c0_i32 = arith.constant 0 : i32
    %c0_i32_0 = arith.constant 0 : i32
    %c0_i32_1 = arith.constant 0 : i32
    return %arg0, %c0_i32, %c0_i32_0 : i32, i32, i32
  }
  func.func @transform_6(%arg0: i32) -> (i32, i32, i32) {
    %c0_i32 = arith.constant 0 : i32
    %c0_i32_0 = arith.constant 0 : i32
    %c0_i32_1 = arith.constant 0 : i32
    return %arg0, %c0_i32, %c0_i32_0 : i32, i32, i32
  }
}

module attributes {stable_mosaic.version = 11 : i64} {
  func.func @_conv2_kernel(%arg0: i32, %arg1: memref<1x288x8xf32, #tpu.memory_space<vmem>>, %arg2: memref<288x1xf32, #tpu.memory_space<vmem>>, %arg3: memref<1x8xf32, #tpu.memory_space<vmem>>, %arg4: memref<1x8xf32, #tpu.memory_space<vmem>>, %arg5: memref<9x8x8xf32, #tpu.memory_space<vmem>>, %arg6: memref<1x8xf32, #tpu.memory_space<vmem>>, %arg7: memref<1x288x8xf32, #tpu.memory_space<vmem>>, %arg8: memref<1x1x8xf32, #tpu.memory_space<vmem>>, %arg9: memref<1x1x8xf32, #tpu.memory_space<vmem>>, %arg10: memref<336x8xf32, #tpu.memory_space<vmem>>) attributes {dimension_semantics = [#tpu.dimension_semantics<parallel>], iteration_bounds = array<i64: 2>, scalar_prefetch = 0 : i64, scratch_operands = 1 : i64, tpu.core_type = #tpu.core_type<tc>, window_params = [{transform_indices = @transform_0, window_bounds = array<i64: 1, 288, 8>}, {pipeline_mode = #tpu.pipeline_mode<synchronous>, transform_indices = @transform_1, window_bounds = array<i64: 288, 1>}, {pipeline_mode = #tpu.pipeline_mode<synchronous>, transform_indices = @transform_2, window_bounds = array<i64: 1, 8>}, {pipeline_mode = #tpu.pipeline_mode<synchronous>, transform_indices = @transform_3, window_bounds = array<i64: 1, 8>}, {pipeline_mode = #tpu.pipeline_mode<synchronous>, transform_indices = @transform_4, window_bounds = array<i64: 9, 8, 8>}, {pipeline_mode = #tpu.pipeline_mode<synchronous>, transform_indices = @transform_5, window_bounds = array<i64: 1, 8>}, {transform_indices = @transform_6, window_bounds = array<i64: 1, 288, 8>}, {transform_indices = @transform_7, window_bounds = array<i64: 1, 1, 8>}, {transform_indices = @transform_8, window_bounds = array<i64: 1, 1, 8>}]} {
    %c0 = arith.constant 0 : index
    %c0_0 = arith.constant 0 : index
    %c0_1 = arith.constant 0 : index
    %0 = vector.load %arg1[%c0, %c0_0, %c0_1] : memref<1x288x8xf32, #tpu.memory_space<vmem>>, vector<1x288x8xf32>
    %1 = vector.shape_cast %0 : vector<1x288x8xf32> to vector<288x8xf32>
    %c0_2 = arith.constant 0 : index
    %c0_3 = arith.constant 0 : index
    %2 = vector.load %arg3[%c0_2, %c0_3] : memref<1x8xf32, #tpu.memory_space<vmem>>, vector<1x8xf32>
    %3 = vector.broadcast %2 : vector<1x8xf32> to vector<288x8xf32>
    %4 = arith.mulf %1, %3 : vector<288x8xf32>
    %c0_4 = arith.constant 0 : index
    %c0_5 = arith.constant 0 : index
    %5 = vector.load %arg4[%c0_4, %c0_5] : memref<1x8xf32, #tpu.memory_space<vmem>>, vector<1x8xf32>
    %6 = vector.broadcast %5 : vector<1x8xf32> to vector<288x8xf32>
    %7 = arith.addf %4, %6 : vector<288x8xf32>
    %cst = arith.constant 0.000000e+00 : f32
    %8 = vector.broadcast %cst : f32 to vector<288x8xf32>
    %9 = arith.maximumf %7, %8 : vector<288x8xf32>
    %c0_6 = arith.constant 0 : index
    %c0_7 = arith.constant 0 : index
    %10 = vector.load %arg2[%c0_6, %c0_7] : memref<288x1xf32, #tpu.memory_space<vmem>>, vector<288x1xf32>
    %11 = vector.broadcast %10 : vector<288x1xf32> to vector<288x8xf32>
    %12 = arith.mulf %9, %11 : vector<288x8xf32>
    %cst_8 = arith.constant 0.000000e+00 : f32
    %13 = vector.broadcast %cst_8 : f32 to vector<336x8xf32>
    %c0_9 = arith.constant 0 : index
    %c0_10 = arith.constant 0 : index
    %14 = vector.load %arg10[%c0_9, %c0_10] : memref<336x8xf32, #tpu.memory_space<vmem>>, vector<336x8xf32>
    tpu.vector_store %arg10[%c0_9, %c0_10], %13 {strides = array<i32>} : memref<336x8xf32, #tpu.memory_space<vmem>>, vector<336x8xf32>,
    %c24 = arith.constant 24 : index
    %c0_11 = arith.constant 0 : index
    %15 = vector.load %arg10[%c24, %c0_11] : memref<336x8xf32, #tpu.memory_space<vmem>>, vector<288x8xf32>
    tpu.vector_store %arg10[%c24, %c0_11], %12 {strides = array<i32>} : memref<336x8xf32, #tpu.memory_space<vmem>>, vector<288x8xf32>,
    %c5 = arith.constant 5 : index
    %c0_12 = arith.constant 0 : index
    %16 = vector.load %arg10[%c5, %c0_12] : memref<336x8xf32, #tpu.memory_space<vmem>>, vector<288x8xf32>
    %c0_13 = arith.constant 0 : index
    %c0_14 = arith.constant 0 : index
    %c0_15 = arith.constant 0 : index
    %17 = vector.load %arg5[%c0_13, %c0_14, %c0_15] : memref<9x8x8xf32, #tpu.memory_space<vmem>>, vector<1x8x8xf32>
    %18 = vector.shape_cast %17 : vector<1x8x8xf32> to vector<8x8xf32>
    %cst_16 = arith.constant dense<0.000000e+00> : vector<288x8xf32>
    %19 = tpu.matmul %16, %18, %cst_16 {dimension_numbers = #tpu.dot_dimension_numbers<[1], [0], [0], [1], [0, 0, 1, 1], [], []>} : vector<288x8xf32>, vector<8x8xf32>, vector<288x8xf32> -> vector<288x8xf32>
    %c6 = arith.constant 6 : index
    %c0_17 = arith.constant 0 : index
    %20 = vector.load %arg10[%c6, %c0_17] : memref<336x8xf32, #tpu.memory_space<vmem>>, vector<288x8xf32>
    %c1 = arith.constant 1 : index
    %c0_18 = arith.constant 0 : index
    %c0_19 = arith.constant 0 : index
    %21 = vector.load %arg5[%c1, %c0_18, %c0_19] : memref<9x8x8xf32, #tpu.memory_space<vmem>>, vector<1x8x8xf32>
    %22 = vector.shape_cast %21 : vector<1x8x8xf32> to vector<8x8xf32>
    %cst_20 = arith.constant dense<0.000000e+00> : vector<288x8xf32>
    %23 = tpu.matmul %20, %22, %cst_20 {dimension_numbers = #tpu.dot_dimension_numbers<[1], [0], [0], [1], [0, 0, 1, 1], [], []>} : vector<288x8xf32>, vector<8x8xf32>, vector<288x8xf32> -> vector<288x8xf32>
    %24 = arith.addf %19, %23 : vector<288x8xf32>
    %c7 = arith.constant 7 : index
    %c0_21 = arith.constant 0 : index
    %25 = vector.load %arg10[%c7, %c0_21] : memref<336x8xf32, #tpu.memory_space<vmem>>, vector<288x8xf32>
    %c2 = arith.constant 2 : index
    %c0_22 = arith.constant 0 : index
    %c0_23 = arith.constant 0 : index
    %26 = vector.load %arg5[%c2, %c0_22, %c0_23] : memref<9x8x8xf32, #tpu.memory_space<vmem>>, vector<1x8x8xf32>
    %27 = vector.shape_cast %26 : vector<1x8x8xf32> to vector<8x8xf32>
    %cst_24 = arith.constant dense<0.000000e+00> : vector<288x8xf32>
    %28 = tpu.matmul %25, %27, %cst_24 {dimension_numbers = #tpu.dot_dimension_numbers<[1], [0], [0], [1], [0, 0, 1, 1], [], []>} : vector<288x8xf32>, vector<8x8xf32>, vector<288x8xf32> -> vector<288x8xf32>
    %29 = arith.addf %24, %28 : vector<288x8xf32>
    %c23 = arith.constant 23 : index
    %c0_25 = arith.constant 0 : index
    %30 = vector.load %arg10[%c23, %c0_25] : memref<336x8xf32, #tpu.memory_space<vmem>>, vector<288x8xf32>
    %c3 = arith.constant 3 : index
    %c0_26 = arith.constant 0 : index
    %c0_27 = arith.constant 0 : index
    %31 = vector.load %arg5[%c3, %c0_26, %c0_27] : memref<9x8x8xf32, #tpu.memory_space<vmem>>, vector<1x8x8xf32>
    %32 = vector.shape_cast %31 : vector<1x8x8xf32> to vector<8x8xf32>
    %cst_28 = arith.constant dense<0.000000e+00> : vector<288x8xf32>
    %33 = tpu.matmul %30, %32, %cst_28 {dimension_numbers = #tpu.dot_dimension_numbers<[1], [0], [0], [1], [0, 0, 1, 1], [], []>} : vector<288x8xf32>, vector<8x8xf32>, vector<288x8xf32> -> vector<288x8xf32>
    %34 = arith.addf %29, %33 : vector<288x8xf32>
    %c24_29 = arith.constant 24 : index
    %c0_30 = arith.constant 0 : index
    %35 = vector.load %arg10[%c24_29, %c0_30] : memref<336x8xf32, #tpu.memory_space<vmem>>, vector<288x8xf32>
    %c4 = arith.constant 4 : index
    %c0_31 = arith.constant 0 : index
    %c0_32 = arith.constant 0 : index
    %36 = vector.load %arg5[%c4, %c0_31, %c0_32] : memref<9x8x8xf32, #tpu.memory_space<vmem>>, vector<1x8x8xf32>
    %37 = vector.shape_cast %36 : vector<1x8x8xf32> to vector<8x8xf32>
    %cst_33 = arith.constant dense<0.000000e+00> : vector<288x8xf32>
    %38 = tpu.matmul %35, %37, %cst_33 {dimension_numbers = #tpu.dot_dimension_numbers<[1], [0], [0], [1], [0, 0, 1, 1], [], []>} : vector<288x8xf32>, vector<8x8xf32>, vector<288x8xf32> -> vector<288x8xf32>
    %39 = arith.addf %34, %38 : vector<288x8xf32>
    %c25 = arith.constant 25 : index
    %c0_34 = arith.constant 0 : index
    %40 = vector.load %arg10[%c25, %c0_34] : memref<336x8xf32, #tpu.memory_space<vmem>>, vector<288x8xf32>
    %c5_35 = arith.constant 5 : index
    %c0_36 = arith.constant 0 : index
    %c0_37 = arith.constant 0 : index
    %41 = vector.load %arg5[%c5_35, %c0_36, %c0_37] : memref<9x8x8xf32, #tpu.memory_space<vmem>>, vector<1x8x8xf32>
    %42 = vector.shape_cast %41 : vector<1x8x8xf32> to vector<8x8xf32>
    %cst_38 = arith.constant dense<0.000000e+00> : vector<288x8xf32>
    %43 = tpu.matmul %40, %42, %cst_38 {dimension_numbers = #tpu.dot_dimension_numbers<[1], [0], [0], [1], [0, 0, 1, 1], [], []>} : vector<288x8xf32>, vector<8x8xf32>, vector<288x8xf32> -> vector<288x8xf32>
    %44 = arith.addf %39, %43 : vector<288x8xf32>
    %c41 = arith.constant 41 : index
    %c0_39 = arith.constant 0 : index
    %45 = vector.load %arg10[%c41, %c0_39] : memref<336x8xf32, #tpu.memory_space<vmem>>, vector<288x8xf32>
    %c6_40 = arith.constant 6 : index
    %c0_41 = arith.constant 0 : index
    %c0_42 = arith.constant 0 : index
    %46 = vector.load %arg5[%c6_40, %c0_41, %c0_42] : memref<9x8x8xf32, #tpu.memory_space<vmem>>, vector<1x8x8xf32>
    %47 = vector.shape_cast %46 : vector<1x8x8xf32> to vector<8x8xf32>
    %cst_43 = arith.constant dense<0.000000e+00> : vector<288x8xf32>
    %48 = tpu.matmul %45, %47, %cst_43 {dimension_numbers = #tpu.dot_dimension_numbers<[1], [0], [0], [1], [0, 0, 1, 1], [], []>} : vector<288x8xf32>, vector<8x8xf32>, vector<288x8xf32> -> vector<288x8xf32>
    %49 = arith.addf %44, %48 : vector<288x8xf32>
    %c42 = arith.constant 42 : index
    %c0_44 = arith.constant 0 : index
    %50 = vector.load %arg10[%c42, %c0_44] : memref<336x8xf32, #tpu.memory_space<vmem>>, vector<288x8xf32>
    %c7_45 = arith.constant 7 : index
    %c0_46 = arith.constant 0 : index
    %c0_47 = arith.constant 0 : index
    %51 = vector.load %arg5[%c7_45, %c0_46, %c0_47] : memref<9x8x8xf32, #tpu.memory_space<vmem>>, vector<1x8x8xf32>
    %52 = vector.shape_cast %51 : vector<1x8x8xf32> to vector<8x8xf32>
    %cst_48 = arith.constant dense<0.000000e+00> : vector<288x8xf32>
    %53 = tpu.matmul %50, %52, %cst_48 {dimension_numbers = #tpu.dot_dimension_numbers<[1], [0], [0], [1], [0, 0, 1, 1], [], []>} : vector<288x8xf32>, vector<8x8xf32>, vector<288x8xf32> -> vector<288x8xf32>
    %54 = arith.addf %49, %53 : vector<288x8xf32>
    %c43 = arith.constant 43 : index
    %c0_49 = arith.constant 0 : index
    %55 = vector.load %arg10[%c43, %c0_49] : memref<336x8xf32, #tpu.memory_space<vmem>>, vector<288x8xf32>
    %c8 = arith.constant 8 : index
    %c0_50 = arith.constant 0 : index
    %c0_51 = arith.constant 0 : index
    %56 = vector.load %arg5[%c8, %c0_50, %c0_51] : memref<9x8x8xf32, #tpu.memory_space<vmem>>, vector<1x8x8xf32>
    %57 = vector.shape_cast %56 : vector<1x8x8xf32> to vector<8x8xf32>
    %cst_52 = arith.constant dense<0.000000e+00> : vector<288x8xf32>
    %58 = tpu.matmul %55, %57, %cst_52 {dimension_numbers = #tpu.dot_dimension_numbers<[1], [0], [0], [1], [0, 0, 1, 1], [], []>} : vector<288x8xf32>, vector<8x8xf32>, vector<288x8xf32> -> vector<288x8xf32>
    %59 = arith.addf %54, %58 : vector<288x8xf32>
    %c0_53 = arith.constant 0 : index
    %c0_54 = arith.constant 0 : index
    %60 = vector.load %arg6[%c0_53, %c0_54] : memref<1x8xf32, #tpu.memory_space<vmem>>, vector<1x8xf32>
    %61 = vector.broadcast %60 : vector<1x8xf32> to vector<288x8xf32>
    %62 = arith.addf %59, %61 : vector<288x8xf32>
    %c0_55 = arith.constant 0 : index
    %c0_56 = arith.constant 0 : index
    %c0_57 = arith.constant 0 : index
    %63 = vector.load %arg7[%c0_55, %c0_56, %c0_57] : memref<1x288x8xf32, #tpu.memory_space<vmem>>, vector<1x288x8xf32>
    %64 = vector.shape_cast %63 : vector<1x288x8xf32> to vector<288x8xf32>
    %65 = vector.shape_cast %62 : vector<288x8xf32> to vector<1x288x8xf32>
    tpu.vector_store %arg7[%c0_55, %c0_56, %c0_57], %65 {strides = array<i32>} : memref<1x288x8xf32, #tpu.memory_space<vmem>>, vector<1x288x8xf32>,
    %c0_58 = arith.constant 0 : index
    %c0_59 = arith.constant 0 : index
    %66 = vector.load %arg2[%c0_58, %c0_59] : memref<288x1xf32, #tpu.memory_space<vmem>>, vector<288x1xf32>
    %67 = vector.broadcast %66 : vector<288x1xf32> to vector<288x8xf32>
    %68 = arith.mulf %62, %67 : vector<288x8xf32>
    %cst_60 = arith.constant dense<0.000000e+00> : vector<8xf32>
    %69 = vector.multi_reduction <add>, %68, %cst_60 [0] : vector<288x8xf32> to vector<8xf32>
    %70 = vector.shape_cast %69 : vector<8xf32> to vector<1x8xf32>
    %c0_61 = arith.constant 0 : index
    %c0_62 = arith.constant 0 : index
    %c0_63 = arith.constant 0 : index
    %71 = vector.load %arg8[%c0_61, %c0_62, %c0_63] : memref<1x1x8xf32, #tpu.memory_space<vmem>>, vector<1x1x8xf32>
    %72 = vector.shape_cast %71 : vector<1x1x8xf32> to vector<1x8xf32>
    %73 = vector.shape_cast %70 : vector<1x8xf32> to vector<1x1x8xf32>
    tpu.vector_store %arg8[%c0_61, %c0_62, %c0_63], %73 {strides = array<i32>} : memref<1x1x8xf32, #tpu.memory_space<vmem>>, vector<1x1x8xf32>,
    %74 = arith.mulf %68, %62 : vector<288x8xf32>
    %cst_64 = arith.constant dense<0.000000e+00> : vector<8xf32>
    %75 = vector.multi_reduction <add>, %74, %cst_64 [0] : vector<288x8xf32> to vector<8xf32>
    %76 = vector.shape_cast %75 : vector<8xf32> to vector<1x8xf32>
    %c0_65 = arith.constant 0 : index
    %c0_66 = arith.constant 0 : index
    %c0_67 = arith.constant 0 : index
    %77 = vector.load %arg9[%c0_65, %c0_66, %c0_67] : memref<1x1x8xf32, #tpu.memory_space<vmem>>, vector<1x1x8xf32>
    %78 = vector.shape_cast %77 : vector<1x1x8xf32> to vector<1x8xf32>
    %79 = vector.shape_cast %76 : vector<1x8xf32> to vector<1x1x8xf32>
    tpu.vector_store %arg9[%c0_65, %c0_66, %c0_67], %79 {strides = array<i32>} : memref<1x1x8xf32, #tpu.memory_space<vmem>>, vector<1x1x8xf32>,
    return
  }
  func.func @transform_0(%arg0: i32) -> (i32, i32, i32) {
    %c0_i32 = arith.constant 0 : i32
    %c0_i32_0 = arith.constant 0 : i32
    %c0_i32_1 = arith.constant 0 : i32
    return %arg0, %c0_i32, %c0_i32_0 : i32, i32, i32
  }
  func.func @transform_1(%arg0: i32) -> (i32, i32) {
    %c0_i32 = arith.constant 0 : i32
    %c0_i32_0 = arith.constant 0 : i32
    %c0_i32_1 = arith.constant 0 : i32
    return %c0_i32, %c0_i32_0 : i32, i32
  }
  func.func @transform_2(%arg0: i32) -> (i32, i32) {
    %c0_i32 = arith.constant 0 : i32
    %c0_i32_0 = arith.constant 0 : i32
    %c0_i32_1 = arith.constant 0 : i32
    return %c0_i32, %c0_i32_0 : i32, i32
  }
  func.func @transform_3(%arg0: i32) -> (i32, i32) {
    %c0_i32 = arith.constant 0 : i32
    %c0_i32_0 = arith.constant 0 : i32
    %c0_i32_1 = arith.constant 0 : i32
    return %c0_i32, %c0_i32_0 : i32, i32
  }
  func.func @transform_4(%arg0: i32) -> (i32, i32, i32) {
    %c0_i32 = arith.constant 0 : i32
    %c0_i32_0 = arith.constant 0 : i32
    %c0_i32_1 = arith.constant 0 : i32
    %c0_i32_2 = arith.constant 0 : i32
    return %c0_i32, %c0_i32_0, %c0_i32_1 : i32, i32, i32
  }
  func.func @transform_5(%arg0: i32) -> (i32, i32) {
    %c0_i32 = arith.constant 0 : i32
    %c0_i32_0 = arith.constant 0 : i32
    %c0_i32_1 = arith.constant 0 : i32
    return %c0_i32, %c0_i32_0 : i32, i32
  }
  func.func @transform_6(%arg0: i32) -> (i32, i32, i32) {
    %c0_i32 = arith.constant 0 : i32
    %c0_i32_0 = arith.constant 0 : i32
    %c0_i32_1 = arith.constant 0 : i32
    return %arg0, %c0_i32, %c0_i32_0 : i32, i32, i32
  }
  func.func @transform_7(%arg0: i32) -> (i32, i32, i32) {
    %c0_i32 = arith.constant 0 : i32
    %c0_i32_0 = arith.constant 0 : i32
    %c0_i32_1 = arith.constant 0 : i32
    return %arg0, %c0_i32, %c0_i32_0 : i32, i32, i32
  }
  func.func @transform_8(%arg0: i32) -> (i32, i32, i32) {
    %c0_i32 = arith.constant 0 : i32
    %c0_i32_0 = arith.constant 0 : i32
    %c0_i32_1 = arith.constant 0 : i32
    return %arg0, %c0_i32, %c0_i32_0 : i32, i32, i32
  }
}

</mosaic_0001>

<llo_original>
// kernel: conv_block_forward.2
$region0: #{conv_block_forward.2}
  #allocation0 [shape = 'u32[]', space=smem, size = 0x4, offset = 0x4, fixed_abs, tag = 'smem constant byte address 0x4 - core index']
  #allocation1 [shape = 'u32[144,128]{1,0:T(1,128)}', space=vmem, size = 0x12000, scoped, tag = 'internal scratch']
  %s0 = inlined_call_operand.vmem [shape: f32[2,328,4], index: 0, kind: input, shape index: {}]
  %s1 = inlined_call_operand.vmem [shape: f32[9,4,8], index: 1, kind: input, shape index: {}]
  %s2 = inlined_call_operand.vmem [shape: f32[1,8], index: 2, kind: input, shape index: {}]
  %s3 = inlined_call_operand.vmem [shape: f32[288,1], index: 3, kind: input, shape index: {}]
  %s4 = inlined_call_operand.vmem [shape: f32[2,288,8], index: 4, kind: output, shape index: {0}]
  %s5 = inlined_call_operand.vmem [shape: f32[2,1,8], index: 5, kind: output, shape index: {1}]
  %s6 = inlined_call_operand.vmem [shape: f32[2,1,8], index: 6, kind: output, shape index: {2}]
  %7 = xla_tuple %s4, %s5, %s6
  %s8 = sld [smem:[#allocation0]]
  $region65: #{conv_block_forward.2} parent=0
    _
  %s10 = ssub.s32 1, %s8
  %s11 = scalar_select 0, %s10, %s8
  loop: start=0, step=1, limit=4
  $region2: #{conv_block_forward.2} parent=0 // loop_pre_header
    _
  $region3: #{conv_block_forward.2} parent=0 // loop_header
    %s13 = sphi 0, %s17
    %p14 = scmp.ge.s32.totalorder %s13, 4
    %s23 = sphi 0, %s25
    %s26 = sphi 0, %s23
    %s27 = sphi 0, %s26
    %s43 = sphi 0, %s27
    %s47 = sphi 0, %s47
    %s49 = sphi 0, %s47
    %s50 = sphi 0, %s49
    %s64 = sphi 0, %s50
    %s68 = sphi 0, %s68
    %s70 = sphi 0, %s68
    %s71 = sphi 0, %s70
    %s85 = sphi 0, %s71
    %s89 = sphi 0, %s89
    %s91 = sphi 0, %s89
    %s92 = sphi 0, %s91
    %s106 = sphi 0, %s92
    %s112 = sphi 0, %s114
    %s115 = sphi 0, %s112
    %s116 = sphi 0, %s115
    %s132 = sphi 0, %s116
    %s138 = sphi 0, %s140
    %s141 = sphi 0, %s138
    %s142 = sphi 0, %s141
    %s158 = sphi 0, %s142
    %s164 = sphi 0, %s166
    %s167 = sphi 0, %s164
    %s168 = sphi 0, %s167
    %s184 = sphi 0, %s168
  $region4: #{conv_block_forward.2} parent=0 // loop_header_branch
    %16 = sbr.rel (%p14) target = $region8
  $region5: #{conv_block_forward.2} parent=0 // loop_body
    %s18 = ssub.s32 %s13, 1
    %s19 = ssub.s32 %s13, 2
    %s20 = sadd.s32 %s13, 1
    %s21 = ssub.s32 %s13, %s20
    %p22 = scmp.eq.s32.totalorder %s21, 0
    %s24 = sadd.s32 %s23, 1
    %s25 = scalar_select %p22, %s23, %s24
    %p28 = pneg %p22
    %p29 = scmp.eq.s32.totalorder %s13, 1
    %p30 = por %p28, %p29
    %p31 = scmp.ne.s32.totalorder %s23, %s26
    %p32 = scmp.eq.s32.totalorder %s13, 0
    %p33 = por %p31, %p32
    %p34 = scmp.ne.s32.totalorder %s23, %s26
    %p35 = scmp.eq.s32.totalorder %s18, 1
    %p36 = por %p34, %p35
    %p37 = scmp.ne.s32.totalorder %s26, %s27
    %p38 = scmp.eq.s32.totalorder %s18, 0
    %p39 = por %p37, %p38
    %p40 = scmp.ne.s32.totalorder %s26, %s27
    %p41 = scmp.eq.s32.totalorder %s19, 1
    %p42 = por %p40, %p41
    %p44 = scmp.ne.s32.totalorder %s27, %s43
    %p45 = scmp.eq.s32.totalorder %s19, 0
    %p46 = por %p44, %p45
    %s48 = sadd.s32 %s47, 1
    %p51 = scmp.eq.s32.totalorder %s13, 1
    %p52 = scmp.ne.s32.totalorder %s47, %s49
    %p53 = scmp.eq.s32.totalorder %s13, 0
    %p54 = por %p52, %p53
    %p55 = scmp.ne.s32.totalorder %s47, %s49
    %p56 = scmp.eq.s32.totalorder %s18, 1
    %p57 = por %p55, %p56
    %p58 = scmp.ne.s32.totalorder %s49, %s50
    %p59 = scmp.eq.s32.totalorder %s18, 0
    %p60 = por %p58, %p59
    %p61 = scmp.ne.s32.totalorder %s49, %s50
    %p62 = scmp.eq.s32.totalorder %s19, 1
    %p63 = por %p61, %p62
    %p65 = scmp.ne.s32.totalorder %s50, %s64
    %p66 = scmp.eq.s32.totalorder %s19, 0
    %p67 = por %p65, %p66
    %s69 = sadd.s32 %s68, 1
    %p72 = scmp.eq.s32.totalorder %s13, 1
    %p73 = scmp.ne.s32.totalorder %s68, %s70
    %p74 = scmp.eq.s32.totalorder %s13, 0
    %p75 = por %p73, %p74
    %p76 = scmp.ne.s32.totalorder %s68, %s70
    %p77 = scmp.eq.s32.totalorder %s18, 1
    %p78 = por %p76, %p77
    %p79 = scmp.ne.s32.totalorder %s70, %s71
    %p80 = scmp.eq.s32.totalorder %s18, 0
    %p81 = por %p79, %p80
    %p82 = scmp.ne.s32.totalorder %s70, %s71
    %p83 = scmp.eq.s32.totalorder %s19, 1
    %p84 = por %p82, %p83
    %p86 = scmp.ne.s32.totalorder %s71, %s85
    %p87 = scmp.eq.s32.totalorder %s19, 0
    %p88 = por %p86, %p87
    %s90 = sadd.s32 %s89, 1
    %p93 = scmp.eq.s32.totalorder %s13, 1
    %p94 = scmp.ne.s32.totalorder %s89, %s91
    %p95 = scmp.eq.s32.totalorder %s13, 0
    %p96 = por %p94, %p95
    %p97 = scmp.ne.s32.totalorder %s89, %s91
    %p98 = scmp.eq.s32.totalorder %s18, 1
    %p99 = por %p97, %p98
    %p100 = scmp.ne.s32.totalorder %s91, %s92
    %p101 = scmp.eq.s32.totalorder %s18, 0
    %p102 = por %p100, %p101
    %p103 = scmp.ne.s32.totalorder %s91, %s92
    %p104 = scmp.eq.s32.totalorder %s19, 1
    %p105 = por %p103, %p104
    %p107 = scmp.ne.s32.totalorder %s92, %s106
    %p108 = scmp.eq.s32.totalorder %s19, 0
    %p109 = por %p107, %p108
    %s110 = ssub.s32 %s13, %s20
    %p111 = scmp.eq.s32.totalorder %s110, 0
    %s113 = sadd.s32 %s112, 1
    %s114 = scalar_select %p111, %s112, %s113
    %p117 = pneg %p111
    %p118 = scmp.eq.s32.totalorder %s13, 1
    %p119 = por %p117, %p118
    %p120 = scmp.ne.s32.totalorder %s112, %s115
    %p121 = scmp.eq.s32.totalorder %s13, 0
    %p122 = por %p120, %p121
    %p123 = scmp.ne.s32.totalorder %s112, %s115
    %p124 = scmp.eq.s32.totalorder %s18, 1
    %p125 = por %p123, %p124
    %p126 = scmp.ne.s32.totalorder %s115, %s116
    %p127 = scmp.eq.s32.totalorder %s18, 0
    %p128 = por %p126, %p127
    %p129 = scmp.ne.s32.totalorder %s115, %s116
    %p130 = scmp.eq.s32.totalorder %s19, 1
    %p131 = por %p129, %p130
    %p133 = scmp.ne.s32.totalorder %s116, %s132
    %p134 = scmp.eq.s32.totalorder %s19, 0
    %p135 = por %p133, %p134
    %s136 = ssub.s32 %s13, %s20
    %p137 = scmp.eq.s32.totalorder %s136, 0
    %s139 = sadd.s32 %s138, 1
    %s140 = scalar_select %p137, %s138, %s139
    %p143 = pneg %p137
    %p144 = scmp.eq.s32.totalorder %s13, 1
    %p145 = por %p143, %p144
    %p146 = scmp.ne.s32.totalorder %s138, %s141
    %p147 = scmp.eq.s32.totalorder %s13, 0
    %p148 = por %p146, %p147
    %p149 = scmp.ne.s32.totalorder %s138, %s141
    %p150 = scmp.eq.s32.totalorder %s18, 1
    %p151 = por %p149, %p150
    %p152 = scmp.ne.s32.totalorder %s141, %s142
    %p153 = scmp.eq.s32.totalorder %s18, 0
    %p154 = por %p152, %p153
    %p155 = scmp.ne.s32.totalorder %s141, %s142
    %p156 = scmp.eq.s32.totalorder %s19, 1
    %p157 = por %p155, %p156
    %p159 = scmp.ne.s32.totalorder %s142, %s158
    %p160 = scmp.eq.s32.totalorder %s19, 0
    %p161 = por %p159, %p160
    %s162 = ssub.s32 %s13, %s20
    %p163 = scmp.eq.s32.totalorder %s162, 0
    %s165 = sadd.s32 %s164, 1
    %s166 = scalar_select %p163, %s164, %s165
    %p169 = pneg %p163
    %p170 = scmp.eq.s32.totalorder %s13, 1
    %p171 = por %p169, %p170
    %p172 = scmp.ne.s32.totalorder %s164, %s167
    %p173 = scmp.eq.s32.totalorder %s13, 0
    %p174 = por %p172, %p173
    %p175 = scmp.ne.s32.totalorder %s164, %s167
    %p176 = scmp.eq.s32.totalorder %s18, 1
    %p177 = por %p175, %p176
    %p178 = scmp.ne.s32.totalorder %s167, %s168
    %p179 = scmp.eq.s32.totalorder %s18, 0
    %p180 = por %p178, %p179
    %p181 = scmp.ne.s32.totalorder %s167, %s168
    %p182 = scmp.eq.s32.totalorder %s19, 1
    %p183 = por %p181, %p182
    %p185 = scmp.ne.s32.totalorder %s168, %s184
    %p186 = scmp.eq.s32.totalorder %s19, 0
    %p187 = por %p185, %p186
    %p188 = scmp.le.s32.totalorder 1, %s13
    %p189 = scmp.lt.s32.totalorder %s13, 3
    %p190 = pnand %p188, %p189
    %p191 = pneg %p190
    // Predicated region
    $region9: #{conv_block_forward.2} parent=5 // pred_check
      _
    $region10: #{conv_block_forward.2} parent=5 // pred_check_branch
      %193 = sbr.rel (%p190) target = $region12
    $region11: #{conv_block_forward.2} parent=5 // pred_region
      %s194 = ssub.s32 %s13, 1
      // Predicated region
      $region13: #{conv_block_forward.2} parent=11 // pred_check
        %p195 = pneg %p60
      $region14: #{conv_block_forward.2} parent=11 // pred_check_branch
        %197 = sbr.rel (%p195) target = $region16
      $region15: #{conv_block_forward.2} parent=11 // pred_region
        _
      $region16: #{conv_block_forward.2} parent=11 // pred_fallthru
        _
      // Predicated region
      $region17: #{conv_block_forward.2} parent=11 // pred_check
        %p198 = pneg %p81
      $region18: #{conv_block_forward.2} parent=11 // pred_check_branch
        %200 = sbr.rel (%p198) target = $region20
      $region19: #{conv_block_forward.2} parent=11 // pred_region
        _
      $region20: #{conv_block_forward.2} parent=11 // pred_fallthru
        _
      // Predicated region
      $region21: #{conv_block_forward.2} parent=11 // pred_check
        %p201 = pneg %p102
      $region22: #{conv_block_forward.2} parent=11 // pred_check_branch
        %203 = sbr.rel (%p201) target = $region24
      $region23: #{conv_block_forward.2} parent=11 // pred_region
        _
      $region24: #{conv_block_forward.2} parent=11 // pred_fallthru
        _
    $region12: #{conv_block_forward.2} parent=5 // pred_fallthru
      _
    %p204 = scmp.lt.s32.totalorder %s13, 2
    // Predicated region
    $region25: #{conv_block_forward.2} parent=5 // pred_check
      %p205 = pneg %p204
    $region26: #{conv_block_forward.2} parent=5 // pred_check_branch
      %207 = sbr.rel (%p205) target = $region28
    $region27: #{conv_block_forward.2} parent=5 // pred_region
      // Predicated region
      $region29: #{conv_block_forward.2} parent=27 // pred_check
        %p208 = pneg %p33
      $region30: #{conv_block_forward.2} parent=27 // pred_check_branch
        %210 = sbr.rel (%p208) target = $region32
      $region31: #{conv_block_forward.2} parent=27 // pred_region
        %p211 = scmp.lt.s32.totalorder %s13, 1
        %s212 = scalar_select %p211, %s13, 1
        %s213 = smul.addr %s212, 41
        %s214 = smul.addr %s213, 8
        %s215 = scalar_lea.vmem %s0, %s214
      $region32: #{conv_block_forward.2} parent=27 // pred_fallthru
        _
    $region28: #{conv_block_forward.2} parent=5 // pred_fallthru
      _
    %p216 = scmp.le.s32.totalorder 1, %s13
    %p217 = scmp.lt.s32.totalorder %s13, 3
    %p218 = pnand %p216, %p217
    %p219 = pneg %p218
    // Predicated region
    $region33: #{conv_block_forward.2} parent=5 // pred_check
      _
    $region34: #{conv_block_forward.2} parent=5 // pred_check_branch
      %221 = sbr.rel (%p218) target = $region36
    $region35: #{conv_block_forward.2} parent=5 // pred_region
      %s222 = ssub.s32 %s13, 1
      %p223 = scmp.lt.s32.totalorder %s18, 1
      %s224 = scalar_select %p223, %s18, 1
      %s225 = smul.addr %s224, 41
      %s226 = smul.addr %s225, 8
      %s227 = scalar_lea.vmem %s0, %s226
      %p228 = pneg %p39
      %p229 = pneg %p36
      %p230 = pneg %p60
      %p231 = pneg %p57
      %p232 = pneg %p81
      %p233 = pneg %p78
      %p234 = pneg %p102
      %p235 = pneg %p99
      %p236 = pneg %p128
      %p237 = pneg %p125
      %p238 = scmp.lt.s32.totalorder %s18, 1
      %s239 = scalar_select %p238, %s18, 1
      %s240 = smul.addr %s239, 36
      %s241 = smul.addr %s240, 8
      %s242 = scalar_lea.vmem %s4, %s241
      %p243 = pneg %p154
      %p244 = pneg %p151
      %p245 = scmp.lt.s32.totalorder %s18, 1
      %s246 = scalar_select %p245, %s18, 1
      %s247 = scalar_lea.vmem %s5, %s246
      %p248 = pneg %p180
      %p249 = pneg %p177
      %p250 = scmp.lt.s32.totalorder %s18, 1
      %s251 = scalar_select %p250, %s18, 1
      %s252 = scalar_lea.vmem %s6, %s251
      %p253 = scmp.lt.s32.totalorder %s18, 1
      %s254 = scalar_select %p253, %s18, 1
      %s255 = smul.addr %s254, 41
      %s256 = smul.addr %s255, 8
      %s257 = scalar_lea.vmem %s0, %s256
      %p258 = scmp.lt.s32.totalorder %s18, 1
      %s259 = scalar_select %p258, %s18, 1
      %s260 = smul.addr %s259, 36
      %s261 = smul.addr %s260, 8
      %s262 = scalar_lea.vmem %s4, %s261
      %p263 = scmp.lt.s32.totalorder %s18, 1
      %s264 = scalar_select %p263, %s18, 1
      %s265 = scalar_lea.vmem %s5, %s264
      %p266 = scmp.lt.s32.totalorder %s18, 1
      %s267 = scalar_select %p266, %s18, 1
      %s268 = scalar_lea.vmem %s6, %s267
      %v269 = vld [vmem:[%s257] sm:$0xff]
      %v270 = vld [vmem:[%s257 + $0x8] sm:$0xff]
      %v271 = vld [vmem:[%s257 + $0x10] sm:$0xff]
      %v272 = vld [vmem:[%s257 + $0x18] sm:$0xff]
      %v273 = vld [vmem:[%s257 + $0x20] sm:$0xff]
      %v274 = vld [vmem:[%s257 + $0x28] sm:$0xff]
      %v275 = vld [vmem:[%s257 + $0x30] sm:$0xff]
      %v276 = vld [vmem:[%s257 + $0x38] sm:$0xff]
      %v277 = vld [vmem:[%s257 + $0x40] sm:$0xff]
      %v278 = vld [vmem:[%s257 + $0x48] sm:$0xff]
      %v279 = vld [vmem:[%s257 + $0x50] sm:$0xff]
      %v280 = vld [vmem:[%s257 + $0x58] sm:$0xff]
      %v281 = vld [vmem:[%s257 + $0x60] sm:$0xff]
      %v282 = vld [vmem:[%s257 + $0x68] sm:$0xff]
      %v283 = vld [vmem:[%s257 + $0x70] sm:$0xff]
      %v284 = vld [vmem:[%s257 + $0x78] sm:$0xff]
      %v285 = vld [vmem:[%s257 + $0x80] sm:$0xff]
      %v286 = vld [vmem:[%s257 + $0x88] sm:$0xff]
      %v287 = vld [vmem:[%s257 + $0x90] sm:$0xff]
      %v288 = vld [vmem:[%s257 + $0x98] sm:$0xff]
      %v289 = vld [vmem:[%s257 + $0xa0] sm:$0xff]
      %v290 = vld [vmem:[%s257 + $0xa8] sm:$0xff]
      %v291 = vld [vmem:[%s257 + $0xb0] sm:$0xff]
      %v292 = vld [vmem:[%s257 + $0xb8] sm:$0xff]
      %v293 = vld [vmem:[%s257 + $0xc0] sm:$0xff]
      %v294 = vld [vmem:[%s257 + $0xc8] sm:$0xff]
      %v295 = vld [vmem:[%s257 + $0xd0] sm:$0xff]
      %v296 = vld [vmem:[%s257 + $0xd8] sm:$0xff]
      %v297 = vld [vmem:[%s257 + $0xe0] sm:$0xff]
      %v298 = vld [vmem:[%s257 + $0xe8] sm:$0xff]
      %v299 = vld [vmem:[%s257 + $0xf0] sm:$0xff]
      %v300 = vld [vmem:[%s257 + $0xf8] sm:$0xff]
      %v301 = vld [vmem:[%s257 + $0x100] sm:$0xff]
      %v302 = vld [vmem:[%s257 + $0x108] sm:$0xff]
      %v303 = vld [vmem:[%s257 + $0x110] sm:$0xff]
      %v304 = vld [vmem:[%s257 + $0x118] sm:$0xff]
      %v305 = vld [vmem:[%s1] sm:$0xf]
      %v306 = vld [vmem:[%s257 + $0x1] sm:$0xff]
      %v307 = vld [vmem:[%s257 + $0x9] sm:$0xff]
      %v308 = vld [vmem:[%s257 + $0x11] sm:$0xff]
      %v309 = vld [vmem:[%s257 + $0x19] sm:$0xff]
      %v310 = vld [vmem:[%s257 + $0x21] sm:$0xff]
      %v311 = vld [vmem:[%s257 + $0x29] sm:$0xff]
      %v312 = vld [vmem:[%s257 + $0x31] sm:$0xff]
      %v313 = vld [vmem:[%s257 + $0x39] sm:$0xff]
      %v314 = vld [vmem:[%s257 + $0x41] sm:$0xff]
      %v315 = vld [vmem:[%s257 + $0x49] sm:$0xff]
      %v316 = vld [vmem:[%s257 + $0x51] sm:$0xff]
      %v317 = vld [vmem:[%s257 + $0x59] sm:$0xff]
      %v318 = vld [vmem:[%s257 + $0x61] sm:$0xff]
      %v319 = vld [vmem:[%s257 + $0x69] sm:$0xff]
      %v320 = vld [vmem:[%s257 + $0x71] sm:$0xff]
      %v321 = vld [vmem:[%s257 + $0x79] sm:$0xff]
      %v322 = vld [vmem:[%s257 + $0x81] sm:$0xff]
      %v323 = vld [vmem:[%s257 + $0x89] sm:$0xff]
      %v324 = vld [vmem:[%s257 + $0x91] sm:$0xff]
      %v325 = vld [vmem:[%s257 + $0x99] sm:$0xff]
      %v326 = vld [vmem:[%s257 + $0xa1] sm:$0xff]
      %v327 = vld [vmem:[%s257 + $0xa9] sm:$0xff]
      %v328 = vld [vmem:[%s257 + $0xb1] sm:$0xff]
      %v329 = vld [vmem:[%s257 + $0xb9] sm:$0xff]
      %v330 = vld [vmem:[%s257 + $0xc1] sm:$0xff]
      %v331 = vld [vmem:[%s257 + $0xc9] sm:$0xff]
      %v332 = vld [vmem:[%s257 + $0xd1] sm:$0xff]
      %v333 = vld [vmem:[%s257 + $0xd9] sm:$0xff]
      %v334 = vld [vmem:[%s257 + $0xe1] sm:$0xff]
      %v335 = vld [vmem:[%s257 + $0xe9] sm:$0xff]
      %v336 = vld [vmem:[%s257 + $0xf1] sm:$0xff]
      %v337 = vld [vmem:[%s257 + $0xf9] sm:$0xff]
      %v338 = vld [vmem:[%s257 + $0x101] sm:$0xff]
      %v339 = vld [vmem:[%s257 + $0x109] sm:$0xff]
      %v340 = vld [vmem:[%s257 + $0x111] sm:$0xff]
      %v341 = vld [vmem:[%s257 + $0x119] sm:$0xff]
      %s342 = scalar_lea.vmem %s1, 4
      %v343 = vld [vmem:[%s342] sm:$0xf]
      %vm344 = vcmask 31744
      %v346 = vsel %vm344, %v306, 0
      %v349 = vsel %vm344, %v307, 0
      %v352 = vsel %vm344, %v308, 0
      %v355 = vsel %vm344, %v309, 0
      %v358 = vsel %vm344, %v310, 0
      %v361 = vsel %vm344, %v311, 0
      %v364 = vsel %vm344, %v312, 0
      %v367 = vsel %vm344, %v313, 0
      %v370 = vsel %vm344, %v314, 0
      %v373 = vsel %vm344, %v315, 0
      %v376 = vsel %vm344, %v316, 0
      %v379 = vsel %vm344, %v317, 0
      %v382 = vsel %vm344, %v318, 0
      %v385 = vsel %vm344, %v319, 0
      %v388 = vsel %vm344, %v320, 0
      %v391 = vsel %vm344, %v321, 0
      %v394 = vsel %vm344, %v322, 0
      %v397 = vsel %vm344, %v323, 0
      %v400 = vsel %vm344, %v324, 0
      %v403 = vsel %vm344, %v325, 0
      %v406 = vsel %vm344, %v326, 0
      %v409 = vsel %vm344, %v327, 0
      %v412 = vsel %vm344, %v328, 0
      %v415 = vsel %vm344, %v329, 0
      %v418 = vsel %vm344, %v330, 0
      %v421 = vsel %vm344, %v331, 0
      %v424 = vsel %vm344, %v332, 0
      %v427 = vsel %vm344, %v333, 0
      %v430 = vsel %vm344, %v334, 0
      %v433 = vsel %vm344, %v335, 0
      %v436 = vsel %vm344, %v336, 0
      %v439 = vsel %vm344, %v337, 0
      %v442 = vsel %vm344, %v338, 0
      %v445 = vsel %vm344, %v339, 0
      %v448 = vsel %vm344, %v340, 0
      %v451 = vsel %vm344, %v341, 0
      %vm453 = vcmask 1043456
      %v455 = vsel %vm453, %v343, 0
      %457 = vmatprep.subr.mxu0 0.0
      %458 = vmatpush1.msra.mxu0 %v455
      %459 = vmatprep.subr.mxu0 0.0
      %460 = vmatpush1.msra.mxu0 0.0
      %461 = vmatprep.subr.mxu0 0.0
      %462 = vmatpush1.msra.mxu0 0.0
      %463 = vmatprep.subr.mxu0 0.0
      %464 = vmatpush1.msra.mxu0 0.0
      %465 = vmatprep.subr.mxu0 0.0
      %466 = vmatpush1.msra.mxu0 0.0
      %467 = vmatprep.subr.mxu0 0.0
      %468 = vmatpush1.msra.mxu0 0.0
      %469 = vmatprep.subr.mxu0 0.0
      %470 = vmatpush1.msra.mxu0 0.0
      %471 = vmatprep.subr.mxu0 0.0
      %472 = vmatpush1.msra.mxu0 0.0
      %473 = vmatprep.subr.mxu0 0.0
      %474 = vmatpush1.msra.mxu0 0.0
      %475 = vmatprep.subr.mxu0 0.0
      %476 = vmatpush1.msra.mxu0 0.0
      %477 = vmatprep.subr.mxu0 0.0
      %478 = vmatpush1.msra.mxu0 0.0
      %479 = vmatprep.subr.mxu0 0.0
      %480 = vmatpush1.msra.mxu0 0.0
      %481 = vmatprep.subr.mxu0 0.0
      %482 = vmatpush1.msra.mxu0 0.0
      %483 = vmatprep.subr.mxu0 0.0
      %484 = vmatpush1.msra.mxu0 0.0
      %485 = vmatprep.subr.mxu0 0.0
      %486 = vmatpush1.msra.mxu0 0.0
      %487 = vmatprep.subr.mxu0 0.0
      %488 = vmatpush1.msra.mxu0 0.0
      %489 = vmatprep.subr.mxu0 0.0
      %490 = vmatpush1.msra.mxu0 0.0
      %491 = vmatprep.subr.mxu0 0.0
      %492 = vmatpush1.msra.mxu0 0.0
      %493 = vmatprep.subr.mxu0 0.0
      %494 = vmatpush1.msra.mxu0 0.0
      %495 = vmatprep.subr.mxu0 0.0
      %496 = vmatpush1.msra.mxu0 0.0
      %497 = vmatprep.subr.mxu0 0.0
      %498 = vmatpush1.msra.mxu0 0.0
      %499 = vmatprep.subr.mxu0 0.0
      %500 = vmatpush1.msra.mxu0 0.0
      %501 = vmatprep.subr.mxu0 0.0
      %502 = vmatpush1.msra.mxu0 0.0
      %503 = vmatprep.subr.mxu0 0.0
      %504 = vmatpush1.msra.mxu0 0.0
      %505 = vmatprep.subr.mxu0 0.0
      %506 = vmatpush1.msra.mxu0 0.0
      %507 = vmatprep.subr.mxu0 0.0
      %508 = vmatpush1.msra.mxu0 0.0
      %509 = vmatprep.subr.mxu0 0.0
      %510 = vmatpush1.msra.mxu0 0.0
      %511 = vmatprep.subr.mxu0 0.0
      %512 = vmatpush1.msra.mxu0 0.0
      %513 = vmatprep.subr.mxu0 0.0
      %514 = vmatpush1.msra.mxu0 0.0
      %515 = vmatprep.subr.mxu0 0.0
      %516 = vmatpush1.msra.mxu0 0.0
      %517 = vmatprep.subr.mxu0 0.0
      %518 = vmatpush1.msra.mxu0 0.0
      %519 = vmatprep.subr.mxu0 0.0
      %520 = vmatpush1.msra.mxu0 0.0
      %521 = vmatprep.mubr.f32.mxu0 0.0
      %522 = vmatmul.mubr.f32.gmra.mrb[0].mxu0 %v346
      %v523 = vpop.f32.mrb[0].mxu0
      %v524 = vadd.f32 0.0, %v523
      %v525 = vpop.f32.mrb[0].mxu0
      %526 = vmatprep.mubr.f32.mxu0 0.0
      %527 = vmatmul.mubr.f32.gmra.mrb[0].mxu0 %v349
      %v528 = vpop.f32.mrb[0].mxu0
      %v529 = vadd.f32 0.0, %v528
      %v530 = vpop.f32.mrb[0].mxu0
      %531 = vmatprep.mubr.f32.mxu0 0.0
      %532 = vmatmul.mubr.f32.gmra.mrb[0].mxu0 %v352
      %v533 = vpop.f32.mrb[0].mxu0
      %v534 = vadd.f32 0.0, %v533
      %v535 = vpop.f32.mrb[0].mxu0
      %536 = vmatprep.mubr.f32.mxu0 0.0
      %537 = vmatmul.mubr.f32.gmra.mrb[0].mxu0 %v355
      %v538 = vpop.f32.mrb[0].mxu0
      %v539 = vadd.f32 0.0, %v538
      %v540 = vpop.f32.mrb[0].mxu0
      %541 = vmatprep.mubr.f32.mxu0 0.0
      %542 = vmatmul.mubr.f32.gmra.mrb[0].mxu0 %v358
      %v543 = vpop.f32.mrb[0].mxu0
      %v544 = vadd.f32 0.0, %v543
      %v545 = vpop.f32.mrb[0].mxu0
      %546 = vmatprep.mubr.f32.mxu0 0.0
      %547 = vmatmul.mubr.f32.gmra.mrb[0].mxu0 %v361
      %v548 = vpop.f32.mrb[0].mxu0
      %v549 = vadd.f32 0.0, %v548
      %v550 = vpop.f32.mrb[0].mxu0
      %551 = vmatprep.mubr.f32.mxu0 0.0
      %552 = vmatmul.mubr.f32.gmra.mrb[0].mxu0 %v364
      %v553 = vpop.f32.mrb[0].mxu0
      %v554 = vadd.f32 0.0, %v553
      %v555 = vpop.f32.mrb[0].mxu0
      %556 = vmatprep.mubr.f32.mxu0 0.0
      %557 = vmatmul.mubr.f32.gmra.mrb[0].mxu0 %v367
      %v558 = vpop.f32.mrb[0].mxu0
      %v559 = vadd.f32 0.0, %v558
      %v560 = vpop.f32.mrb[0].mxu0
      %561 = vmatprep.mubr.f32.mxu0 0.0
      %562 = vmatmul.mubr.f32.gmra.mrb[0].mxu0 %v370
      %v563 = vpop.f32.mrb[0].mxu0
      %v564 = vadd.f32 0.0, %v563
      %v565 = vpop.f32.mrb[0].mxu0
      %566 = vmatprep.mubr.f32.mxu0 0.0
      %567 = vmatmul.mubr.f32.gmra.mrb[0].mxu0 %v373
      %v568 = vpop.f32.mrb[0].mxu0
      %v569 = vadd.f32 0.0, %v568
      %v570 = vpop.f32.mrb[0].mxu0
      %571 = vmatprep.mubr.f32.mxu0 0.0
      %572 = vmatmul.mubr.f32.gmra.mrb[0].mxu0 %v376
      %v573 = vpop.f32.mrb[0].mxu0
      %v574 = vadd.f32 0.0, %v573
      %v575 = vpop.f32.mrb[0].mxu0
      %576 = vmatprep.mubr.f32.mxu0 0.0
      %577 = vmatmul.mubr.f32.gmra.mrb[0].mxu0 %v379
      %v578 = vpop.f32.mrb[0].mxu0
      %v579 = vadd.f32 0.0, %v578
      %v580 = vpop.f32.mrb[0].mxu0
      %581 = vmatprep.mubr.f32.mxu0 0.0
      %582 = vmatmul.mubr.f32.gmra.mrb[0].mxu0 %v382
      %v583 = vpop.f32.mrb[0].mxu0
      %v584 = vadd.f32 0.0, %v583
      %v585 = vpop.f32.mrb[0].mxu0
      %586 = vmatprep.mubr.f32.mxu0 0.0
      %587 = vmatmul.mubr.f32.gmra.mrb[0].mxu0 %v385
      %v588 = vpop.f32.mrb[0].mxu0
      %v589 = vadd.f32 0.0, %v588
      %v590 = vpop.f32.mrb[0].mxu0
      %591 = vmatprep.mubr.f32.mxu0 0.0
      %592 = vmatmul.mubr.f32.gmra.mrb[0].mxu0 %v388
      %v593 = vpop.f32.mrb[0].mxu0
      %v594 = vadd.f32 0.0, %v593
      %v595 = vpop.f32.mrb[0].mxu0
      %596 = vmatprep.mubr.f32.mxu0 0.0
      %597 = vmatmul.mubr.f32.gmra.mrb[0].mxu0 %v391
      %v598 = vpop.f32.mrb[0].mxu0
      %v599 = vadd.f32 0.0, %v598
      %v600 = vpop.f32.mrb[0].mxu0
      %601 = vmatprep.mubr.f32.mxu0 0.0
      %602 = vmatmul.mubr.f32.gmra.mrb[0].mxu0 %v394
      %v603 = vpop.f32.mrb[0].mxu0
      %v604 = vadd.f32 0.0, %v603
      %v605 = vpop.f32.mrb[0].mxu0
      %606 = vmatprep.mubr.f32.mxu0 0.0
      %607 = vmatmul.mubr.f32.gmra.mrb[0].mxu0 %v397
      %v608 = vpop.f32.mrb[0].mxu0
      %v609 = vadd.f32 0.0, %v608
      %v610 = vpop.f32.mrb[0].mxu0
      %611 = vmatprep.mubr.f32.mxu0 0.0
      %612 = vmatmul.mubr.f32.gmra.mrb[0].mxu0 %v400
      %v613 = vpop.f32.mrb[0].mxu0
      %v614 = vadd.f32 0.0, %v613
      %v615 = vpop.f32.mrb[0].mxu0
      %616 = vmatprep.mubr.f32.mxu0 0.0
      %617 = vmatmul.mubr.f32.gmra.mrb[0].mxu0 %v403
      %v618 = vpop.f32.mrb[0].mxu0
      %v619 = vadd.f32 0.0, %v618
      %v620 = vpop.f32.mrb[0].mxu0
      %621 = vmatprep.mubr.f32.mxu0 0.0
      %622 = vmatmul.mubr.f32.gmra.mrb[0].mxu0 %v406
      %v623 = vpop.f32.mrb[0].mxu0
      %v624 = vadd.f32 0.0, %v623
      %v625 = vpop.f32.mrb[0].mxu0
      %626 = vmatprep.mubr.f32.mxu0 0.0
      %627 = vmatmul.mubr.f32.gmra.mrb[0].mxu0 %v409
      %v628 = vpop.f32.mrb[0].mxu0
      %v629 = vadd.f32 0.0, %v628
      %v630 = vpop.f32.mrb[0].mxu0
      %631 = vmatprep.mubr.f32.mxu0 0.0
      %632 = vmatmul.mubr.f32.gmra.mrb[0].mxu0 %v412
      %v633 = vpop.f32.mrb[0].mxu0
      %v634 = vadd.f32 0.0, %v633
      %v635 = vpop.f32.mrb[0].mxu0
      %636 = vmatprep.mubr.f32.mxu0 0.0
      %637 = vmatmul.mubr.f32.gmra.mrb[0].mxu0 %v415
      %v638 = vpop.f32.mrb[0].mxu0
      %v639 = vadd.f32 0.0, %v638
      %v640 = vpop.f32.mrb[0].mxu0
      %641 = vmatprep.mubr.f32.mxu0 0.0
      %642 = vmatmul.mubr.f32.gmra.mrb[0].mxu0 %v418
      %v643 = vpop.f32.mrb[0].mxu0
      %v644 = vadd.f32 0.0, %v643
      %v645 = vpop.f32.mrb[0].mxu0
      %646 = vmatprep.mubr.f32.mxu0 0.0
      %647 = vmatmul.mubr.f32.gmra.mrb[0].mxu0 %v421
      %v648 = vpop.f32.mrb[0].mxu0
      %v649 = vadd.f32 0.0, %v648
      %v650 = vpop.f32.mrb[0].mxu0
      %651 = vmatprep.mubr.f32.mxu0 0.0
      %652 = vmatmul.mubr.f32.gmra.mrb[0].mxu0 %v424
      %v653 = vpop.f32.mrb[0].mxu0
      %v654 = vadd.f32 0.0, %v653
      %v655 = vpop.f32.mrb[0].mxu0
      %656 = vmatprep.mubr.f32.mxu0 0.0
      %657 = vmatmul.mubr.f32.gmra.mrb[0].mxu0 %v427
      %v658 = vpop.f32.mrb[0].mxu0
      %v659 = vadd.f32 0.0, %v658
      %v660 = vpop.f32.mrb[0].mxu0
      %661 = vmatprep.mubr.f32.mxu0 0.0
      %662 = vmatmul.mubr.f32.gmra.mrb[0].mxu0 %v430
      %v663 = vpop.f32.mrb[0].mxu0
      %v664 = vadd.f32 0.0, %v663
      %v665 = vpop.f32.mrb[0].mxu0
      %666 = vmatprep.mubr.f32.mxu0 0.0
      %667 = vmatmul.mubr.f32.gmra.mrb[0].mxu0 %v433
      %v668 = vpop.f32.mrb[0].mxu0
      %v669 = vadd.f32 0.0, %v668
      %v670 = vpop.f32.mrb[0].mxu0
      %671 = vmatprep.mubr.f32.mxu0 0.0
      %672 = vmatmul.mubr.f32.gmra.mrb[0].mxu0 %v436
      %v673 = vpop.f32.mrb[0].mxu0
      %v674 = vadd.f32 0.0, %v673
      %v675 = vpop.f32.mrb[0].mxu0
      %676 = vmatprep.mubr.f32.mxu0 0.0
      %677 = vmatmul.mubr.f32.gmra.mrb[0].mxu0 %v439
      %v678 = vpop.f32.mrb[0].mxu0
      %v679 = vadd.f32 0.0, %v678
      %v680 = vpop.f32.mrb[0].mxu0
      %681 = vmatprep.mubr.f32.mxu0 0.0
      %682 = vmatmul.mubr.f32.gmra.mrb[0].mxu0 %v442
      %v683 = vpop.f32.mrb[0].mxu0
      %v684 = vadd.f32 0.0, %v683
      %v685 = vpop.f32.mrb[0].mxu0
      %686 = vmatprep.mubr.f32.mxu0 0.0
      %687 = vmatmul.mubr.f32.gmra.mrb[0].mxu0 %v445
      %v688 = vpop.f32.mrb[0].mxu0
      %v689 = vadd.f32 0.0, %v688
      %v690 = vpop.f32.mrb[0].mxu0
      %691 = vmatprep.mubr.f32.mxu0 0.0
      %692 = vmatmul.mubr.f32.gmra.mrb[0].mxu0 %v448
      %v693 = vpop.f32.mrb[0].mxu0
      %v694 = vadd.f32 0.0, %v693
      %v695 = vpop.f32.mrb[0].mxu0
      %696 = vmatprep.mubr.f32.mxu0 0.0
      %697 = vmatmul.mubr.f32.gmra.mrb[0].mxu0 %v451
      %v698 = vpop.f32.mrb[0].mxu0
      %v699 = vadd.f32 0.0, %v698
      %v700 = vpop.f32.mrb[0].mxu0
      %701 = vdwg.mxu0
      %v703 = vsel %vm344, %v269, 0
      %v706 = vsel %vm344, %v270, 0
      %v709 = vsel %vm344, %v271, 0
      %v712 = vsel %vm344, %v272, 0
      %v715 = vsel %vm344, %v273, 0
      %v718 = vsel %vm344, %v274, 0
      %v721 = vsel %vm344, %v275, 0
      %v724 = vsel %vm344, %v276, 0
      %v727 = vsel %vm344, %v277, 0
      %v730 = vsel %vm344, %v278, 0
      %v733 = vsel %vm344, %v279, 0
      %v736 = vsel %vm344, %v280, 0
      %v739 = vsel %vm344, %v281, 0
      %v742 = vsel %vm344, %v282, 0
      %v745 = vsel %vm344, %v283, 0
      %v748 = vsel %vm344, %v284, 0
      %v751 = vsel %vm344, %v285, 0
      %v754 = vsel %vm344, %v286, 0
      %v757 = vsel %vm344, %v287, 0
      %v760 = vsel %vm344, %v288, 0
      %v763 = vsel %vm344, %v289, 0
      %v766 = vsel %vm344, %v290, 0
      %v769 = vsel %vm344, %v291, 0
      %v772 = vsel %vm344, %v292, 0
      %v775 = vsel %vm344, %v293, 0
      %v778 = vsel %vm344, %v294, 0
      %v781 = vsel %vm344, %v295, 0
      %v784 = vsel %vm344, %v296, 0
      %v787 = vsel %vm344, %v297, 0
      %v790 = vsel %vm344, %v298, 0
      %v793 = vsel %vm344, %v299, 0
      %v796 = vsel %vm344, %v300, 0
      %v799 = vsel %vm344, %v301, 0
      %v802 = vsel %vm344, %v302, 0
      %v805 = vsel %vm344, %v303, 0
      %v808 = vsel %vm344, %v304, 0
      %v811 = vsel %vm453, %v305, 0
      %813 = vmatprep.subr.mxu0 0.0
      %814 = vmatpush1.msra.mxu0 %v811
      %815 = vmatprep.subr.mxu0 0.0
      %816 = vmatpush1.msra.mxu0 0.0
      %817 = vmatprep.subr.mxu0 0.0
      %818 = vmatpush1.msra.mxu0 0.0
      %819 = vmatprep.subr.mxu0 0.0
      %820 = vmatpush1.msra.mxu0 0.0
      %821 = vmatprep.subr.mxu0 0.0
      %822 = vmatpush1.msra.mxu0 0.0
      %823 = vmatprep.subr.mxu0 0.0
      %824 = vmatpush1.msra.mxu0 0.0
      %825 = vmatprep.subr.mxu0 0.0
      %826 = vmatpush1.msra.mxu0 0.0
      %827 = vmatprep.subr.mxu0 0.0
      %828 = vmatpush1.msra.mxu0 0.0
      %829 = vmatprep.subr.mxu0 0.0
      %830 = vmatpush1.msra.mxu0 0.0
      %831 = vmatprep.subr.mxu0 0.0
      %832 = vmatpush1.msra.mxu0 0.0
      %833 = vmatprep.subr.mxu0 0.0
      %834 = vmatpush1.msra.mxu0 0.0
      %835 = vmatprep.subr.mxu0 0.0
      %836 = vmatpush1.msra.mxu0 0.0
      %837 = vmatprep.subr.mxu0 0.0
      %838 = vmatpush1.msra.mxu0 0.0
      %839 = vmatprep.subr.mxu0 0.0
      %840 = vmatpush1.msra.mxu0 0.0
      %841 = vmatprep.subr.mxu0 0.0
      %842 = vmatpush1.msra.mxu0 0.0
      %843 = vmatprep.subr.mxu0 0.0
      %844 = vmatpush1.msra.mxu0 0.0
      %845 = vmatprep.subr.mxu0 0.0
      %846 = vmatpush1.msra.mxu0 0.0
      %847 = vmatprep.subr.mxu0 0.0
      %848 = vmatpush1.msra.mxu0 0.0
      %849 = vmatprep.subr.mxu0 0.0
      %850 = vmatpush1.msra.mxu0 0.0
      %851 = vmatprep.subr.mxu0 0.0
      %852 = vmatpush1.msra.mxu0 0.0
      %853 = vmatprep.subr.mxu0 0.0
      %854 = vmatpush1.msra.mxu0 0.0
      %855 = vmatprep.subr.mxu0 0.0
      %856 = vmatpush1.msra.mxu0 0.0
      %857 = vmatprep.subr.mxu0 0.0
      %858 = vmatpush1.msra.mxu0 0.0
      %859 = vmatprep.subr.mxu0 0.0
      %860 = vmatpush1.msra.mxu0 0.0
      %861 = vmatprep.subr.mxu0 0.0
      %862 = vmatpush1.msra.mxu0 0.0
      %863 = vmatprep.subr.mxu0 0.0
      %864 = vmatpush1.msra.mxu0 0.0
      %865 = vmatprep.subr.mxu0 0.0
      %866 = vmatpush1.msra.mxu0 0.0
      %867 = vmatprep.subr.mxu0 0.0
      %868 = vmatpush1.msra.mxu0 0.0
      %869 = vmatprep.subr.mxu0 0.0
      %870 = vmatpush1.msra.mxu0 0.0
      %871 = vmatprep.subr.mxu0 0.0
      %872 = vmatpush1.msra.mxu0 0.0
      %873 = vmatprep.subr.mxu0 0.0
      %874 = vmatpush1.msra.mxu0 0.0
      %875 = vmatprep.subr.mxu0 0.0
      %876 = vmatpush1.msra.mxu0 0.0
      %877 = vmatprep.mubr.f32.mxu0 0.0
      %878 = vmatmul.mubr.f32.gmra.mrb[0].mxu0 %v703
      %v879 = vpop.f32.mrb[0].mxu0
      %v880 = vadd.f32 %v524, %v879
      %v881 = vpop.f32.mrb[0].mxu0
      %882 = vmatprep.mubr.f32.mxu0 0.0
      %883 = vmatmul.mubr.f32.gmra.mrb[0].mxu0 %v706
      %v884 = vpop.f32.mrb[0].mxu0
      %v885 = vadd.f32 %v529, %v884
      %v886 = vpop.f32.mrb[0].mxu0
      %887 = vmatprep.mubr.f32.mxu0 0.0
      %888 = vmatmul.mubr.f32.gmra.mrb[0].mxu0 %v709
      %v889 = vpop.f32.mrb[0].mxu0
      %v890 = vadd.f32 %v534, %v889
      %v891 = vpop.f32.mrb[0].mxu0
      %892 = vmatprep.mubr.f32.mxu0 0.0
      %893 = vmatmul.mubr.f32.gmra.mrb[0].mxu0 %v712
      %v894 = vpop.f32.mrb[0].mxu0
      %v895 = vadd.f32 %v539, %v894
      %v896 = vpop.f32.mrb[0].mxu0
      %897 = vmatprep.mubr.f32.mxu0 0.0
      %898 = vmatmul.mubr.f32.gmra.mrb[0].mxu0 %v715
      %v899 = vpop.f32.mrb[0].mxu0
      %v900 = vadd.f32 %v544, %v899
      %v901 = vpop.f32.mrb[0].mxu0
      %902 = vmatprep.mubr.f32.mxu0 0.0
      %903 = vmatmul.mubr.f32.gmra.mrb[0].mxu0 %v718
      %v904 = vpop.f32.mrb[0].mxu0
      %v905 = vadd.f32 %v549, %v904
      %v906 = vpop.f32.mrb[0].mxu0
      %907 = vmatprep.mubr.f32.mxu0 0.0
      %908 = vmatmul.mubr.f32.gmra.mrb[0].mxu0 %v721
      %v909 = vpop.f32.mrb[0].mxu0
      %v910 = vadd.f32 %v554, %v909
      %v911 = vpop.f32.mrb[0].mxu0
      %912 = vmatprep.mubr.f32.mxu0 0.0
      %913 = vmatmul.mubr.f32.gmra.mrb[0].mxu0 %v724
      %v914 = vpop.f32.mrb[0].mxu0
      %v915 = vadd.f32 %v559, %v914
      %v916 = vpop.f32.mrb[0].mxu0
      %917 = vmatprep.mubr.f32.mxu0 0.0
      %918 = vmatmul.mubr.f32.gmra.mrb[0].mxu0 %v727
      %v919 = vpop.f32.mrb[0].mxu0
      %v920 = vadd.f32 %v564, %v919
      %v921 = vpop.f32.mrb[0].mxu0
      %922 = vmatprep.mubr.f32.mxu0 0.0
      %923 = vmatmul.mubr.f32.gmra.mrb[0].mxu0 %v730
      %v924 = vpop.f32.mrb[0].mxu0
      %v925 = vadd.f32 %v569, %v924
      %v926 = vpop.f32.mrb[0].mxu0
      %927 = vmatprep.mubr.f32.mxu0 0.0
      %928 = vmatmul.mubr.f32.gmra.mrb[0].mxu0 %v733
      %v929 = vpop.f32.mrb[0].mxu0
      %v930 = vadd.f32 %v574, %v929
      %v931 = vpop.f32.mrb[0].mxu0
      %932 = vmatprep.mubr.f32.mxu0 0.0
      %933 = vmatmul.mubr.f32.gmra.mrb[0].mxu0 %v736
      %v934 = vpop.f32.mrb[0].mxu0
      %v935 = vadd.f32 %v579, %v934
      %v936 = vpop.f32.mrb[0].mxu0
      %937 = vmatprep.mubr.f32.mxu0 0.0
      %938 = vmatmul.mubr.f32.gmra.mrb[0].mxu0 %v739
      %v939 = vpop.f32.mrb[0].mxu0
      %v940 = vadd.f32 %v584, %v939
      %v941 = vpop.f32.mrb[0].mxu0
      %942 = vmatprep.mubr.f32.mxu0 0.0
      %943 = vmatmul.mubr.f32.gmra.mrb[0].mxu0 %v742
      %v944 = vpop.f32.mrb[0].mxu0
      %v945 = vadd.f32 %v589, %v944
      %v946 = vpop.f32.mrb[0].mxu0
      %947 = vmatprep.mubr.f32.mxu0 0.0
      %948 = vmatmul.mubr.f32.gmra.mrb[0].mxu0 %v745
      %v949 = vpop.f32.mrb[0].mxu0
      %v950 = vadd.f32 %v594, %v949
      %v951 = vpop.f32.mrb[0].mxu0
      %952 = vmatprep.mubr.f32.mxu0 0.0
      %953 = vmatmul.mubr.f32.gmra.mrb[0].mxu0 %v748
      %v954 = vpop.f32.mrb[0].mxu0
      %v955 = vadd.f32 %v599, %v954
      %v956 = vpop.f32.mrb[0].mxu0
      %957 = vmatprep.mubr.f32.mxu0 0.0
      %958 = vmatmul.mubr.f32.gmra.mrb[0].mxu0 %v751
      %v959 = vpop.f32.mrb[0].mxu0
      %v960 = vadd.f32 %v604, %v959
      %v961 = vpop.f32.mrb[0].mxu0
      %962 = vmatprep.mubr.f32.mxu0 0.0
      %963 = vmatmul.mubr.f32.gmra.mrb[0].mxu0 %v754
      %v964 = vpop.f32.mrb[0].mxu0
      %v965 = vadd.f32 %v609, %v964
      %v966 = vpop.f32.mrb[0].mxu0
      %967 = vmatprep.mubr.f32.mxu0 0.0
      %968 = vmatmul.mubr.f32.gmra.mrb[0].mxu0 %v757
      %v969 = vpop.f32.mrb[0].mxu0
      %v970 = vadd.f32 %v614, %v969
      %v971 = vpop.f32.mrb[0].mxu0
      %972 = vmatprep.mubr.f32.mxu0 0.0
      %973 = vmatmul.mubr.f32.gmra.mrb[0].mxu0 %v760
      %v974 = vpop.f32.mrb[0].mxu0
      %v975 = vadd.f32 %v619, %v974
      %v976 = vpop.f32.mrb[0].mxu0
      %977 = vmatprep.mubr.f32.mxu0 0.0
      %978 = vmatmul.mubr.f32.gmra.mrb[0].mxu0 %v763
      %v979 = vpop.f32.mrb[0].mxu0
      %v980 = vadd.f32 %v624, %v979
      %v981 = vpop.f32.mrb[0].mxu0
      %982 = vmatprep.mubr.f32.mxu0 0.0
      %983 = vmatmul.mubr.f32.gmra.mrb[0].mxu0 %v766
      %v984 = vpop.f32.mrb[0].mxu0
      %v985 = vadd.f32 %v629, %v984
      %v986 = vpop.f32.mrb[0].mxu0
      %987 = vmatprep.mubr.f32.mxu0 0.0
      %988 = vmatmul.mubr.f32.gmra.mrb[0].mxu0 %v769
      %v989 = vpop.f32.mrb[0].mxu0
      %v990 = vadd.f32 %v634, %v989
      %v991 = vpop.f32.mrb[0].mxu0
      %992 = vmatprep.mubr.f32.mxu0 0.0
      %993 = vmatmul.mubr.f32.gmra.mrb[0].mxu0 %v772
      %v994 = vpop.f32.mrb[0].mxu0
      %v995 = vadd.f32 %v639, %v994
      %v996 = vpop.f32.mrb[0].mxu0
      %997 = vmatprep.mubr.f32.mxu0 0.0
      %998 = vmatmul.mubr.f32.gmra.mrb[0].mxu0 %v775
      %v999 = vpop.f32.mrb[0].mxu0
      %v1000 = vadd.f32 %v644, %v999
      %v1001 = vpop.f32.mrb[0].mxu0
      %1002 = vmatprep.mubr.f32.mxu0 0.0
      %1003 = vmatmul.mubr.f32.gmra.mrb[0].mxu0 %v778
      %v1004 = vpop.f32.mrb[0].mxu0
      %v1005 = vadd.f32 %v649, %v1004
      %v1006 = vpop.f32.mrb[0].mxu0
      %1007 = vmatprep.mubr.f32.mxu0 0.0
      %1008 = vmatmul.mubr.f32.gmra.mrb[0].mxu0 %v781
      %v1009 = vpop.f32.mrb[0].mxu0
      %v1010 = vadd.f32 %v654, %v1009
      %v1011 = vpop.f32.mrb[0].mxu0
      %1012 = vmatprep.mubr.f32.mxu0 0.0
      %1013 = vmatmul.mubr.f32.gmra.mrb[0].mxu0 %v784
      %v1014 = vpop.f32.mrb[0].mxu0
      %v1015 = vadd.f32 %v659, %v1014
      %v1016 = vpop.f32.mrb[0].mxu0
      %1017 = vmatprep.mubr.f32.mxu0 0.0
      %1018 = vmatmul.mubr.f32.gmra.mrb[0].mxu0 %v787
      %v1019 = vpop.f32.mrb[0].mxu0
      %v1020 = vadd.f32 %v664, %v1019
      %v1021 = vpop.f32.mrb[0].mxu0
      %1022 = vmatprep.mubr.f32.mxu0 0.0
      %1023 = vmatmul.mubr.f32.gmra.mrb[0].mxu0 %v790
      %v1024 = vpop.f32.mrb[0].mxu0
      %v1025 = vadd.f32 %v669, %v1024
      %v1026 = vpop.f32.mrb[0].mxu0
      %1027 = vmatprep.mubr.f32.mxu0 0.0
      %1028 = vmatmul.mubr.f32.gmra.mrb[0].mxu0 %v793
      %v1029 = vpop.f32.mrb[0].mxu0
      %v1030 = vadd.f32 %v674, %v1029
      %v1031 = vpop.f32.mrb[0].mxu0
      %1032 = vmatprep.mubr.f32.mxu0 0.0
      %1033 = vmatmul.mubr.f32.gmra.mrb[0].mxu0 %v796
      %v1034 = vpop.f32.mrb[0].mxu0
      %v1035 = vadd.f32 %v679, %v1034
      %v1036 = vpop.f32.mrb[0].mxu0
      %1037 = vmatprep.mubr.f32.mxu0 0.0
      %1038 = vmatmul.mubr.f32.gmra.mrb[0].mxu0 %v799
      %v1039 = vpop.f32.mrb[0].mxu0
      %v1040 = vadd.f32 %v684, %v1039
      %v1041 = vpop.f32.mrb[0].mxu0
      %1042 = vmatprep.mubr.f32.mxu0 0.0
      %1043 = vmatmul.mubr.f32.gmra.mrb[0].mxu0 %v802
      %v1044 = vpop.f32.mrb[0].mxu0
      %v1045 = vadd.f32 %v689, %v1044
      %v1046 = vpop.f32.mrb[0].mxu0
      %1047 = vmatprep.mubr.f32.mxu0 0.0
      %1048 = vmatmul.mubr.f32.gmra.mrb[0].mxu0 %v805
      %v1049 = vpop.f32.mrb[0].mxu0
      %v1050 = vadd.f32 %v694, %v1049
      %v1051 = vpop.f32.mrb[0].mxu0
      %1052 = vmatprep.mubr.f32.mxu0 0.0
      %1053 = vmatmul.mubr.f32.gmra.mrb[0].mxu0 %v808
      %v1054 = vpop.f32.mrb[0].mxu0
      %v1055 = vadd.f32 %v699, %v1054
      %v1056 = vpop.f32.mrb[0].mxu0
      %1057 = vdwg.mxu0
      %v1058 = vld [vmem:[%s257 + $0x2] sm:$0xff]
      %v1059 = vld [vmem:[%s257 + $0xa] sm:$0xff]
      %v1060 = vld [vmem:[%s257 + $0x12] sm:$0xff]
      %v1061 = vld [vmem:[%s257 + $0x1a] sm:$0xff]
      %v1062 = vld [vmem:[%s257 + $0x22] sm:$0xff]
      %v1063 = vld [vmem:[%s257 + $0x2a] sm:$0xff]
      %v1064 = vld [vmem:[%s257 + $0x32] sm:$0xff]
      %v1065 = vld [vmem:[%s257 + $0x3a] sm:$0xff]
      %v1066 = vld [vmem:[%s257 + $0x42] sm:$0xff]
      %v1067 = vld [vmem:[%s257 + $0x4a] sm:$0xff]
      %v1068 = vld [vmem:[%s257 + $0x52] sm:$0xff]
      %v1069 = vld [vmem:[%s257 + $0x5a] sm:$0xff]
      %v1070 = vld [vmem:[%s257 + $0x62] sm:$0xff]
      %v1071 = vld [vmem:[%s257 + $0x6a] sm:$0xff]
      %v1072 = vld [vmem:[%s257 + $0x72] sm:$0xff]
      %v1073 = vld [vmem:[%s257 + $0x7a] sm:$0xff]
      %v1074 = vld [vmem:[%s257 + $0x82] sm:$0xff]
      %v1075 = vld [vmem:[%s257 + $0x8a] sm:$0xff]
      %v1076 = vld [vmem:[%s257 + $0x92] sm:$0xff]
      %v1077 = vld [vmem:[%s257 + $0x9a] sm:$0xff]
      %v1078 = vld [vmem:[%s257 + $0xa2] sm:$0xff]
      %v1079 = vld [vmem:[%s257 + $0xaa] sm:$0xff]
      %v1080 = vld [vmem:[%s257 + $0xb2] sm:$0xff]
      %v1081 = vld [vmem:[%s257 + $0xba] sm:$0xff]
      %v1082 = vld [vmem:[%s257 + $0xc2] sm:$0xff]
      %v1083 = vld [vmem:[%s257 + $0xca] sm:$0xff]
      %v1084 = vld [vmem:[%s257 + $0xd2] sm:$0xff]
      %v1085 = vld [vmem:[%s257 + $0xda] sm:$0xff]
      %v1086 = vld [vmem:[%s257 + $0xe2] sm:$0xff]
      %v1087 = vld [vmem:[%s257 + $0xea] sm:$0xff]
      %v1088 = vld [vmem:[%s257 + $0xf2] sm:$0xff]
      %v1089 = vld [vmem:[%s257 + $0xfa] sm:$0xff]
      %v1090 = vld [vmem:[%s257 + $0x102] sm:$0xff]
      %v1091 = vld [vmem:[%s257 + $0x10a] sm:$0xff]
      %v1092 = vld [vmem:[%s257 + $0x112] sm:$0xff]
      %v1093 = vld [vmem:[%s257 + $0x11a] sm:$0xff]
      %s1094 = scalar_lea.vmem %s1, 8
      %v1095 = vld [vmem:[%s1094] sm:$0xf]
      %v1097 = vsel %vm344, %v1058, 0
      %v1100 = vsel %vm344, %v1059, 0
      %v1103 = vsel %vm344, %v1060, 0
      %v1106 = vsel %vm344, %v1061, 0
      %v1109 = vsel %vm344, %v1062, 0
      %v1112 = vsel %vm344, %v1063, 0
      %v1115 = vsel %vm344, %v1064, 0
      %v1118 = vsel %vm344, %v1065, 0
      %v1121 = vsel %vm344, %v1066, 0
      %v1124 = vsel %vm344, %v1067, 0
      %v1127 = vsel %vm344, %v1068, 0
      %v1130 = vsel %vm344, %v1069, 0
      %v1133 = vsel %vm344, %v1070, 0
      %v1136 = vsel %vm344, %v1071, 0
      %v1139 = vsel %vm344, %v1072, 0
      %v1142 = vsel %vm344, %v1073, 0
      %v1145 = vsel %vm344, %v1074, 0
      %v1148 = vsel %vm344, %v1075, 0
      %v1151 = vsel %vm344, %v1076, 0
      %v1154 = vsel %vm344, %v1077, 0
      %v1157 = vsel %vm344, %v1078, 0
      %v1160 = vsel %vm344, %v1079, 0
      %v1163 = vsel %vm344, %v1080, 0
      %v1166 = vsel %vm344, %v1081, 0
      %v1169 = vsel %vm344, %v1082, 0
      %v1172 = vsel %vm344, %v1083, 0
      %v1175 = vsel %vm344, %v1084, 0
      %v1178 = vsel %vm344, %v1085, 0
      %v1181 = vsel %vm344, %v1086, 0
      %v1184 = vsel %vm344, %v1087, 0
      %v1187 = vsel %vm344, %v1088, 0
      %v1190 = vsel %vm344, %v1089, 0
      %v1193 = vsel %vm344, %v1090, 0
      %v1196 = vsel %vm344, %v1091, 0
      %v1199 = vsel %vm344, %v1092, 0
      %v1202 = vsel %vm344, %v1093, 0
      %v1205 = vsel %vm453, %v1095, 0
      %1207 = vmatprep.subr.mxu0 0.0
      %1208 = vmatpush1.msra.mxu0 %v1205
      %1209 = vmatprep.subr.mxu0 0.0
      %1210 = vmatpush1.msra.mxu0 0.0
      %1211 = vmatprep.subr.mxu0 0.0
      %1212 = vmatpush1.msra.mxu0 0.0
      %1213 = vmatprep.subr.mxu0 0.0
      %1214 = vmatpush1.msra.mxu0 0.0
      %1215 = vmatprep.subr.mxu0 0.0
      %1216 = vmatpush1.msra.mxu0 0.0
      %1217 = vmatprep.subr.mxu0 0.0
      %1218 = vmatpush1.msra.mxu0 0.0
      %1219 = vmatprep.subr.mxu0 0.0
      %1220 = vmatpush1.msra.mxu0 0.0
      %1221 = vmatprep.subr.mxu0 0.0
      %1222 = vmatpush1.msra.mxu0 0.0
      %1223 = vmatprep.subr.mxu0 0.0
      %1224 = vmatpush1.msra.mxu0 0.0
      %1225 = vmatprep.subr.mxu0 0.0
      %1226 = vmatpush1.msra.mxu0 0.0
      %1227 = vmatprep.subr.mxu0 0.0
      %1228 = vmatpush1.msra.mxu0 0.0
      %1229 = vmatprep.subr.mxu0 0.0
      %1230 = vmatpush1.msra.mxu0 0.0
      %1231 = vmatprep.subr.mxu0 0.0
      %1232 = vmatpush1.msra.mxu0 0.0
      %1233 = vmatprep.subr.mxu0 0.0
      %1234 = vmatpush1.msra.mxu0 0.0
      %1235 = vmatprep.subr.mxu0 0.0
      %1236 = vmatpush1.msra.mxu0 0.0
      %1237 = vmatprep.subr.mxu0 0.0
      %1238 = vmatpush1.msra.mxu0 0.0
      %1239 = vmatprep.subr.mxu0 0.0
      %1240 = vmatpush1.msra.mxu0 0.0
      %1241 = vmatprep.subr.mxu0 0.0
      %1242 = vmatpush1.msra.mxu0 0.0
      %1243 = vmatprep.subr.mxu0 0.0
      %1244 = vmatpush1.msra.mxu0 0.0
      %1245 = vmatprep.subr.mxu0 0.0
      %1246 = vmatpush1.msra.mxu0 0.0
      %1247 = vmatprep.subr.mxu0 0.0
      %1248 = vmatpush1.msra.mxu0 0.0
      %1249 = vmatprep.subr.mxu0 0.0
      %1250 = vmatpush1.msra.mxu0 0.0
      %1251 = vmatprep.subr.mxu0 0.0
      %1252 = vmatpush1.msra.mxu0 0.0
      %1253 = vmatprep.subr.mxu0 0.0
      %1254 = vmatpush1.msra.mxu0 0.0
      %1255 = vmatprep.subr.mxu0 0.0
      %1256 = vmatpush1.msra.mxu0 0.0
      %1257 = vmatprep.subr.mxu0 0.0
      %1258 = vmatpush1.msra.mxu0 0.0
      %1259 = vmatprep.subr.mxu0 0.0
      %1260 = vmatpush1.msra.mxu0 0.0
      %1261 = vmatprep.subr.mxu0 0.0
      %1262 = vmatpush1.msra.mxu0 0.0
      %1263 = vmatprep.subr.mxu0 0.0
      %1264 = vmatpush1.msra.mxu0 0.0
      %1265 = vmatprep.subr.mxu0 0.0
      %1266 = vmatpush1.msra.mxu0 0.0
      %1267 = vmatprep.subr.mxu0 0.0
      %1268 = vmatpush1.msra.mxu0 0.0
      %1269 = vmatprep.subr.mxu0 0.0
      %1270 = vmatpush1.msra.mxu0 0.0
      %1271 = vmatprep.mubr.f32.mxu0 0.0
      %1272 = vmatmul.mubr.f32.gmra.mrb[0].mxu0 %v1097
      %v1273 = vpop.f32.mrb[0].mxu0
      %v1274 = vadd.f32 0.0, %v1273
      %v1275 = vpop.f32.mrb[0].mxu0
      %1276 = vmatprep.mubr.f32.mxu0 0.0
      %1277 = vmatmul.mubr.f32.gmra.mrb[0].mxu0 %v1100
      %v1278 = vpop.f32.mrb[0].mxu0
      %v1279 = vadd.f32 0.0, %v1278
      %v1280 = vpop.f32.mrb[0].mxu0
      %1281 = vmatprep.mubr.f32.mxu0 0.0
      %1282 = vmatmul.mubr.f32.gmra.mrb[0].mxu0 %v1103
      %v1283 = vpop.f32.mrb[0].mxu0
      %v1284 = vadd.f32 0.0, %v1283
      %v1285 = vpop.f32.mrb[0].mxu0
      %1286 = vmatprep.mubr.f32.mxu0 0.0
      %1287 = vmatmul.mubr.f32.gmra.mrb[0].mxu0 %v1106
      %v1288 = vpop.f32.mrb[0].mxu0
      %v1289 = vadd.f32 0.0, %v1288
      %v1290 = vpop.f32.mrb[0].mxu0
      %1291 = vmatprep.mubr.f32.mxu0 0.0
      %1292 = vmatmul.mubr.f32.gmra.mrb[0].mxu0 %v1109
      %v1293 = vpop.f32.mrb[0].mxu0
      %v1294 = vadd.f32 0.0, %v1293
      %v1295 = vpop.f32.mrb[0].mxu0
      %1296 = vmatprep.mubr.f32.mxu0 0.0
      %1297 = vmatmul.mubr.f32.gmra.mrb[0].mxu0 %v1112
      %v1298 = vpop.f32.mrb[0].mxu0
      %v1299 = vadd.f32 0.0, %v1298
      %v1300 = vpop.f32.mrb[0].mxu0
      %1301 = vmatprep.mubr.f32.mxu0 0.0
      %1302 = vmatmul.mubr.f32.gmra.mrb[0].mxu0 %v1115
      %v1303 = vpop.f32.mrb[0].mxu0
      %v1304 = vadd.f32 0.0, %v1303
      %v1305 = vpop.f32.mrb[0].mxu0
      %1306 = vmatprep.mubr.f32.mxu0 0.0
      %1307 = vmatmul.mubr.f32.gmra.mrb[0].mxu0 %v1118
      %v1308 = vpop.f32.mrb[0].mxu0
      %v1309 = vadd.f32 0.0, %v1308
      %v1310 = vpop.f32.mrb[0].mxu0
      %1311 = vmatprep.mubr.f32.mxu0 0.0
      %1312 = vmatmul.mubr.f32.gmra.mrb[0].mxu0 %v1121
      %v1313 = vpop.f32.mrb[0].mxu0
      %v1314 = vadd.f32 0.0, %v1313
      %v1315 = vpop.f32.mrb[0].mxu0
      %1316 = vmatprep.mubr.f32.mxu0 0.0
      %1317 = vmatmul.mubr.f32.gmra.mrb[0].mxu0 %v1124
      %v1318 = vpop.f32.mrb[0].mxu0
      %v1319 = vadd.f32 0.0, %v1318
      %v1320 = vpop.f32.mrb[0].mxu0
      %1321 = vmatprep.mubr.f32.mxu0 0.0
      %1322 = vmatmul.mubr.f32.gmra.mrb[0].mxu0 %v1127
      %v1323 = vpop.f32.mrb[0].mxu0
      %v1324 = vadd.f32 0.0, %v1323
      %v1325 = vpop.f32.mrb[0].mxu0
      %1326 = vmatprep.mubr.f32.mxu0 0.0
      %1327 = vmatmul.mubr.f32.gmra.mrb[0].mxu0 %v1130
      %v1328 = vpop.f32.mrb[0].mxu0
      %v1329 = vadd.f32 0.0, %v1328
      %v1330 = vpop.f32.mrb[0].mxu0
      %1331 = vmatprep.mubr.f32.mxu0 0.0
      %1332 = vmatmul.mubr.f32.gmra.mrb[0].mxu0 %v1133
      %v1333 = vpop.f32.mrb[0].mxu0
      %v1334 = vadd.f32 0.0, %v1333
      %v1335 = vpop.f32.mrb[0].mxu0
      %1336 = vmatprep.mubr.f32.mxu0 0.0
      %1337 = vmatmul.mubr.f32.gmra.mrb[0].mxu0 %v1136
      %v1338 = vpop.f32.mrb[0].mxu0
      %v1339 = vadd.f32 0.0, %v1338
      %v1340 = vpop.f32.mrb[0].mxu0
      %1341 = vmatprep.mubr.f32.mxu0 0.0
      %1342 = vmatmul.mubr.f32.gmra.mrb[0].mxu0 %v1139
      %v1343 = vpop.f32.mrb[0].mxu0
      %v1344 = vadd.f32 0.0, %v1343
      %v1345 = vpop.f32.mrb[0].mxu0
      %1346 = vmatprep.mubr.f32.mxu0 0.0
      %1347 = vmatmul.mubr.f32.gmra.mrb[0].mxu0 %v1142
      %v1348 = vpop.f32.mrb[0].mxu0
      %v1349 = vadd.f32 0.0, %v1348
      %v1350 = vpop.f32.mrb[0].mxu0
      %1351 = vmatprep.mubr.f32.mxu0 0.0
      %1352 = vmatmul.mubr.f32.gmra.mrb[0].mxu0 %v1145
      %v1353 = vpop.f32.mrb[0].mxu0
      %v1354 = vadd.f32 0.0, %v1353
      %v1355 = vpop.f32.mrb[0].mxu0
      %1356 = vmatprep.mubr.f32.mxu0 0.0
      %1357 = vmatmul.mubr.f32.gmra.mrb[0].mxu0 %v1148
      %v1358 = vpop.f32.mrb[0].mxu0
      %v1359 = vadd.f32 0.0, %v1358
      %v1360 = vpop.f32.mrb[0].mxu0
      %1361 = vmatprep.mubr.f32.mxu0 0.0
      %1362 = vmatmul.mubr.f32.gmra.mrb[0].mxu0 %v1151
      %v1363 = vpop.f32.mrb[0].mxu0
      %v1364 = vadd.f32 0.0, %v1363
      %v1365 = vpop.f32.mrb[0].mxu0
      %1366 = vmatprep.mubr.f32.mxu0 0.0
      %1367 = vmatmul.mubr.f32.gmra.mrb[0].mxu0 %v1154
      %v1368 = vpop.f32.mrb[0].mxu0
      %v1369 = vadd.f32 0.0, %v1368
      %v1370 = vpop.f32.mrb[0].mxu0
      %1371 = vmatprep.mubr.f32.mxu0 0.0
      %1372 = vmatmul.mubr.f32.gmra.mrb[0].mxu0 %v1157
      %v1373 = vpop.f32.mrb[0].mxu0
      %v1374 = vadd.f32 0.0, %v1373
      %v1375 = vpop.f32.mrb[0].mxu0
      %1376 = vmatprep.mubr.f32.mxu0 0.0
      %1377 = vmatmul.mubr.f32.gmra.mrb[0].mxu0 %v1160
      %v1378 = vpop.f32.mrb[0].mxu0
      %v1379 = vadd.f32 0.0, %v1378
      %v1380 = vpop.f32.mrb[0].mxu0
      %1381 = vmatprep.mubr.f32.mxu0 0.0
      %1382 = vmatmul.mubr.f32.gmra.mrb[0].mxu0 %v1163
      %v1383 = vpop.f32.mrb[0].mxu0
      %v1384 = vadd.f32 0.0, %v1383
      %v1385 = vpop.f32.mrb[0].mxu0
      %1386 = vmatprep.mubr.f32.mxu0 0.0
      %1387 = vmatmul.mubr.f32.gmra.mrb[0].mxu0 %v1166
      %v1388 = vpop.f32.mrb[0].mxu0
      %v1389 = vadd.f32 0.0, %v1388
      %v1390 = vpop.f32.mrb[0].mxu0
      %1391 = vmatprep.mubr.f32.mxu0 0.0
      %1392 = vmatmul.mubr.f32.gmra.mrb[0].mxu0 %v1169
      %v1393 = vpop.f32.mrb[0].mxu0
      %v1394 = vadd.f32 0.0, %v1393
      %v1395 = vpop.f32.mrb[0].mxu0
      %1396 = vmatprep.mubr.f32.mxu0 0.0
      %1397 = vmatmul.mubr.f32.gmra.mrb[0].mxu0 %v1172
      %v1398 = vpop.f32.mrb[0].mxu0
      %v1399 = vadd.f32 0.0, %v1398
      %v1400 = vpop.f32.mrb[0].mxu0
      %1401 = vmatprep.mubr.f32.mxu0 0.0
      %1402 = vmatmul.mubr.f32.gmra.mrb[0].mxu0 %v1175
      %v1403 = vpop.f32.mrb[0].mxu0
      %v1404 = vadd.f32 0.0, %v1403
      %v1405 = vpop.f32.mrb[0].mxu0
      %1406 = vmatprep.mubr.f32.mxu0 0.0
      %1407 = vmatmul.mubr.f32.gmra.mrb[0].mxu0 %v1178
      %v1408 = vpop.f32.mrb[0].mxu0
      %v1409 = vadd.f32 0.0, %v1408
      %v1410 = vpop.f32.mrb[0].mxu0
      %1411 = vmatprep.mubr.f32.mxu0 0.0
      %1412 = vmatmul.mubr.f32.gmra.mrb[0].mxu0 %v1181
      %v1413 = vpop.f32.mrb[0].mxu0
      %v1414 = vadd.f32 0.0, %v1413
      %v1415 = vpop.f32.mrb[0].mxu0
      %1416 = vmatprep.mubr.f32.mxu0 0.0
      %1417 = vmatmul.mubr.f32.gmra.mrb[0].mxu0 %v1184
      %v1418 = vpop.f32.mrb[0].mxu0
      %v1419 = vadd.f32 0.0, %v1418
      %v1420 = vpop.f32.mrb[0].mxu0
      %1421 = vmatprep.mubr.f32.mxu0 0.0
      %1422 = vmatmul.mubr.f32.gmra.mrb[0].mxu0 %v1187
      %v1423 = vpop.f32.mrb[0].mxu0
      %v1424 = vadd.f32 0.0, %v1423
      %v1425 = vpop.f32.mrb[0].mxu0
      %1426 = vmatprep.mubr.f32.mxu0 0.0
      %1427 = vmatmul.mubr.f32.gmra.mrb[0].mxu0 %v1190
      %v1428 = vpop.f32.mrb[0].mxu0
      %v1429 = vadd.f32 0.0, %v1428
      %v1430 = vpop.f32.mrb[0].mxu0
      %1431 = vmatprep.mubr.f32.mxu0 0.0
      %1432 = vmatmul.mubr.f32.gmra.mrb[0].mxu0 %v1193
      %v1433 = vpop.f32.mrb[0].mxu0
      %v1434 = vadd.f32 0.0, %v1433
      %v1435 = vpop.f32.mrb[0].mxu0
      %1436 = vmatprep.mubr.f32.mxu0 0.0
      %1437 = vmatmul.mubr.f32.gmra.mrb[0].mxu0 %v1196
      %v1438 = vpop.f32.mrb[0].mxu0
      %v1439 = vadd.f32 0.0, %v1438
      %v1440 = vpop.f32.mrb[0].mxu0
      %1441 = vmatprep.mubr.f32.mxu0 0.0
      %1442 = vmatmul.mubr.f32.gmra.mrb[0].mxu0 %v1199
      %v1443 = vpop.f32.mrb[0].mxu0
      %v1444 = vadd.f32 0.0, %v1443
      %v1445 = vpop.f32.mrb[0].mxu0
      %1446 = vmatprep.mubr.f32.mxu0 0.0
      %1447 = vmatmul.mubr.f32.gmra.mrb[0].mxu0 %v1202
      %v1448 = vpop.f32.mrb[0].mxu0
      %v1449 = vadd.f32 0.0, %v1448
      %v1450 = vpop.f32.mrb[0].mxu0
      %1451 = vdwg.mxu0
      %v1452 = vadd.f32 %v880, %v1274
      %v1453 = vadd.f32 %v885, %v1279
      %v1454 = vadd.f32 %v890, %v1284
      %v1455 = vadd.f32 %v895, %v1289
      %v1456 = vadd.f32 %v900, %v1294
      %v1457 = vadd.f32 %v905, %v1299
      %v1458 = vadd.f32 %v910, %v1304
      %v1459 = vadd.f32 %v915, %v1309
      %v1460 = vadd.f32 %v920, %v1314
      %v1461 = vadd.f32 %v925, %v1319
      %v1462 = vadd.f32 %v930, %v1324
      %v1463 = vadd.f32 %v935, %v1329
      %v1464 = vadd.f32 %v940, %v1334
      %v1465 = vadd.f32 %v945, %v1339
      %v1466 = vadd.f32 %v950, %v1344
      %v1467 = vadd.f32 %v955, %v1349
      %v1468 = vadd.f32 %v960, %v1354
      %v1469 = vadd.f32 %v965, %v1359
      %v1470 = vadd.f32 %v970, %v1364
      %v1471 = vadd.f32 %v975, %v1369
      %v1472 = vadd.f32 %v980, %v1374
      %v1473 = vadd.f32 %v985, %v1379
      %v1474 = vadd.f32 %v990, %v1384
      %v1475 = vadd.f32 %v995, %v1389
      %v1476 = vadd.f32 %v1000, %v1394
      %v1477 = vadd.f32 %v1005, %v1399
      %v1478 = vadd.f32 %v1010, %v1404
      %v1479 = vadd.f32 %v1015, %v1409
      %v1480 = vadd.f32 %v1020, %v1414
      %v1481 = vadd.f32 %v1025, %v1419
      %v1482 = vadd.f32 %v1030, %v1424
      %v1483 = vadd.f32 %v1035, %v1429
      %v1484 = vadd.f32 %v1040, %v1434
      %v1485 = vadd.f32 %v1045, %v1439
      %v1486 = vadd.f32 %v1050, %v1444
      %v1487 = vadd.f32 %v1055, %v1449
      %v1488 = vld [vmem:[%s257 + $0x12] sm:$0xff]
      %v1489 = vld [vmem:[%s257 + $0x1a] sm:$0xff]
      %v1490 = vld [vmem:[%s257 + $0x22] sm:$0xff]
      %v1491 = vld [vmem:[%s257 + $0x2a] sm:$0xff]
      %v1492 = vld [vmem:[%s257 + $0x32] sm:$0xff]
      %v1493 = vld [vmem:[%s257 + $0x3a] sm:$0xff]
      %v1494 = vld [vmem:[%s257 + $0x42] sm:$0xff]
      %v1495 = vld [vmem:[%s257 + $0x4a] sm:$0xff]
      %v1496 = vld [vmem:[%s257 + $0x52] sm:$0xff]
      %v1497 = vld [vmem:[%s257 + $0x5a] sm:$0xff]
      %v1498 = vld [vmem:[%s257 + $0x62] sm:$0xff]
      %v1499 = vld [vmem:[%s257 + $0x6a] sm:$0xff]
      %v1500 = vld [vmem:[%s257 + $0x72] sm:$0xff]
      %v1501 = vld [vmem:[%s257 + $0x7a] sm:$0xff]
      %v1502 = vld [vmem:[%s257 + $0x82] sm:$0xff]
      %v1503 = vld [vmem:[%s257 + $0x8a] sm:$0xff]
      %v1504 = vld [vmem:[%s257 + $0x92] sm:$0xff]
      %v1505 = vld [vmem:[%s257 + $0x9a] sm:$0xff]
      %v1506 = vld [vmem:[%s257 + $0xa2] sm:$0xff]
      %v1507 = vld [vmem:[%s257 + $0xaa] sm:$0xff]
      %v1508 = vld [vmem:[%s257 + $0xb2] sm:$0xff]
      %v1509 = vld [vmem:[%s257 + $0xba] sm:$0xff]
      %v1510 = vld [vmem:[%s257 + $0xc2] sm:$0xff]
      %v1511 = vld [vmem:[%s257 + $0xca] sm:$0xff]
      %v1512 = vld [vmem:[%s257 + $0xd2] sm:$0xff]
      %v1513 = vld [vmem:[%s257 + $0xda] sm:$0xff]
      %v1514 = vld [vmem:[%s257 + $0xe2] sm:$0xff]
      %v1515 = vld [vmem:[%s257 + $0xea] sm:$0xff]
      %v1516 = vld [vmem:[%s257 + $0xf2] sm:$0xff]
      %v1517 = vld [vmem:[%s257 + $0xfa] sm:$0xff]
      %v1518 = vld [vmem:[%s257 + $0x102] sm:$0xff]
      %v1519 = vld [vmem:[%s257 + $0x10a] sm:$0xff]
      %v1520 = vld [vmem:[%s257 + $0x112] sm:$0xff]
      %v1521 = vld [vmem:[%s257 + $0x11a] sm:$0xff]
      %v1522 = vld [vmem:[%s257 + $0x122] sm:$0xff]
      %v1523 = vld [vmem:[%s257 + $0x12a] sm:$0xff]
      %s1524 = scalar_lea.vmem %s1, 12
      %v1525 = vld [vmem:[%s1524] sm:$0xf]
      %v1527 = vsel %vm344, %v1488, 0
      %v1530 = vsel %vm344, %v1489, 0
      %v1533 = vsel %vm344, %v1490, 0
      %v1536 = vsel %vm344, %v1491, 0
      %v1539 = vsel %vm344, %v1492, 0
      %v1542 = vsel %vm344, %v1493, 0
      %v1545 = vsel %vm344, %v1494, 0
      %v1548 = vsel %vm344, %v1495, 0
      %v1551 = vsel %vm344, %v1496, 0
      %v1554 = vsel %vm344, %v1497, 0
      %v1557 = vsel %vm344, %v1498, 0
      %v1560 = vsel %vm344, %v1499, 0
      %v1563 = vsel %vm344, %v1500, 0
      %v1566 = vsel %vm344, %v1501, 0
      %v1569 = vsel %vm344, %v1502, 0
      %v1572 = vsel %vm344, %v1503, 0
      %v1575 = vsel %vm344, %v1504, 0
      %v1578 = vsel %vm344, %v1505, 0
      %v1581 = vsel %vm344, %v1506, 0
      %v1584 = vsel %vm344, %v1507, 0
      %v1587 = vsel %vm344, %v1508, 0
      %v1590 = vsel %vm344, %v1509, 0
      %v1593 = vsel %vm344, %v1510, 0
      %v1596 = vsel %vm344, %v1511, 0
      %v1599 = vsel %vm344, %v1512, 0
      %v1602 = vsel %vm344, %v1513, 0
      %v1605 = vsel %vm344, %v1514, 0
      %v1608 = vsel %vm344, %v1515, 0
      %v1611 = vsel %vm344, %v1516, 0
      %v1614 = vsel %vm344, %v1517, 0
      %v1617 = vsel %vm344, %v1518, 0
      %v1620 = vsel %vm344, %v1519, 0
      %v1623 = vsel %vm344, %v1520, 0
      %v1626 = vsel %vm344, %v1521, 0
      %v1629 = vsel %vm344, %v1522, 0
      %v1632 = vsel %vm344, %v1523, 0
      %v1635 = vsel %vm453, %v1525, 0
      %1637 = vmatprep.subr.mxu0 0.0
      %1638 = vmatpush1.msra.mxu0 %v1635
      %1639 = vmatprep.subr.mxu0 0.0
      %1640 = vmatpush1.msra.mxu0 0.0
      %1641 = vmatprep.subr.mxu0 0.0
      %1642 = vmatpush1.msra.mxu0 0.0
      %1643 = vmatprep.subr.mxu0 0.0
      %1644 = vmatpush1.msra.mxu0 0.0
      %1645 = vmatprep.subr.mxu0 0.0
      %1646 = vmatpush1.msra.mxu0 0.0
      %1647 = vmatprep.subr.mxu0 0.0
      %1648 = vmatpush1.msra.mxu0 0.0
      %1649 = vmatprep.subr.mxu0 0.0
      %1650 = vmatpush1.msra.mxu0 0.0
      %1651 = vmatprep.subr.mxu0 0.0
      %1652 = vmatpush1.msra.mxu0 0.0
      %1653 = vmatprep.subr.mxu0 0.0
      %1654 = vmatpush1.msra.mxu0 0.0
      %1655 = vmatprep.subr.mxu0 0.0
      %1656 = vmatpush1.msra.mxu0 0.0
      %1657 = vmatprep.subr.mxu0 0.0
      %1658 = vmatpush1.msra.mxu0 0.0
      %1659 = vmatprep.subr.mxu0 0.0
      %1660 = vmatpush1.msra.mxu0 0.0
      %1661 = vmatprep.subr.mxu0 0.0
      %1662 = vmatpush1.msra.mxu0 0.0
      %1663 = vmatprep.subr.mxu0 0.0
      %1664 = vmatpush1.msra.mxu0 0.0
      %1665 = vmatprep.subr.mxu0 0.0
      %1666 = vmatpush1.msra.mxu0 0.0
      %1667 = vmatprep.subr.mxu0 0.0
      %1668 = vmatpush1.msra.mxu0 0.0
      %1669 = vmatprep.subr.mxu0 0.0
      %1670 = vmatpush1.msra.mxu0 0.0
      %1671 = vmatprep.subr.mxu0 0.0
      %1672 = vmatpush1.msra.mxu0 0.0
      %1673 = vmatprep.subr.mxu0 0.0
      %1674 = vmatpush1.msra.mxu0 0.0
      %1675 = vmatprep.subr.mxu0 0.0
      %1676 = vmatpush1.msra.mxu0 0.0
      %1677 = vmatprep.subr.mxu0 0.0
      %1678 = vmatpush1.msra.mxu0 0.0
      %1679 = vmatprep.subr.mxu0 0.0
      %1680 = vmatpush1.msra.mxu0 0.0
      %1681 = vmatprep.subr.mxu0 0.0
      %1682 = vmatpush1.msra.mxu0 0.0
      %1683 = vmatprep.subr.mxu0 0.0
      %1684 = vmatpush1.msra.mxu0 0.0
      %1685 = vmatprep.subr.mxu0 0.0
      %1686 = vmatpush1.msra.mxu0 0.0
      %1687 = vmatprep.subr.mxu0 0.0
      %1688 = vmatpush1.msra.mxu0 0.0
      %1689 = vmatprep.subr.mxu0 0.0
      %1690 = vmatpush1.msra.mxu0 0.0
      %1691 = vmatprep.subr.mxu0 0.0
      %1692 = vmatpush1.msra.mxu0 0.0
      %1693 = vmatprep.subr.mxu0 0.0
      %1694 = vmatpush1.msra.mxu0 0.0
      %1695 = vmatprep.subr.mxu0 0.0
      %1696 = vmatpush1.msra.mxu0 0.0
      %1697 = vmatprep.subr.mxu0 0.0
      %1698 = vmatpush1.msra.mxu0 0.0
      %1699 = vmatprep.subr.mxu0 0.0
      %1700 = vmatpush1.msra.mxu0 0.0
      %1701 = vmatprep.mubr.f32.mxu0 0.0
      %1702 = vmatmul.mubr.f32.gmra.mrb[0].mxu0 %v1527
      %v1703 = vpop.f32.mrb[0].mxu0
      %v1704 = vadd.f32 0.0, %v1703
      %v1705 = vpop.f32.mrb[0].mxu0
      %1706 = vmatprep.mubr.f32.mxu0 0.0
      %1707 = vmatmul.mubr.f32.gmra.mrb[0].mxu0 %v1530
      %v1708 = vpop.f32.mrb[0].mxu0
      %v1709 = vadd.f32 0.0, %v1708
      %v1710 = vpop.f32.mrb[0].mxu0
      %1711 = vmatprep.mubr.f32.mxu0 0.0
      %1712 = vmatmul.mubr.f32.gmra.mrb[0].mxu0 %v1533
      %v1713 = vpop.f32.mrb[0].mxu0
      %v1714 = vadd.f32 0.0, %v1713
      %v1715 = vpop.f32.mrb[0].mxu0
      %1716 = vmatprep.mubr.f32.mxu0 0.0
      %1717 = vmatmul.mubr.f32.gmra.mrb[0].mxu0 %v1536
      %v1718 = vpop.f32.mrb[0].mxu0
      %v1719 = vadd.f32 0.0, %v1718
      %v1720 = vpop.f32.mrb[0].mxu0
      %1721 = vmatprep.mubr.f32.mxu0 0.0
      %1722 = vmatmul.mubr.f32.gmra.mrb[0].mxu0 %v1539
      %v1723 = vpop.f32.mrb[0].mxu0
      %v1724 = vadd.f32 0.0, %v1723
      %v1725 = vpop.f32.mrb[0].mxu0
      %1726 = vmatprep.mubr.f32.mxu0 0.0
      %1727 = vmatmul.mubr.f32.gmra.mrb[0].mxu0 %v1542
      %v1728 = vpop.f32.mrb[0].mxu0
      %v1729 = vadd.f32 0.0, %v1728
      %v1730 = vpop.f32.mrb[0].mxu0
      %1731 = vmatprep.mubr.f32.mxu0 0.0
      %1732 = vmatmul.mubr.f32.gmra.mrb[0].mxu0 %v1545
      %v1733 = vpop.f32.mrb[0].mxu0
      %v1734 = vadd.f32 0.0, %v1733
      %v1735 = vpop.f32.mrb[0].mxu0
      %1736 = vmatprep.mubr.f32.mxu0 0.0
      %1737 = vmatmul.mubr.f32.gmra.mrb[0].mxu0 %v1548
      %v1738 = vpop.f32.mrb[0].mxu0
      %v1739 = vadd.f32 0.0, %v1738
      %v1740 = vpop.f32.mrb[0].mxu0
      %1741 = vmatprep.mubr.f32.mxu0 0.0
      %1742 = vmatmul.mubr.f32.gmra.mrb[0].mxu0 %v1551
      %v1743 = vpop.f32.mrb[0].mxu0
      %v1744 = vadd.f32 0.0, %v1743
      %v1745 = vpop.f32.mrb[0].mxu0
      %1746 = vmatprep.mubr.f32.mxu0 0.0
      %1747 = vmatmul.mubr.f32.gmra.mrb[0].mxu0 %v1554
      %v1748 = vpop.f32.mrb[0].mxu0
      %v1749 = vadd.f32 0.0, %v1748
      %v1750 = vpop.f32.mrb[0].mxu0
      %1751 = vmatprep.mubr.f32.mxu0 0.0
      %1752 = vmatmul.mubr.f32.gmra.mrb[0].mxu0 %v1557
      %v1753 = vpop.f32.mrb[0].mxu0
      %v1754 = vadd.f32 0.0, %v1753
      %v1755 = vpop.f32.mrb[0].mxu0
      %1756 = vmatprep.mubr.f32.mxu0 0.0
      %1757 = vmatmul.mubr.f32.gmra.mrb[0].mxu0 %v1560
      %v1758 = vpop.f32.mrb[0].mxu0
      %v1759 = vadd.f32 0.0, %v1758
      %v1760 = vpop.f32.mrb[0].mxu0
      %1761 = vmatprep.mubr.f32.mxu0 0.0
      %1762 = vmatmul.mubr.f32.gmra.mrb[0].mxu0 %v1563
      %v1763 = vpop.f32.mrb[0].mxu0
      %v1764 = vadd.f32 0.0, %v1763
      %v1765 = vpop.f32.mrb[0].mxu0
      %1766 = vmatprep.mubr.f32.mxu0 0.0
      %1767 = vmatmul.mubr.f32.gmra.mrb[0].mxu0 %v1566
      %v1768 = vpop.f32.mrb[0].mxu0
      %v1769 = vadd.f32 0.0, %v1768
      %v1770 = vpop.f32.mrb[0].mxu0
      %1771 = vmatprep.mubr.f32.mxu0 0.0
      %1772 = vmatmul.mubr.f32.gmra.mrb[0].mxu0 %v1569
      %v1773 = vpop.f32.mrb[0].mxu0
      %v1774 = vadd.f32 0.0, %v1773
      %v1775 = vpop.f32.mrb[0].mxu0
      %1776 = vmatprep.mubr.f32.mxu0 0.0
      %1777 = vmatmul.mubr.f32.gmra.mrb[0].mxu0 %v1572
      %v1778 = vpop.f32.mrb[0].mxu0
      %v1779 = vadd.f32 0.0, %v1778
      %v1780 = vpop.f32.mrb[0].mxu0
      %1781 = vmatprep.mubr.f32.mxu0 0.0
      %1782 = vmatmul.mubr.f32.gmra.mrb[0].mxu0 %v1575
      %v1783 = vpop.f32.mrb[0].mxu0
      %v1784 = vadd.f32 0.0, %v1783
      %v1785 = vpop.f32.mrb[0].mxu0
      %1786 = vmatprep.mubr.f32.mxu0 0.0
      %1787 = vmatmul.mubr.f32.gmra.mrb[0].mxu0 %v1578
      %v1788 = vpop.f32.mrb[0].mxu0
      %v1789 = vadd.f32 0.0, %v1788
      %v1790 = vpop.f32.mrb[0].mxu0
      %1791 = vmatprep.mubr.f32.mxu0 0.0
      %1792 = vmatmul.mubr.f32.gmra.mrb[0].mxu0 %v1581
      %v1793 = vpop.f32.mrb[0].mxu0
      %v1794 = vadd.f32 0.0, %v1793
      %v1795 = vpop.f32.mrb[0].mxu0
      %1796 = vmatprep.mubr.f32.mxu0 0.0
      %1797 = vmatmul.mubr.f32.gmra.mrb[0].mxu0 %v1584
      %v1798 = vpop.f32.mrb[0].mxu0
      %v1799 = vadd.f32 0.0, %v1798
      %v1800 = vpop.f32.mrb[0].mxu0
      %1801 = vmatprep.mubr.f32.mxu0 0.0
      %1802 = vmatmul.mubr.f32.gmra.mrb[0].mxu0 %v1587
      %v1803 = vpop.f32.mrb[0].mxu0
      %v1804 = vadd.f32 0.0, %v1803
      %v1805 = vpop.f32.mrb[0].mxu0
      %1806 = vmatprep.mubr.f32.mxu0 0.0
      %1807 = vmatmul.mubr.f32.gmra.mrb[0].mxu0 %v1590
      %v1808 = vpop.f32.mrb[0].mxu0
      %v1809 = vadd.f32 0.0, %v1808
      %v1810 = vpop.f32.mrb[0].mxu0
      %1811 = vmatprep.mubr.f32.mxu0 0.0
      %1812 = vmatmul.mubr.f32.gmra.mrb[0].mxu0 %v1593
      %v1813 = vpop.f32.mrb[0].mxu0
      %v1814 = vadd.f32 0.0, %v1813
      %v1815 = vpop.f32.mrb[0].mxu0
      %1816 = vmatprep.mubr.f32.mxu0 0.0
      %1817 = vmatmul.mubr.f32.gmra.mrb[0].mxu0 %v1596
      %v1818 = vpop.f32.mrb[0].mxu0
      %v1819 = vadd.f32 0.0, %v1818
      %v1820 = vpop.f32.mrb[0].mxu0
      %1821 = vmatprep.mubr.f32.mxu0 0.0
      %1822 = vmatmul.mubr.f32.gmra.mrb[0].mxu0 %v1599
      %v1823 = vpop.f32.mrb[0].mxu0
      %v1824 = vadd.f32 0.0, %v1823
      %v1825 = vpop.f32.mrb[0].mxu0
      %1826 = vmatprep.mubr.f32.mxu0 0.0
      %1827 = vmatmul.mubr.f32.gmra.mrb[0].mxu0 %v1602
      %v1828 = vpop.f32.mrb[0].mxu0
      %v1829 = vadd.f32 0.0, %v1828
      %v1830 = vpop.f32.mrb[0].mxu0
      %1831 = vmatprep.mubr.f32.mxu0 0.0
      %1832 = vmatmul.mubr.f32.gmra.mrb[0].mxu0 %v1605
      %v1833 = vpop.f32.mrb[0].mxu0
      %v1834 = vadd.f32 0.0, %v1833
      %v1835 = vpop.f32.mrb[0].mxu0
      %1836 = vmatprep.mubr.f32.mxu0 0.0
      %1837 = vmatmul.mubr.f32.gmra.mrb[0].mxu0 %v1608
      %v1838 = vpop.f32.mrb[0].mxu0
      %v1839 = vadd.f32 0.0, %v1838
      %v1840 = vpop.f32.mrb[0].mxu0
      %1841 = vmatprep.mubr.f32.mxu0 0.0
      %1842 = vmatmul.mubr.f32.gmra.mrb[0].mxu0 %v1611
      %v1843 = vpop.f32.mrb[0].mxu0
      %v1844 = vadd.f32 0.0, %v1843
      %v1845 = vpop.f32.mrb[0].mxu0
      %1846 = vmatprep.mubr.f32.mxu0 0.0
      %1847 = vmatmul.mubr.f32.gmra.mrb[0].mxu0 %v1614
      %v1848 = vpop.f32.mrb[0].mxu0
      %v1849 = vadd.f32 0.0, %v1848
      %v1850 = vpop.f32.mrb[0].mxu0
      %1851 = vmatprep.mubr.f32.mxu0 0.0
      %1852 = vmatmul.mubr.f32.gmra.mrb[0].mxu0 %v1617
      %v1853 = vpop.f32.mrb[0].mxu0
      %v1854 = vadd.f32 0.0, %v1853
      %v1855 = vpop.f32.mrb[0].mxu0
      %1856 = vmatprep.mubr.f32.mxu0 0.0
      %1857 = vmatmul.mubr.f32.gmra.mrb[0].mxu0 %v1620
      %v1858 = vpop.f32.mrb[0].mxu0
      %v1859 = vadd.f32 0.0, %v1858
      %v1860 = vpop.f32.mrb[0].mxu0
      %1861 = vmatprep.mubr.f32.mxu0 0.0
      %1862 = vmatmul.mubr.f32.gmra.mrb[0].mxu0 %v1623
      %v1863 = vpop.f32.mrb[0].mxu0
      %v1864 = vadd.f32 0.0, %v1863
      %v1865 = vpop.f32.mrb[0].mxu0
      %1866 = vmatprep.mubr.f32.mxu0 0.0
      %1867 = vmatmul.mubr.f32.gmra.mrb[0].mxu0 %v1626
      %v1868 = vpop.f32.mrb[0].mxu0
      %v1869 = vadd.f32 0.0, %v1868
      %v1870 = vpop.f32.mrb[0].mxu0
      %1871 = vmatprep.mubr.f32.mxu0 0.0
      %1872 = vmatmul.mubr.f32.gmra.mrb[0].mxu0 %v1629
      %v1873 = vpop.f32.mrb[0].mxu0
      %v1874 = vadd.f32 0.0, %v1873
      %v1875 = vpop.f32.mrb[0].mxu0
      %1876 = vmatprep.mubr.f32.mxu0 0.0
      %1877 = vmatmul.mubr.f32.gmra.mrb[0].mxu0 %v1632
      %v1878 = vpop.f32.mrb[0].mxu0
      %v1879 = vadd.f32 0.0, %v1878
      %v1880 = vpop.f32.mrb[0].mxu0
      %1881 = vdwg.mxu0
      %v1882 = vadd.f32 %v1452, %v1704
      %v1883 = vadd.f32 %v1453, %v1709
      %v1884 = vadd.f32 %v1454, %v1714
      %v1885 = vadd.f32 %v1455, %v1719
      %v1886 = vadd.f32 %v1456, %v1724
      %v1887 = vadd.f32 %v1457, %v1729
      %v1888 = vadd.f32 %v1458, %v1734
      %v1889 = vadd.f32 %v1459, %v1739
      %v1890 = vadd.f32 %v1460, %v1744
      %v1891 = vadd.f32 %v1461, %v1749
      %v1892 = vadd.f32 %v1462, %v1754
      %v1893 = vadd.f32 %v1463, %v1759
      %v1894 = vadd.f32 %v1464, %v1764
      %v1895 = vadd.f32 %v1465, %v1769
      %v1896 = vadd.f32 %v1466, %v1774
      %v1897 = vadd.f32 %v1467, %v1779
      %v1898 = vadd.f32 %v1468, %v1784
      %v1899 = vadd.f32 %v1469, %v1789
      %v1900 = vadd.f32 %v1470, %v1794
      %v1901 = vadd.f32 %v1471, %v1799
      %v1902 = vadd.f32 %v1472, %v1804
      %v1903 = vadd.f32 %v1473, %v1809
      %v1904 = vadd.f32 %v1474, %v1814
      %v1905 = vadd.f32 %v1475, %v1819
      %v1906 = vadd.f32 %v1476, %v1824
      %v1907 = vadd.f32 %v1477, %v1829
      %v1908 = vadd.f32 %v1478, %v1834
      %v1909 = vadd.f32 %v1479, %v1839
      %v1910 = vadd.f32 %v1480, %v1844
      %v1911 = vadd.f32 %v1481, %v1849
      %v1912 = vadd.f32 %v1482, %v1854
      %v1913 = vadd.f32 %v1483, %v1859
      %v1914 = vadd.f32 %v1484, %v1864
      %v1915 = vadd.f32 %v1485, %v1869
      %v1916 = vadd.f32 %v1486, %v1874
      %v1917 = vadd.f32 %v1487, %v1879
      %v1918 = vld [vmem:[%s257 + $0x13] sm:$0xff]
      %v1919 = vld [vmem:[%s257 + $0x1b] sm:$0xff]
      %v1920 = vld [vmem:[%s257 + $0x23] sm:$0xff]
      %v1921 = vld [vmem:[%s257 + $0x2b] sm:$0xff]
      %v1922 = vld [vmem:[%s257 + $0x33] sm:$0xff]
      %v1923 = vld [vmem:[%s257 + $0x3b] sm:$0xff]
      %v1924 = vld [vmem:[%s257 + $0x43] sm:$0xff]
      %v1925 = vld [vmem:[%s257 + $0x4b] sm:$0xff]
      %v1926 = vld [vmem:[%s257 + $0x53] sm:$0xff]
      %v1927 = vld [vmem:[%s257 + $0x5b] sm:$0xff]
      %v1928 = vld [vmem:[%s257 + $0x63] sm:$0xff]
      %v1929 = vld [vmem:[%s257 + $0x6b] sm:$0xff]
      %v1930 = vld [vmem:[%s257 + $0x73] sm:$0xff]
      %v1931 = vld [vmem:[%s257 + $0x7b] sm:$0xff]
      %v1932 = vld [vmem:[%s257 + $0x83] sm:$0xff]
      %v1933 = vld [vmem:[%s257 + $0x8b] sm:$0xff]
      %v1934 = vld [vmem:[%s257 + $0x93] sm:$0xff]
      %v1935 = vld [vmem:[%s257 + $0x9b] sm:$0xff]
      %v1936 = vld [vmem:[%s257 + $0xa3] sm:$0xff]
      %v1937 = vld [vmem:[%s257 + $0xab] sm:$0xff]
      %v1938 = vld [vmem:[%s257 + $0xb3] sm:$0xff]
      %v1939 = vld [vmem:[%s257 + $0xbb] sm:$0xff]
      %v1940 = vld [vmem:[%s257 + $0xc3] sm:$0xff]
      %v1941 = vld [vmem:[%s257 + $0xcb] sm:$0xff]
      %v1942 = vld [vmem:[%s257 + $0xd3] sm:$0xff]
      %v1943 = vld [vmem:[%s257 + $0xdb] sm:$0xff]
      %v1944 = vld [vmem:[%s257 + $0xe3] sm:$0xff]
      %v1945 = vld [vmem:[%s257 + $0xeb] sm:$0xff]
      %v1946 = vld [vmem:[%s257 + $0xf3] sm:$0xff]
      %v1947 = vld [vmem:[%s257 + $0xfb] sm:$0xff]
      %v1948 = vld [vmem:[%s257 + $0x103] sm:$0xff]
      %v1949 = vld [vmem:[%s257 + $0x10b] sm:$0xff]
      %v1950 = vld [vmem:[%s257 + $0x113] sm:$0xff]
      %v1951 = vld [vmem:[%s257 + $0x11b] sm:$0xff]
      %v1952 = vld [vmem:[%s257 + $0x123] sm:$0xff]
      %v1953 = vld [vmem:[%s257 + $0x12b] sm:$0xff]
      %s1954 = scalar_lea.vmem %s1, 16
      %v1955 = vld [vmem:[%s1954] sm:$0xf]
      %v1957 = vsel %vm344, %v1918, 0
      %v1960 = vsel %vm344, %v1919, 0
      %v1963 = vsel %vm344, %v1920, 0
      %v1966 = vsel %vm344, %v1921, 0
      %v1969 = vsel %vm344, %v1922, 0
      %v1972 = vsel %vm344, %v1923, 0
      %v1975 = vsel %vm344, %v1924, 0
      %v1978 = vsel %vm344, %v1925, 0
      %v1981 = vsel %vm344, %v1926, 0
      %v1984 = vsel %vm344, %v1927, 0
      %v1987 = vsel %vm344, %v1928, 0
      %v1990 = vsel %vm344, %v1929, 0
      %v1993 = vsel %vm344, %v1930, 0
      %v1996 = vsel %vm344, %v1931, 0
      %v1999 = vsel %vm344, %v1932, 0
      %v2002 = vsel %vm344, %v1933, 0
      %v2005 = vsel %vm344, %v1934, 0
      %v2008 = vsel %vm344, %v1935, 0
      %v2011 = vsel %vm344, %v1936, 0
      %v2014 = vsel %vm344, %v1937, 0
      %v2017 = vsel %vm344, %v1938, 0
      %v2020 = vsel %vm344, %v1939, 0
      %v2023 = vsel %vm344, %v1940, 0
      %v2026 = vsel %vm344, %v1941, 0
      %v2029 = vsel %vm344, %v1942, 0
      %v2032 = vsel %vm344, %v1943, 0
      %v2035 = vsel %vm344, %v1944, 0
      %v2038 = vsel %vm344, %v1945, 0
      %v2041 = vsel %vm344, %v1946, 0
      %v2044 = vsel %vm344, %v1947, 0
      %v2047 = vsel %vm344, %v1948, 0
      %v2050 = vsel %vm344, %v1949, 0
      %v2053 = vsel %vm344, %v1950, 0
      %v2056 = vsel %vm344, %v1951, 0
      %v2059 = vsel %vm344, %v1952, 0
      %v2062 = vsel %vm344, %v1953, 0
      %v2065 = vsel %vm453, %v1955, 0
      %2067 = vmatprep.subr.mxu0 0.0
      %2068 = vmatpush1.msra.mxu0 %v2065
      %2069 = vmatprep.subr.mxu0 0.0
      %2070 = vmatpush1.msra.mxu0 0.0
      %2071 = vmatprep.subr.mxu0 0.0
      %2072 = vmatpush1.msra.mxu0 0.0
      %2073 = vmatprep.subr.mxu0 0.0
      %2074 = vmatpush1.msra.mxu0 0.0
      %2075 = vmatprep.subr.mxu0 0.0
      %2076 = vmatpush1.msra.mxu0 0.0
      %2077 = vmatprep.subr.mxu0 0.0
      %2078 = vmatpush1.msra.mxu0 0.0
      %2079 = vmatprep.subr.mxu0 0.0
      %2080 = vmatpush1.msra.mxu0 0.0
      %2081 = vmatprep.subr.mxu0 0.0
      %2082 = vmatpush1.msra.mxu0 0.0
      %2083 = vmatprep.subr.mxu0 0.0
      %2084 = vmatpush1.msra.mxu0 0.0
      %2085 = vmatprep.subr.mxu0 0.0
      %2086 = vmatpush1.msra.mxu0 0.0
      %2087 = vmatprep.subr.mxu0 0.0
      %2088 = vmatpush1.msra.mxu0 0.0
      %2089 = vmatprep.subr.mxu0 0.0
      %2090 = vmatpush1.msra.mxu0 0.0
      %2091 = vmatprep.subr.mxu0 0.0
      %2092 = vmatpush1.msra.mxu0 0.0
      %2093 = vmatprep.subr.mxu0 0.0
      %2094 = vmatpush1.msra.mxu0 0.0
      %2095 = vmatprep.subr.mxu0 0.0
      %2096 = vmatpush1.msra.mxu0 0.0
      %2097 = vmatprep.subr.mxu0 0.0
      %2098 = vmatpush1.msra.mxu0 0.0
      %2099 = vmatprep.subr.mxu0 0.0
      %2100 = vmatpush1.msra.mxu0 0.0
      %2101 = vmatprep.subr.mxu0 0.0
      %2102 = vmatpush1.msra.mxu0 0.0
      %2103 = vmatprep.subr.mxu0 0.0
      %2104 = vmatpush1.msra.mxu0 0.0
      %2105 = vmatprep.subr.mxu0 0.0
      %2106 = vmatpush1.msra.mxu0 0.0
      %2107 = vmatprep.subr.mxu0 0.0
      %2108 = vmatpush1.msra.mxu0 0.0
      %2109 = vmatprep.subr.mxu0 0.0
      %2110 = vmatpush1.msra.mxu0 0.0
      %2111 = vmatprep.subr.mxu0 0.0
      %2112 = vmatpush1.msra.mxu0 0.0
      %2113 = vmatprep.subr.mxu0 0.0
      %2114 = vmatpush1.msra.mxu0 0.0
      %2115 = vmatprep.subr.mxu0 0.0
      %2116 = vmatpush1.msra.mxu0 0.0
      %2117 = vmatprep.subr.mxu0 0.0
      %2118 = vmatpush1.msra.mxu0 0.0
      %2119 = vmatprep.subr.mxu0 0.0
      %2120 = vmatpush1.msra.mxu0 0.0
      %2121 = vmatprep.subr.mxu0 0.0
      %2122 = vmatpush1.msra.mxu0 0.0
      %2123 = vmatprep.subr.mxu0 0.0
      %2124 = vmatpush1.msra.mxu0 0.0
      %2125 = vmatprep.subr.mxu0 0.0
      %2126 = vmatpush1.msra.mxu0 0.0
      %2127 = vmatprep.subr.mxu0 0.0
      %2128 = vmatpush1.msra.mxu0 0.0
      %2129 = vmatprep.subr.mxu0 0.0
      %2130 = vmatpush1.msra.mxu0 0.0
      %2131 = vmatprep.mubr.f32.mxu0 0.0
      %2132 = vmatmul.mubr.f32.gmra.mrb[0].mxu0 %v1957
      %v2133 = vpop.f32.mrb[0].mxu0
      %v2134 = vadd.f32 0.0, %v2133
      %v2135 = vpop.f32.mrb[0].mxu0
      %2136 = vmatprep.mubr.f32.mxu0 0.0
      %2137 = vmatmul.mubr.f32.gmra.mrb[0].mxu0 %v1960
      %v2138 = vpop.f32.mrb[0].mxu0
      %v2139 = vadd.f32 0.0, %v2138
      %v2140 = vpop.f32.mrb[0].mxu0
      %2141 = vmatprep.mubr.f32.mxu0 0.0
      %2142 = vmatmul.mubr.f32.gmra.mrb[0].mxu0 %v1963
      %v2143 = vpop.f32.mrb[0].mxu0
      %v2144 = vadd.f32 0.0, %v2143
      %v2145 = vpop.f32.mrb[0].mxu0
      %2146 = vmatprep.mubr.f32.mxu0 0.0
      %2147 = vmatmul.mubr.f32.gmra.mrb[0].mxu0 %v1966
      %v2148 = vpop.f32.mrb[0].mxu0
      %v2149 = vadd.f32 0.0, %v2148
      %v2150 = vpop.f32.mrb[0].mxu0
      %2151 = vmatprep.mubr.f32.mxu0 0.0
      %2152 = vmatmul.mubr.f32.gmra.mrb[0].mxu0 %v1969
      %v2153 = vpop.f32.mrb[0].mxu0
      %v2154 = vadd.f32 0.0, %v2153
      %v2155 = vpop.f32.mrb[0].mxu0
      %2156 = vmatprep.mubr.f32.mxu0 0.0
      %2157 = vmatmul.mubr.f32.gmra.mrb[0].mxu0 %v1972
      %v2158 = vpop.f32.mrb[0].mxu0
      %v2159 = vadd.f32 0.0, %v2158
      %v2160 = vpop.f32.mrb[0].mxu0
      %2161 = vmatprep.mubr.f32.mxu0 0.0
      %2162 = vmatmul.mubr.f32.gmra.mrb[0].mxu0 %v1975
      %v2163 = vpop.f32.mrb[0].mxu0
      %v2164 = vadd.f32 0.0, %v2163
      %v2165 = vpop.f32.mrb[0].mxu0
      %2166 = vmatprep.mubr.f32.mxu0 0.0
      %2167 = vmatmul.mubr.f32.gmra.mrb[0].mxu0 %v1978
      %v2168 = vpop.f32.mrb[0].mxu0
      %v2169 = vadd.f32 0.0, %v2168
      %v2170 = vpop.f32.mrb[0].mxu0
      %2171 = vmatprep.mubr.f32.mxu0 0.0
      %2172 = vmatmul.mubr.f32.gmra.mrb[0].mxu0 %v1981
      %v2173 = vpop.f32.mrb[0].mxu0
      %v2174 = vadd.f32 0.0, %v2173
      %v2175 = vpop.f32.mrb[0].mxu0
      %2176 = vmatprep.mubr.f32.mxu0 0.0
      %2177 = vmatmul.mubr.f32.gmra.mrb[0].mxu0 %v1984
      %v2178 = vpop.f32.mrb[0].mxu0
      %v2179 = vadd.f32 0.0, %v2178
      %v2180 = vpop.f32.mrb[0].mxu0
      %2181 = vmatprep.mubr.f32.mxu0 0.0
      %2182 = vmatmul.mubr.f32.gmra.mrb[0].mxu0 %v1987
      %v2183 = vpop.f32.mrb[0].mxu0
      %v2184 = vadd.f32 0.0, %v2183
      %v2185 = vpop.f32.mrb[0].mxu0
      %2186 = vmatprep.mubr.f32.mxu0 0.0
      %2187 = vmatmul.mubr.f32.gmra.mrb[0].mxu0 %v1990
      %v2188 = vpop.f32.mrb[0].mxu0
      %v2189 = vadd.f32 0.0, %v2188
      %v2190 = vpop.f32.mrb[0].mxu0
      %2191 = vmatprep.mubr.f32.mxu0 0.0
      %2192 = vmatmul.mubr.f32.gmra.mrb[0].mxu0 %v1993
      %v2193 = vpop.f32.mrb[0].mxu0
      %v2194 = vadd.f32 0.0, %v2193
      %v2195 = vpop.f32.mrb[0].mxu0
      %2196 = vmatprep.mubr.f32.mxu0 0.0
      %2197 = vmatmul.mubr.f32.gmra.mrb[0].mxu0 %v1996
      %v2198 = vpop.f32.mrb[0].mxu0
      %v2199 = vadd.f32 0.0, %v2198
      %v2200 = vpop.f32.mrb[0].mxu0
      %2201 = vmatprep.mubr.f32.mxu0 0.0
      %2202 = vmatmul.mubr.f32.gmra.mrb[0].mxu0 %v1999
      %v2203 = vpop.f32.mrb[0].mxu0
      %v2204 = vadd.f32 0.0, %v2203
      %v2205 = vpop.f32.mrb[0].mxu0
      %2206 = vmatprep.mubr.f32.mxu0 0.0
      %2207 = vmatmul.mubr.f32.gmra.mrb[0].mxu0 %v2002
      %v2208 = vpop.f32.mrb[0].mxu0
      %v2209 = vadd.f32 0.0, %v2208
      %v2210 = vpop.f32.mrb[0].mxu0
      %2211 = vmatprep.mubr.f32.mxu0 0.0
      %2212 = vmatmul.mubr.f32.gmra.mrb[0].mxu0 %v2005
      %v2213 = vpop.f32.mrb[0].mxu0
      %v2214 = vadd.f32 0.0, %v2213
      %v2215 = vpop.f32.mrb[0].mxu0
      %2216 = vmatprep.mubr.f32.mxu0 0.0
      %2217 = vmatmul.mubr.f32.gmra.mrb[0].mxu0 %v2008
      %v2218 = vpop.f32.mrb[0].mxu0
      %v2219 = vadd.f32 0.0, %v2218
      %v2220 = vpop.f32.mrb[0].mxu0
      %2221 = vmatprep.mubr.f32.mxu0 0.0
      %2222 = vmatmul.mubr.f32.gmra.mrb[0].mxu0 %v2011
      %v2223 = vpop.f32.mrb[0].mxu0
      %v2224 = vadd.f32 0.0, %v2223
      %v2225 = vpop.f32.mrb[0].mxu0
      %2226 = vmatprep.mubr.f32.mxu0 0.0
      %2227 = vmatmul.mubr.f32.gmra.mrb[0].mxu0 %v2014
      %v2228 = vpop.f32.mrb[0].mxu0
      %v2229 = vadd.f32 0.0, %v2228
      %v2230 = vpop.f32.mrb[0].mxu0
      %2231 = vmatprep.mubr.f32.mxu0 0.0
      %2232 = vmatmul.mubr.f32.gmra.mrb[0].mxu0 %v2017
      %v2233 = vpop.f32.mrb[0].mxu0
      %v2234 = vadd.f32 0.0, %v2233
      %v2235 = vpop.f32.mrb[0].mxu0
      %2236 = vmatprep.mubr.f32.mxu0 0.0
      %2237 = vmatmul.mubr.f32.gmra.mrb[0].mxu0 %v2020
      %v2238 = vpop.f32.mrb[0].mxu0
      %v2239 = vadd.f32 0.0, %v2238
      %v2240 = vpop.f32.mrb[0].mxu0
      %2241 = vmatprep.mubr.f32.mxu0 0.0
      %2242 = vmatmul.mubr.f32.gmra.mrb[0].mxu0 %v2023
      %v2243 = vpop.f32.mrb[0].mxu0
      %v2244 = vadd.f32 0.0, %v2243
      %v2245 = vpop.f32.mrb[0].mxu0
      %2246 = vmatprep.mubr.f32.mxu0 0.0
      %2247 = vmatmul.mubr.f32.gmra.mrb[0].mxu0 %v2026
      %v2248 = vpop.f32.mrb[0].mxu0
      %v2249 = vadd.f32 0.0, %v2248
      %v2250 = vpop.f32.mrb[0].mxu0
      %2251 = vmatprep.mubr.f32.mxu0 0.0
      %2252 = vmatmul.mubr.f32.gmra.mrb[0].mxu0 %v2029
      %v2253 = vpop.f32.mrb[0].mxu0
      %v2254 = vadd.f32 0.0, %v2253
      %v2255 = vpop.f32.mrb[0].mxu0
      %2256 = vmatprep.mubr.f32.mxu0 0.0
      %2257 = vmatmul.mubr.f32.gmra.mrb[0].mxu0 %v2032
      %v2258 = vpop.f32.mrb[0].mxu0
      %v2259 = vadd.f32 0.0, %v2258
      %v2260 = vpop.f32.mrb[0].mxu0
      %2261 = vmatprep.mubr.f32.mxu0 0.0
      %2262 = vmatmul.mubr.f32.gmra.mrb[0].mxu0 %v2035
      %v2263 = vpop.f32.mrb[0].mxu0
      %v2264 = vadd.f32 0.0, %v2263
      %v2265 = vpop.f32.mrb[0].mxu0
      %2266 = vmatprep.mubr.f32.mxu0 0.0
      %2267 = vmatmul.mubr.f32.gmra.mrb[0].mxu0 %v2038
      %v2268 = vpop.f32.mrb[0].mxu0
      %v2269 = vadd.f32 0.0, %v2268
      %v2270 = vpop.f32.mrb[0].mxu0
      %2271 = vmatprep.mubr.f32.mxu0 0.0
      %2272 = vmatmul.mubr.f32.gmra.mrb[0].mxu0 %v2041
      %v2273 = vpop.f32.mrb[0].mxu0
      %v2274 = vadd.f32 0.0, %v2273
      %v2275 = vpop.f32.mrb[0].mxu0
      %2276 = vmatprep.mubr.f32.mxu0 0.0
      %2277 = vmatmul.mubr.f32.gmra.mrb[0].mxu0 %v2044
      %v2278 = vpop.f32.mrb[0].mxu0
      %v2279 = vadd.f32 0.0, %v2278
      %v2280 = vpop.f32.mrb[0].mxu0
      %2281 = vmatprep.mubr.f32.mxu0 0.0
      %2282 = vmatmul.mubr.f32.gmra.mrb[0].mxu0 %v2047
      %v2283 = vpop.f32.mrb[0].mxu0
      %v2284 = vadd.f32 0.0, %v2283
      %v2285 = vpop.f32.mrb[0].mxu0
      %2286 = vmatprep.mubr.f32.mxu0 0.0
      %2287 = vmatmul.mubr.f32.gmra.mrb[0].mxu0 %v2050
      %v2288 = vpop.f32.mrb[0].mxu0
      %v2289 = vadd.f32 0.0, %v2288
      %v2290 = vpop.f32.mrb[0].mxu0
      %2291 = vmatprep.mubr.f32.mxu0 0.0
      %2292 = vmatmul.mubr.f32.gmra.mrb[0].mxu0 %v2053
      %v2293 = vpop.f32.mrb[0].mxu0
      %v2294 = vadd.f32 0.0, %v2293
      %v2295 = vpop.f32.mrb[0].mxu0
      %2296 = vmatprep.mubr.f32.mxu0 0.0
      %2297 = vmatmul.mubr.f32.gmra.mrb[0].mxu0 %v2056
      %v2298 = vpop.f32.mrb[0].mxu0
      %v2299 = vadd.f32 0.0, %v2298
      %v2300 = vpop.f32.mrb[0].mxu0
      %2301 = vmatprep.mubr.f32.mxu0 0.0
      %2302 = vmatmul.mubr.f32.gmra.mrb[0].mxu0 %v2059
      %v2303 = vpop.f32.mrb[0].mxu0
      %v2304 = vadd.f32 0.0, %v2303
      %v2305 = vpop.f32.mrb[0].mxu0
      %2306 = vmatprep.mubr.f32.mxu0 0.0
      %2307 = vmatmul.mubr.f32.gmra.mrb[0].mxu0 %v2062
      %v2308 = vpop.f32.mrb[0].mxu0
      %v2309 = vadd.f32 0.0, %v2308
      %v2310 = vpop.f32.mrb[0].mxu0
      %2311 = vdwg.mxu0
      %v2312 = vadd.f32 %v1882, %v2134
      %v2313 = vadd.f32 %v1883, %v2139
      %v2314 = vadd.f32 %v1884, %v2144
      %v2315 = vadd.f32 %v1885, %v2149
      %v2316 = vadd.f32 %v1886, %v2154
      %v2317 = vadd.f32 %v1887, %v2159
      %v2318 = vadd.f32 %v1888, %v2164
      %v2319 = vadd.f32 %v1889, %v2169
      %v2320 = vadd.f32 %v1890, %v2174
      %v2321 = vadd.f32 %v1891, %v2179
      %v2322 = vadd.f32 %v1892, %v2184
      %v2323 = vadd.f32 %v1893, %v2189
      %v2324 = vadd.f32 %v1894, %v2194
      %v2325 = vadd.f32 %v1895, %v2199
      %v2326 = vadd.f32 %v1896, %v2204
      %v2327 = vadd.f32 %v1897, %v2209
      %v2328 = vadd.f32 %v1898, %v2214
      %v2329 = vadd.f32 %v1899, %v2219
      %v2330 = vadd.f32 %v1900, %v2224
      %v2331 = vadd.f32 %v1901, %v2229
      %v2332 = vadd.f32 %v1902, %v2234
      %v2333 = vadd.f32 %v1903, %v2239
      %v2334 = vadd.f32 %v1904, %v2244
      %v2335 = vadd.f32 %v1905, %v2249
      %v2336 = vadd.f32 %v1906, %v2254
      %v2337 = vadd.f32 %v1907, %v2259
      %v2338 = vadd.f32 %v1908, %v2264
      %v2339 = vadd.f32 %v1909, %v2269
      %v2340 = vadd.f32 %v1910, %v2274
      %v2341 = vadd.f32 %v1911, %v2279
      %v2342 = vadd.f32 %v1912, %v2284
      %v2343 = vadd.f32 %v1913, %v2289
      %v2344 = vadd.f32 %v1914, %v2294
      %v2345 = vadd.f32 %v1915, %v2299
      %v2346 = vadd.f32 %v1916, %v2304
      %v2347 = vadd.f32 %v1917, %v2309
      %v2348 = vld [vmem:[%s257 + $0x14] sm:$0xff]
      %v2349 = vld [vmem:[%s257 + $0x1c] sm:$0xff]
      %v2350 = vld [vmem:[%s257 + $0x24] sm:$0xff]
      %v2351 = vld [vmem:[%s257 + $0x2c] sm:$0xff]
      %v2352 = vld [vmem:[%s257 + $0x34] sm:$0xff]
      %v2353 = vld [vmem:[%s257 + $0x3c] sm:$0xff]
      %v2354 = vld [vmem:[%s257 + $0x44] sm:$0xff]
      %v2355 = vld [vmem:[%s257 + $0x4c] sm:$0xff]
      %v2356 = vld [vmem:[%s257 + $0x54] sm:$0xff]
      %v2357 = vld [vmem:[%s257 + $0x5c] sm:$0xff]
      %v2358 = vld [vmem:[%s257 + $0x64] sm:$0xff]
      %v2359 = vld [vmem:[%s257 + $0x6c] sm:$0xff]
      %v2360 = vld [vmem:[%s257 + $0x74] sm:$0xff]
      %v2361 = vld [vmem:[%s257 + $0x7c] sm:$0xff]
      %v2362 = vld [vmem:[%s257 + $0x84] sm:$0xff]
      %v2363 = vld [vmem:[%s257 + $0x8c] sm:$0xff]
      %v2364 = vld [vmem:[%s257 + $0x94] sm:$0xff]
      %v2365 = vld [vmem:[%s257 + $0x9c] sm:$0xff]
      %v2366 = vld [vmem:[%s257 + $0xa4] sm:$0xff]
      %v2367 = vld [vmem:[%s257 + $0xac] sm:$0xff]
      %v2368 = vld [vmem:[%s257 + $0xb4] sm:$0xff]
      %v2369 = vld [vmem:[%s257 + $0xbc] sm:$0xff]
      %v2370 = vld [vmem:[%s257 + $0xc4] sm:$0xff]
      %v2371 = vld [vmem:[%s257 + $0xcc] sm:$0xff]
      %v2372 = vld [vmem:[%s257 + $0xd4] sm:$0xff]
      %v2373 = vld [vmem:[%s257 + $0xdc] sm:$0xff]
      %v2374 = vld [vmem:[%s257 + $0xe4] sm:$0xff]
      %v2375 = vld [vmem:[%s257 + $0xec] sm:$0xff]
      %v2376 = vld [vmem:[%s257 + $0xf4] sm:$0xff]
      %v2377 = vld [vmem:[%s257 + $0xfc] sm:$0xff]
      %v2378 = vld [vmem:[%s257 + $0x104] sm:$0xff]
      %v2379 = vld [vmem:[%s257 + $0x10c] sm:$0xff]
      %v2380 = vld [vmem:[%s257 + $0x114] sm:$0xff]
      %v2381 = vld [vmem:[%s257 + $0x11c] sm:$0xff]
      %v2382 = vld [vmem:[%s257 + $0x124] sm:$0xff]
      %v2383 = vld [vmem:[%s257 + $0x12c] sm:$0xff]
      %s2384 = scalar_lea.vmem %s1, 20
      %v2385 = vld [vmem:[%s2384] sm:$0xf]
      %v2387 = vsel %vm344, %v2348, 0
      %v2390 = vsel %vm344, %v2349, 0
      %v2393 = vsel %vm344, %v2350, 0
      %v2396 = vsel %vm344, %v2351, 0
      %v2399 = vsel %vm344, %v2352, 0
      %v2402 = vsel %vm344, %v2353, 0
      %v2405 = vsel %vm344, %v2354, 0
      %v2408 = vsel %vm344, %v2355, 0
      %v2411 = vsel %vm344, %v2356, 0
      %v2414 = vsel %vm344, %v2357, 0
      %v2417 = vsel %vm344, %v2358, 0
      %v2420 = vsel %vm344, %v2359, 0
      %v2423 = vsel %vm344, %v2360, 0
      %v2426 = vsel %vm344, %v2361, 0
      %v2429 = vsel %vm344, %v2362, 0
      %v2432 = vsel %vm344, %v2363, 0
      %v2435 = vsel %vm344, %v2364, 0
      %v2438 = vsel %vm344, %v2365, 0
      %v2441 = vsel %vm344, %v2366, 0
      %v2444 = vsel %vm344, %v2367, 0
      %v2447 = vsel %vm344, %v2368, 0
      %v2450 = vsel %vm344, %v2369, 0
      %v2453 = vsel %vm344, %v2370, 0
      %v2456 = vsel %vm344, %v2371, 0
      %v2459 = vsel %vm344, %v2372, 0
      %v2462 = vsel %vm344, %v2373, 0
      %v2465 = vsel %vm344, %v2374, 0
      %v2468 = vsel %vm344, %v2375, 0
      %v2471 = vsel %vm344, %v2376, 0
      %v2474 = vsel %vm344, %v2377, 0
      %v2477 = vsel %vm344, %v2378, 0
      %v2480 = vsel %vm344, %v2379, 0
      %v2483 = vsel %vm344, %v2380, 0
      %v2486 = vsel %vm344, %v2381, 0
      %v2489 = vsel %vm344, %v2382, 0
      %v2492 = vsel %vm344, %v2383, 0
      %v2495 = vsel %vm453, %v2385, 0
      %2497 = vmatprep.subr.mxu0 0.0
      %2498 = vmatpush1.msra.mxu0 %v2495
      %2499 = vmatprep.subr.mxu0 0.0
      %2500 = vmatpush1.msra.mxu0 0.0
      %2501 = vmatprep.subr.mxu0 0.0
      %2502 = vmatpush1.msra.mxu0 0.0
      %2503 = vmatprep.subr.mxu0 0.0
      %2504 = vmatpush1.msra.mxu0 0.0
      %2505 = vmatprep.subr.mxu0 0.0
      %2506 = vmatpush1.msra.mxu0 0.0
      %2507 = vmatprep.subr.mxu0 0.0
      %2508 = vmatpush1.msra.mxu0 0.0
      %2509 = vmatprep.subr.mxu0 0.0
      %2510 = vmatpush1.msra.mxu0 0.0
      %2511 = vmatprep.subr.mxu0 0.0
      %2512 = vmatpush1.msra.mxu0 0.0
      %2513 = vmatprep.subr.mxu0 0.0
      %2514 = vmatpush1.msra.mxu0 0.0
      %2515 = vmatprep.subr.mxu0 0.0
      %2516 = vmatpush1.msra.mxu0 0.0
      %2517 = vmatprep.subr.mxu0 0.0
      %2518 = vmatpush1.msra.mxu0 0.0
      %2519 = vmatprep.subr.mxu0 0.0
      %2520 = vmatpush1.msra.mxu0 0.0
      %2521 = vmatprep.subr.mxu0 0.0
      %2522 = vmatpush1.msra.mxu0 0.0
      %2523 = vmatprep.subr.mxu0 0.0
      %2524 = vmatpush1.msra.mxu0 0.0
      %2525 = vmatprep.subr.mxu0 0.0
      %2526 = vmatpush1.msra.mxu0 0.0
      %2527 = vmatprep.subr.mxu0 0.0
      %2528 = vmatpush1.msra.mxu0 0.0
      %2529 = vmatprep.subr.mxu0 0.0
      %2530 = vmatpush1.msra.mxu0 0.0
      %2531 = vmatprep.subr.mxu0 0.0
      %2532 = vmatpush1.msra.mxu0 0.0
      %2533 = vmatprep.subr.mxu0 0.0
      %2534 = vmatpush1.msra.mxu0 0.0
      %2535 = vmatprep.subr.mxu0 0.0
      %2536 = vmatpush1.msra.mxu0 0.0
      %2537 = vmatprep.subr.mxu0 0.0
      %2538 = vmatpush1.msra.mxu0 0.0
      %2539 = vmatprep.subr.mxu0 0.0
      %2540 = vmatpush1.msra.mxu0 0.0
      %2541 = vmatprep.subr.mxu0 0.0
      %2542 = vmatpush1.msra.mxu0 0.0
      %2543 = vmatprep.subr.mxu0 0.0
      %2544 = vmatpush1.msra.mxu0 0.0
      %2545 = vmatprep.subr.mxu0 0.0
      %2546 = vmatpush1.msra.mxu0 0.0
      %2547 = vmatprep.subr.mxu0 0.0
      %2548 = vmatpush1.msra.mxu0 0.0
      %2549 = vmatprep.subr.mxu0 0.0
      %2550 = vmatpush1.msra.mxu0 0.0
      %2551 = vmatprep.subr.mxu0 0.0
      %2552 = vmatpush1.msra.mxu0 0.0
      %2553 = vmatprep.subr.mxu0 0.0
      %2554 = vmatpush1.msra.mxu0 0.0
      %2555 = vmatprep.subr.mxu0 0.0
      %2556 = vmatpush1.msra.mxu0 0.0
      %2557 = vmatprep.subr.mxu0 0.0
      %2558 = vmatpush1.msra.mxu0 0.0
      %2559 = vmatprep.subr.mxu0 0.0
      %2560 = vmatpush1.msra.mxu0 0.0
      %2561 = vmatprep.mubr.f32.mxu0 0.0
      %2562 = vmatmul.mubr.f32.gmra.mrb[0].mxu0 %v2387
      %v2563 = vpop.f32.mrb[0].mxu0
      %v2564 = vadd.f32 0.0, %v2563
      %v2565 = vpop.f32.mrb[0].mxu0
      %2566 = vmatprep.mubr.f32.mxu0 0.0
      %2567 = vmatmul.mubr.f32.gmra.mrb[0].mxu0 %v2390
      %v2568 = vpop.f32.mrb[0].mxu0
      %v2569 = vadd.f32 0.0, %v2568
      %v2570 = vpop.f32.mrb[0].mxu0
      %2571 = vmatprep.mubr.f32.mxu0 0.0
      %2572 = vmatmul.mubr.f32.gmra.mrb[0].mxu0 %v2393
      %v2573 = vpop.f32.mrb[0].mxu0
      %v2574 = vadd.f32 0.0, %v2573
      %v2575 = vpop.f32.mrb[0].mxu0
      %2576 = vmatprep.mubr.f32.mxu0 0.0
      %2577 = vmatmul.mubr.f32.gmra.mrb[0].mxu0 %v2396
      %v2578 = vpop.f32.mrb[0].mxu0
      %v2579 = vadd.f32 0.0, %v2578
      %v2580 = vpop.f32.mrb[0].mxu0
      %2581 = vmatprep.mubr.f32.mxu0 0.0
      %2582 = vmatmul.mubr.f32.gmra.mrb[0].mxu0 %v2399
      %v2583 = vpop.f32.mrb[0].mxu0
      %v2584 = vadd.f32 0.0, %v2583
      %v2585 = vpop.f32.mrb[0].mxu0
      %2586 = vmatprep.mubr.f32.mxu0 0.0
      %2587 = vmatmul.mubr.f32.gmra.mrb[0].mxu0 %v2402
      %v2588 = vpop.f32.mrb[0].mxu0
      %v2589 = vadd.f32 0.0, %v2588
      %v2590 = vpop.f32.mrb[0].mxu0
      %2591 = vmatprep.mubr.f32.mxu0 0.0
      %2592 = vmatmul.mubr.f32.gmra.mrb[0].mxu0 %v2405
      %v2593 = vpop.f32.mrb[0].mxu0
      %v2594 = vadd.f32 0.0, %v2593
      %v2595 = vpop.f32.mrb[0].mxu0
      %2596 = vmatprep.mubr.f32.mxu0 0.0
      %2597 = vmatmul.mubr.f32.gmra.mrb[0].mxu0 %v2408
      %v2598 = vpop.f32.mrb[0].mxu0
      %v2599 = vadd.f32 0.0, %v2598
      %v2600 = vpop.f32.mrb[0].mxu0
      %2601 = vmatprep.mubr.f32.mxu0 0.0
      %2602 = vmatmul.mubr.f32.gmra.mrb[0].mxu0 %v2411
      %v2603 = vpop.f32.mrb[0].mxu0
      %v2604 = vadd.f32 0.0, %v2603
      %v2605 = vpop.f32.mrb[0].mxu0
      %2606 = vmatprep.mubr.f32.mxu0 0.0
      %2607 = vmatmul.mubr.f32.gmra.mrb[0].mxu0 %v2414
      %v2608 = vpop.f32.mrb[0].mxu0
      %v2609 = vadd.f32 0.0, %v2608
      %v2610 = vpop.f32.mrb[0].mxu0
      %2611 = vmatprep.mubr.f32.mxu0 0.0
      %2612 = vmatmul.mubr.f32.gmra.mrb[0].mxu0 %v2417
      %v2613 = vpop.f32.mrb[0].mxu0
      %v2614 = vadd.f32 0.0, %v2613
      %v2615 = vpop.f32.mrb[0].mxu0
      %2616 = vmatprep.mubr.f32.mxu0 0.0
      %2617 = vmatmul.mubr.f32.gmra.mrb[0].mxu0 %v2420
      %v2618 = vpop.f32.mrb[0].mxu0
      %v2619 = vadd.f32 0.0, %v2618
      %v2620 = vpop.f32.mrb[0].mxu0
      %2621 = vmatprep.mubr.f32.mxu0 0.0
      %2622 = vmatmul.mubr.f32.gmra.mrb[0].mxu0 %v2423
      %v2623 = vpop.f32.mrb[0].mxu0
      %v2624 = vadd.f32 0.0, %v2623
      %v2625 = vpop.f32.mrb[0].mxu0
      %2626 = vmatprep.mubr.f32.mxu0 0.0
      %2627 = vmatmul.mubr.f32.gmra.mrb[0].mxu0 %v2426
      %v2628 = vpop.f32.mrb[0].mxu0
      %v2629 = vadd.f32 0.0, %v2628
      %v2630 = vpop.f32.mrb[0].mxu0
      %2631 = vmatprep.mubr.f32.mxu0 0.0
      %2632 = vmatmul.mubr.f32.gmra.mrb[0].mxu0 %v2429
      %v2633 = vpop.f32.mrb[0].mxu0
      %v2634 = vadd.f32 0.0, %v2633
      %v2635 = vpop.f32.mrb[0].mxu0
      %2636 = vmatprep.mubr.f32.mxu0 0.0
      %2637 = vmatmul.mubr.f32.gmra.mrb[0].mxu0 %v2432
      %v2638 = vpop.f32.mrb[0].mxu0
      %v2639 = vadd.f32 0.0, %v2638
      %v2640 = vpop.f32.mrb[0].mxu0
      %2641 = vmatprep.mubr.f32.mxu0 0.0
      %2642 = vmatmul.mubr.f32.gmra.mrb[0].mxu0 %v2435
      %v2643 = vpop.f32.mrb[0].mxu0
      %v2644 = vadd.f32 0.0, %v2643
      %v2645 = vpop.f32.mrb[0].mxu0
      %2646 = vmatprep.mubr.f32.mxu0 0.0
      %2647 = vmatmul.mubr.f32.gmra.mrb[0].mxu0 %v2438
      %v2648 = vpop.f32.mrb[0].mxu0
      %v2649 = vadd.f32 0.0, %v2648
      %v2650 = vpop.f32.mrb[0].mxu0
      %2651 = vmatprep.mubr.f32.mxu0 0.0
      %2652 = vmatmul.mubr.f32.gmra.mrb[0].mxu0 %v2441
      %v2653 = vpop.f32.mrb[0].mxu0
      %v2654 = vadd.f32 0.0, %v2653
      %v2655 = vpop.f32.mrb[0].mxu0
      %2656 = vmatprep.mubr.f32.mxu0 0.0
      %2657 = vmatmul.mubr.f32.gmra.mrb[0].mxu0 %v2444
      %v2658 = vpop.f32.mrb[0].mxu0
      %v2659 = vadd.f32 0.0, %v2658
      %v2660 = vpop.f32.mrb[0].mxu0
      %2661 = vmatprep.mubr.f32.mxu0 0.0
      %2662 = vmatmul.mubr.f32.gmra.mrb[0].mxu0 %v2447
      %v2663 = vpop.f32.mrb[0].mxu0
      %v2664 = vadd.f32 0.0, %v2663
      %v2665 = vpop.f32.mrb[0].mxu0
      %2666 = vmatprep.mubr.f32.mxu0 0.0
      %2667 = vmatmul.mubr.f32.gmra.mrb[0].mxu0 %v2450
      %v2668 = vpop.f32.mrb[0].mxu0
      %v2669 = vadd.f32 0.0, %v2668
      %v2670 = vpop.f32.mrb[0].mxu0
      %2671 = vmatprep.mubr.f32.mxu0 0.0
      %2672 = vmatmul.mubr.f32.gmra.mrb[0].mxu0 %v2453
      %v2673 = vpop.f32.mrb[0].mxu0
      %v2674 = vadd.f32 0.0, %v2673
      %v2675 = vpop.f32.mrb[0].mxu0
      %2676 = vmatprep.mubr.f32.mxu0 0.0
      %2677 = vmatmul.mubr.f32.gmra.mrb[0].mxu0 %v2456
      %v2678 = vpop.f32.mrb[0].mxu0
      %v2679 = vadd.f32 0.0, %v2678
      %v2680 = vpop.f32.mrb[0].mxu0
      %2681 = vmatprep.mubr.f32.mxu0 0.0
      %2682 = vmatmul.mubr.f32.gmra.mrb[0].mxu0 %v2459
      %v2683 = vpop.f32.mrb[0].mxu0
      %v2684 = vadd.f32 0.0, %v2683
      %v2685 = vpop.f32.mrb[0].mxu0
      %2686 = vmatprep.mubr.f32.mxu0 0.0
      %2687 = vmatmul.mubr.f32.gmra.mrb[0].mxu0 %v2462
      %v2688 = vpop.f32.mrb[0].mxu0
      %v2689 = vadd.f32 0.0, %v2688
      %v2690 = vpop.f32.mrb[0].mxu0
      %2691 = vmatprep.mubr.f32.mxu0 0.0
      %2692 = vmatmul.mubr.f32.gmra.mrb[0].mxu0 %v2465
      %v2693 = vpop.f32.mrb[0].mxu0
      %v2694 = vadd.f32 0.0, %v2693
      %v2695 = vpop.f32.mrb[0].mxu0
      %2696 = vmatprep.mubr.f32.mxu0 0.0
      %2697 = vmatmul.mubr.f32.gmra.mrb[0].mxu0 %v2468
      %v2698 = vpop.f32.mrb[0].mxu0
      %v2699 = vadd.f32 0.0, %v2698
      %v2700 = vpop.f32.mrb[0].mxu0
      %2701 = vmatprep.mubr.f32.mxu0 0.0
      %2702 = vmatmul.mubr.f32.gmra.mrb[0].mxu0 %v2471
      %v2703 = vpop.f32.mrb[0].mxu0
      %v2704 = vadd.f32 0.0, %v2703
      %v2705 = vpop.f32.mrb[0].mxu0
      %2706 = vmatprep.mubr.f32.mxu0 0.0
      %2707 = vmatmul.mubr.f32.gmra.mrb[0].mxu0 %v2474
      %v2708 = vpop.f32.mrb[0].mxu0
      %v2709 = vadd.f32 0.0, %v2708
      %v2710 = vpop.f32.mrb[0].mxu0
      %2711 = vmatprep.mubr.f32.mxu0 0.0
      %2712 = vmatmul.mubr.f32.gmra.mrb[0].mxu0 %v2477
      %v2713 = vpop.f32.mrb[0].mxu0
      %v2714 = vadd.f32 0.0, %v2713
      %v2715 = vpop.f32.mrb[0].mxu0
      %2716 = vmatprep.mubr.f32.mxu0 0.0
      %2717 = vmatmul.mubr.f32.gmra.mrb[0].mxu0 %v2480
      %v2718 = vpop.f32.mrb[0].mxu0
      %v2719 = vadd.f32 0.0, %v2718
      %v2720 = vpop.f32.mrb[0].mxu0
      %2721 = vmatprep.mubr.f32.mxu0 0.0
      %2722 = vmatmul.mubr.f32.gmra.mrb[0].mxu0 %v2483
      %v2723 = vpop.f32.mrb[0].mxu0
      %v2724 = vadd.f32 0.0, %v2723
      %v2725 = vpop.f32.mrb[0].mxu0
      %2726 = vmatprep.mubr.f32.mxu0 0.0
      %2727 = vmatmul.mubr.f32.gmra.mrb[0].mxu0 %v2486
      %v2728 = vpop.f32.mrb[0].mxu0
      %v2729 = vadd.f32 0.0, %v2728
      %v2730 = vpop.f32.mrb[0].mxu0
      %2731 = vmatprep.mubr.f32.mxu0 0.0
      %2732 = vmatmul.mubr.f32.gmra.mrb[0].mxu0 %v2489
      %v2733 = vpop.f32.mrb[0].mxu0
      %v2734 = vadd.f32 0.0, %v2733
      %v2735 = vpop.f32.mrb[0].mxu0
      %2736 = vmatprep.mubr.f32.mxu0 0.0
      %2737 = vmatmul.mubr.f32.gmra.mrb[0].mxu0 %v2492
      %v2738 = vpop.f32.mrb[0].mxu0
      %v2739 = vadd.f32 0.0, %v2738
      %v2740 = vpop.f32.mrb[0].mxu0
      %2741 = vdwg.mxu0
      %v2742 = vadd.f32 %v2312, %v2564
      %v2743 = vadd.f32 %v2313, %v2569
      %v2744 = vadd.f32 %v2314, %v2574
      %v2745 = vadd.f32 %v2315, %v2579
      %v2746 = vadd.f32 %v2316, %v2584
      %v2747 = vadd.f32 %v2317, %v2589
      %v2748 = vadd.f32 %v2318, %v2594
      %v2749 = vadd.f32 %v2319, %v2599
      %v2750 = vadd.f32 %v2320, %v2604
      %v2751 = vadd.f32 %v2321, %v2609
      %v2752 = vadd.f32 %v2322, %v2614
      %v2753 = vadd.f32 %v2323, %v2619
      %v2754 = vadd.f32 %v2324, %v2624
      %v2755 = vadd.f32 %v2325, %v2629
      %v2756 = vadd.f32 %v2326, %v2634
      %v2757 = vadd.f32 %v2327, %v2639
      %v2758 = vadd.f32 %v2328, %v2644
      %v2759 = vadd.f32 %v2329, %v2649
      %v2760 = vadd.f32 %v2330, %v2654
      %v2761 = vadd.f32 %v2331, %v2659
      %v2762 = vadd.f32 %v2332, %v2664
      %v2763 = vadd.f32 %v2333, %v2669
      %v2764 = vadd.f32 %v2334, %v2674
      %v2765 = vadd.f32 %v2335, %v2679
      %v2766 = vadd.f32 %v2336, %v2684
      %v2767 = vadd.f32 %v2337, %v2689
      %v2768 = vadd.f32 %v2338, %v2694
      %v2769 = vadd.f32 %v2339, %v2699
      %v2770 = vadd.f32 %v2340, %v2704
      %v2771 = vadd.f32 %v2341, %v2709
      %v2772 = vadd.f32 %v2342, %v2714
      %v2773 = vadd.f32 %v2343, %v2719
      %v2774 = vadd.f32 %v2344, %v2724
      %v2775 = vadd.f32 %v2345, %v2729
      %v2776 = vadd.f32 %v2346, %v2734
      %v2777 = vadd.f32 %v2347, %v2739
      %v2778 = vld [vmem:[%s257 + $0x24] sm:$0xff]
      %v2779 = vld [vmem:[%s257 + $0x2c] sm:$0xff]
      %v2780 = vld [vmem:[%s257 + $0x34] sm:$0xff]
      %v2781 = vld [vmem:[%s257 + $0x3c] sm:$0xff]
      %v2782 = vld [vmem:[%s257 + $0x44] sm:$0xff]
      %v2783 = vld [vmem:[%s257 + $0x4c] sm:$0xff]
      %v2784 = vld [vmem:[%s257 + $0x54] sm:$0xff]
      %v2785 = vld [vmem:[%s257 + $0x5c] sm:$0xff]
      %v2786 = vld [vmem:[%s257 + $0x64] sm:$0xff]
      %v2787 = vld [vmem:[%s257 + $0x6c] sm:$0xff]
      %v2788 = vld [vmem:[%s257 + $0x74] sm:$0xff]
      %v2789 = vld [vmem:[%s257 + $0x7c] sm:$0xff]
      %v2790 = vld [vmem:[%s257 + $0x84] sm:$0xff]
      %v2791 = vld [vmem:[%s257 + $0x8c] sm:$0xff]
      %v2792 = vld [vmem:[%s257 + $0x94] sm:$0xff]
      %v2793 = vld [vmem:[%s257 + $0x9c] sm:$0xff]
      %v2794 = vld [vmem:[%s257 + $0xa4] sm:$0xff]
      %v2795 = vld [vmem:[%s257 + $0xac] sm:$0xff]
      %v2796 = vld [vmem:[%s257 + $0xb4] sm:$0xff]
      %v2797 = vld [vmem:[%s257 + $0xbc] sm:$0xff]
      %v2798 = vld [vmem:[%s257 + $0xc4] sm:$0xff]
      %v2799 = vld [vmem:[%s257 + $0xcc] sm:$0xff]
      %v2800 = vld [vmem:[%s257 + $0xd4] sm:$0xff]
      %v2801 = vld [vmem:[%s257 + $0xdc] sm:$0xff]
      %v2802 = vld [vmem:[%s257 + $0xe4] sm:$0xff]
      %v2803 = vld [vmem:[%s257 + $0xec] sm:$0xff]
      %v2804 = vld [vmem:[%s257 + $0xf4] sm:$0xff]
      %v2805 = vld [vmem:[%s257 + $0xfc] sm:$0xff]
      %v2806 = vld [vmem:[%s257 + $0x104] sm:$0xff]
      %v2807 = vld [vmem:[%s257 + $0x10c] sm:$0xff]
      %v2808 = vld [vmem:[%s257 + $0x114] sm:$0xff]
      %v2809 = vld [vmem:[%s257 + $0x11c] sm:$0xff]
      %v2810 = vld [vmem:[%s257 + $0x124] sm:$0xff]
      %v2811 = vld [vmem:[%s257 + $0x12c] sm:$0xff]
      %v2812 = vld [vmem:[%s257 + $0x134] sm:$0xff]
      %v2813 = vld [vmem:[%s257 + $0x13c] sm:$0xff]
      %s2814 = scalar_lea.vmem %s1, 24
      %v2815 = vld [vmem:[%s2814] sm:$0xf]
      %v2817 = vsel %vm344, %v2778, 0
      %v2820 = vsel %vm344, %v2779, 0
      %v2823 = vsel %vm344, %v2780, 0
      %v2826 = vsel %vm344, %v2781, 0
      %v2829 = vsel %vm344, %v2782, 0
      %v2832 = vsel %vm344, %v2783, 0
      %v2835 = vsel %vm344, %v2784, 0
      %v2838 = vsel %vm344, %v2785, 0
      %v2841 = vsel %vm344, %v2786, 0
      %v2844 = vsel %vm344, %v2787, 0
      %v2847 = vsel %vm344, %v2788, 0
      %v2850 = vsel %vm344, %v2789, 0
      %v2853 = vsel %vm344, %v2790, 0
      %v2856 = vsel %vm344, %v2791, 0
      %v2859 = vsel %vm344, %v2792, 0
      %v2862 = vsel %vm344, %v2793, 0
      %v2865 = vsel %vm344, %v2794, 0
      %v2868 = vsel %vm344, %v2795, 0
      %v2871 = vsel %vm344, %v2796, 0
      %v2874 = vsel %vm344, %v2797, 0
      %v2877 = vsel %vm344, %v2798, 0
      %v2880 = vsel %vm344, %v2799, 0
      %v2883 = vsel %vm344, %v2800, 0
      %v2886 = vsel %vm344, %v2801, 0
      %v2889 = vsel %vm344, %v2802, 0
      %v2892 = vsel %vm344, %v2803, 0
      %v2895 = vsel %vm344, %v2804, 0
      %v2898 = vsel %vm344, %v2805, 0
      %v2901 = vsel %vm344, %v2806, 0
      %v2904 = vsel %vm344, %v2807, 0
      %v2907 = vsel %vm344, %v2808, 0
      %v2910 = vsel %vm344, %v2809, 0
      %v2913 = vsel %vm344, %v2810, 0
      %v2916 = vsel %vm344, %v2811, 0
      %v2919 = vsel %vm344, %v2812, 0
      %v2922 = vsel %vm344, %v2813, 0
      %v2925 = vsel %vm453, %v2815, 0
      %2927 = vmatprep.subr.mxu0 0.0
      %2928 = vmatpush1.msra.mxu0 %v2925
      %2929 = vmatprep.subr.mxu0 0.0
      %2930 = vmatpush1.msra.mxu0 0.0
      %2931 = vmatprep.subr.mxu0 0.0
      %2932 = vmatpush1.msra.mxu0 0.0
      %2933 = vmatprep.subr.mxu0 0.0
      %2934 = vmatpush1.msra.mxu0 0.0
      %2935 = vmatprep.subr.mxu0 0.0
      %2936 = vmatpush1.msra.mxu0 0.0
      %2937 = vmatprep.subr.mxu0 0.0
      %2938 = vmatpush1.msra.mxu0 0.0
      %2939 = vmatprep.subr.mxu0 0.0
      %2940 = vmatpush1.msra.mxu0 0.0
      %2941 = vmatprep.subr.mxu0 0.0
      %2942 = vmatpush1.msra.mxu0 0.0
      %2943 = vmatprep.subr.mxu0 0.0
      %2944 = vmatpush1.msra.mxu0 0.0
      %2945 = vmatprep.subr.mxu0 0.0
      %2946 = vmatpush1.msra.mxu0 0.0
      %2947 = vmatprep.subr.mxu0 0.0
      %2948 = vmatpush1.msra.mxu0 0.0
      %2949 = vmatprep.subr.mxu0 0.0
      %2950 = vmatpush1.msra.mxu0 0.0
      %2951 = vmatprep.subr.mxu0 0.0
      %2952 = vmatpush1.msra.mxu0 0.0
      %2953 = vmatprep.subr.mxu0 0.0
      %2954 = vmatpush1.msra.mxu0 0.0
      %2955 = vmatprep.subr.mxu0 0.0
      %2956 = vmatpush1.msra.mxu0 0.0
      %2957 = vmatprep.subr.mxu0 0.0
      %2958 = vmatpush1.msra.mxu0 0.0
      %2959 = vmatprep.subr.mxu0 0.0
      %2960 = vmatpush1.msra.mxu0 0.0
      %2961 = vmatprep.subr.mxu0 0.0
      %2962 = vmatpush1.msra.mxu0 0.0
      %2963 = vmatprep.subr.mxu0 0.0
      %2964 = vmatpush1.msra.mxu0 0.0
      %2965 = vmatprep.subr.mxu0 0.0
      %2966 = vmatpush1.msra.mxu0 0.0
      %2967 = vmatprep.subr.mxu0 0.0
      %2968 = vmatpush1.msra.mxu0 0.0
      %2969 = vmatprep.subr.mxu0 0.0
      %2970 = vmatpush1.msra.mxu0 0.0
      %2971 = vmatprep.subr.mxu0 0.0
      %2972 = vmatpush1.msra.mxu0 0.0
      %2973 = vmatprep.subr.mxu0 0.0
      %2974 = vmatpush1.msra.mxu0 0.0
      %2975 = vmatprep.subr.mxu0 0.0
      %2976 = vmatpush1.msra.mxu0 0.0
      %2977 = vmatprep.subr.mxu0 0.0
      %2978 = vmatpush1.msra.mxu0 0.0
      %2979 = vmatprep.subr.mxu0 0.0
      %2980 = vmatpush1.msra.mxu0 0.0
      %2981 = vmatprep.subr.mxu0 0.0
      %2982 = vmatpush1.msra.mxu0 0.0
      %2983 = vmatprep.subr.mxu0 0.0
      %2984 = vmatpush1.msra.mxu0 0.0
      %2985 = vmatprep.subr.mxu0 0.0
      %2986 = vmatpush1.msra.mxu0 0.0
      %2987 = vmatprep.subr.mxu0 0.0
      %2988 = vmatpush1.msra.mxu0 0.0
      %2989 = vmatprep.subr.mxu0 0.0
      %2990 = vmatpush1.msra.mxu0 0.0
      %2991 = vmatprep.mubr.f32.mxu0 0.0
      %2992 = vmatmul.mubr.f32.gmra.mrb[0].mxu0 %v2817
      %v2993 = vpop.f32.mrb[0].mxu0
      %v2994 = vadd.f32 0.0, %v2993
      %v2995 = vpop.f32.mrb[0].mxu0
      %2996 = vmatprep.mubr.f32.mxu0 0.0
      %2997 = vmatmul.mubr.f32.gmra.mrb[0].mxu0 %v2820
      %v2998 = vpop.f32.mrb[0].mxu0
      %v2999 = vadd.f32 0.0, %v2998
      %v3000 = vpop.f32.mrb[0].mxu0
      %3001 = vmatprep.mubr.f32.mxu0 0.0
      %3002 = vmatmul.mubr.f32.gmra.mrb[0].mxu0 %v2823
      %v3003 = vpop.f32.mrb[0].mxu0
      %v3004 = vadd.f32 0.0, %v3003
      %v3005 = vpop.f32.mrb[0].mxu0
      %3006 = vmatprep.mubr.f32.mxu0 0.0
      %3007 = vmatmul.mubr.f32.gmra.mrb[0].mxu0 %v2826
      %v3008 = vpop.f32.mrb[0].mxu0
      %v3009 = vadd.f32 0.0, %v3008
      %v3010 = vpop.f32.mrb[0].mxu0
      %3011 = vmatprep.mubr.f32.mxu0 0.0
      %3012 = vmatmul.mubr.f32.gmra.mrb[0].mxu0 %v2829
      %v3013 = vpop.f32.mrb[0].mxu0
      %v3014 = vadd.f32 0.0, %v3013
      %v3015 = vpop.f32.mrb[0].mxu0
      %3016 = vmatprep.mubr.f32.mxu0 0.0
      %3017 = vmatmul.mubr.f32.gmra.mrb[0].mxu0 %v2832
      %v3018 = vpop.f32.mrb[0].mxu0
      %v3019 = vadd.f32 0.0, %v3018
      %v3020 = vpop.f32.mrb[0].mxu0
      %3021 = vmatprep.mubr.f32.mxu0 0.0
      %3022 = vmatmul.mubr.f32.gmra.mrb[0].mxu0 %v2835
      %v3023 = vpop.f32.mrb[0].mxu0
      %v3024 = vadd.f32 0.0, %v3023
      %v3025 = vpop.f32.mrb[0].mxu0
      %3026 = vmatprep.mubr.f32.mxu0 0.0
      %3027 = vmatmul.mubr.f32.gmra.mrb[0].mxu0 %v2838
      %v3028 = vpop.f32.mrb[0].mxu0
      %v3029 = vadd.f32 0.0, %v3028
      %v3030 = vpop.f32.mrb[0].mxu0
      %3031 = vmatprep.mubr.f32.mxu0 0.0
      %3032 = vmatmul.mubr.f32.gmra.mrb[0].mxu0 %v2841
      %v3033 = vpop.f32.mrb[0].mxu0
      %v3034 = vadd.f32 0.0, %v3033
      %v3035 = vpop.f32.mrb[0].mxu0
      %3036 = vmatprep.mubr.f32.mxu0 0.0
      %3037 = vmatmul.mubr.f32.gmra.mrb[0].mxu0 %v2844
      %v3038 = vpop.f32.mrb[0].mxu0
      %v3039 = vadd.f32 0.0, %v3038
      %v3040 = vpop.f32.mrb[0].mxu0
      %3041 = vmatprep.mubr.f32.mxu0 0.0
      %3042 = vmatmul.mubr.f32.gmra.mrb[0].mxu0 %v2847
      %v3043 = vpop.f32.mrb[0].mxu0
      %v3044 = vadd.f32 0.0, %v3043
      %v3045 = vpop.f32.mrb[0].mxu0
      %3046 = vmatprep.mubr.f32.mxu0 0.0
      %3047 = vmatmul.mubr.f32.gmra.mrb[0].mxu0 %v2850
      %v3048 = vpop.f32.mrb[0].mxu0
      %v3049 = vadd.f32 0.0, %v3048
      %v3050 = vpop.f32.mrb[0].mxu0
      %3051 = vmatprep.mubr.f32.mxu0 0.0
      %3052 = vmatmul.mubr.f32.gmra.mrb[0].mxu0 %v2853
      %v3053 = vpop.f32.mrb[0].mxu0
      %v3054 = vadd.f32 0.0, %v3053
      %v3055 = vpop.f32.mrb[0].mxu0
      %3056 = vmatprep.mubr.f32.mxu0 0.0
      %3057 = vmatmul.mubr.f32.gmra.mrb[0].mxu0 %v2856
      %v3058 = vpop.f32.mrb[0].mxu0
      %v3059 = vadd.f32 0.0, %v3058
      %v3060 = vpop.f32.mrb[0].mxu0
      %3061 = vmatprep.mubr.f32.mxu0 0.0
      %3062 = vmatmul.mubr.f32.gmra.mrb[0].mxu0 %v2859
      %v3063 = vpop.f32.mrb[0].mxu0
      %v3064 = vadd.f32 0.0, %v3063
      %v3065 = vpop.f32.mrb[0].mxu0
      %3066 = vmatprep.mubr.f32.mxu0 0.0
      %3067 = vmatmul.mubr.f32.gmra.mrb[0].mxu0 %v2862
      %v3068 = vpop.f32.mrb[0].mxu0
      %v3069 = vadd.f32 0.0, %v3068
      %v3070 = vpop.f32.mrb[0].mxu0
      %3071 = vmatprep.mubr.f32.mxu0 0.0
      %3072 = vmatmul.mubr.f32.gmra.mrb[0].mxu0 %v2865
      %v3073 = vpop.f32.mrb[0].mxu0
      %v3074 = vadd.f32 0.0, %v3073
      %v3075 = vpop.f32.mrb[0].mxu0
      %3076 = vmatprep.mubr.f32.mxu0 0.0
      %3077 = vmatmul.mubr.f32.gmra.mrb[0].mxu0 %v2868
      %v3078 = vpop.f32.mrb[0].mxu0
      %v3079 = vadd.f32 0.0, %v3078
      %v3080 = vpop.f32.mrb[0].mxu0
      %3081 = vmatprep.mubr.f32.mxu0 0.0
      %3082 = vmatmul.mubr.f32.gmra.mrb[0].mxu0 %v2871
      %v3083 = vpop.f32.mrb[0].mxu0
      %v3084 = vadd.f32 0.0, %v3083
      %v3085 = vpop.f32.mrb[0].mxu0
      %3086 = vmatprep.mubr.f32.mxu0 0.0
      %3087 = vmatmul.mubr.f32.gmra.mrb[0].mxu0 %v2874
      %v3088 = vpop.f32.mrb[0].mxu0
      %v3089 = vadd.f32 0.0, %v3088
      %v3090 = vpop.f32.mrb[0].mxu0
      %3091 = vmatprep.mubr.f32.mxu0 0.0
      %3092 = vmatmul.mubr.f32.gmra.mrb[0].mxu0 %v2877
      %v3093 = vpop.f32.mrb[0].mxu0
      %v3094 = vadd.f32 0.0, %v3093
      %v3095 = vpop.f32.mrb[0].mxu0
      %3096 = vmatprep.mubr.f32.mxu0 0.0
      %3097 = vmatmul.mubr.f32.gmra.mrb[0].mxu0 %v2880
      %v3098 = vpop.f32.mrb[0].mxu0
      %v3099 = vadd.f32 0.0, %v3098
      %v3100 = vpop.f32.mrb[0].mxu0
      %3101 = vmatprep.mubr.f32.mxu0 0.0
      %3102 = vmatmul.mubr.f32.gmra.mrb[0].mxu0 %v2883
      %v3103 = vpop.f32.mrb[0].mxu0
      %v3104 = vadd.f32 0.0, %v3103
      %v3105 = vpop.f32.mrb[0].mxu0
      %3106 = vmatprep.mubr.f32.mxu0 0.0
      %3107 = vmatmul.mubr.f32.gmra.mrb[0].mxu0 %v2886
      %v3108 = vpop.f32.mrb[0].mxu0
      %v3109 = vadd.f32 0.0, %v3108
      %v3110 = vpop.f32.mrb[0].mxu0
      %3111 = vmatprep.mubr.f32.mxu0 0.0
      %3112 = vmatmul.mubr.f32.gmra.mrb[0].mxu0 %v2889
      %v3113 = vpop.f32.mrb[0].mxu0
      %v3114 = vadd.f32 0.0, %v3113
      %v3115 = vpop.f32.mrb[0].mxu0
      %3116 = vmatprep.mubr.f32.mxu0 0.0
      %3117 = vmatmul.mubr.f32.gmra.mrb[0].mxu0 %v2892
      %v3118 = vpop.f32.mrb[0].mxu0
      %v3119 = vadd.f32 0.0, %v3118
      %v3120 = vpop.f32.mrb[0].mxu0
      %3121 = vmatprep.mubr.f32.mxu0 0.0
      %3122 = vmatmul.mubr.f32.gmra.mrb[0].mxu0 %v2895
      %v3123 = vpop.f32.mrb[0].mxu0
      %v3124 = vadd.f32 0.0, %v3123
      %v3125 = vpop.f32.mrb[0].mxu0
      %3126 = vmatprep.mubr.f32.mxu0 0.0
      %3127 = vmatmul.mubr.f32.gmra.mrb[0].mxu0 %v2898
      %v3128 = vpop.f32.mrb[0].mxu0
      %v3129 = vadd.f32 0.0, %v3128
      %v3130 = vpop.f32.mrb[0].mxu0
      %3131 = vmatprep.mubr.f32.mxu0 0.0
      %3132 = vmatmul.mubr.f32.gmra.mrb[0].mxu0 %v2901
      %v3133 = vpop.f32.mrb[0].mxu0
      %v3134 = vadd.f32 0.0, %v3133
      %v3135 = vpop.f32.mrb[0].mxu0
      %3136 = vmatprep.mubr.f32.mxu0 0.0
      %3137 = vmatmul.mubr.f32.gmra.mrb[0].mxu0 %v2904
      %v3138 = vpop.f32.mrb[0].mxu0
      %v3139 = vadd.f32 0.0, %v3138
      %v3140 = vpop.f32.mrb[0].mxu0
      %3141 = vmatprep.mubr.f32.mxu0 0.0
      %3142 = vmatmul.mubr.f32.gmra.mrb[0].mxu0 %v2907
      %v3143 = vpop.f32.mrb[0].mxu0
      %v3144 = vadd.f32 0.0, %v3143
      %v3145 = vpop.f32.mrb[0].mxu0
      %3146 = vmatprep.mubr.f32.mxu0 0.0
      %3147 = vmatmul.mubr.f32.gmra.mrb[0].mxu0 %v2910
      %v3148 = vpop.f32.mrb[0].mxu0
      %v3149 = vadd.f32 0.0, %v3148
      %v3150 = vpop.f32.mrb[0].mxu0
      %3151 = vmatprep.mubr.f32.mxu0 0.0
      %3152 = vmatmul.mubr.f32.gmra.mrb[0].mxu0 %v2913
      %v3153 = vpop.f32.mrb[0].mxu0
      %v3154 = vadd.f32 0.0, %v3153
      %v3155 = vpop.f32.mrb[0].mxu0
      %3156 = vmatprep.mubr.f32.mxu0 0.0
      %3157 = vmatmul.mubr.f32.gmra.mrb[0].mxu0 %v2916
      %v3158 = vpop.f32.mrb[0].mxu0
      %v3159 = vadd.f32 0.0, %v3158
      %v3160 = vpop.f32.mrb[0].mxu0
      %3161 = vmatprep.mubr.f32.mxu0 0.0
      %3162 = vmatmul.mubr.f32.gmra.mrb[0].mxu0 %v2919
      %v3163 = vpop.f32.mrb[0].mxu0
      %v3164 = vadd.f32 0.0, %v3163
      %v3165 = vpop.f32.mrb[0].mxu0
      %3166 = vmatprep.mubr.f32.mxu0 0.0
      %3167 = vmatmul.mubr.f32.gmra.mrb[0].mxu0 %v2922
      %v3168 = vpop.f32.mrb[0].mxu0
      %v3169 = vadd.f32 0.0, %v3168
      %v3170 = vpop.f32.mrb[0].mxu0
      %3171 = vdwg.mxu0
      %v3172 = vadd.f32 %v2742, %v2994
      %v3173 = vadd.f32 %v2743, %v2999
      %v3174 = vadd.f32 %v2744, %v3004
      %v3175 = vadd.f32 %v2745, %v3009
      %v3176 = vadd.f32 %v2746, %v3014
      %v3177 = vadd.f32 %v2747, %v3019
      %v3178 = vadd.f32 %v2748, %v3024
      %v3179 = vadd.f32 %v2749, %v3029
      %v3180 = vadd.f32 %v2750, %v3034
      %v3181 = vadd.f32 %v2751, %v3039
      %v3182 = vadd.f32 %v2752, %v3044
      %v3183 = vadd.f32 %v2753, %v3049
      %v3184 = vadd.f32 %v2754, %v3054
      %v3185 = vadd.f32 %v2755, %v3059
      %v3186 = vadd.f32 %v2756, %v3064
      %v3187 = vadd.f32 %v2757, %v3069
      %v3188 = vadd.f32 %v2758, %v3074
      %v3189 = vadd.f32 %v2759, %v3079
      %v3190 = vadd.f32 %v2760, %v3084
      %v3191 = vadd.f32 %v2761, %v3089
      %v3192 = vadd.f32 %v2762, %v3094
      %v3193 = vadd.f32 %v2763, %v3099
      %v3194 = vadd.f32 %v2764, %v3104
      %v3195 = vadd.f32 %v2765, %v3109
      %v3196 = vadd.f32 %v2766, %v3114
      %v3197 = vadd.f32 %v2767, %v3119
      %v3198 = vadd.f32 %v2768, %v3124
      %v3199 = vadd.f32 %v2769, %v3129
      %v3200 = vadd.f32 %v2770, %v3134
      %v3201 = vadd.f32 %v2771, %v3139
      %v3202 = vadd.f32 %v2772, %v3144
      %v3203 = vadd.f32 %v2773, %v3149
      %v3204 = vadd.f32 %v2774, %v3154
      %v3205 = vadd.f32 %v2775, %v3159
      %v3206 = vadd.f32 %v2776, %v3164
      %v3207 = vadd.f32 %v2777, %v3169
      %v3208 = vld [vmem:[%s257 + $0x25] sm:$0xff]
      %v3209 = vld [vmem:[%s257 + $0x2d] sm:$0xff]
      %v3210 = vld [vmem:[%s257 + $0x35] sm:$0xff]
      %v3211 = vld [vmem:[%s257 + $0x3d] sm:$0xff]
      %v3212 = vld [vmem:[%s257 + $0x45] sm:$0xff]
      %v3213 = vld [vmem:[%s257 + $0x4d] sm:$0xff]
      %v3214 = vld [vmem:[%s257 + $0x55] sm:$0xff]
      %v3215 = vld [vmem:[%s257 + $0x5d] sm:$0xff]
      %v3216 = vld [vmem:[%s257 + $0x65] sm:$0xff]
      %v3217 = vld [vmem:[%s257 + $0x6d] sm:$0xff]
      %v3218 = vld [vmem:[%s257 + $0x75] sm:$0xff]
      %v3219 = vld [vmem:[%s257 + $0x7d] sm:$0xff]
      %v3220 = vld [vmem:[%s257 + $0x85] sm:$0xff]
      %v3221 = vld [vmem:[%s257 + $0x8d] sm:$0xff]
      %v3222 = vld [vmem:[%s257 + $0x95] sm:$0xff]
      %v3223 = vld [vmem:[%s257 + $0x9d] sm:$0xff]
      %v3224 = vld [vmem:[%s257 + $0xa5] sm:$0xff]
      %v3225 = vld [vmem:[%s257 + $0xad] sm:$0xff]
      %v3226 = vld [vmem:[%s257 + $0xb5] sm:$0xff]
      %v3227 = vld [vmem:[%s257 + $0xbd] sm:$0xff]
      %v3228 = vld [vmem:[%s257 + $0xc5] sm:$0xff]
      %v3229 = vld [vmem:[%s257 + $0xcd] sm:$0xff]
      %v3230 = vld [vmem:[%s257 + $0xd5] sm:$0xff]
      %v3231 = vld [vmem:[%s257 + $0xdd] sm:$0xff]
      %v3232 = vld [vmem:[%s257 + $0xe5] sm:$0xff]
      %v3233 = vld [vmem:[%s257 + $0xed] sm:$0xff]
      %v3234 = vld [vmem:[%s257 + $0xf5] sm:$0xff]
      %v3235 = vld [vmem:[%s257 + $0xfd] sm:$0xff]
      %v3236 = vld [vmem:[%s257 + $0x105] sm:$0xff]
      %v3237 = vld [vmem:[%s257 + $0x10d] sm:$0xff]
      %v3238 = vld [vmem:[%s257 + $0x115] sm:$0xff]
      %v3239 = vld [vmem:[%s257 + $0x11d] sm:$0xff]
      %v3240 = vld [vmem:[%s257 + $0x125] sm:$0xff]
      %v3241 = vld [vmem:[%s257 + $0x12d] sm:$0xff]
      %v3242 = vld [vmem:[%s257 + $0x135] sm:$0xff]
      %v3243 = vld [vmem:[%s257 + $0x13d] sm:$0xff]
      %s3244 = scalar_lea.vmem %s1, 28
      %v3245 = vld [vmem:[%s3244] sm:$0xf]
      %v3247 = vsel %vm344, %v3208, 0
      %v3250 = vsel %vm344, %v3209, 0
      %v3253 = vsel %vm344, %v3210, 0
      %v3256 = vsel %vm344, %v3211, 0
      %v3259 = vsel %vm344, %v3212, 0
      %v3262 = vsel %vm344, %v3213, 0
      %v3265 = vsel %vm344, %v3214, 0
      %v3268 = vsel %vm344, %v3215, 0
      %v3271 = vsel %vm344, %v3216, 0
      %v3274 = vsel %vm344, %v3217, 0
      %v3277 = vsel %vm344, %v3218, 0
      %v3280 = vsel %vm344, %v3219, 0
      %v3283 = vsel %vm344, %v3220, 0
      %v3286 = vsel %vm344, %v3221, 0
      %v3289 = vsel %vm344, %v3222, 0
      %v3292 = vsel %vm344, %v3223, 0
      %v3295 = vsel %vm344, %v3224, 0
      %v3298 = vsel %vm344, %v3225, 0
      %v3301 = vsel %vm344, %v3226, 0
      %v3304 = vsel %vm344, %v3227, 0
      %v3307 = vsel %vm344, %v3228, 0
      %v3310 = vsel %vm344, %v3229, 0
      %v3313 = vsel %vm344, %v3230, 0
      %v3316 = vsel %vm344, %v3231, 0
      %v3319 = vsel %vm344, %v3232, 0
      %v3322 = vsel %vm344, %v3233, 0
      %v3325 = vsel %vm344, %v3234, 0
      %v3328 = vsel %vm344, %v3235, 0
      %v3331 = vsel %vm344, %v3236, 0
      %v3334 = vsel %vm344, %v3237, 0
      %v3337 = vsel %vm344, %v3238, 0
      %v3340 = vsel %vm344, %v3239, 0
      %v3343 = vsel %vm344, %v3240, 0
      %v3346 = vsel %vm344, %v3241, 0
      %v3349 = vsel %vm344, %v3242, 0
      %v3352 = vsel %vm344, %v3243, 0
      %v3355 = vsel %vm453, %v3245, 0
      %3357 = vmatprep.subr.mxu0 0.0
      %3358 = vmatpush1.msra.mxu0 %v3355
      %3359 = vmatprep.subr.mxu0 0.0
      %3360 = vmatpush1.msra.mxu0 0.0
      %3361 = vmatprep.subr.mxu0 0.0
      %3362 = vmatpush1.msra.mxu0 0.0
      %3363 = vmatprep.subr.mxu0 0.0
      %3364 = vmatpush1.msra.mxu0 0.0
      %3365 = vmatprep.subr.mxu0 0.0
      %3366 = vmatpush1.msra.mxu0 0.0
      %3367 = vmatprep.subr.mxu0 0.0
      %3368 = vmatpush1.msra.mxu0 0.0
      %3369 = vmatprep.subr.mxu0 0.0
      %3370 = vmatpush1.msra.mxu0 0.0
      %3371 = vmatprep.subr.mxu0 0.0
      %3372 = vmatpush1.msra.mxu0 0.0
      %3373 = vmatprep.subr.mxu0 0.0
      %3374 = vmatpush1.msra.mxu0 0.0
      %3375 = vmatprep.subr.mxu0 0.0
      %3376 = vmatpush1.msra.mxu0 0.0
      %3377 = vmatprep.subr.mxu0 0.0
      %3378 = vmatpush1.msra.mxu0 0.0
      %3379 = vmatprep.subr.mxu0 0.0
      %3380 = vmatpush1.msra.mxu0 0.0
      %3381 = vmatprep.subr.mxu0 0.0
      %3382 = vmatpush1.msra.mxu0 0.0
      %3383 = vmatprep.subr.mxu0 0.0
      %3384 = vmatpush1.msra.mxu0 0.0
      %3385 = vmatprep.subr.mxu0 0.0
      %3386 = vmatpush1.msra.mxu0 0.0
      %3387 = vmatprep.subr.mxu0 0.0
      %3388 = vmatpush1.msra.mxu0 0.0
      %3389 = vmatprep.subr.mxu0 0.0
      %3390 = vmatpush1.msra.mxu0 0.0
      %3391 = vmatprep.subr.mxu0 0.0
      %3392 = vmatpush1.msra.mxu0 0.0
      %3393 = vmatprep.subr.mxu0 0.0
      %3394 = vmatpush1.msra.mxu0 0.0
      %3395 = vmatprep.subr.mxu0 0.0
      %3396 = vmatpush1.msra.mxu0 0.0
      %3397 = vmatprep.subr.mxu0 0.0
      %3398 = vmatpush1.msra.mxu0 0.0
      %3399 = vmatprep.subr.mxu0 0.0
      %3400 = vmatpush1.msra.mxu0 0.0
      %3401 = vmatprep.subr.mxu0 0.0
      %3402 = vmatpush1.msra.mxu0 0.0
      %3403 = vmatprep.subr.mxu0 0.0
      %3404 = vmatpush1.msra.mxu0 0.0
      %3405 = vmatprep.subr.mxu0 0.0
      %3406 = vmatpush1.msra.mxu0 0.0
      %3407 = vmatprep.subr.mxu0 0.0
      %3408 = vmatpush1.msra.mxu0 0.0
      %3409 = vmatprep.subr.mxu0 0.0
      %3410 = vmatpush1.msra.mxu0 0.0
      %3411 = vmatprep.subr.mxu0 0.0
      %3412 = vmatpush1.msra.mxu0 0.0
      %3413 = vmatprep.subr.mxu0 0.0
      %3414 = vmatpush1.msra.mxu0 0.0
      %3415 = vmatprep.subr.mxu0 0.0
      %3416 = vmatpush1.msra.mxu0 0.0
      %3417 = vmatprep.subr.mxu0 0.0
      %3418 = vmatpush1.msra.mxu0 0.0
      %3419 = vmatprep.subr.mxu0 0.0
      %3420 = vmatpush1.msra.mxu0 0.0
      %3421 = vmatprep.mubr.f32.mxu0 0.0
      %3422 = vmatmul.mubr.f32.gmra.mrb[0].mxu0 %v3247
      %v3423 = vpop.f32.mrb[0].mxu0
      %v3424 = vadd.f32 0.0, %v3423
      %v3425 = vpop.f32.mrb[0].mxu0
      %3426 = vmatprep.mubr.f32.mxu0 0.0
      %3427 = vmatmul.mubr.f32.gmra.mrb[0].mxu0 %v3250
      %v3428 = vpop.f32.mrb[0].mxu0
      %v3429 = vadd.f32 0.0, %v3428
      %v3430 = vpop.f32.mrb[0].mxu0
      %3431 = vmatprep.mubr.f32.mxu0 0.0
      %3432 = vmatmul.mubr.f32.gmra.mrb[0].mxu0 %v3253
      %v3433 = vpop.f32.mrb[0].mxu0
      %v3434 = vadd.f32 0.0, %v3433
      %v3435 = vpop.f32.mrb[0].mxu0
      %3436 = vmatprep.mubr.f32.mxu0 0.0
      %3437 = vmatmul.mubr.f32.gmra.mrb[0].mxu0 %v3256
      %v3438 = vpop.f32.mrb[0].mxu0
      %v3439 = vadd.f32 0.0, %v3438
      %v3440 = vpop.f32.mrb[0].mxu0
      %3441 = vmatprep.mubr.f32.mxu0 0.0
      %3442 = vmatmul.mubr.f32.gmra.mrb[0].mxu0 %v3259
      %v3443 = vpop.f32.mrb[0].mxu0
      %v3444 = vadd.f32 0.0, %v3443
      %v3445 = vpop.f32.mrb[0].mxu0
      %3446 = vmatprep.mubr.f32.mxu0 0.0
      %3447 = vmatmul.mubr.f32.gmra.mrb[0].mxu0 %v3262
      %v3448 = vpop.f32.mrb[0].mxu0
      %v3449 = vadd.f32 0.0, %v3448
      %v3450 = vpop.f32.mrb[0].mxu0
      %3451 = vmatprep.mubr.f32.mxu0 0.0
      %3452 = vmatmul.mubr.f32.gmra.mrb[0].mxu0 %v3265
      %v3453 = vpop.f32.mrb[0].mxu0
      %v3454 = vadd.f32 0.0, %v3453
      %v3455 = vpop.f32.mrb[0].mxu0
      %3456 = vmatprep.mubr.f32.mxu0 0.0
      %3457 = vmatmul.mubr.f32.gmra.mrb[0].mxu0 %v3268
      %v3458 = vpop.f32.mrb[0].mxu0
      %v3459 = vadd.f32 0.0, %v3458
      %v3460 = vpop.f32.mrb[0].mxu0
      %3461 = vmatprep.mubr.f32.mxu0 0.0
      %3462 = vmatmul.mubr.f32.gmra.mrb[0].mxu0 %v3271
      %v3463 = vpop.f32.mrb[0].mxu0
      %v3464 = vadd.f32 0.0, %v3463
      %v3465 = vpop.f32.mrb[0].mxu0
      %3466 = vmatprep.mubr.f32.mxu0 0.0
      %3467 = vmatmul.mubr.f32.gmra.mrb[0].mxu0 %v3274
      %v3468 = vpop.f32.mrb[0].mxu0
      %v3469 = vadd.f32 0.0, %v3468
      %v3470 = vpop.f32.mrb[0].mxu0
      %3471 = vmatprep.mubr.f32.mxu0 0.0
      %3472 = vmatmul.mubr.f32.gmra.mrb[0].mxu0 %v3277
      %v3473 = vpop.f32.mrb[0].mxu0
      %v3474 = vadd.f32 0.0, %v3473
      %v3475 = vpop.f32.mrb[0].mxu0
      %3476 = vmatprep.mubr.f32.mxu0 0.0
      %3477 = vmatmul.mubr.f32.gmra.mrb[0].mxu0 %v3280
      %v3478 = vpop.f32.mrb[0].mxu0
      %v3479 = vadd.f32 0.0, %v3478
      %v3480 = vpop.f32.mrb[0].mxu0
      %3481 = vmatprep.mubr.f32.mxu0 0.0
      %3482 = vmatmul.mubr.f32.gmra.mrb[0].mxu0 %v3283
      %v3483 = vpop.f32.mrb[0].mxu0
      %v3484 = vadd.f32 0.0, %v3483
      %v3485 = vpop.f32.mrb[0].mxu0
      %3486 = vmatprep.mubr.f32.mxu0 0.0
      %3487 = vmatmul.mubr.f32.gmra.mrb[0].mxu0 %v3286
      %v3488 = vpop.f32.mrb[0].mxu0
      %v3489 = vadd.f32 0.0, %v3488
      %v3490 = vpop.f32.mrb[0].mxu0
      %3491 = vmatprep.mubr.f32.mxu0 0.0
      %3492 = vmatmul.mubr.f32.gmra.mrb[0].mxu0 %v3289
      %v3493 = vpop.f32.mrb[0].mxu0
      %v3494 = vadd.f32 0.0, %v3493
      %v3495 = vpop.f32.mrb[0].mxu0
      %3496 = vmatprep.mubr.f32.mxu0 0.0
      %3497 = vmatmul.mubr.f32.gmra.mrb[0].mxu0 %v3292
      %v3498 = vpop.f32.mrb[0].mxu0
      %v3499 = vadd.f32 0.0, %v3498
      %v3500 = vpop.f32.mrb[0].mxu0
      %3501 = vmatprep.mubr.f32.mxu0 0.0
      %3502 = vmatmul.mubr.f32.gmra.mrb[0].mxu0 %v3295
      %v3503 = vpop.f32.mrb[0].mxu0
      %v3504 = vadd.f32 0.0, %v3503
      %v3505 = vpop.f32.mrb[0].mxu0
      %3506 = vmatprep.mubr.f32.mxu0 0.0
      %3507 = vmatmul.mubr.f32.gmra.mrb[0].mxu0 %v3298
      %v3508 = vpop.f32.mrb[0].mxu0
      %v3509 = vadd.f32 0.0, %v3508
      %v3510 = vpop.f32.mrb[0].mxu0
      %3511 = vmatprep.mubr.f32.mxu0 0.0
      %3512 = vmatmul.mubr.f32.gmra.mrb[0].mxu0 %v3301
      %v3513 = vpop.f32.mrb[0].mxu0
      %v3514 = vadd.f32 0.0, %v3513
      %v3515 = vpop.f32.mrb[0].mxu0
      %3516 = vmatprep.mubr.f32.mxu0 0.0
      %3517 = vmatmul.mubr.f32.gmra.mrb[0].mxu0 %v3304
      %v3518 = vpop.f32.mrb[0].mxu0
      %v3519 = vadd.f32 0.0, %v3518
      %v3520 = vpop.f32.mrb[0].mxu0
      %3521 = vmatprep.mubr.f32.mxu0 0.0
      %3522 = vmatmul.mubr.f32.gmra.mrb[0].mxu0 %v3307
      %v3523 = vpop.f32.mrb[0].mxu0
      %v3524 = vadd.f32 0.0, %v3523
      %v3525 = vpop.f32.mrb[0].mxu0
      %3526 = vmatprep.mubr.f32.mxu0 0.0
      %3527 = vmatmul.mubr.f32.gmra.mrb[0].mxu0 %v3310
      %v3528 = vpop.f32.mrb[0].mxu0
      %v3529 = vadd.f32 0.0, %v3528
      %v3530 = vpop.f32.mrb[0].mxu0
      %3531 = vmatprep.mubr.f32.mxu0 0.0
      %3532 = vmatmul.mubr.f32.gmra.mrb[0].mxu0 %v3313
      %v3533 = vpop.f32.mrb[0].mxu0
      %v3534 = vadd.f32 0.0, %v3533
      %v3535 = vpop.f32.mrb[0].mxu0
      %3536 = vmatprep.mubr.f32.mxu0 0.0
      %3537 = vmatmul.mubr.f32.gmra.mrb[0].mxu0 %v3316
      %v3538 = vpop.f32.mrb[0].mxu0
      %v3539 = vadd.f32 0.0, %v3538
      %v3540 = vpop.f32.mrb[0].mxu0
      %3541 = vmatprep.mubr.f32.mxu0 0.0
      %3542 = vmatmul.mubr.f32.gmra.mrb[0].mxu0 %v3319
      %v3543 = vpop.f32.mrb[0].mxu0
      %v3544 = vadd.f32 0.0, %v3543
      %v3545 = vpop.f32.mrb[0].mxu0
      %3546 = vmatprep.mubr.f32.mxu0 0.0
      %3547 = vmatmul.mubr.f32.gmra.mrb[0].mxu0 %v3322
      %v3548 = vpop.f32.mrb[0].mxu0
      %v3549 = vadd.f32 0.0, %v3548
      %v3550 = vpop.f32.mrb[0].mxu0
      %3551 = vmatprep.mubr.f32.mxu0 0.0
      %3552 = vmatmul.mubr.f32.gmra.mrb[0].mxu0 %v3325
      %v3553 = vpop.f32.mrb[0].mxu0
      %v3554 = vadd.f32 0.0, %v3553
      %v3555 = vpop.f32.mrb[0].mxu0
      %3556 = vmatprep.mubr.f32.mxu0 0.0
      %3557 = vmatmul.mubr.f32.gmra.mrb[0].mxu0 %v3328
      %v3558 = vpop.f32.mrb[0].mxu0
      %v3559 = vadd.f32 0.0, %v3558
      %v3560 = vpop.f32.mrb[0].mxu0
      %3561 = vmatprep.mubr.f32.mxu0 0.0
      %3562 = vmatmul.mubr.f32.gmra.mrb[0].mxu0 %v3331
      %v3563 = vpop.f32.mrb[0].mxu0
      %v3564 = vadd.f32 0.0, %v3563
      %v3565 = vpop.f32.mrb[0].mxu0
      %3566 = vmatprep.mubr.f32.mxu0 0.0
      %3567 = vmatmul.mubr.f32.gmra.mrb[0].mxu0 %v3334
      %v3568 = vpop.f32.mrb[0].mxu0
      %v3569 = vadd.f32 0.0, %v3568
      %v3570 = vpop.f32.mrb[0].mxu0
      %3571 = vmatprep.mubr.f32.mxu0 0.0
      %3572 = vmatmul.mubr.f32.gmra.mrb[0].mxu0 %v3337
      %v3573 = vpop.f32.mrb[0].mxu0
      %v3574 = vadd.f32 0.0, %v3573
      %v3575 = vpop.f32.mrb[0].mxu0
      %3576 = vmatprep.mubr.f32.mxu0 0.0
      %3577 = vmatmul.mubr.f32.gmra.mrb[0].mxu0 %v3340
      %v3578 = vpop.f32.mrb[0].mxu0
      %v3579 = vadd.f32 0.0, %v3578
      %v3580 = vpop.f32.mrb[0].mxu0
      %3581 = vmatprep.mubr.f32.mxu0 0.0
      %3582 = vmatmul.mubr.f32.gmra.mrb[0].mxu0 %v3343
      %v3583 = vpop.f32.mrb[0].mxu0
      %v3584 = vadd.f32 0.0, %v3583
      %v3585 = vpop.f32.mrb[0].mxu0
      %3586 = vmatprep.mubr.f32.mxu0 0.0
      %3587 = vmatmul.mubr.f32.gmra.mrb[0].mxu0 %v3346
      %v3588 = vpop.f32.mrb[0].mxu0
      %v3589 = vadd.f32 0.0, %v3588
      %v3590 = vpop.f32.mrb[0].mxu0
      %3591 = vmatprep.mubr.f32.mxu0 0.0
      %3592 = vmatmul.mubr.f32.gmra.mrb[0].mxu0 %v3349
      %v3593 = vpop.f32.mrb[0].mxu0
      %v3594 = vadd.f32 0.0, %v3593
      %v3595 = vpop.f32.mrb[0].mxu0
      %3596 = vmatprep.mubr.f32.mxu0 0.0
      %3597 = vmatmul.mubr.f32.gmra.mrb[0].mxu0 %v3352
      %v3598 = vpop.f32.mrb[0].mxu0
      %v3599 = vadd.f32 0.0, %v3598
      %v3600 = vpop.f32.mrb[0].mxu0
      %3601 = vdwg.mxu0
      %v3602 = vadd.f32 %v3172, %v3424
      %v3603 = vadd.f32 %v3173, %v3429
      %v3604 = vadd.f32 %v3174, %v3434
      %v3605 = vadd.f32 %v3175, %v3439
      %v3606 = vadd.f32 %v3176, %v3444
      %v3607 = vadd.f32 %v3177, %v3449
      %v3608 = vadd.f32 %v3178, %v3454
      %v3609 = vadd.f32 %v3179, %v3459
      %v3610 = vadd.f32 %v3180, %v3464
      %v3611 = vadd.f32 %v3181, %v3469
      %v3612 = vadd.f32 %v3182, %v3474
      %v3613 = vadd.f32 %v3183, %v3479
      %v3614 = vadd.f32 %v3184, %v3484
      %v3615 = vadd.f32 %v3185, %v3489
      %v3616 = vadd.f32 %v3186, %v3494
      %v3617 = vadd.f32 %v3187, %v3499
      %v3618 = vadd.f32 %v3188, %v3504
      %v3619 = vadd.f32 %v3189, %v3509
      %v3620 = vadd.f32 %v3190, %v3514
      %v3621 = vadd.f32 %v3191, %v3519
      %v3622 = vadd.f32 %v3192, %v3524
      %v3623 = vadd.f32 %v3193, %v3529
      %v3624 = vadd.f32 %v3194, %v3534
      %v3625 = vadd.f32 %v3195, %v3539
      %v3626 = vadd.f32 %v3196, %v3544
      %v3627 = vadd.f32 %v3197, %v3549
      %v3628 = vadd.f32 %v3198, %v3554
      %v3629 = vadd.f32 %v3199, %v3559
      %v3630 = vadd.f32 %v3200, %v3564
      %v3631 = vadd.f32 %v3201, %v3569
      %v3632 = vadd.f32 %v3202, %v3574
      %v3633 = vadd.f32 %v3203, %v3579
      %v3634 = vadd.f32 %v3204, %v3584
      %v3635 = vadd.f32 %v3205, %v3589
      %v3636 = vadd.f32 %v3206, %v3594
      %v3637 = vadd.f32 %v3207, %v3599
      %v3638 = vld [vmem:[%s257 + $0x26] sm:$0xff]
      %v3639 = vld [vmem:[%s257 + $0x2e] sm:$0xff]
      %v3640 = vld [vmem:[%s257 + $0x36] sm:$0xff]
      %v3641 = vld [vmem:[%s257 + $0x3e] sm:$0xff]
      %v3642 = vld [vmem:[%s257 + $0x46] sm:$0xff]
      %v3643 = vld [vmem:[%s257 + $0x4e] sm:$0xff]
      %v3644 = vld [vmem:[%s257 + $0x56] sm:$0xff]
      %v3645 = vld [vmem:[%s257 + $0x5e] sm:$0xff]
      %v3646 = vld [vmem:[%s257 + $0x66] sm:$0xff]
      %v3647 = vld [vmem:[%s257 + $0x6e] sm:$0xff]
      %v3648 = vld [vmem:[%s257 + $0x76] sm:$0xff]
      %v3649 = vld [vmem:[%s257 + $0x7e] sm:$0xff]
      %v3650 = vld [vmem:[%s257 + $0x86] sm:$0xff]
      %v3651 = vld [vmem:[%s257 + $0x8e] sm:$0xff]
      %v3652 = vld [vmem:[%s257 + $0x96] sm:$0xff]
      %v3653 = vld [vmem:[%s257 + $0x9e] sm:$0xff]
      %v3654 = vld [vmem:[%s257 + $0xa6] sm:$0xff]
      %v3655 = vld [vmem:[%s257 + $0xae] sm:$0xff]
      %v3656 = vld [vmem:[%s257 + $0xb6] sm:$0xff]
      %v3657 = vld [vmem:[%s257 + $0xbe] sm:$0xff]
      %v3658 = vld [vmem:[%s257 + $0xc6] sm:$0xff]
      %v3659 = vld [vmem:[%s257 + $0xce] sm:$0xff]
      %v3660 = vld [vmem:[%s257 + $0xd6] sm:$0xff]
      %v3661 = vld [vmem:[%s257 + $0xde] sm:$0xff]
      %v3662 = vld [vmem:[%s257 + $0xe6] sm:$0xff]
      %v3663 = vld [vmem:[%s257 + $0xee] sm:$0xff]
      %v3664 = vld [vmem:[%s257 + $0xf6] sm:$0xff]
      %v3665 = vld [vmem:[%s257 + $0xfe] sm:$0xff]
      %v3666 = vld [vmem:[%s257 + $0x106] sm:$0xff]
      %v3667 = vld [vmem:[%s257 + $0x10e] sm:$0xff]
      %v3668 = vld [vmem:[%s257 + $0x116] sm:$0xff]
      %v3669 = vld [vmem:[%s257 + $0x11e] sm:$0xff]
      %v3670 = vld [vmem:[%s257 + $0x126] sm:$0xff]
      %v3671 = vld [vmem:[%s257 + $0x12e] sm:$0xff]
      %v3672 = vld [vmem:[%s257 + $0x136] sm:$0xff]
      %v3673 = vld [vmem:[%s257 + $0x13e] sm:$0xff]
      %s3674 = scalar_lea.vmem %s1, 32
      %v3675 = vld [vmem:[%s3674] sm:$0xf]
      %v3677 = vsel %vm344, %v3638, 0
      %v3680 = vsel %vm344, %v3639, 0
      %v3683 = vsel %vm344, %v3640, 0
      %v3686 = vsel %vm344, %v3641, 0
      %v3689 = vsel %vm344, %v3642, 0
      %v3692 = vsel %vm344, %v3643, 0
      %v3695 = vsel %vm344, %v3644, 0
      %v3698 = vsel %vm344, %v3645, 0
      %v3701 = vsel %vm344, %v3646, 0
      %v3704 = vsel %vm344, %v3647, 0
      %v3707 = vsel %vm344, %v3648, 0
      %v3710 = vsel %vm344, %v3649, 0
      %v3713 = vsel %vm344, %v3650, 0
      %v3716 = vsel %vm344, %v3651, 0
      %v3719 = vsel %vm344, %v3652, 0
      %v3722 = vsel %vm344, %v3653, 0
      %v3725 = vsel %vm344, %v3654, 0
      %v3728 = vsel %vm344, %v3655, 0
      %v3731 = vsel %vm344, %v3656, 0
      %v3734 = vsel %vm344, %v3657, 0
      %v3737 = vsel %vm344, %v3658, 0
      %v3740 = vsel %vm344, %v3659, 0
      %v3743 = vsel %vm344, %v3660, 0
      %v3746 = vsel %vm344, %v3661, 0
      %v3749 = vsel %vm344, %v3662, 0
      %v3752 = vsel %vm344, %v3663, 0
      %v3755 = vsel %vm344, %v3664, 0
      %v3758 = vsel %vm344, %v3665, 0
      %v3761 = vsel %vm344, %v3666, 0
      %v3764 = vsel %vm344, %v3667, 0
      %v3767 = vsel %vm344, %v3668, 0
      %v3770 = vsel %vm344, %v3669, 0
      %v3773 = vsel %vm344, %v3670, 0
      %v3776 = vsel %vm344, %v3671, 0
      %v3779 = vsel %vm344, %v3672, 0
      %v3782 = vsel %vm344, %v3673, 0
      %v3785 = vsel %vm453, %v3675, 0
      %3787 = vmatprep.subr.mxu0 0.0
      %3788 = vmatpush1.msra.mxu0 %v3785
      %3789 = vmatprep.subr.mxu0 0.0
      %3790 = vmatpush1.msra.mxu0 0.0
      %3791 = vmatprep.subr.mxu0 0.0
      %3792 = vmatpush1.msra.mxu0 0.0
      %3793 = vmatprep.subr.mxu0 0.0
      %3794 = vmatpush1.msra.mxu0 0.0
      %3795 = vmatprep.subr.mxu0 0.0
      %3796 = vmatpush1.msra.mxu0 0.0
      %3797 = vmatprep.subr.mxu0 0.0
      %3798 = vmatpush1.msra.mxu0 0.0
      %3799 = vmatprep.subr.mxu0 0.0
      %3800 = vmatpush1.msra.mxu0 0.0
      %3801 = vmatprep.subr.mxu0 0.0
      %3802 = vmatpush1.msra.mxu0 0.0
      %3803 = vmatprep.subr.mxu0 0.0
      %3804 = vmatpush1.msra.mxu0 0.0
      %3805 = vmatprep.subr.mxu0 0.0
      %3806 = vmatpush1.msra.mxu0 0.0
      %3807 = vmatprep.subr.mxu0 0.0
      %3808 = vmatpush1.msra.mxu0 0.0
      %3809 = vmatprep.subr.mxu0 0.0
      %3810 = vmatpush1.msra.mxu0 0.0
      %3811 = vmatprep.subr.mxu0 0.0
      %3812 = vmatpush1.msra.mxu0 0.0
      %3813 = vmatprep.subr.mxu0 0.0
      %3814 = vmatpush1.msra.mxu0 0.0
      %3815 = vmatprep.subr.mxu0 0.0
      %3816 = vmatpush1.msra.mxu0 0.0
      %3817 = vmatprep.subr.mxu0 0.0
      %3818 = vmatpush1.msra.mxu0 0.0
      %3819 = vmatprep.subr.mxu0 0.0
      %3820 = vmatpush1.msra.mxu0 0.0
      %3821 = vmatprep.subr.mxu0 0.0
      %3822 = vmatpush1.msra.mxu0 0.0
      %3823 = vmatprep.subr.mxu0 0.0
      %3824 = vmatpush1.msra.mxu0 0.0
      %3825 = vmatprep.subr.mxu0 0.0
      %3826 = vmatpush1.msra.mxu0 0.0
      %3827 = vmatprep.subr.mxu0 0.0
      %3828 = vmatpush1.msra.mxu0 0.0
      %3829 = vmatprep.subr.mxu0 0.0
      %3830 = vmatpush1.msra.mxu0 0.0
      %3831 = vmatprep.subr.mxu0 0.0
      %3832 = vmatpush1.msra.mxu0 0.0
      %3833 = vmatprep.subr.mxu0 0.0
      %3834 = vmatpush1.msra.mxu0 0.0
      %3835 = vmatprep.subr.mxu0 0.0
      %3836 = vmatpush1.msra.mxu0 0.0
      %3837 = vmatprep.subr.mxu0 0.0
      %3838 = vmatpush1.msra.mxu0 0.0
      %3839 = vmatprep.subr.mxu0 0.0
      %3840 = vmatpush1.msra.mxu0 0.0
      %3841 = vmatprep.subr.mxu0 0.0
      %3842 = vmatpush1.msra.mxu0 0.0
      %3843 = vmatprep.subr.mxu0 0.0
      %3844 = vmatpush1.msra.mxu0 0.0
      %3845 = vmatprep.subr.mxu0 0.0
      %3846 = vmatpush1.msra.mxu0 0.0
      %3847 = vmatprep.subr.mxu0 0.0
      %3848 = vmatpush1.msra.mxu0 0.0
      %3849 = vmatprep.subr.mxu0 0.0
      %3850 = vmatpush1.msra.mxu0 0.0
      %3851 = vmatprep.mubr.f32.mxu0 0.0
      %3852 = vmatmul.mubr.f32.gmra.mrb[0].mxu0 %v3677
      %v3853 = vpop.f32.mrb[0].mxu0
      %v3854 = vadd.f32 0.0, %v3853
      %v3855 = vpop.f32.mrb[0].mxu0
      %3856 = vmatprep.mubr.f32.mxu0 0.0
      %3857 = vmatmul.mubr.f32.gmra.mrb[0].mxu0 %v3680
      %v3858 = vpop.f32.mrb[0].mxu0
      %v3859 = vadd.f32 0.0, %v3858
      %v3860 = vpop.f32.mrb[0].mxu0
      %3861 = vmatprep.mubr.f32.mxu0 0.0
      %3862 = vmatmul.mubr.f32.gmra.mrb[0].mxu0 %v3683
      %v3863 = vpop.f32.mrb[0].mxu0
      %v3864 = vadd.f32 0.0, %v3863
      %v3865 = vpop.f32.mrb[0].mxu0
      %3866 = vmatprep.mubr.f32.mxu0 0.0
      %3867 = vmatmul.mubr.f32.gmra.mrb[0].mxu0 %v3686
      %v3868 = vpop.f32.mrb[0].mxu0
      %v3869 = vadd.f32 0.0, %v3868
      %v3870 = vpop.f32.mrb[0].mxu0
      %3871 = vmatprep.mubr.f32.mxu0 0.0
      %3872 = vmatmul.mubr.f32.gmra.mrb[0].mxu0 %v3689
      %v3873 = vpop.f32.mrb[0].mxu0
      %v3874 = vadd.f32 0.0, %v3873
      %v3875 = vpop.f32.mrb[0].mxu0
      %3876 = vmatprep.mubr.f32.mxu0 0.0
      %3877 = vmatmul.mubr.f32.gmra.mrb[0].mxu0 %v3692
      %v3878 = vpop.f32.mrb[0].mxu0
      %v3879 = vadd.f32 0.0, %v3878
      %v3880 = vpop.f32.mrb[0].mxu0
      %3881 = vmatprep.mubr.f32.mxu0 0.0
      %3882 = vmatmul.mubr.f32.gmra.mrb[0].mxu0 %v3695
      %v3883 = vpop.f32.mrb[0].mxu0
      %v3884 = vadd.f32 0.0, %v3883
      %v3885 = vpop.f32.mrb[0].mxu0
      %3886 = vmatprep.mubr.f32.mxu0 0.0
      %3887 = vmatmul.mubr.f32.gmra.mrb[0].mxu0 %v3698
      %v3888 = vpop.f32.mrb[0].mxu0
      %v3889 = vadd.f32 0.0, %v3888
      %v3890 = vpop.f32.mrb[0].mxu0
      %3891 = vmatprep.mubr.f32.mxu0 0.0
      %3892 = vmatmul.mubr.f32.gmra.mrb[0].mxu0 %v3701
      %v3893 = vpop.f32.mrb[0].mxu0
      %v3894 = vadd.f32 0.0, %v3893
      %v3895 = vpop.f32.mrb[0].mxu0
      %3896 = vmatprep.mubr.f32.mxu0 0.0
      %3897 = vmatmul.mubr.f32.gmra.mrb[0].mxu0 %v3704
      %v3898 = vpop.f32.mrb[0].mxu0
      %v3899 = vadd.f32 0.0, %v3898
      %v3900 = vpop.f32.mrb[0].mxu0
      %3901 = vmatprep.mubr.f32.mxu0 0.0
      %3902 = vmatmul.mubr.f32.gmra.mrb[0].mxu0 %v3707
      %v3903 = vpop.f32.mrb[0].mxu0
      %v3904 = vadd.f32 0.0, %v3903
      %v3905 = vpop.f32.mrb[0].mxu0
      %3906 = vmatprep.mubr.f32.mxu0 0.0
      %3907 = vmatmul.mubr.f32.gmra.mrb[0].mxu0 %v3710
      %v3908 = vpop.f32.mrb[0].mxu0
      %v3909 = vadd.f32 0.0, %v3908
      %v3910 = vpop.f32.mrb[0].mxu0
      %3911 = vmatprep.mubr.f32.mxu0 0.0
      %3912 = vmatmul.mubr.f32.gmra.mrb[0].mxu0 %v3713
      %v3913 = vpop.f32.mrb[0].mxu0
      %v3914 = vadd.f32 0.0, %v3913
      %v3915 = vpop.f32.mrb[0].mxu0
      %3916 = vmatprep.mubr.f32.mxu0 0.0
      %3917 = vmatmul.mubr.f32.gmra.mrb[0].mxu0 %v3716
      %v3918 = vpop.f32.mrb[0].mxu0
      %v3919 = vadd.f32 0.0, %v3918
      %v3920 = vpop.f32.mrb[0].mxu0
      %3921 = vmatprep.mubr.f32.mxu0 0.0
      %3922 = vmatmul.mubr.f32.gmra.mrb[0].mxu0 %v3719
      %v3923 = vpop.f32.mrb[0].mxu0
      %v3924 = vadd.f32 0.0, %v3923
      %v3925 = vpop.f32.mrb[0].mxu0
      %3926 = vmatprep.mubr.f32.mxu0 0.0
      %3927 = vmatmul.mubr.f32.gmra.mrb[0].mxu0 %v3722
      %v3928 = vpop.f32.mrb[0].mxu0
      %v3929 = vadd.f32 0.0, %v3928
      %v3930 = vpop.f32.mrb[0].mxu0
      %3931 = vmatprep.mubr.f32.mxu0 0.0
      %3932 = vmatmul.mubr.f32.gmra.mrb[0].mxu0 %v3725
      %v3933 = vpop.f32.mrb[0].mxu0
      %v3934 = vadd.f32 0.0, %v3933
      %v3935 = vpop.f32.mrb[0].mxu0
      %3936 = vmatprep.mubr.f32.mxu0 0.0
      %3937 = vmatmul.mubr.f32.gmra.mrb[0].mxu0 %v3728
      %v3938 = vpop.f32.mrb[0].mxu0
      %v3939 = vadd.f32 0.0, %v3938
      %v3940 = vpop.f32.mrb[0].mxu0
      %3941 = vmatprep.mubr.f32.mxu0 0.0
      %3942 = vmatmul.mubr.f32.gmra.mrb[0].mxu0 %v3731
      %v3943 = vpop.f32.mrb[0].mxu0
      %v3944 = vadd.f32 0.0, %v3943
      %v3945 = vpop.f32.mrb[0].mxu0
      %3946 = vmatprep.mubr.f32.mxu0 0.0
      %3947 = vmatmul.mubr.f32.gmra.mrb[0].mxu0 %v3734
      %v3948 = vpop.f32.mrb[0].mxu0
      %v3949 = vadd.f32 0.0, %v3948
      %v3950 = vpop.f32.mrb[0].mxu0
      %3951 = vmatprep.mubr.f32.mxu0 0.0
      %3952 = vmatmul.mubr.f32.gmra.mrb[0].mxu0 %v3737
      %v3953 = vpop.f32.mrb[0].mxu0
      %v3954 = vadd.f32 0.0, %v3953
      %v3955 = vpop.f32.mrb[0].mxu0
      %3956 = vmatprep.mubr.f32.mxu0 0.0
      %3957 = vmatmul.mubr.f32.gmra.mrb[0].mxu0 %v3740
      %v3958 = vpop.f32.mrb[0].mxu0
      %v3959 = vadd.f32 0.0, %v3958
      %v3960 = vpop.f32.mrb[0].mxu0
      %3961 = vmatprep.mubr.f32.mxu0 0.0
      %3962 = vmatmul.mubr.f32.gmra.mrb[0].mxu0 %v3743
      %v3963 = vpop.f32.mrb[0].mxu0
      %v3964 = vadd.f32 0.0, %v3963
      %v3965 = vpop.f32.mrb[0].mxu0
      %3966 = vmatprep.mubr.f32.mxu0 0.0
      %3967 = vmatmul.mubr.f32.gmra.mrb[0].mxu0 %v3746
      %v3968 = vpop.f32.mrb[0].mxu0
      %v3969 = vadd.f32 0.0, %v3968
      %v3970 = vpop.f32.mrb[0].mxu0
      %3971 = vmatprep.mubr.f32.mxu0 0.0
      %3972 = vmatmul.mubr.f32.gmra.mrb[0].mxu0 %v3749
      %v3973 = vpop.f32.mrb[0].mxu0
      %v3974 = vadd.f32 0.0, %v3973
      %v3975 = vpop.f32.mrb[0].mxu0
      %3976 = vmatprep.mubr.f32.mxu0 0.0
      %3977 = vmatmul.mubr.f32.gmra.mrb[0].mxu0 %v3752
      %v3978 = vpop.f32.mrb[0].mxu0
      %v3979 = vadd.f32 0.0, %v3978
      %v3980 = vpop.f32.mrb[0].mxu0
      %3981 = vmatprep.mubr.f32.mxu0 0.0
      %3982 = vmatmul.mubr.f32.gmra.mrb[0].mxu0 %v3755
      %v3983 = vpop.f32.mrb[0].mxu0
      %v3984 = vadd.f32 0.0, %v3983
      %v3985 = vpop.f32.mrb[0].mxu0
      %3986 = vmatprep.mubr.f32.mxu0 0.0
      %3987 = vmatmul.mubr.f32.gmra.mrb[0].mxu0 %v3758
      %v3988 = vpop.f32.mrb[0].mxu0
      %v3989 = vadd.f32 0.0, %v3988
      %v3990 = vpop.f32.mrb[0].mxu0
      %3991 = vmatprep.mubr.f32.mxu0 0.0
      %3992 = vmatmul.mubr.f32.gmra.mrb[0].mxu0 %v3761
      %v3993 = vpop.f32.mrb[0].mxu0
      %v3994 = vadd.f32 0.0, %v3993
      %v3995 = vpop.f32.mrb[0].mxu0
      %3996 = vmatprep.mubr.f32.mxu0 0.0
      %3997 = vmatmul.mubr.f32.gmra.mrb[0].mxu0 %v3764
      %v3998 = vpop.f32.mrb[0].mxu0
      %v3999 = vadd.f32 0.0, %v3998
      %v4000 = vpop.f32.mrb[0].mxu0
      %4001 = vmatprep.mubr.f32.mxu0 0.0
      %4002 = vmatmul.mubr.f32.gmra.mrb[0].mxu0 %v3767
      %v4003 = vpop.f32.mrb[0].mxu0
      %v4004 = vadd.f32 0.0, %v4003
      %v4005 = vpop.f32.mrb[0].mxu0
      %4006 = vmatprep.mubr.f32.mxu0 0.0
      %4007 = vmatmul.mubr.f32.gmra.mrb[0].mxu0 %v3770
      %v4008 = vpop.f32.mrb[0].mxu0
      %v4009 = vadd.f32 0.0, %v4008
      %v4010 = vpop.f32.mrb[0].mxu0
      %4011 = vmatprep.mubr.f32.mxu0 0.0
      %4012 = vmatmul.mubr.f32.gmra.mrb[0].mxu0 %v3773
      %v4013 = vpop.f32.mrb[0].mxu0
      %v4014 = vadd.f32 0.0, %v4013
      %v4015 = vpop.f32.mrb[0].mxu0
      %4016 = vmatprep.mubr.f32.mxu0 0.0
      %4017 = vmatmul.mubr.f32.gmra.mrb[0].mxu0 %v3776
      %v4018 = vpop.f32.mrb[0].mxu0
      %v4019 = vadd.f32 0.0, %v4018
      %v4020 = vpop.f32.mrb[0].mxu0
      %4021 = vmatprep.mubr.f32.mxu0 0.0
      %4022 = vmatmul.mubr.f32.gmra.mrb[0].mxu0 %v3779
      %v4023 = vpop.f32.mrb[0].mxu0
      %v4024 = vadd.f32 0.0, %v4023
      %v4025 = vpop.f32.mrb[0].mxu0
      %4026 = vmatprep.mubr.f32.mxu0 0.0
      %4027 = vmatmul.mubr.f32.gmra.mrb[0].mxu0 %v3782
      %v4028 = vpop.f32.mrb[0].mxu0
      %v4029 = vadd.f32 0.0, %v4028
      %v4030 = vpop.f32.mrb[0].mxu0
      %4031 = vdwg.mxu0
      %v4032 = vadd.f32 %v3602, %v3854
      %v4033 = vadd.f32 %v3603, %v3859
      %v4034 = vadd.f32 %v3604, %v3864
      %v4035 = vadd.f32 %v3605, %v3869
      %v4036 = vadd.f32 %v3606, %v3874
      %v4037 = vadd.f32 %v3607, %v3879
      %v4038 = vadd.f32 %v3608, %v3884
      %v4039 = vadd.f32 %v3609, %v3889
      %v4040 = vadd.f32 %v3610, %v3894
      %v4041 = vadd.f32 %v3611, %v3899
      %v4042 = vadd.f32 %v3612, %v3904
      %v4043 = vadd.f32 %v3613, %v3909
      %v4044 = vadd.f32 %v3614, %v3914
      %v4045 = vadd.f32 %v3615, %v3919
      %v4046 = vadd.f32 %v3616, %v3924
      %v4047 = vadd.f32 %v3617, %v3929
      %v4048 = vadd.f32 %v3618, %v3934
      %v4049 = vadd.f32 %v3619, %v3939
      %v4050 = vadd.f32 %v3620, %v3944
      %v4051 = vadd.f32 %v3621, %v3949
      %v4052 = vadd.f32 %v3622, %v3954
      %v4053 = vadd.f32 %v3623, %v3959
      %v4054 = vadd.f32 %v3624, %v3964
      %v4055 = vadd.f32 %v3625, %v3969
      %v4056 = vadd.f32 %v3626, %v3974
      %v4057 = vadd.f32 %v3627, %v3979
      %v4058 = vadd.f32 %v3628, %v3984
      %v4059 = vadd.f32 %v3629, %v3989
      %v4060 = vadd.f32 %v3630, %v3994
      %v4061 = vadd.f32 %v3631, %v3999
      %v4062 = vadd.f32 %v3632, %v4004
      %v4063 = vadd.f32 %v3633, %v4009
      %v4064 = vadd.f32 %v3634, %v4014
      %v4065 = vadd.f32 %v3635, %v4019
      %v4066 = vadd.f32 %v3636, %v4024
      %v4067 = vadd.f32 %v3637, %v4029
      %v4068 = vld [vmem:[%s2] sm:$0x1]
      %v4070 = vlaneseq
      %v4071 = vshrl.u32 %v4070, 7
      %v4072 = vsub.s32 0, %v4071
      %v4073 = vrot.slane %v4068, %v4072
      %v4075 = vadd.f32 %v4032, %v4073
      %v4076 = vadd.f32 %v4033, %v4073
      %v4077 = vadd.f32 %v4034, %v4073
      %v4078 = vadd.f32 %v4035, %v4073
      %v4079 = vadd.f32 %v4036, %v4073
      %v4080 = vadd.f32 %v4037, %v4073
      %v4081 = vadd.f32 %v4038, %v4073
      %v4082 = vadd.f32 %v4039, %v4073
      %v4083 = vadd.f32 %v4040, %v4073
      %v4084 = vadd.f32 %v4041, %v4073
      %v4085 = vadd.f32 %v4042, %v4073
      %v4086 = vadd.f32 %v4043, %v4073
      %v4087 = vadd.f32 %v4044, %v4073
      %v4088 = vadd.f32 %v4045, %v4073
      %v4089 = vadd.f32 %v4046, %v4073
      %v4090 = vadd.f32 %v4047, %v4073
      %v4091 = vadd.f32 %v4048, %v4073
      %v4092 = vadd.f32 %v4049, %v4073
      %v4093 = vadd.f32 %v4050, %v4073
      %v4094 = vadd.f32 %v4051, %v4073
      %v4095 = vadd.f32 %v4052, %v4073
      %v4096 = vadd.f32 %v4053, %v4073
      %v4097 = vadd.f32 %v4054, %v4073
      %v4098 = vadd.f32 %v4055, %v4073
      %v4099 = vadd.f32 %v4056, %v4073
      %v4100 = vadd.f32 %v4057, %v4073
      %v4101 = vadd.f32 %v4058, %v4073
      %v4102 = vadd.f32 %v4059, %v4073
      %v4103 = vadd.f32 %v4060, %v4073
      %v4104 = vadd.f32 %v4061, %v4073
      %v4105 = vadd.f32 %v4062, %v4073
      %v4106 = vadd.f32 %v4063, %v4073
      %v4107 = vadd.f32 %v4064, %v4073
      %v4108 = vadd.f32 %v4065, %v4073
      %v4109 = vadd.f32 %v4066, %v4073
      %v4110 = vadd.f32 %v4067, %v4073
      %vm4111 = vcmask 64512
      %4112 = vst.msk [vmem:[%s262] sm:$0xff] %vm4111, %v4075
      %4113 = vst.msk [vmem:[%s262 + $0x8] sm:$0xff] %vm4111, %v4076
      %4114 = vst.msk [vmem:[%s262 + $0x10] sm:$0xff] %vm4111, %v4077
      %4115 = vst.msk [vmem:[%s262 + $0x18] sm:$0xff] %vm4111, %v4078
      %4116 = vst.msk [vmem:[%s262 + $0x20] sm:$0xff] %vm4111, %v4079
      %4117 = vst.msk [vmem:[%s262 + $0x28] sm:$0xff] %vm4111, %v4080
      %4118 = vst.msk [vmem:[%s262 + $0x30] sm:$0xff] %vm4111, %v4081
      %4119 = vst.msk [vmem:[%s262 + $0x38] sm:$0xff] %vm4111, %v4082
      %4120 = vst.msk [vmem:[%s262 + $0x40] sm:$0xff] %vm4111, %v4083
      %4121 = vst.msk [vmem:[%s262 + $0x48] sm:$0xff] %vm4111, %v4084
      %4122 = vst.msk [vmem:[%s262 + $0x50] sm:$0xff] %vm4111, %v4085
      %4123 = vst.msk [vmem:[%s262 + $0x58] sm:$0xff] %vm4111, %v4086
      %4124 = vst.msk [vmem:[%s262 + $0x60] sm:$0xff] %vm4111, %v4087
      %4125 = vst.msk [vmem:[%s262 + $0x68] sm:$0xff] %vm4111, %v4088
      %4126 = vst.msk [vmem:[%s262 + $0x70] sm:$0xff] %vm4111, %v4089
      %4127 = vst.msk [vmem:[%s262 + $0x78] sm:$0xff] %vm4111, %v4090
      %4128 = vst.msk [vmem:[%s262 + $0x80] sm:$0xff] %vm4111, %v4091
      %4129 = vst.msk [vmem:[%s262 + $0x88] sm:$0xff] %vm4111, %v4092
      %4130 = vst.msk [vmem:[%s262 + $0x90] sm:$0xff] %vm4111, %v4093
      %4131 = vst.msk [vmem:[%s262 + $0x98] sm:$0xff] %vm4111, %v4094
      %4132 = vst.msk [vmem:[%s262 + $0xa0] sm:$0xff] %vm4111, %v4095
      %4133 = vst.msk [vmem:[%s262 + $0xa8] sm:$0xff] %vm4111, %v4096
      %4134 = vst.msk [vmem:[%s262 + $0xb0] sm:$0xff] %vm4111, %v4097
      %4135 = vst.msk [vmem:[%s262 + $0xb8] sm:$0xff] %vm4111, %v4098
      %4136 = vst.msk [vmem:[%s262 + $0xc0] sm:$0xff] %vm4111, %v4099
      %4137 = vst.msk [vmem:[%s262 + $0xc8] sm:$0xff] %vm4111, %v4100
      %4138 = vst.msk [vmem:[%s262 + $0xd0] sm:$0xff] %vm4111, %v4101
      %4139 = vst.msk [vmem:[%s262 + $0xd8] sm:$0xff] %vm4111, %v4102
      %4140 = vst.msk [vmem:[%s262 + $0xe0] sm:$0xff] %vm4111, %v4103
      %4141 = vst.msk [vmem:[%s262 + $0xe8] sm:$0xff] %vm4111, %v4104
      %4142 = vst.msk [vmem:[%s262 + $0xf0] sm:$0xff] %vm4111, %v4105
      %4143 = vst.msk [vmem:[%s262 + $0xf8] sm:$0xff] %vm4111, %v4106
      %4144 = vst.msk [vmem:[%s262 + $0x100] sm:$0xff] %vm4111, %v4107
      %4145 = vst.msk [vmem:[%s262 + $0x108] sm:$0xff] %vm4111, %v4108
      %4146 = vst.msk [vmem:[%s262 + $0x110] sm:$0xff] %vm4111, %v4109
      %4147 = vst.msk [vmem:[%s262 + $0x118] sm:$0xff] %vm4111, %v4110
      %v4148 = vld [vmem:[%s3] sm:$0xff]
      %v4149 = vld [vmem:[%s3 + $0x8] sm:$0xff]
      %v4150 = vld [vmem:[%s3 + $0x10] sm:$0xff]
      %v4151 = vld [vmem:[%s3 + $0x18] sm:$0xff]
      %v4152 = vld [vmem:[%s3 + $0x20] sm:$0xff]
      %v4153 = vld [vmem:[%s3 + $0x28] sm:$0xff]
      %v4154 = vld [vmem:[%s3 + $0x30] sm:$0xff]
      %v4155 = vld [vmem:[%s3 + $0x38] sm:$0xff]
      %v4156 = vld [vmem:[%s3 + $0x40] sm:$0xff]
      %v4157 = vld [vmem:[%s3 + $0x48] sm:$0xff]
      %v4158 = vld [vmem:[%s3 + $0x50] sm:$0xff]
      %v4159 = vld [vmem:[%s3 + $0x58] sm:$0xff]
      %v4160 = vld [vmem:[%s3 + $0x60] sm:$0xff]
      %v4161 = vld [vmem:[%s3 + $0x68] sm:$0xff]
      %v4162 = vld [vmem:[%s3 + $0x70] sm:$0xff]
      %v4163 = vld [vmem:[%s3 + $0x78] sm:$0xff]
      %v4164 = vld [vmem:[%s3 + $0x80] sm:$0xff]
      %v4165 = vld [vmem:[%s3 + $0x88] sm:$0xff]
      %v4166 = vld [vmem:[%s3 + $0x90] sm:$0xff]
      %v4167 = vld [vmem:[%s3 + $0x98] sm:$0xff]
      %v4168 = vld [vmem:[%s3 + $0xa0] sm:$0xff]
      %v4169 = vld [vmem:[%s3 + $0xa8] sm:$0xff]
      %v4170 = vld [vmem:[%s3 + $0xb0] sm:$0xff]
      %v4171 = vld [vmem:[%s3 + $0xb8] sm:$0xff]
      %v4172 = vld [vmem:[%s3 + $0xc0] sm:$0xff]
      %v4173 = vld [vmem:[%s3 + $0xc8] sm:$0xff]
      %v4174 = vld [vmem:[%s3 + $0xd0] sm:$0xff]
      %v4175 = vld [vmem:[%s3 + $0xd8] sm:$0xff]
      %v4176 = vld [vmem:[%s3 + $0xe0] sm:$0xff]
      %v4177 = vld [vmem:[%s3 + $0xe8] sm:$0xff]
      %v4178 = vld [vmem:[%s3 + $0xf0] sm:$0xff]
      %v4179 = vld [vmem:[%s3 + $0xf8] sm:$0xff]
      %v4180 = vld [vmem:[%s3 + $0x100] sm:$0xff]
      %v4181 = vld [vmem:[%s3 + $0x108] sm:$0xff]
      %v4182 = vld [vmem:[%s3 + $0x110] sm:$0xff]
      %v4183 = vld [vmem:[%s3 + $0x118] sm:$0xff]
      %4185 = vset.pattern.permute.xlu0 0
      %4186 = vperm.xlu0 %4185, %v4148
      %v4187 = vpop.permute.xlu0 %4186
      %4190 = vset.pattern.permute.xlu0 0
      %4191 = vperm.xlu0 %4190, %v4149
      %v4192 = vpop.permute.xlu0 %4191
      %4195 = vset.pattern.permute.xlu0 0
      %4196 = vperm.xlu0 %4195, %v4150
      %v4197 = vpop.permute.xlu0 %4196
      %4200 = vset.pattern.permute.xlu0 0
      %4201 = vperm.xlu0 %4200, %v4151
      %v4202 = vpop.permute.xlu0 %4201
      %4205 = vset.pattern.permute.xlu0 0
      %4206 = vperm.xlu0 %4205, %v4152
      %v4207 = vpop.permute.xlu0 %4206
      %4210 = vset.pattern.permute.xlu0 0
      %4211 = vperm.xlu0 %4210, %v4153
      %v4212 = vpop.permute.xlu0 %4211
      %4215 = vset.pattern.permute.xlu0 0
      %4216 = vperm.xlu0 %4215, %v4154
      %v4217 = vpop.permute.xlu0 %4216
      %4220 = vset.pattern.permute.xlu0 0
      %4221 = vperm.xlu0 %4220, %v4155
      %v4222 = vpop.permute.xlu0 %4221
      %4225 = vset.pattern.permute.xlu0 0
      %4226 = vperm.xlu0 %4225, %v4156
      %v4227 = vpop.permute.xlu0 %4226
      %4230 = vset.pattern.permute.xlu0 0
      %4231 = vperm.xlu0 %4230, %v4157
      %v4232 = vpop.permute.xlu0 %4231
      %4235 = vset.pattern.permute.xlu0 0
      %4236 = vperm.xlu0 %4235, %v4158
      %v4237 = vpop.permute.xlu0 %4236
      %4240 = vset.pattern.permute.xlu0 0
      %4241 = vperm.xlu0 %4240, %v4159
      %v4242 = vpop.permute.xlu0 %4241
      %4245 = vset.pattern.permute.xlu0 0
      %4246 = vperm.xlu0 %4245, %v4160
      %v4247 = vpop.permute.xlu0 %4246
      %4250 = vset.pattern.permute.xlu0 0
      %4251 = vperm.xlu0 %4250, %v4161
      %v4252 = vpop.permute.xlu0 %4251
      %4255 = vset.pattern.permute.xlu0 0
      %4256 = vperm.xlu0 %4255, %v4162
      %v4257 = vpop.permute.xlu0 %4256
      %4260 = vset.pattern.permute.xlu0 0
      %4261 = vperm.xlu0 %4260, %v4163
      %v4262 = vpop.permute.xlu0 %4261
      %4265 = vset.pattern.permute.xlu0 0
      %4266 = vperm.xlu0 %4265, %v4164
      %v4267 = vpop.permute.xlu0 %4266
      %4270 = vset.pattern.permute.xlu0 0
      %4271 = vperm.xlu0 %4270, %v4165
      %v4272 = vpop.permute.xlu0 %4271
      %4275 = vset.pattern.permute.xlu0 0
      %4276 = vperm.xlu0 %4275, %v4166
      %v4277 = vpop.permute.xlu0 %4276
      %4280 = vset.pattern.permute.xlu0 0
      %4281 = vperm.xlu0 %4280, %v4167
      %v4282 = vpop.permute.xlu0 %4281
      %4285 = vset.pattern.permute.xlu0 0
      %4286 = vperm.xlu0 %4285, %v4168
      %v4287 = vpop.permute.xlu0 %4286
      %4290 = vset.pattern.permute.xlu0 0
      %4291 = vperm.xlu0 %4290, %v4169
      %v4292 = vpop.permute.xlu0 %4291
      %4295 = vset.pattern.permute.xlu0 0
      %4296 = vperm.xlu0 %4295, %v4170
      %v4297 = vpop.permute.xlu0 %4296
      %4300 = vset.pattern.permute.xlu0 0
      %4301 = vperm.xlu0 %4300, %v4171
      %v4302 = vpop.permute.xlu0 %4301
      %4305 = vset.pattern.permute.xlu0 0
      %4306 = vperm.xlu0 %4305, %v4172
      %v4307 = vpop.permute.xlu0 %4306
      %4310 = vset.pattern.permute.xlu0 0
      %4311 = vperm.xlu0 %4310, %v4173
      %v4312 = vpop.permute.xlu0 %4311
      %4315 = vset.pattern.permute.xlu0 0
      %4316 = vperm.xlu0 %4315, %v4174
      %v4317 = vpop.permute.xlu0 %4316
      %4320 = vset.pattern.permute.xlu0 0
      %4321 = vperm.xlu0 %4320, %v4175
      %v4322 = vpop.permute.xlu0 %4321
      %4325 = vset.pattern.permute.xlu0 0
      %4326 = vperm.xlu0 %4325, %v4176
      %v4327 = vpop.permute.xlu0 %4326
      %4330 = vset.pattern.permute.xlu0 0
      %4331 = vperm.xlu0 %4330, %v4177
      %v4332 = vpop.permute.xlu0 %4331
      %4335 = vset.pattern.permute.xlu0 0
      %4336 = vperm.xlu0 %4335, %v4178
      %v4337 = vpop.permute.xlu0 %4336
      %4340 = vset.pattern.permute.xlu0 0
      %4341 = vperm.xlu0 %4340, %v4179
      %v4342 = vpop.permute.xlu0 %4341
      %4345 = vset.pattern.permute.xlu0 0
      %4346 = vperm.xlu0 %4345, %v4180
      %v4347 = vpop.permute.xlu0 %4346
      %4350 = vset.pattern.permute.xlu0 0
      %4351 = vperm.xlu0 %4350, %v4181
      %v4352 = vpop.permute.xlu0 %4351
      %4355 = vset.pattern.permute.xlu0 0
      %4356 = vperm.xlu0 %4355, %v4182
      %v4357 = vpop.permute.xlu0 %4356
      %4360 = vset.pattern.permute.xlu0 0
      %4361 = vperm.xlu0 %4360, %v4183
      %v4362 = vpop.permute.xlu0 %4361
      %v4364 = vmul.f32 %v4075, %v4187
      %v4365 = vmul.f32 %v4076, %v4192
      %v4366 = vmul.f32 %v4077, %v4197
      %v4367 = vmul.f32 %v4078, %v4202
      %v4368 = vmul.f32 %v4079, %v4207
      %v4369 = vmul.f32 %v4080, %v4212
      %v4370 = vmul.f32 %v4081, %v4217
      %v4371 = vmul.f32 %v4082, %v4222
      %v4372 = vmul.f32 %v4083, %v4227
      %v4373 = vmul.f32 %v4084, %v4232
      %v4374 = vmul.f32 %v4085, %v4237
      %v4375 = vmul.f32 %v4086, %v4242
      %v4376 = vmul.f32 %v4087, %v4247
      %v4377 = vmul.f32 %v4088, %v4252
      %v4378 = vmul.f32 %v4089, %v4257
      %v4379 = vmul.f32 %v4090, %v4262
      %v4380 = vmul.f32 %v4091, %v4267
      %v4381 = vmul.f32 %v4092, %v4272
      %v4382 = vmul.f32 %v4093, %v4277
      %v4383 = vmul.f32 %v4094, %v4282
      %v4384 = vmul.f32 %v4095, %v4287
      %v4385 = vmul.f32 %v4096, %v4292
      %v4386 = vmul.f32 %v4097, %v4297
      %v4387 = vmul.f32 %v4098, %v4302
      %v4388 = vmul.f32 %v4099, %v4307
      %v4389 = vmul.f32 %v4100, %v4312
      %v4390 = vmul.f32 %v4101, %v4317
      %v4391 = vmul.f32 %v4102, %v4322
      %v4392 = vmul.f32 %v4103, %v4327
      %v4393 = vmul.f32 %v4104, %v4332
      %v4394 = vmul.f32 %v4105, %v4337
      %v4395 = vmul.f32 %v4106, %v4342
      %v4396 = vmul.f32 %v4107, %v4347
      %v4397 = vmul.f32 %v4108, %v4352
      %v4398 = vmul.f32 %v4109, %v4357
      %v4399 = vmul.f32 %v4110, %v4362
      %v4400 = vsel %vm4111, %v4364, 0.0
      %v4401 = vsel %vm4111, %v4365, 0.0
      %v4402 = vadd.f32 %v4400, %v4401
      %v4403 = vsel %vm4111, %v4366, 0.0
      %v4404 = vadd.f32 %v4402, %v4403
      %v4405 = vsel %vm4111, %v4367, 0.0
      %v4406 = vadd.f32 %v4404, %v4405
      %v4407 = vsel %vm4111, %v4368, 0.0
      %v4408 = vadd.f32 %v4406, %v4407
      %v4409 = vsel %vm4111, %v4369, 0.0
      %v4410 = vadd.f32 %v4408, %v4409
      %v4411 = vsel %vm4111, %v4370, 0.0
      %v4412 = vadd.f32 %v4410, %v4411
      %v4413 = vsel %vm4111, %v4371, 0.0
      %v4414 = vadd.f32 %v4412, %v4413
      %v4415 = vsel %vm4111, %v4372, 0.0
      %v4416 = vadd.f32 %v4414, %v4415
      %v4417 = vsel %vm4111, %v4373, 0.0
      %v4418 = vadd.f32 %v4416, %v4417
      %v4419 = vsel %vm4111, %v4374, 0.0
      %v4420 = vadd.f32 %v4418, %v4419
      %v4421 = vsel %vm4111, %v4375, 0.0
      %v4422 = vadd.f32 %v4420, %v4421
      %v4423 = vsel %vm4111, %v4376, 0.0
      %v4424 = vadd.f32 %v4422, %v4423
      %v4425 = vsel %vm4111, %v4377, 0.0
      %v4426 = vadd.f32 %v4424, %v4425
      %v4427 = vsel %vm4111, %v4378, 0.0
      %v4428 = vadd.f32 %v4426, %v4427
      %v4429 = vsel %vm4111, %v4379, 0.0
      %v4430 = vadd.f32 %v4428, %v4429
      %v4431 = vsel %vm4111, %v4380, 0.0
      %v4432 = vadd.f32 %v4430, %v4431
      %v4433 = vsel %vm4111, %v4381, 0.0
      %v4434 = vadd.f32 %v4432, %v4433
      %v4435 = vsel %vm4111, %v4382, 0.0
      %v4436 = vadd.f32 %v4434, %v4435
      %v4437 = vsel %vm4111, %v4383, 0.0
      %v4438 = vadd.f32 %v4436, %v4437
      %v4439 = vsel %vm4111, %v4384, 0.0
      %v4440 = vadd.f32 %v4438, %v4439
      %v4441 = vsel %vm4111, %v4385, 0.0
      %v4442 = vadd.f32 %v4440, %v4441
      %v4443 = vsel %vm4111, %v4386, 0.0
      %v4444 = vadd.f32 %v4442, %v4443
      %v4445 = vsel %vm4111, %v4387, 0.0
      %v4446 = vadd.f32 %v4444, %v4445
      %v4447 = vsel %vm4111, %v4388, 0.0
      %v4448 = vadd.f32 %v4446, %v4447
      %v4449 = vsel %vm4111, %v4389, 0.0
      %v4450 = vadd.f32 %v4448, %v4449
      %v4451 = vsel %vm4111, %v4390, 0.0
      %v4452 = vadd.f32 %v4450, %v4451
      %v4453 = vsel %vm4111, %v4391, 0.0
      %v4454 = vadd.f32 %v4452, %v4453
      %v4455 = vsel %vm4111, %v4392, 0.0
      %v4456 = vadd.f32 %v4454, %v4455
      %v4457 = vsel %vm4111, %v4393, 0.0
      %v4458 = vadd.f32 %v4456, %v4457
      %v4459 = vsel %vm4111, %v4394, 0.0
      %v4460 = vadd.f32 %v4458, %v4459
      %v4461 = vsel %vm4111, %v4395, 0.0
      %v4462 = vadd.f32 %v4460, %v4461
      %v4463 = vsel %vm4111, %v4396, 0.0
      %v4464 = vadd.f32 %v4462, %v4463
      %v4465 = vsel %vm4111, %v4397, 0.0
      %v4466 = vadd.f32 %v4464, %v4465
      %v4467 = vsel %vm4111, %v4398, 0.0
      %v4468 = vadd.f32 %v4466, %v4467
      %v4469 = vsel %vm4111, %v4399, 0.0
      %v4470 = vadd.f32 %v4468, %v4469
      %v4471 = vrot.slane %v4470, 4
      %v4472 = vadd.f32 %v4470, %v4471
      %v4473 = vrot.slane %v4472, 2
      %v4474 = vadd.f32 %v4472, %v4473
      %v4475 = vrot.slane %v4474, 1
      %v4476 = vadd.f32 %v4474, %v4475
      %vm4477 = vcmask 57344
      %4478 = vst.msk [vmem:[%s265] sm:$0x1] %vm4477, %v4476
      %v4479 = vmul.f32 %v4364, %v4075
      %v4480 = vmul.f32 %v4365, %v4076
      %v4481 = vmul.f32 %v4366, %v4077
      %v4482 = vmul.f32 %v4367, %v4078
      %v4483 = vmul.f32 %v4368, %v4079
      %v4484 = vmul.f32 %v4369, %v4080
      %v4485 = vmul.f32 %v4370, %v4081
      %v4486 = vmul.f32 %v4371, %v4082
      %v4487 = vmul.f32 %v4372, %v4083
      %v4488 = vmul.f32 %v4373, %v4084
      %v4489 = vmul.f32 %v4374, %v4085
      %v4490 = vmul.f32 %v4375, %v4086
      %v4491 = vmul.f32 %v4376, %v4087
      %v4492 = vmul.f32 %v4377, %v4088
      %v4493 = vmul.f32 %v4378, %v4089
      %v4494 = vmul.f32 %v4379, %v4090
      %v4495 = vmul.f32 %v4380, %v4091
      %v4496 = vmul.f32 %v4381, %v4092
      %v4497 = vmul.f32 %v4382, %v4093
      %v4498 = vmul.f32 %v4383, %v4094
      %v4499 = vmul.f32 %v4384, %v4095
      %v4500 = vmul.f32 %v4385, %v4096
      %v4501 = vmul.f32 %v4386, %v4097
      %v4502 = vmul.f32 %v4387, %v4098
      %v4503 = vmul.f32 %v4388, %v4099
      %v4504 = vmul.f32 %v4389, %v4100
      %v4505 = vmul.f32 %v4390, %v4101
      %v4506 = vmul.f32 %v4391, %v4102
      %v4507 = vmul.f32 %v4392, %v4103
      %v4508 = vmul.f32 %v4393, %v4104
      %v4509 = vmul.f32 %v4394, %v4105
      %v4510 = vmul.f32 %v4395, %v4106
      %v4511 = vmul.f32 %v4396, %v4107
      %v4512 = vmul.f32 %v4397, %v4108
      %v4513 = vmul.f32 %v4398, %v4109
      %v4514 = vmul.f32 %v4399, %v4110
      %v4515 = vsel %vm4111, %v4479, 0.0
      %v4516 = vsel %vm4111, %v4480, 0.0
      %v4517 = vadd.f32 %v4515, %v4516
      %v4518 = vsel %vm4111, %v4481, 0.0
      %v4519 = vadd.f32 %v4517, %v4518
      %v4520 = vsel %vm4111, %v4482, 0.0
      %v4521 = vadd.f32 %v4519, %v4520
      %v4522 = vsel %vm4111, %v4483, 0.0
      %v4523 = vadd.f32 %v4521, %v4522
      %v4524 = vsel %vm4111, %v4484, 0.0
      %v4525 = vadd.f32 %v4523, %v4524
      %v4526 = vsel %vm4111, %v4485, 0.0
      %v4527 = vadd.f32 %v4525, %v4526
      %v4528 = vsel %vm4111, %v4486, 0.0
      %v4529 = vadd.f32 %v4527, %v4528
      %v4530 = vsel %vm4111, %v4487, 0.0
      %v4531 = vadd.f32 %v4529, %v4530
      %v4532 = vsel %vm4111, %v4488, 0.0
      %v4533 = vadd.f32 %v4531, %v4532
      %v4534 = vsel %vm4111, %v4489, 0.0
      %v4535 = vadd.f32 %v4533, %v4534
      %v4536 = vsel %vm4111, %v4490, 0.0
      %v4537 = vadd.f32 %v4535, %v4536
      %v4538 = vsel %vm4111, %v4491, 0.0
      %v4539 = vadd.f32 %v4537, %v4538
      %v4540 = vsel %vm4111, %v4492, 0.0
      %v4541 = vadd.f32 %v4539, %v4540
      %v4542 = vsel %vm4111, %v4493, 0.0
      %v4543 = vadd.f32 %v4541, %v4542
      %v4544 = vsel %vm4111, %v4494, 0.0
      %v4545 = vadd.f32 %v4543, %v4544
      %v4546 = vsel %vm4111, %v4495, 0.0
      %v4547 = vadd.f32 %v4545, %v4546
      %v4548 = vsel %vm4111, %v4496, 0.0
      %v4549 = vadd.f32 %v4547, %v4548
      %v4550 = vsel %vm4111, %v4497, 0.0
      %v4551 = vadd.f32 %v4549, %v4550
      %v4552 = vsel %vm4111, %v4498, 0.0
      %v4553 = vadd.f32 %v4551, %v4552
      %v4554 = vsel %vm4111, %v4499, 0.0
      %v4555 = vadd.f32 %v4553, %v4554
      %v4556 = vsel %vm4111, %v4500, 0.0
      %v4557 = vadd.f32 %v4555, %v4556
      %v4558 = vsel %vm4111, %v4501, 0.0
      %v4559 = vadd.f32 %v4557, %v4558
      %v4560 = vsel %vm4111, %v4502, 0.0
      %v4561 = vadd.f32 %v4559, %v4560
      %v4562 = vsel %vm4111, %v4503, 0.0
      %v4563 = vadd.f32 %v4561, %v4562
      %v4564 = vsel %vm4111, %v4504, 0.0
      %v4565 = vadd.f32 %v4563, %v4564
      %v4566 = vsel %vm4111, %v4505, 0.0
      %v4567 = vadd.f32 %v4565, %v4566
      %v4568 = vsel %vm4111, %v4506, 0.0
      %v4569 = vadd.f32 %v4567, %v4568
      %v4570 = vsel %vm4111, %v4507, 0.0
      %v4571 = vadd.f32 %v4569, %v4570
      %v4572 = vsel %vm4111, %v4508, 0.0
      %v4573 = vadd.f32 %v4571, %v4572
      %v4574 = vsel %vm4111, %v4509, 0.0
      %v4575 = vadd.f32 %v4573, %v4574
      %v4576 = vsel %vm4111, %v4510, 0.0
      %v4577 = vadd.f32 %v4575, %v4576
      %v4578 = vsel %vm4111, %v4511, 0.0
      %v4579 = vadd.f32 %v4577, %v4578
      %v4580 = vsel %vm4111, %v4512, 0.0
      %v4581 = vadd.f32 %v4579, %v4580
      %v4582 = vsel %vm4111, %v4513, 0.0
      %v4583 = vadd.f32 %v4581, %v4582
      %v4584 = vsel %vm4111, %v4514, 0.0
      %v4585 = vadd.f32 %v4583, %v4584
      %v4586 = vrot.slane %v4585, 4
      %v4587 = vadd.f32 %v4585, %v4586
      %v4588 = vrot.slane %v4587, 2
      %v4589 = vadd.f32 %v4587, %v4588
      %v4590 = vrot.slane %v4589, 1
      %v4591 = vadd.f32 %v4589, %v4590
      %4592 = vst.msk [vmem:[%s268] sm:$0x1] %vm4477, %v4591
      %p4593 = scmp.lt.s32.totalorder %s18, 1
      %s4594 = scalar_select %p4593, %s18, 1
      %s4595 = smul.addr %s4594, 36
      %s4596 = smul.addr %s4595, 8
      %s4597 = scalar_lea.vmem %s4, %s4596
      %p4598 = scmp.lt.s32.totalorder %s18, 1
      %s4599 = scalar_select %p4598, %s18, 1
      %s4600 = scalar_lea.vmem %s5, %s4599
      %p4601 = scmp.lt.s32.totalorder %s18, 1
      %s4602 = scalar_select %p4601, %s18, 1
      %s4603 = scalar_lea.vmem %s6, %s4602
      // Predicated region
      $region37: #{conv_block_forward.2} parent=35 // pred_check
        %p4604 = pneg %p125
      $region38: #{conv_block_forward.2} parent=35 // pred_check_branch
        %4606 = sbr.rel (%p4604) target = $region40
      $region39: #{conv_block_forward.2} parent=35 // pred_region
        _
      $region40: #{conv_block_forward.2} parent=35 // pred_fallthru
        _
      // Predicated region
      $region41: #{conv_block_forward.2} parent=35 // pred_check
        %p4607 = pneg %p151
      $region42: #{conv_block_forward.2} parent=35 // pred_check_branch
        %4609 = sbr.rel (%p4607) target = $region44
      $region43: #{conv_block_forward.2} parent=35 // pred_region
        _
      $region44: #{conv_block_forward.2} parent=35 // pred_fallthru
        _
      // Predicated region
      $region45: #{conv_block_forward.2} parent=35 // pred_check
        %p4610 = pneg %p177
      $region46: #{conv_block_forward.2} parent=35 // pred_check_branch
        %4612 = sbr.rel (%p4610) target = $region48
      $region47: #{conv_block_forward.2} parent=35 // pred_region
        _
      $region48: #{conv_block_forward.2} parent=35 // pred_fallthru
        _
    $region36: #{conv_block_forward.2} parent=5 // pred_fallthru
      _
    %p4613 = scmp.le.s32.totalorder 2, %s13
    // Predicated region
    $region49: #{conv_block_forward.2} parent=5 // pred_check
      %p4614 = pneg %p4613
    $region50: #{conv_block_forward.2} parent=5 // pred_check_branch
      %4616 = sbr.rel (%p4614) target = $region52
    $region51: #{conv_block_forward.2} parent=5 // pred_region
      %s4617 = ssub.s32 %s13, 2
      // Predicated region
      $region53: #{conv_block_forward.2} parent=51 // pred_check
        %p4618 = pneg %p131
      $region54: #{conv_block_forward.2} parent=51 // pred_check_branch
        %4620 = sbr.rel (%p4618) target = $region56
      $region55: #{conv_block_forward.2} parent=51 // pred_region
        %p4621 = scmp.lt.s32.totalorder %s19, 1
        %s4622 = scalar_select %p4621, %s19, 1
        %s4623 = smul.addr %s4622, 36
        %s4624 = smul.addr %s4623, 8
        %s4625 = scalar_lea.vmem %s4, %s4624
      $region56: #{conv_block_forward.2} parent=51 // pred_fallthru
        _
      // Predicated region
      $region57: #{conv_block_forward.2} parent=51 // pred_check
        %p4626 = pneg %p157
      $region58: #{conv_block_forward.2} parent=51 // pred_check_branch
        %4628 = sbr.rel (%p4626) target = $region60
      $region59: #{conv_block_forward.2} parent=51 // pred_region
        %p4629 = scmp.lt.s32.totalorder %s19, 1
        %s4630 = scalar_select %p4629, %s19, 1
        %s4631 = scalar_lea.vmem %s5, %s4630
      $region60: #{conv_block_forward.2} parent=51 // pred_fallthru
        _
      // Predicated region
      $region61: #{conv_block_forward.2} parent=51 // pred_check
        %p4632 = pneg %p183
      $region62: #{conv_block_forward.2} parent=51 // pred_check_branch
        %4634 = sbr.rel (%p4632) target = $region64
      $region63: #{conv_block_forward.2} parent=51 // pred_region
        %p4635 = scmp.lt.s32.totalorder %s19, 1
        %s4636 = scalar_select %p4635, %s19, 1
        %s4637 = scalar_lea.vmem %s6, %s4636
      $region64: #{conv_block_forward.2} parent=51 // pred_fallthru
        _
    $region52: #{conv_block_forward.2} parent=5 // pred_fallthru
      _
  $region6: #{conv_block_forward.2} parent=0 // loop_footer
    %s17 = sadd.s32 1, %s13
  $region7: #{conv_block_forward.2} parent=0 // loop_footer_branch
    %12 = sbr.rel target = $region3
  $region8: #{conv_block_forward.2} parent=0 // loop_exit
    _

// kernel: conv_block_forward.3
$region0: #{conv_block_forward.3}
  #allocation0 [shape = 'u32[]', space=smem, size = 0x4, offset = 0x4, fixed_abs, tag = 'smem constant byte address 0x4 - core index']
  #allocation1 [shape = 'u32[144,128]{1,0:T(1,128)}', space=vmem, size = 0x12000, scoped, tag = 'internal scratch']
  #allocation2 [shape = 'f32[336,8]{1,0:T(8,128)}', space=vmem, size = 0x2a000, scoped, tag = 'scratch operand']
  %s0 = inlined_call_operand.vmem [shape: f32[2,288,8], index: 0, kind: input, shape index: {}]
  %s1 = inlined_call_operand.vmem [shape: f32[288,1], index: 1, kind: input, shape index: {}]
  %s2 = inlined_call_operand.vmem [shape: f32[1,8], index: 2, kind: input, shape index: {}]
  %s3 = inlined_call_operand.vmem [shape: f32[1,8], index: 3, kind: input, shape index: {}]
  %s4 = inlined_call_operand.vmem [shape: f32[9,8,8], index: 4, kind: input, shape index: {}]
  %s5 = inlined_call_operand.vmem [shape: f32[1,8], index: 5, kind: input, shape index: {}]
  %s6 = inlined_call_operand.vmem [shape: f32[2,288,8], index: 6, kind: output, shape index: {0}]
  %s7 = inlined_call_operand.vmem [shape: f32[2,1,8], index: 7, kind: output, shape index: {1}]
  %s8 = inlined_call_operand.vmem [shape: f32[2,1,8], index: 8, kind: output, shape index: {2}]
  %9 = xla_tuple %s6, %s7, %s8
  %s10 = sld [smem:[#allocation0]]
  $region73: #{conv_block_forward.3} parent=0
    _
  %s12 = ssub.s32 1, %s10
  %s13 = scalar_select 0, %s12, %s10
  loop: start=0, step=1, limit=4
  $region2: #{conv_block_forward.3} parent=0 // loop_pre_header
    _
  $region3: #{conv_block_forward.3} parent=0 // loop_header
    %s15 = sphi 0, %s19
    %p16 = scmp.ge.s32.totalorder %s15, 4
    %s25 = sphi 0, %s27
    %s28 = sphi 0, %s25
    %s29 = sphi 0, %s28
    %s45 = sphi 0, %s29
    %s49 = sphi 0, %s49
    %s51 = sphi 0, %s49
    %s52 = sphi 0, %s51
    %s66 = sphi 0, %s52
    %s70 = sphi 0, %s70
    %s72 = sphi 0, %s70
    %s73 = sphi 0, %s72
    %s87 = sphi 0, %s73
    %s91 = sphi 0, %s91
    %s93 = sphi 0, %s91
    %s94 = sphi 0, %s93
    %s108 = sphi 0, %s94
    %s112 = sphi 0, %s112
    %s114 = sphi 0, %s112
    %s115 = sphi 0, %s114
    %s129 = sphi 0, %s115
    %s133 = sphi 0, %s133
    %s135 = sphi 0, %s133
    %s136 = sphi 0, %s135
    %s150 = sphi 0, %s136
    %s156 = sphi 0, %s158
    %s159 = sphi 0, %s156
    %s160 = sphi 0, %s159
    %s176 = sphi 0, %s160
    %s182 = sphi 0, %s184
    %s185 = sphi 0, %s182
    %s186 = sphi 0, %s185
    %s202 = sphi 0, %s186
    %s208 = sphi 0, %s210
    %s211 = sphi 0, %s208
    %s212 = sphi 0, %s211
    %s228 = sphi 0, %s212
  $region4: #{conv_block_forward.3} parent=0 // loop_header_branch
    %18 = sbr.rel (%p16) target = $region8
  $region5: #{conv_block_forward.3} parent=0 // loop_body
    %s20 = ssub.s32 %s15, 1
    %s21 = ssub.s32 %s15, 2
    %s22 = sadd.s32 %s15, 1
    %s23 = ssub.s32 %s15, %s22
    %p24 = scmp.eq.s32.totalorder %s23, 0
    %s26 = sadd.s32 %s25, 1
    %s27 = scalar_select %p24, %s25, %s26
    %p30 = pneg %p24
    %p31 = scmp.eq.s32.totalorder %s15, 1
    %p32 = por %p30, %p31
    %p33 = scmp.ne.s32.totalorder %s25, %s28
    %p34 = scmp.eq.s32.totalorder %s15, 0
    %p35 = por %p33, %p34
    %p36 = scmp.ne.s32.totalorder %s25, %s28
    %p37 = scmp.eq.s32.totalorder %s20, 1
    %p38 = por %p36, %p37
    %p39 = scmp.ne.s32.totalorder %s28, %s29
    %p40 = scmp.eq.s32.totalorder %s20, 0
    %p41 = por %p39, %p40
    %p42 = scmp.ne.s32.totalorder %s28, %s29
    %p43 = scmp.eq.s32.totalorder %s21, 1
    %p44 = por %p42, %p43
    %p46 = scmp.ne.s32.totalorder %s29, %s45
    %p47 = scmp.eq.s32.totalorder %s21, 0
    %p48 = por %p46, %p47
    %s50 = sadd.s32 %s49, 1
    %p53 = scmp.eq.s32.totalorder %s15, 1
    %p54 = scmp.ne.s32.totalorder %s49, %s51
    %p55 = scmp.eq.s32.totalorder %s15, 0
    %p56 = por %p54, %p55
    %p57 = scmp.ne.s32.totalorder %s49, %s51
    %p58 = scmp.eq.s32.totalorder %s20, 1
    %p59 = por %p57, %p58
    %p60 = scmp.ne.s32.totalorder %s51, %s52
    %p61 = scmp.eq.s32.totalorder %s20, 0
    %p62 = por %p60, %p61
    %p63 = scmp.ne.s32.totalorder %s51, %s52
    %p64 = scmp.eq.s32.totalorder %s21, 1
    %p65 = por %p63, %p64
    %p67 = scmp.ne.s32.totalorder %s52, %s66
    %p68 = scmp.eq.s32.totalorder %s21, 0
    %p69 = por %p67, %p68
    %s71 = sadd.s32 %s70, 1
    %p74 = scmp.eq.s32.totalorder %s15, 1
    %p75 = scmp.ne.s32.totalorder %s70, %s72
    %p76 = scmp.eq.s32.totalorder %s15, 0
    %p77 = por %p75, %p76
    %p78 = scmp.ne.s32.totalorder %s70, %s72
    %p79 = scmp.eq.s32.totalorder %s20, 1
    %p80 = por %p78, %p79
    %p81 = scmp.ne.s32.totalorder %s72, %s73
    %p82 = scmp.eq.s32.totalorder %s20, 0
    %p83 = por %p81, %p82
    %p84 = scmp.ne.s32.totalorder %s72, %s73
    %p85 = scmp.eq.s32.totalorder %s21, 1
    %p86 = por %p84, %p85
    %p88 = scmp.ne.s32.totalorder %s73, %s87
    %p89 = scmp.eq.s32.totalorder %s21, 0
    %p90 = por %p88, %p89
    %s92 = sadd.s32 %s91, 1
    %p95 = scmp.eq.s32.totalorder %s15, 1
    %p96 = scmp.ne.s32.totalorder %s91, %s93
    %p97 = scmp.eq.s32.totalorder %s15, 0
    %p98 = por %p96, %p97
    %p99 = scmp.ne.s32.totalorder %s91, %s93
    %p100 = scmp.eq.s32.totalorder %s20, 1
    %p101 = por %p99, %p100
    %p102 = scmp.ne.s32.totalorder %s93, %s94
    %p103 = scmp.eq.s32.totalorder %s20, 0
    %p104 = por %p102, %p103
    %p105 = scmp.ne.s32.totalorder %s93, %s94
    %p106 = scmp.eq.s32.totalorder %s21, 1
    %p107 = por %p105, %p106
    %p109 = scmp.ne.s32.totalorder %s94, %s108
    %p110 = scmp.eq.s32.totalorder %s21, 0
    %p111 = por %p109, %p110
    %s113 = sadd.s32 %s112, 1
    %p116 = scmp.eq.s32.totalorder %s15, 1
    %p117 = scmp.ne.s32.totalorder %s112, %s114
    %p118 = scmp.eq.s32.totalorder %s15, 0
    %p119 = por %p117, %p118
    %p120 = scmp.ne.s32.totalorder %s112, %s114
    %p121 = scmp.eq.s32.totalorder %s20, 1
    %p122 = por %p120, %p121
    %p123 = scmp.ne.s32.totalorder %s114, %s115
    %p124 = scmp.eq.s32.totalorder %s20, 0
    %p125 = por %p123, %p124
    %p126 = scmp.ne.s32.totalorder %s114, %s115
    %p127 = scmp.eq.s32.totalorder %s21, 1
    %p128 = por %p126, %p127
    %p130 = scmp.ne.s32.totalorder %s115, %s129
    %p131 = scmp.eq.s32.totalorder %s21, 0
    %p132 = por %p130, %p131
    %s134 = sadd.s32 %s133, 1
    %p137 = scmp.eq.s32.totalorder %s15, 1
    %p138 = scmp.ne.s32.totalorder %s133, %s135
    %p139 = scmp.eq.s32.totalorder %s15, 0
    %p140 = por %p138, %p139
    %p141 = scmp.ne.s32.totalorder %s133, %s135
    %p142 = scmp.eq.s32.totalorder %s20, 1
    %p143 = por %p141, %p142
    %p144 = scmp.ne.s32.totalorder %s135, %s136
    %p145 = scmp.eq.s32.totalorder %s20, 0
    %p146 = por %p144, %p145
    %p147 = scmp.ne.s32.totalorder %s135, %s136
    %p148 = scmp.eq.s32.totalorder %s21, 1
    %p149 = por %p147, %p148
    %p151 = scmp.ne.s32.totalorder %s136, %s150
    %p152 = scmp.eq.s32.totalorder %s21, 0
    %p153 = por %p151, %p152
    %s154 = ssub.s32 %s15, %s22
    %p155 = scmp.eq.s32.totalorder %s154, 0
    %s157 = sadd.s32 %s156, 1
    %s158 = scalar_select %p155, %s156, %s157
    %p161 = pneg %p155
    %p162 = scmp.eq.s32.totalorder %s15, 1
    %p163 = por %p161, %p162
    %p164 = scmp.ne.s32.totalorder %s156, %s159
    %p165 = scmp.eq.s32.totalorder %s15, 0
    %p166 = por %p164, %p165
    %p167 = scmp.ne.s32.totalorder %s156, %s159
    %p168 = scmp.eq.s32.totalorder %s20, 1
    %p169 = por %p167, %p168
    %p170 = scmp.ne.s32.totalorder %s159, %s160
    %p171 = scmp.eq.s32.totalorder %s20, 0
    %p172 = por %p170, %p171
    %p173 = scmp.ne.s32.totalorder %s159, %s160
    %p174 = scmp.eq.s32.totalorder %s21, 1
    %p175 = por %p173, %p174
    %p177 = scmp.ne.s32.totalorder %s160, %s176
    %p178 = scmp.eq.s32.totalorder %s21, 0
    %p179 = por %p177, %p178
    %s180 = ssub.s32 %s15, %s22
    %p181 = scmp.eq.s32.totalorder %s180, 0
    %s183 = sadd.s32 %s182, 1
    %s184 = scalar_select %p181, %s182, %s183
    %p187 = pneg %p181
    %p188 = scmp.eq.s32.totalorder %s15, 1
    %p189 = por %p187, %p188
    %p190 = scmp.ne.s32.totalorder %s182, %s185
    %p191 = scmp.eq.s32.totalorder %s15, 0
    %p192 = por %p190, %p191
    %p193 = scmp.ne.s32.totalorder %s182, %s185
    %p194 = scmp.eq.s32.totalorder %s20, 1
    %p195 = por %p193, %p194
    %p196 = scmp.ne.s32.totalorder %s185, %s186
    %p197 = scmp.eq.s32.totalorder %s20, 0
    %p198 = por %p196, %p197
    %p199 = scmp.ne.s32.totalorder %s185, %s186
    %p200 = scmp.eq.s32.totalorder %s21, 1
    %p201 = por %p199, %p200
    %p203 = scmp.ne.s32.totalorder %s186, %s202
    %p204 = scmp.eq.s32.totalorder %s21, 0
    %p205 = por %p203, %p204
    %s206 = ssub.s32 %s15, %s22
    %p207 = scmp.eq.s32.totalorder %s206, 0
    %s209 = sadd.s32 %s208, 1
    %s210 = scalar_select %p207, %s208, %s209
    %p213 = pneg %p207
    %p214 = scmp.eq.s32.totalorder %s15, 1
    %p215 = por %p213, %p214
    %p216 = scmp.ne.s32.totalorder %s208, %s211
    %p217 = scmp.eq.s32.totalorder %s15, 0
    %p218 = por %p216, %p217
    %p219 = scmp.ne.s32.totalorder %s208, %s211
    %p220 = scmp.eq.s32.totalorder %s20, 1
    %p221 = por %p219, %p220
    %p222 = scmp.ne.s32.totalorder %s211, %s212
    %p223 = scmp.eq.s32.totalorder %s20, 0
    %p224 = por %p222, %p223
    %p225 = scmp.ne.s32.totalorder %s211, %s212
    %p226 = scmp.eq.s32.totalorder %s21, 1
    %p227 = por %p225, %p226
    %p229 = scmp.ne.s32.totalorder %s212, %s228
    %p230 = scmp.eq.s32.totalorder %s21, 0
    %p231 = por %p229, %p230
    %p232 = scmp.le.s32.totalorder 1, %s15
    %p233 = scmp.lt.s32.totalorder %s15, 3
    %p234 = pnand %p232, %p233
    %p235 = pneg %p234
    // Predicated region
    $region9: #{conv_block_forward.3} parent=5 // pred_check
      _
    $region10: #{conv_block_forward.3} parent=5 // pred_check_branch
      %237 = sbr.rel (%p234) target = $region12
    $region11: #{conv_block_forward.3} parent=5 // pred_region
      %s238 = ssub.s32 %s15, 1
      // Predicated region
      $region13: #{conv_block_forward.3} parent=11 // pred_check
        %p239 = pneg %p62
      $region14: #{conv_block_forward.3} parent=11 // pred_check_branch
        %241 = sbr.rel (%p239) target = $region16
      $region15: #{conv_block_forward.3} parent=11 // pred_region
        _
      $region16: #{conv_block_forward.3} parent=11 // pred_fallthru
        _
      // Predicated region
      $region17: #{conv_block_forward.3} parent=11 // pred_check
        %p242 = pneg %p83
      $region18: #{conv_block_forward.3} parent=11 // pred_check_branch
        %244 = sbr.rel (%p242) target = $region20
      $region19: #{conv_block_forward.3} parent=11 // pred_region
        _
      $region20: #{conv_block_forward.3} parent=11 // pred_fallthru
        _
      // Predicated region
      $region21: #{conv_block_forward.3} parent=11 // pred_check
        %p245 = pneg %p104
      $region22: #{conv_block_forward.3} parent=11 // pred_check_branch
        %247 = sbr.rel (%p245) target = $region24
      $region23: #{conv_block_forward.3} parent=11 // pred_region
        _
      $region24: #{conv_block_forward.3} parent=11 // pred_fallthru
        _
      // Predicated region
      $region25: #{conv_block_forward.3} parent=11 // pred_check
        %p248 = pneg %p125
      $region26: #{conv_block_forward.3} parent=11 // pred_check_branch
        %250 = sbr.rel (%p248) target = $region28
      $region27: #{conv_block_forward.3} parent=11 // pred_region
        _
      $region28: #{conv_block_forward.3} parent=11 // pred_fallthru
        _
      // Predicated region
      $region29: #{conv_block_forward.3} parent=11 // pred_check
        %p251 = pneg %p146
      $region30: #{conv_block_forward.3} parent=11 // pred_check_branch
        %253 = sbr.rel (%p251) target = $region32
      $region31: #{conv_block_forward.3} parent=11 // pred_region
        _
      $region32: #{conv_block_forward.3} parent=11 // pred_fallthru
        _
    $region12: #{conv_block_forward.3} parent=5 // pred_fallthru
      _
    %p254 = scmp.lt.s32.totalorder %s15, 2
    // Predicated region
    $region33: #{conv_block_forward.3} parent=5 // pred_check
      %p255 = pneg %p254
    $region34: #{conv_block_forward.3} parent=5 // pred_check_branch
      %257 = sbr.rel (%p255) target = $region36
    $region35: #{conv_block_forward.3} parent=5 // pred_region
      // Predicated region
      $region37: #{conv_block_forward.3} parent=35 // pred_check
        %p258 = pneg %p35
      $region38: #{conv_block_forward.3} parent=35 // pred_check_branch
        %260 = sbr.rel (%p258) target = $region40
      $region39: #{conv_block_forward.3} parent=35 // pred_region
        %p261 = scmp.lt.s32.totalorder %s15, 1
        %s262 = scalar_select %p261, %s15, 1
        %s263 = smul.addr %s262, 36
        %s264 = smul.addr %s263, 8
        %s265 = scalar_lea.vmem %s0, %s264
      $region40: #{conv_block_forward.3} parent=35 // pred_fallthru
        _
    $region36: #{conv_block_forward.3} parent=5 // pred_fallthru
      _
    %p266 = scmp.le.s32.totalorder 1, %s15
    %p267 = scmp.lt.s32.totalorder %s15, 3
    %p268 = pnand %p266, %p267
    %p269 = pneg %p268
    // Predicated region
    $region41: #{conv_block_forward.3} parent=5 // pred_check
      _
    $region42: #{conv_block_forward.3} parent=5 // pred_check_branch
      %271 = sbr.rel (%p268) target = $region44
    $region43: #{conv_block_forward.3} parent=5 // pred_region
      %s272 = ssub.s32 %s15, 1
      %p273 = scmp.lt.s32.totalorder %s20, 1
      %s274 = scalar_select %p273, %s20, 1
      %s275 = smul.addr %s274, 36
      %s276 = smul.addr %s275, 8
      %s277 = scalar_lea.vmem %s0, %s276
      %p278 = pneg %p41
      %p279 = pneg %p38
      %p280 = pneg %p62
      %p281 = pneg %p59
      %p282 = pneg %p83
      %p283 = pneg %p80
      %p284 = pneg %p104
      %p285 = pneg %p101
      %p286 = pneg %p125
      %p287 = pneg %p122
      %p288 = pneg %p146
      %p289 = pneg %p143
      %p290 = pneg %p172
      %p291 = pneg %p169
      %p292 = scmp.lt.s32.totalorder %s20, 1
      %s293 = scalar_select %p292, %s20, 1
      %s294 = smul.addr %s293, 36
      %s295 = smul.addr %s294, 8
      %s296 = scalar_lea.vmem %s6, %s295
      %p297 = pneg %p198
      %p298 = pneg %p195
      %p299 = scmp.lt.s32.totalorder %s20, 1
      %s300 = scalar_select %p299, %s20, 1
      %s301 = scalar_lea.vmem %s7, %s300
      %p302 = pneg %p224
      %p303 = pneg %p221
      %p304 = scmp.lt.s32.totalorder %s20, 1
      %s305 = scalar_select %p304, %s20, 1
      %s306 = scalar_lea.vmem %s8, %s305
      %p307 = scmp.lt.s32.totalorder %s20, 1
      %s308 = scalar_select %p307, %s20, 1
      %s309 = smul.addr %s308, 36
      %s310 = smul.addr %s309, 8
      %s311 = scalar_lea.vmem %s0, %s310
      %p312 = scmp.lt.s32.totalorder %s20, 1
      %s313 = scalar_select %p312, %s20, 1
      %s314 = smul.addr %s313, 36
      %s315 = smul.addr %s314, 8
      %s316 = scalar_lea.vmem %s6, %s315
      %p317 = scmp.lt.s32.totalorder %s20, 1
      %s318 = scalar_select %p317, %s20, 1
      %s319 = scalar_lea.vmem %s7, %s318
      %p320 = scmp.lt.s32.totalorder %s20, 1
      %s321 = scalar_select %p320, %s20, 1
      %s322 = scalar_lea.vmem %s8, %s321
      %v323 = vld [vmem:[%s311] sm:$0xff]
      %v324 = vld [vmem:[%s311 + $0x8] sm:$0xff]
      %v325 = vld [vmem:[%s311 + $0x10] sm:$0xff]
      %v326 = vld [vmem:[%s311 + $0x18] sm:$0xff]
      %v327 = vld [vmem:[%s311 + $0x20] sm:$0xff]
      %v328 = vld [vmem:[%s311 + $0x28] sm:$0xff]
      %v329 = vld [vmem:[%s311 + $0x30] sm:$0xff]
      %v330 = vld [vmem:[%s311 + $0x38] sm:$0xff]
      %v331 = vld [vmem:[%s311 + $0x40] sm:$0xff]
      %v332 = vld [vmem:[%s311 + $0x48] sm:$0xff]
      %v333 = vld [vmem:[%s311 + $0x50] sm:$0xff]
      %v334 = vld [vmem:[%s311 + $0x58] sm:$0xff]
      %v335 = vld [vmem:[%s311 + $0x60] sm:$0xff]
      %v336 = vld [vmem:[%s311 + $0x68] sm:$0xff]
      %v337 = vld [vmem:[%s311 + $0x70] sm:$0xff]
      %v338 = vld [vmem:[%s311 + $0x78] sm:$0xff]
      %v339 = vld [vmem:[%s311 + $0x80] sm:$0xff]
      %v340 = vld [vmem:[%s311 + $0x88] sm:$0xff]
      %v341 = vld [vmem:[%s311 + $0x90] sm:$0xff]
      %v342 = vld [vmem:[%s311 + $0x98] sm:$0xff]
      %v343 = vld [vmem:[%s311 + $0xa0] sm:$0xff]
      %v344 = vld [vmem:[%s311 + $0xa8] sm:$0xff]
      %v345 = vld [vmem:[%s311 + $0xb0] sm:$0xff]
      %v346 = vld [vmem:[%s311 + $0xb8] sm:$0xff]
      %v347 = vld [vmem:[%s311 + $0xc0] sm:$0xff]
      %v348 = vld [vmem:[%s311 + $0xc8] sm:$0xff]
      %v349 = vld [vmem:[%s311 + $0xd0] sm:$0xff]
      %v350 = vld [vmem:[%s311 + $0xd8] sm:$0xff]
      %v351 = vld [vmem:[%s311 + $0xe0] sm:$0xff]
      %v352 = vld [vmem:[%s311 + $0xe8] sm:$0xff]
      %v353 = vld [vmem:[%s311 + $0xf0] sm:$0xff]
      %v354 = vld [vmem:[%s311 + $0xf8] sm:$0xff]
      %v355 = vld [vmem:[%s311 + $0x100] sm:$0xff]
      %v356 = vld [vmem:[%s311 + $0x108] sm:$0xff]
      %v357 = vld [vmem:[%s311 + $0x110] sm:$0xff]
      %v358 = vld [vmem:[%s311 + $0x118] sm:$0xff]
      %v359 = vld [vmem:[%s2] sm:$0x1]
      %v361 = vlaneseq
      %v362 = vshrl.u32 %v361, 7
      %v363 = vsub.s32 0, %v362
      %v364 = vrot.slane %v359, %v363
      %v366 = vmul.f32 %v323, %v364
      %v367 = vmul.f32 %v324, %v364
      %v368 = vmul.f32 %v325, %v364
      %v369 = vmul.f32 %v326, %v364
      %v370 = vmul.f32 %v327, %v364
      %v371 = vmul.f32 %v328, %v364
      %v372 = vmul.f32 %v329, %v364
      %v373 = vmul.f32 %v330, %v364
      %v374 = vmul.f32 %v331, %v364
      %v375 = vmul.f32 %v332, %v364
      %v376 = vmul.f32 %v333, %v364
      %v377 = vmul.f32 %v334, %v364
      %v378 = vmul.f32 %v335, %v364
      %v379 = vmul.f32 %v336, %v364
      %v380 = vmul.f32 %v337, %v364
      %v381 = vmul.f32 %v338, %v364
      %v382 = vmul.f32 %v339, %v364
      %v383 = vmul.f32 %v340, %v364
      %v384 = vmul.f32 %v341, %v364
      %v385 = vmul.f32 %v342, %v364
      %v386 = vmul.f32 %v343, %v364
      %v387 = vmul.f32 %v344, %v364
      %v388 = vmul.f32 %v345, %v364
      %v389 = vmul.f32 %v346, %v364
      %v390 = vmul.f32 %v347, %v364
      %v391 = vmul.f32 %v348, %v364
      %v392 = vmul.f32 %v349, %v364
      %v393 = vmul.f32 %v350, %v364
      %v394 = vmul.f32 %v351, %v364
      %v395 = vmul.f32 %v352, %v364
      %v396 = vmul.f32 %v353, %v364
      %v397 = vmul.f32 %v354, %v364
      %v398 = vmul.f32 %v355, %v364
      %v399 = vmul.f32 %v356, %v364
      %v400 = vmul.f32 %v357, %v364
      %v401 = vmul.f32 %v358, %v364
      %v402 = vld [vmem:[%s3] sm:$0x1]
      %v404 = vlaneseq
      %v405 = vshrl.u32 %v404, 7
      %v406 = vsub.s32 0, %v405
      %v407 = vrot.slane %v402, %v406
      %v409 = vadd.f32 %v366, %v407
      %v410 = vadd.f32 %v367, %v407
      %v411 = vadd.f32 %v368, %v407
      %v412 = vadd.f32 %v369, %v407
      %v413 = vadd.f32 %v370, %v407
      %v414 = vadd.f32 %v371, %v407
      %v415 = vadd.f32 %v372, %v407
      %v416 = vadd.f32 %v373, %v407
      %v417 = vadd.f32 %v374, %v407
      %v418 = vadd.f32 %v375, %v407
      %v419 = vadd.f32 %v376, %v407
      %v420 = vadd.f32 %v377, %v407
      %v421 = vadd.f32 %v378, %v407
      %v422 = vadd.f32 %v379, %v407
      %v423 = vadd.f32 %v380, %v407
      %v424 = vadd.f32 %v381, %v407
      %v425 = vadd.f32 %v382, %v407
      %v426 = vadd.f32 %v383, %v407
      %v427 = vadd.f32 %v384, %v407
      %v428 = vadd.f32 %v385, %v407
      %v429 = vadd.f32 %v386, %v407
      %v430 = vadd.f32 %v387, %v407
      %v431 = vadd.f32 %v388, %v407
      %v432 = vadd.f32 %v389, %v407
      %v433 = vadd.f32 %v390, %v407
      %v434 = vadd.f32 %v391, %v407
      %v435 = vadd.f32 %v392, %v407
      %v436 = vadd.f32 %v393, %v407
      %v437 = vadd.f32 %v394, %v407
      %v438 = vadd.f32 %v395, %v407
      %v439 = vadd.f32 %v396, %v407
      %v440 = vadd.f32 %v397, %v407
      %v441 = vadd.f32 %v398, %v407
      %v442 = vadd.f32 %v399, %v407
      %v443 = vadd.f32 %v400, %v407
      %v444 = vadd.f32 %v401, %v407
      %v445 = vmax.f32 %v409, 0.0
      %v446 = vmax.f32 %v410, 0.0
      %v447 = vmax.f32 %v411, 0.0
      %v448 = vmax.f32 %v412, 0.0
      %v449 = vmax.f32 %v413, 0.0
      %v450 = vmax.f32 %v414, 0.0
      %v451 = vmax.f32 %v415, 0.0
      %v452 = vmax.f32 %v416, 0.0
      %v453 = vmax.f32 %v417, 0.0
      %v454 = vmax.f32 %v418, 0.0
      %v455 = vmax.f32 %v419, 0.0
      %v456 = vmax.f32 %v420, 0.0
      %v457 = vmax.f32 %v421, 0.0
      %v458 = vmax.f32 %v422, 0.0
      %v459 = vmax.f32 %v423, 0.0
      %v460 = vmax.f32 %v424, 0.0
      %v461 = vmax.f32 %v425, 0.0
      %v462 = vmax.f32 %v426, 0.0
      %v463 = vmax.f32 %v427, 0.0
      %v464 = vmax.f32 %v428, 0.0
      %v465 = vmax.f32 %v429, 0.0
      %v466 = vmax.f32 %v430, 0.0
      %v467 = vmax.f32 %v431, 0.0
      %v468 = vmax.f32 %v432, 0.0
      %v469 = vmax.f32 %v433, 0.0
      %v470 = vmax.f32 %v434, 0.0
      %v471 = vmax.f32 %v435, 0.0
      %v472 = vmax.f32 %v436, 0.0
      %v473 = vmax.f32 %v437, 0.0
      %v474 = vmax.f32 %v438, 0.0
      %v475 = vmax.f32 %v439, 0.0
      %v476 = vmax.f32 %v440, 0.0
      %v477 = vmax.f32 %v441, 0.0
      %v478 = vmax.f32 %v442, 0.0
      %v479 = vmax.f32 %v443, 0.0
      %v480 = vmax.f32 %v444, 0.0
      %v481 = vld [vmem:[%s1] sm:$0xff]
      %v482 = vld [vmem:[%s1 + $0x8] sm:$0xff]
      %v483 = vld [vmem:[%s1 + $0x10] sm:$0xff]
      %v484 = vld [vmem:[%s1 + $0x18] sm:$0xff]
      %v485 = vld [vmem:[%s1 + $0x20] sm:$0xff]
      %v486 = vld [vmem:[%s1 + $0x28] sm:$0xff]
      %v487 = vld [vmem:[%s1 + $0x30] sm:$0xff]
      %v488 = vld [vmem:[%s1 + $0x38] sm:$0xff]
      %v489 = vld [vmem:[%s1 + $0x40] sm:$0xff]
      %v490 = vld [vmem:[%s1 + $0x48] sm:$0xff]
      %v491 = vld [vmem:[%s1 + $0x50] sm:$0xff]
      %v492 = vld [vmem:[%s1 + $0x58] sm:$0xff]
      %v493 = vld [vmem:[%s1 + $0x60] sm:$0xff]
      %v494 = vld [vmem:[%s1 + $0x68] sm:$0xff]
      %v495 = vld [vmem:[%s1 + $0x70] sm:$0xff]
      %v496 = vld [vmem:[%s1 + $0x78] sm:$0xff]
      %v497 = vld [vmem:[%s1 + $0x80] sm:$0xff]
      %v498 = vld [vmem:[%s1 + $0x88] sm:$0xff]
      %v499 = vld [vmem:[%s1 + $0x90] sm:$0xff]
      %v500 = vld [vmem:[%s1 + $0x98] sm:$0xff]
      %v501 = vld [vmem:[%s1 + $0xa0] sm:$0xff]
      %v502 = vld [vmem:[%s1 + $0xa8] sm:$0xff]
      %v503 = vld [vmem:[%s1 + $0xb0] sm:$0xff]
      %v504 = vld [vmem:[%s1 + $0xb8] sm:$0xff]
      %v505 = vld [vmem:[%s1 + $0xc0] sm:$0xff]
      %v506 = vld [vmem:[%s1 + $0xc8] sm:$0xff]
      %v507 = vld [vmem:[%s1 + $0xd0] sm:$0xff]
      %v508 = vld [vmem:[%s1 + $0xd8] sm:$0xff]
      %v509 = vld [vmem:[%s1 + $0xe0] sm:$0xff]
      %v510 = vld [vmem:[%s1 + $0xe8] sm:$0xff]
      %v511 = vld [vmem:[%s1 + $0xf0] sm:$0xff]
      %v512 = vld [vmem:[%s1 + $0xf8] sm:$0xff]
      %v513 = vld [vmem:[%s1 + $0x100] sm:$0xff]
      %v514 = vld [vmem:[%s1 + $0x108] sm:$0xff]
      %v515 = vld [vmem:[%s1 + $0x110] sm:$0xff]
      %v516 = vld [vmem:[%s1 + $0x118] sm:$0xff]
      %518 = vset.pattern.permute.xlu0 0
      %519 = vperm.xlu0 %518, %v481
      %v520 = vpop.permute.xlu0 %519
      %523 = vset.pattern.permute.xlu0 0
      %524 = vperm.xlu0 %523, %v482
      %v525 = vpop.permute.xlu0 %524
      %528 = vset.pattern.permute.xlu0 0
      %529 = vperm.xlu0 %528, %v483
      %v530 = vpop.permute.xlu0 %529
      %533 = vset.pattern.permute.xlu0 0
      %534 = vperm.xlu0 %533, %v484
      %v535 = vpop.permute.xlu0 %534
      %538 = vset.pattern.permute.xlu0 0
      %539 = vperm.xlu0 %538, %v485
      %v540 = vpop.permute.xlu0 %539
      %543 = vset.pattern.permute.xlu0 0
      %544 = vperm.xlu0 %543, %v486
      %v545 = vpop.permute.xlu0 %544
      %548 = vset.pattern.permute.xlu0 0
      %549 = vperm.xlu0 %548, %v487
      %v550 = vpop.permute.xlu0 %549
      %553 = vset.pattern.permute.xlu0 0
      %554 = vperm.xlu0 %553, %v488
      %v555 = vpop.permute.xlu0 %554
      %558 = vset.pattern.permute.xlu0 0
      %559 = vperm.xlu0 %558, %v489
      %v560 = vpop.permute.xlu0 %559
      %563 = vset.pattern.permute.xlu0 0
      %564 = vperm.xlu0 %563, %v490
      %v565 = vpop.permute.xlu0 %564
      %568 = vset.pattern.permute.xlu0 0
      %569 = vperm.xlu0 %568, %v491
      %v570 = vpop.permute.xlu0 %569
      %573 = vset.pattern.permute.xlu0 0
      %574 = vperm.xlu0 %573, %v492
      %v575 = vpop.permute.xlu0 %574
      %578 = vset.pattern.permute.xlu0 0
      %579 = vperm.xlu0 %578, %v493
      %v580 = vpop.permute.xlu0 %579
      %583 = vset.pattern.permute.xlu0 0
      %584 = vperm.xlu0 %583, %v494
      %v585 = vpop.permute.xlu0 %584
      %588 = vset.pattern.permute.xlu0 0
      %589 = vperm.xlu0 %588, %v495
      %v590 = vpop.permute.xlu0 %589
      %593 = vset.pattern.permute.xlu0 0
      %594 = vperm.xlu0 %593, %v496
      %v595 = vpop.permute.xlu0 %594
      %598 = vset.pattern.permute.xlu0 0
      %599 = vperm.xlu0 %598, %v497
      %v600 = vpop.permute.xlu0 %599
      %603 = vset.pattern.permute.xlu0 0
      %604 = vperm.xlu0 %603, %v498
      %v605 = vpop.permute.xlu0 %604
      %608 = vset.pattern.permute.xlu0 0
      %609 = vperm.xlu0 %608, %v499
      %v610 = vpop.permute.xlu0 %609
      %613 = vset.pattern.permute.xlu0 0
      %614 = vperm.xlu0 %613, %v500
      %v615 = vpop.permute.xlu0 %614
      %618 = vset.pattern.permute.xlu0 0
      %619 = vperm.xlu0 %618, %v501
      %v620 = vpop.permute.xlu0 %619
      %623 = vset.pattern.permute.xlu0 0
      %624 = vperm.xlu0 %623, %v502
      %v625 = vpop.permute.xlu0 %624
      %628 = vset.pattern.permute.xlu0 0
      %629 = vperm.xlu0 %628, %v503
      %v630 = vpop.permute.xlu0 %629
      %633 = vset.pattern.permute.xlu0 0
      %634 = vperm.xlu0 %633, %v504
      %v635 = vpop.permute.xlu0 %634
      %638 = vset.pattern.permute.xlu0 0
      %639 = vperm.xlu0 %638, %v505
      %v640 = vpop.permute.xlu0 %639
      %643 = vset.pattern.permute.xlu0 0
      %644 = vperm.xlu0 %643, %v506
      %v645 = vpop.permute.xlu0 %644
      %648 = vset.pattern.permute.xlu0 0
      %649 = vperm.xlu0 %648, %v507
      %v650 = vpop.permute.xlu0 %649
      %653 = vset.pattern.permute.xlu0 0
      %654 = vperm.xlu0 %653, %v508
      %v655 = vpop.permute.xlu0 %654
      %658 = vset.pattern.permute.xlu0 0
      %659 = vperm.xlu0 %658, %v509
      %v660 = vpop.permute.xlu0 %659
      %663 = vset.pattern.permute.xlu0 0
      %664 = vperm.xlu0 %663, %v510
      %v665 = vpop.permute.xlu0 %664
      %668 = vset.pattern.permute.xlu0 0
      %669 = vperm.xlu0 %668, %v511
      %v670 = vpop.permute.xlu0 %669
      %673 = vset.pattern.permute.xlu0 0
      %674 = vperm.xlu0 %673, %v512
      %v675 = vpop.permute.xlu0 %674
      %678 = vset.pattern.permute.xlu0 0
      %679 = vperm.xlu0 %678, %v513
      %v680 = vpop.permute.xlu0 %679
      %683 = vset.pattern.permute.xlu0 0
      %684 = vperm.xlu0 %683, %v514
      %v685 = vpop.permute.xlu0 %684
      %688 = vset.pattern.permute.xlu0 0
      %689 = vperm.xlu0 %688, %v515
      %v690 = vpop.permute.xlu0 %689
      %693 = vset.pattern.permute.xlu0 0
      %694 = vperm.xlu0 %693, %v516
      %v695 = vpop.permute.xlu0 %694
      %v697 = vmul.f32 %v445, %v520
      %v698 = vmul.f32 %v446, %v525
      %v699 = vmul.f32 %v447, %v530
      %v700 = vmul.f32 %v448, %v535
      %v701 = vmul.f32 %v449, %v540
      %v702 = vmul.f32 %v450, %v545
      %v703 = vmul.f32 %v451, %v550
      %v704 = vmul.f32 %v452, %v555
      %v705 = vmul.f32 %v453, %v560
      %v706 = vmul.f32 %v454, %v565
      %v707 = vmul.f32 %v455, %v570
      %v708 = vmul.f32 %v456, %v575
      %v709 = vmul.f32 %v457, %v580
      %v710 = vmul.f32 %v458, %v585
      %v711 = vmul.f32 %v459, %v590
      %v712 = vmul.f32 %v460, %v595
      %v713 = vmul.f32 %v461, %v600
      %v714 = vmul.f32 %v462, %v605
      %v715 = vmul.f32 %v463, %v610
      %v716 = vmul.f32 %v464, %v615
      %v717 = vmul.f32 %v465, %v620
      %v718 = vmul.f32 %v466, %v625
      %v719 = vmul.f32 %v467, %v630
      %v720 = vmul.f32 %v468, %v635
      %v721 = vmul.f32 %v469, %v640
      %v722 = vmul.f32 %v470, %v645
      %v723 = vmul.f32 %v471, %v650
      %v724 = vmul.f32 %v472, %v655
      %v725 = vmul.f32 %v473, %v660
      %v726 = vmul.f32 %v474, %v665
      %v727 = vmul.f32 %v475, %v670
      %v728 = vmul.f32 %v476, %v675
      %v729 = vmul.f32 %v477, %v680
      %v730 = vmul.f32 %v478, %v685
      %v731 = vmul.f32 %v479, %v690
      %v732 = vmul.f32 %v480, %v695
      %vm733 = vcmask 64512
      %734 = vst.msk [vmem:[#allocation2] sm:$0xff] %vm733, 0.0
      %735 = vst.msk [vmem:[#allocation2 + $0x8] sm:$0xff] %vm733, 0.0
      %736 = vst.msk [vmem:[#allocation2 + $0x10] sm:$0xff] %vm733, 0.0
      %737 = vst.msk [vmem:[#allocation2 + $0x18] sm:$0xff] %vm733, 0.0
      %738 = vst.msk [vmem:[#allocation2 + $0x20] sm:$0xff] %vm733, 0.0
      %739 = vst.msk [vmem:[#allocation2 + $0x28] sm:$0xff] %vm733, 0.0
      %740 = vst.msk [vmem:[#allocation2 + $0x30] sm:$0xff] %vm733, 0.0
      %741 = vst.msk [vmem:[#allocation2 + $0x38] sm:$0xff] %vm733, 0.0
      %742 = vst.msk [vmem:[#allocation2 + $0x40] sm:$0xff] %vm733, 0.0
      %743 = vst.msk [vmem:[#allocation2 + $0x48] sm:$0xff] %vm733, 0.0
      %744 = vst.msk [vmem:[#allocation2 + $0x50] sm:$0xff] %vm733, 0.0
      %745 = vst.msk [vmem:[#allocation2 + $0x58] sm:$0xff] %vm733, 0.0
      %746 = vst.msk [vmem:[#allocation2 + $0x60] sm:$0xff] %vm733, 0.0
      %747 = vst.msk [vmem:[#allocation2 + $0x68] sm:$0xff] %vm733, 0.0
      %748 = vst.msk [vmem:[#allocation2 + $0x70] sm:$0xff] %vm733, 0.0
      %749 = vst.msk [vmem:[#allocation2 + $0x78] sm:$0xff] %vm733, 0.0
      %750 = vst.msk [vmem:[#allocation2 + $0x80] sm:$0xff] %vm733, 0.0
      %751 = vst.msk [vmem:[#allocation2 + $0x88] sm:$0xff] %vm733, 0.0
      %752 = vst.msk [vmem:[#allocation2 + $0x90] sm:$0xff] %vm733, 0.0
      %753 = vst.msk [vmem:[#allocation2 + $0x98] sm:$0xff] %vm733, 0.0
      %754 = vst.msk [vmem:[#allocation2 + $0xa0] sm:$0xff] %vm733, 0.0
      %755 = vst.msk [vmem:[#allocation2 + $0xa8] sm:$0xff] %vm733, 0.0
      %756 = vst.msk [vmem:[#allocation2 + $0xb0] sm:$0xff] %vm733, 0.0
      %757 = vst.msk [vmem:[#allocation2 + $0xb8] sm:$0xff] %vm733, 0.0
      %758 = vst.msk [vmem:[#allocation2 + $0xc0] sm:$0xff] %vm733, 0.0
      %759 = vst.msk [vmem:[#allocation2 + $0xc8] sm:$0xff] %vm733, 0.0
      %760 = vst.msk [vmem:[#allocation2 + $0xd0] sm:$0xff] %vm733, 0.0
      %761 = vst.msk [vmem:[#allocation2 + $0xd8] sm:$0xff] %vm733, 0.0
      %762 = vst.msk [vmem:[#allocation2 + $0xe0] sm:$0xff] %vm733, 0.0
      %763 = vst.msk [vmem:[#allocation2 + $0xe8] sm:$0xff] %vm733, 0.0
      %764 = vst.msk [vmem:[#allocation2 + $0xf0] sm:$0xff] %vm733, 0.0
      %765 = vst.msk [vmem:[#allocation2 + $0xf8] sm:$0xff] %vm733, 0.0
      %766 = vst.msk [vmem:[#allocation2 + $0x100] sm:$0xff] %vm733, 0.0
      %767 = vst.msk [vmem:[#allocation2 + $0x108] sm:$0xff] %vm733, 0.0
      %768 = vst.msk [vmem:[#allocation2 + $0x110] sm:$0xff] %vm733, 0.0
      %769 = vst.msk [vmem:[#allocation2 + $0x118] sm:$0xff] %vm733, 0.0
      %770 = vst.msk [vmem:[#allocation2 + $0x120] sm:$0xff] %vm733, 0.0
      %771 = vst.msk [vmem:[#allocation2 + $0x128] sm:$0xff] %vm733, 0.0
      %772 = vst.msk [vmem:[#allocation2 + $0x130] sm:$0xff] %vm733, 0.0
      %773 = vst.msk [vmem:[#allocation2 + $0x138] sm:$0xff] %vm733, 0.0
      %774 = vst.msk [vmem:[#allocation2 + $0x140] sm:$0xff] %vm733, 0.0
      %775 = vst.msk [vmem:[#allocation2 + $0x148] sm:$0xff] %vm733, 0.0
      %776 = vst.msk [vmem:[#allocation2 + $0x18] sm:$0xff] %vm733, %v697
      %777 = vst.msk [vmem:[#allocation2 + $0x20] sm:$0xff] %vm733, %v698
      %778 = vst.msk [vmem:[#allocation2 + $0x28] sm:$0xff] %vm733, %v699
      %779 = vst.msk [vmem:[#allocation2 + $0x30] sm:$0xff] %vm733, %v700
      %780 = vst.msk [vmem:[#allocation2 + $0x38] sm:$0xff] %vm733, %v701
      %781 = vst.msk [vmem:[#allocation2 + $0x40] sm:$0xff] %vm733, %v702
      %782 = vst.msk [vmem:[#allocation2 + $0x48] sm:$0xff] %vm733, %v703
      %783 = vst.msk [vmem:[#allocation2 + $0x50] sm:$0xff] %vm733, %v704
      %784 = vst.msk [vmem:[#allocation2 + $0x58] sm:$0xff] %vm733, %v705
      %785 = vst.msk [vmem:[#allocation2 + $0x60] sm:$0xff] %vm733, %v706
      %786 = vst.msk [vmem:[#allocation2 + $0x68] sm:$0xff] %vm733, %v707
      %787 = vst.msk [vmem:[#allocation2 + $0x70] sm:$0xff] %vm733, %v708
      %788 = vst.msk [vmem:[#allocation2 + $0x78] sm:$0xff] %vm733, %v709
      %789 = vst.msk [vmem:[#allocation2 + $0x80] sm:$0xff] %vm733, %v710
      %790 = vst.msk [vmem:[#allocation2 + $0x88] sm:$0xff] %vm733, %v711
      %791 = vst.msk [vmem:[#allocation2 + $0x90] sm:$0xff] %vm733, %v712
      %792 = vst.msk [vmem:[#allocation2 + $0x98] sm:$0xff] %vm733, %v713
      %793 = vst.msk [vmem:[#allocation2 + $0xa0] sm:$0xff] %vm733, %v714
      %794 = vst.msk [vmem:[#allocation2 + $0xa8] sm:$0xff] %vm733, %v715
      %795 = vst.msk [vmem:[#allocation2 + $0xb0] sm:$0xff] %vm733, %v716
      %796 = vst.msk [vmem:[#allocation2 + $0xb8] sm:$0xff] %vm733, %v717
      %797 = vst.msk [vmem:[#allocation2 + $0xc0] sm:$0xff] %vm733, %v718
      %798 = vst.msk [vmem:[#allocation2 + $0xc8] sm:$0xff] %vm733, %v719
      %799 = vst.msk [vmem:[#allocation2 + $0xd0] sm:$0xff] %vm733, %v720
      %800 = vst.msk [vmem:[#allocation2 + $0xd8] sm:$0xff] %vm733, %v721
      %801 = vst.msk [vmem:[#allocation2 + $0xe0] sm:$0xff] %vm733, %v722
      %802 = vst.msk [vmem:[#allocation2 + $0xe8] sm:$0xff] %vm733, %v723
      %803 = vst.msk [vmem:[#allocation2 + $0xf0] sm:$0xff] %vm733, %v724
      %804 = vst.msk [vmem:[#allocation2 + $0xf8] sm:$0xff] %vm733, %v725
      %805 = vst.msk [vmem:[#allocation2 + $0x100] sm:$0xff] %vm733, %v726
      %806 = vst.msk [vmem:[#allocation2 + $0x108] sm:$0xff] %vm733, %v727
      %807 = vst.msk [vmem:[#allocation2 + $0x110] sm:$0xff] %vm733, %v728
      %808 = vst.msk [vmem:[#allocation2 + $0x118] sm:$0xff] %vm733, %v729
      %809 = vst.msk [vmem:[#allocation2 + $0x120] sm:$0xff] %vm733, %v730
      %810 = vst.msk [vmem:[#allocation2 + $0x128] sm:$0xff] %vm733, %v731
      %811 = vst.msk [vmem:[#allocation2 + $0x130] sm:$0xff] %vm733, %v732
      %v812 = vld [vmem:[#allocation2 + $0x5] sm:$0xff]
      %v813 = vld [vmem:[#allocation2 + $0xd] sm:$0xff]
      %v814 = vld [vmem:[#allocation2 + $0x15] sm:$0xff]
      %v815 = vld [vmem:[#allocation2 + $0x1d] sm:$0xff]
      %v816 = vld [vmem:[#allocation2 + $0x25] sm:$0xff]
      %v817 = vld [vmem:[#allocation2 + $0x2d] sm:$0xff]
      %v818 = vld [vmem:[#allocation2 + $0x35] sm:$0xff]
      %v819 = vld [vmem:[#allocation2 + $0x3d] sm:$0xff]
      %v820 = vld [vmem:[#allocation2 + $0x45] sm:$0xff]
      %v821 = vld [vmem:[#allocation2 + $0x4d] sm:$0xff]
      %v822 = vld [vmem:[#allocation2 + $0x55] sm:$0xff]
      %v823 = vld [vmem:[#allocation2 + $0x5d] sm:$0xff]
      %v824 = vld [vmem:[#allocation2 + $0x65] sm:$0xff]
      %v825 = vld [vmem:[#allocation2 + $0x6d] sm:$0xff]
      %v826 = vld [vmem:[#allocation2 + $0x75] sm:$0xff]
      %v827 = vld [vmem:[#allocation2 + $0x7d] sm:$0xff]
      %v828 = vld [vmem:[#allocation2 + $0x85] sm:$0xff]
      %v829 = vld [vmem:[#allocation2 + $0x8d] sm:$0xff]
      %v830 = vld [vmem:[#allocation2 + $0x95] sm:$0xff]
      %v831 = vld [vmem:[#allocation2 + $0x9d] sm:$0xff]
      %v832 = vld [vmem:[#allocation2 + $0xa5] sm:$0xff]
      %v833 = vld [vmem:[#allocation2 + $0xad] sm:$0xff]
      %v834 = vld [vmem:[#allocation2 + $0xb5] sm:$0xff]
      %v835 = vld [vmem:[#allocation2 + $0xbd] sm:$0xff]
      %v836 = vld [vmem:[#allocation2 + $0xc5] sm:$0xff]
      %v837 = vld [vmem:[#allocation2 + $0xcd] sm:$0xff]
      %v838 = vld [vmem:[#allocation2 + $0xd5] sm:$0xff]
      %v839 = vld [vmem:[#allocation2 + $0xdd] sm:$0xff]
      %v840 = vld [vmem:[#allocation2 + $0xe5] sm:$0xff]
      %v841 = vld [vmem:[#allocation2 + $0xed] sm:$0xff]
      %v842 = vld [vmem:[#allocation2 + $0xf5] sm:$0xff]
      %v843 = vld [vmem:[#allocation2 + $0xfd] sm:$0xff]
      %v844 = vld [vmem:[#allocation2 + $0x105] sm:$0xff]
      %v845 = vld [vmem:[#allocation2 + $0x10d] sm:$0xff]
      %v846 = vld [vmem:[#allocation2 + $0x115] sm:$0xff]
      %v847 = vld [vmem:[#allocation2 + $0x11d] sm:$0xff]
      %v848 = vld [vmem:[%s4] sm:$0xff]
      %v849 = vld [vmem:[#allocation2 + $0x6] sm:$0xff]
      %v850 = vld [vmem:[#allocation2 + $0xe] sm:$0xff]
      %v851 = vld [vmem:[#allocation2 + $0x16] sm:$0xff]
      %v852 = vld [vmem:[#allocation2 + $0x1e] sm:$0xff]
      %v853 = vld [vmem:[#allocation2 + $0x26] sm:$0xff]
      %v854 = vld [vmem:[#allocation2 + $0x2e] sm:$0xff]
      %v855 = vld [vmem:[#allocation2 + $0x36] sm:$0xff]
      %v856 = vld [vmem:[#allocation2 + $0x3e] sm:$0xff]
      %v857 = vld [vmem:[#allocation2 + $0x46] sm:$0xff]
      %v858 = vld [vmem:[#allocation2 + $0x4e] sm:$0xff]
      %v859 = vld [vmem:[#allocation2 + $0x56] sm:$0xff]
      %v860 = vld [vmem:[#allocation2 + $0x5e] sm:$0xff]
      %v861 = vld [vmem:[#allocation2 + $0x66] sm:$0xff]
      %v862 = vld [vmem:[#allocation2 + $0x6e] sm:$0xff]
      %v863 = vld [vmem:[#allocation2 + $0x76] sm:$0xff]
      %v864 = vld [vmem:[#allocation2 + $0x7e] sm:$0xff]
      %v865 = vld [vmem:[#allocation2 + $0x86] sm:$0xff]
      %v866 = vld [vmem:[#allocation2 + $0x8e] sm:$0xff]
      %v867 = vld [vmem:[#allocation2 + $0x96] sm:$0xff]
      %v868 = vld [vmem:[#allocation2 + $0x9e] sm:$0xff]
      %v869 = vld [vmem:[#allocation2 + $0xa6] sm:$0xff]
      %v870 = vld [vmem:[#allocation2 + $0xae] sm:$0xff]
      %v871 = vld [vmem:[#allocation2 + $0xb6] sm:$0xff]
      %v872 = vld [vmem:[#allocation2 + $0xbe] sm:$0xff]
      %v873 = vld [vmem:[#allocation2 + $0xc6] sm:$0xff]
      %v874 = vld [vmem:[#allocation2 + $0xce] sm:$0xff]
      %v875 = vld [vmem:[#allocation2 + $0xd6] sm:$0xff]
      %v876 = vld [vmem:[#allocation2 + $0xde] sm:$0xff]
      %v877 = vld [vmem:[#allocation2 + $0xe6] sm:$0xff]
      %v878 = vld [vmem:[#allocation2 + $0xee] sm:$0xff]
      %v879 = vld [vmem:[#allocation2 + $0xf6] sm:$0xff]
      %v880 = vld [vmem:[#allocation2 + $0xfe] sm:$0xff]
      %v881 = vld [vmem:[#allocation2 + $0x106] sm:$0xff]
      %v882 = vld [vmem:[#allocation2 + $0x10e] sm:$0xff]
      %v883 = vld [vmem:[#allocation2 + $0x116] sm:$0xff]
      %v884 = vld [vmem:[#allocation2 + $0x11e] sm:$0xff]
      %s885 = scalar_lea.vmem %s4, 8
      %v886 = vld [vmem:[%s885] sm:$0xff]
      %v888 = vsel %vm733, %v849, 0
      %v891 = vsel %vm733, %v850, 0
      %v894 = vsel %vm733, %v851, 0
      %v897 = vsel %vm733, %v852, 0
      %v900 = vsel %vm733, %v853, 0
      %v903 = vsel %vm733, %v854, 0
      %v906 = vsel %vm733, %v855, 0
      %v909 = vsel %vm733, %v856, 0
      %v912 = vsel %vm733, %v857, 0
      %v915 = vsel %vm733, %v858, 0
      %v918 = vsel %vm733, %v859, 0
      %v921 = vsel %vm733, %v860, 0
      %v924 = vsel %vm733, %v861, 0
      %v927 = vsel %vm733, %v862, 0
      %v930 = vsel %vm733, %v863, 0
      %v933 = vsel %vm733, %v864, 0
      %v936 = vsel %vm733, %v865, 0
      %v939 = vsel %vm733, %v866, 0
      %v942 = vsel %vm733, %v867, 0
      %v945 = vsel %vm733, %v868, 0
      %v948 = vsel %vm733, %v869, 0
      %v951 = vsel %vm733, %v870, 0
      %v954 = vsel %vm733, %v871, 0
      %v957 = vsel %vm733, %v872, 0
      %v960 = vsel %vm733, %v873, 0
      %v963 = vsel %vm733, %v874, 0
      %v966 = vsel %vm733, %v875, 0
      %v969 = vsel %vm733, %v876, 0
      %v972 = vsel %vm733, %v877, 0
      %v975 = vsel %vm733, %v878, 0
      %v978 = vsel %vm733, %v879, 0
      %v981 = vsel %vm733, %v880, 0
      %v984 = vsel %vm733, %v881, 0
      %v987 = vsel %vm733, %v882, 0
      %v990 = vsel %vm733, %v883, 0
      %v993 = vsel %vm733, %v884, 0
      %995 = vmatprep.subr.mxu0 0.0
      %996 = vmatpush1.msra.mxu0 %v886
      %997 = vmatprep.subr.mxu0 0.0
      %998 = vmatpush1.msra.mxu0 0.0
      %999 = vmatprep.subr.mxu0 0.0
      %1000 = vmatpush1.msra.mxu0 0.0
      %1001 = vmatprep.subr.mxu0 0.0
      %1002 = vmatpush1.msra.mxu0 0.0
      %1003 = vmatprep.subr.mxu0 0.0
      %1004 = vmatpush1.msra.mxu0 0.0
      %1005 = vmatprep.subr.mxu0 0.0
      %1006 = vmatpush1.msra.mxu0 0.0
      %1007 = vmatprep.subr.mxu0 0.0
      %1008 = vmatpush1.msra.mxu0 0.0
      %1009 = vmatprep.subr.mxu0 0.0
      %1010 = vmatpush1.msra.mxu0 0.0
      %1011 = vmatprep.subr.mxu0 0.0
      %1012 = vmatpush1.msra.mxu0 0.0
      %1013 = vmatprep.subr.mxu0 0.0
      %1014 = vmatpush1.msra.mxu0 0.0
      %1015 = vmatprep.subr.mxu0 0.0
      %1016 = vmatpush1.msra.mxu0 0.0
      %1017 = vmatprep.subr.mxu0 0.0
      %1018 = vmatpush1.msra.mxu0 0.0
      %1019 = vmatprep.subr.mxu0 0.0
      %1020 = vmatpush1.msra.mxu0 0.0
      %1021 = vmatprep.subr.mxu0 0.0
      %1022 = vmatpush1.msra.mxu0 0.0
      %1023 = vmatprep.subr.mxu0 0.0
      %1024 = vmatpush1.msra.mxu0 0.0
      %1025 = vmatprep.subr.mxu0 0.0
      %1026 = vmatpush1.msra.mxu0 0.0
      %1027 = vmatprep.subr.mxu0 0.0
      %1028 = vmatpush1.msra.mxu0 0.0
      %1029 = vmatprep.subr.mxu0 0.0
      %1030 = vmatpush1.msra.mxu0 0.0
      %1031 = vmatprep.subr.mxu0 0.0
      %1032 = vmatpush1.msra.mxu0 0.0
      %1033 = vmatprep.subr.mxu0 0.0
      %1034 = vmatpush1.msra.mxu0 0.0
      %1035 = vmatprep.subr.mxu0 0.0
      %1036 = vmatpush1.msra.mxu0 0.0
      %1037 = vmatprep.subr.mxu0 0.0
      %1038 = vmatpush1.msra.mxu0 0.0
      %1039 = vmatprep.subr.mxu0 0.0
      %1040 = vmatpush1.msra.mxu0 0.0
      %1041 = vmatprep.subr.mxu0 0.0
      %1042 = vmatpush1.msra.mxu0 0.0
      %1043 = vmatprep.subr.mxu0 0.0
      %1044 = vmatpush1.msra.mxu0 0.0
      %1045 = vmatprep.subr.mxu0 0.0
      %1046 = vmatpush1.msra.mxu0 0.0
      %1047 = vmatprep.subr.mxu0 0.0
      %1048 = vmatpush1.msra.mxu0 0.0
      %1049 = vmatprep.subr.mxu0 0.0
      %1050 = vmatpush1.msra.mxu0 0.0
      %1051 = vmatprep.subr.mxu0 0.0
      %1052 = vmatpush1.msra.mxu0 0.0
      %1053 = vmatprep.subr.mxu0 0.0
      %1054 = vmatpush1.msra.mxu0 0.0
      %1055 = vmatprep.subr.mxu0 0.0
      %1056 = vmatpush1.msra.mxu0 0.0
      %1057 = vmatprep.subr.mxu0 0.0
      %1058 = vmatpush1.msra.mxu0 0.0
      %1059 = vmatprep.mubr.f32.mxu0 0.0
      %1060 = vmatmul.mubr.f32.gmra.mrb[0].mxu0 %v888
      %v1061 = vpop.f32.mrb[0].mxu0
      %v1062 = vadd.f32 0.0, %v1061
      %v1063 = vpop.f32.mrb[0].mxu0
      %1064 = vmatprep.mubr.f32.mxu0 0.0
      %1065 = vmatmul.mubr.f32.gmra.mrb[0].mxu0 %v891
      %v1066 = vpop.f32.mrb[0].mxu0
      %v1067 = vadd.f32 0.0, %v1066
      %v1068 = vpop.f32.mrb[0].mxu0
      %1069 = vmatprep.mubr.f32.mxu0 0.0
      %1070 = vmatmul.mubr.f32.gmra.mrb[0].mxu0 %v894
      %v1071 = vpop.f32.mrb[0].mxu0
      %v1072 = vadd.f32 0.0, %v1071
      %v1073 = vpop.f32.mrb[0].mxu0
      %1074 = vmatprep.mubr.f32.mxu0 0.0
      %1075 = vmatmul.mubr.f32.gmra.mrb[0].mxu0 %v897
      %v1076 = vpop.f32.mrb[0].mxu0
      %v1077 = vadd.f32 0.0, %v1076
      %v1078 = vpop.f32.mrb[0].mxu0
      %1079 = vmatprep.mubr.f32.mxu0 0.0
      %1080 = vmatmul.mubr.f32.gmra.mrb[0].mxu0 %v900
      %v1081 = vpop.f32.mrb[0].mxu0
      %v1082 = vadd.f32 0.0, %v1081
      %v1083 = vpop.f32.mrb[0].mxu0
      %1084 = vmatprep.mubr.f32.mxu0 0.0
      %1085 = vmatmul.mubr.f32.gmra.mrb[0].mxu0 %v903
      %v1086 = vpop.f32.mrb[0].mxu0
      %v1087 = vadd.f32 0.0, %v1086
      %v1088 = vpop.f32.mrb[0].mxu0
      %1089 = vmatprep.mubr.f32.mxu0 0.0
      %1090 = vmatmul.mubr.f32.gmra.mrb[0].mxu0 %v906
      %v1091 = vpop.f32.mrb[0].mxu0
      %v1092 = vadd.f32 0.0, %v1091
      %v1093 = vpop.f32.mrb[0].mxu0
      %1094 = vmatprep.mubr.f32.mxu0 0.0
      %1095 = vmatmul.mubr.f32.gmra.mrb[0].mxu0 %v909
      %v1096 = vpop.f32.mrb[0].mxu0
      %v1097 = vadd.f32 0.0, %v1096
      %v1098 = vpop.f32.mrb[0].mxu0
      %1099 = vmatprep.mubr.f32.mxu0 0.0
      %1100 = vmatmul.mubr.f32.gmra.mrb[0].mxu0 %v912
      %v1101 = vpop.f32.mrb[0].mxu0
      %v1102 = vadd.f32 0.0, %v1101
      %v1103 = vpop.f32.mrb[0].mxu0
      %1104 = vmatprep.mubr.f32.mxu0 0.0
      %1105 = vmatmul.mubr.f32.gmra.mrb[0].mxu0 %v915
      %v1106 = vpop.f32.mrb[0].mxu0
      %v1107 = vadd.f32 0.0, %v1106
      %v1108 = vpop.f32.mrb[0].mxu0
      %1109 = vmatprep.mubr.f32.mxu0 0.0
      %1110 = vmatmul.mubr.f32.gmra.mrb[0].mxu0 %v918
      %v1111 = vpop.f32.mrb[0].mxu0
      %v1112 = vadd.f32 0.0, %v1111
      %v1113 = vpop.f32.mrb[0].mxu0
      %1114 = vmatprep.mubr.f32.mxu0 0.0
      %1115 = vmatmul.mubr.f32.gmra.mrb[0].mxu0 %v921
      %v1116 = vpop.f32.mrb[0].mxu0
      %v1117 = vadd.f32 0.0, %v1116
      %v1118 = vpop.f32.mrb[0].mxu0
      %1119 = vmatprep.mubr.f32.mxu0 0.0
      %1120 = vmatmul.mubr.f32.gmra.mrb[0].mxu0 %v924
      %v1121 = vpop.f32.mrb[0].mxu0
      %v1122 = vadd.f32 0.0, %v1121
      %v1123 = vpop.f32.mrb[0].mxu0
      %1124 = vmatprep.mubr.f32.mxu0 0.0
      %1125 = vmatmul.mubr.f32.gmra.mrb[0].mxu0 %v927
      %v1126 = vpop.f32.mrb[0].mxu0
      %v1127 = vadd.f32 0.0, %v1126
      %v1128 = vpop.f32.mrb[0].mxu0
      %1129 = vmatprep.mubr.f32.mxu0 0.0
      %1130 = vmatmul.mubr.f32.gmra.mrb[0].mxu0 %v930
      %v1131 = vpop.f32.mrb[0].mxu0
      %v1132 = vadd.f32 0.0, %v1131
      %v1133 = vpop.f32.mrb[0].mxu0
      %1134 = vmatprep.mubr.f32.mxu0 0.0
      %1135 = vmatmul.mubr.f32.gmra.mrb[0].mxu0 %v933
      %v1136 = vpop.f32.mrb[0].mxu0
      %v1137 = vadd.f32 0.0, %v1136
      %v1138 = vpop.f32.mrb[0].mxu0
      %1139 = vmatprep.mubr.f32.mxu0 0.0
      %1140 = vmatmul.mubr.f32.gmra.mrb[0].mxu0 %v936
      %v1141 = vpop.f32.mrb[0].mxu0
      %v1142 = vadd.f32 0.0, %v1141
      %v1143 = vpop.f32.mrb[0].mxu0
      %1144 = vmatprep.mubr.f32.mxu0 0.0
      %1145 = vmatmul.mubr.f32.gmra.mrb[0].mxu0 %v939
      %v1146 = vpop.f32.mrb[0].mxu0
      %v1147 = vadd.f32 0.0, %v1146
      %v1148 = vpop.f32.mrb[0].mxu0
      %1149 = vmatprep.mubr.f32.mxu0 0.0
      %1150 = vmatmul.mubr.f32.gmra.mrb[0].mxu0 %v942
      %v1151 = vpop.f32.mrb[0].mxu0
      %v1152 = vadd.f32 0.0, %v1151
      %v1153 = vpop.f32.mrb[0].mxu0
      %1154 = vmatprep.mubr.f32.mxu0 0.0
      %1155 = vmatmul.mubr.f32.gmra.mrb[0].mxu0 %v945
      %v1156 = vpop.f32.mrb[0].mxu0
      %v1157 = vadd.f32 0.0, %v1156
      %v1158 = vpop.f32.mrb[0].mxu0
      %1159 = vmatprep.mubr.f32.mxu0 0.0
      %1160 = vmatmul.mubr.f32.gmra.mrb[0].mxu0 %v948
      %v1161 = vpop.f32.mrb[0].mxu0
      %v1162 = vadd.f32 0.0, %v1161
      %v1163 = vpop.f32.mrb[0].mxu0
      %1164 = vmatprep.mubr.f32.mxu0 0.0
      %1165 = vmatmul.mubr.f32.gmra.mrb[0].mxu0 %v951
      %v1166 = vpop.f32.mrb[0].mxu0
      %v1167 = vadd.f32 0.0, %v1166
      %v1168 = vpop.f32.mrb[0].mxu0
      %1169 = vmatprep.mubr.f32.mxu0 0.0
      %1170 = vmatmul.mubr.f32.gmra.mrb[0].mxu0 %v954
      %v1171 = vpop.f32.mrb[0].mxu0
      %v1172 = vadd.f32 0.0, %v1171
      %v1173 = vpop.f32.mrb[0].mxu0
      %1174 = vmatprep.mubr.f32.mxu0 0.0
      %1175 = vmatmul.mubr.f32.gmra.mrb[0].mxu0 %v957
      %v1176 = vpop.f32.mrb[0].mxu0
      %v1177 = vadd.f32 0.0, %v1176
      %v1178 = vpop.f32.mrb[0].mxu0
      %1179 = vmatprep.mubr.f32.mxu0 0.0
      %1180 = vmatmul.mubr.f32.gmra.mrb[0].mxu0 %v960
      %v1181 = vpop.f32.mrb[0].mxu0
      %v1182 = vadd.f32 0.0, %v1181
      %v1183 = vpop.f32.mrb[0].mxu0
      %1184 = vmatprep.mubr.f32.mxu0 0.0
      %1185 = vmatmul.mubr.f32.gmra.mrb[0].mxu0 %v963
      %v1186 = vpop.f32.mrb[0].mxu0
      %v1187 = vadd.f32 0.0, %v1186
      %v1188 = vpop.f32.mrb[0].mxu0
      %1189 = vmatprep.mubr.f32.mxu0 0.0
      %1190 = vmatmul.mubr.f32.gmra.mrb[0].mxu0 %v966
      %v1191 = vpop.f32.mrb[0].mxu0
      %v1192 = vadd.f32 0.0, %v1191
      %v1193 = vpop.f32.mrb[0].mxu0
      %1194 = vmatprep.mubr.f32.mxu0 0.0
      %1195 = vmatmul.mubr.f32.gmra.mrb[0].mxu0 %v969
      %v1196 = vpop.f32.mrb[0].mxu0
      %v1197 = vadd.f32 0.0, %v1196
      %v1198 = vpop.f32.mrb[0].mxu0
      %1199 = vmatprep.mubr.f32.mxu0 0.0
      %1200 = vmatmul.mubr.f32.gmra.mrb[0].mxu0 %v972
      %v1201 = vpop.f32.mrb[0].mxu0
      %v1202 = vadd.f32 0.0, %v1201
      %v1203 = vpop.f32.mrb[0].mxu0
      %1204 = vmatprep.mubr.f32.mxu0 0.0
      %1205 = vmatmul.mubr.f32.gmra.mrb[0].mxu0 %v975
      %v1206 = vpop.f32.mrb[0].mxu0
      %v1207 = vadd.f32 0.0, %v1206
      %v1208 = vpop.f32.mrb[0].mxu0
      %1209 = vmatprep.mubr.f32.mxu0 0.0
      %1210 = vmatmul.mubr.f32.gmra.mrb[0].mxu0 %v978
      %v1211 = vpop.f32.mrb[0].mxu0
      %v1212 = vadd.f32 0.0, %v1211
      %v1213 = vpop.f32.mrb[0].mxu0
      %1214 = vmatprep.mubr.f32.mxu0 0.0
      %1215 = vmatmul.mubr.f32.gmra.mrb[0].mxu0 %v981
      %v1216 = vpop.f32.mrb[0].mxu0
      %v1217 = vadd.f32 0.0, %v1216
      %v1218 = vpop.f32.mrb[0].mxu0
      %1219 = vmatprep.mubr.f32.mxu0 0.0
      %1220 = vmatmul.mubr.f32.gmra.mrb[0].mxu0 %v984
      %v1221 = vpop.f32.mrb[0].mxu0
      %v1222 = vadd.f32 0.0, %v1221
      %v1223 = vpop.f32.mrb[0].mxu0
      %1224 = vmatprep.mubr.f32.mxu0 0.0
      %1225 = vmatmul.mubr.f32.gmra.mrb[0].mxu0 %v987
      %v1226 = vpop.f32.mrb[0].mxu0
      %v1227 = vadd.f32 0.0, %v1226
      %v1228 = vpop.f32.mrb[0].mxu0
      %1229 = vmatprep.mubr.f32.mxu0 0.0
      %1230 = vmatmul.mubr.f32.gmra.mrb[0].mxu0 %v990
      %v1231 = vpop.f32.mrb[0].mxu0
      %v1232 = vadd.f32 0.0, %v1231
      %v1233 = vpop.f32.mrb[0].mxu0
      %1234 = vmatprep.mubr.f32.mxu0 0.0
      %1235 = vmatmul.mubr.f32.gmra.mrb[0].mxu0 %v993
      %v1236 = vpop.f32.mrb[0].mxu0
      %v1237 = vadd.f32 0.0, %v1236
      %v1238 = vpop.f32.mrb[0].mxu0
      %1239 = vdwg.mxu0
      %v1241 = vsel %vm733, %v812, 0
      %v1244 = vsel %vm733, %v813, 0
      %v1247 = vsel %vm733, %v814, 0
      %v1250 = vsel %vm733, %v815, 0
      %v1253 = vsel %vm733, %v816, 0
      %v1256 = vsel %vm733, %v817, 0
      %v1259 = vsel %vm733, %v818, 0
      %v1262 = vsel %vm733, %v819, 0
      %v1265 = vsel %vm733, %v820, 0
      %v1268 = vsel %vm733, %v821, 0
      %v1271 = vsel %vm733, %v822, 0
      %v1274 = vsel %vm733, %v823, 0
      %v1277 = vsel %vm733, %v824, 0
      %v1280 = vsel %vm733, %v825, 0
      %v1283 = vsel %vm733, %v826, 0
      %v1286 = vsel %vm733, %v827, 0
      %v1289 = vsel %vm733, %v828, 0
      %v1292 = vsel %vm733, %v829, 0
      %v1295 = vsel %vm733, %v830, 0
      %v1298 = vsel %vm733, %v831, 0
      %v1301 = vsel %vm733, %v832, 0
      %v1304 = vsel %vm733, %v833, 0
      %v1307 = vsel %vm733, %v834, 0
      %v1310 = vsel %vm733, %v835, 0
      %v1313 = vsel %vm733, %v836, 0
      %v1316 = vsel %vm733, %v837, 0
      %v1319 = vsel %vm733, %v838, 0
      %v1322 = vsel %vm733, %v839, 0
      %v1325 = vsel %vm733, %v840, 0
      %v1328 = vsel %vm733, %v841, 0
      %v1331 = vsel %vm733, %v842, 0
      %v1334 = vsel %vm733, %v843, 0
      %v1337 = vsel %vm733, %v844, 0
      %v1340 = vsel %vm733, %v845, 0
      %v1343 = vsel %vm733, %v846, 0
      %v1346 = vsel %vm733, %v847, 0
      %1348 = vmatprep.subr.mxu0 0.0
      %1349 = vmatpush1.msra.mxu0 %v848
      %1350 = vmatprep.subr.mxu0 0.0
      %1351 = vmatpush1.msra.mxu0 0.0
      %1352 = vmatprep.subr.mxu0 0.0
      %1353 = vmatpush1.msra.mxu0 0.0
      %1354 = vmatprep.subr.mxu0 0.0
      %1355 = vmatpush1.msra.mxu0 0.0
      %1356 = vmatprep.subr.mxu0 0.0
      %1357 = vmatpush1.msra.mxu0 0.0
      %1358 = vmatprep.subr.mxu0 0.0
      %1359 = vmatpush1.msra.mxu0 0.0
      %1360 = vmatprep.subr.mxu0 0.0
      %1361 = vmatpush1.msra.mxu0 0.0
      %1362 = vmatprep.subr.mxu0 0.0
      %1363 = vmatpush1.msra.mxu0 0.0
      %1364 = vmatprep.subr.mxu0 0.0
      %1365 = vmatpush1.msra.mxu0 0.0
      %1366 = vmatprep.subr.mxu0 0.0
      %1367 = vmatpush1.msra.mxu0 0.0
      %1368 = vmatprep.subr.mxu0 0.0
      %1369 = vmatpush1.msra.mxu0 0.0
      %1370 = vmatprep.subr.mxu0 0.0
      %1371 = vmatpush1.msra.mxu0 0.0
      %1372 = vmatprep.subr.mxu0 0.0
      %1373 = vmatpush1.msra.mxu0 0.0
      %1374 = vmatprep.subr.mxu0 0.0
      %1375 = vmatpush1.msra.mxu0 0.0
      %1376 = vmatprep.subr.mxu0 0.0
      %1377 = vmatpush1.msra.mxu0 0.0
      %1378 = vmatprep.subr.mxu0 0.0
      %1379 = vmatpush1.msra.mxu0 0.0
      %1380 = vmatprep.subr.mxu0 0.0
      %1381 = vmatpush1.msra.mxu0 0.0
      %1382 = vmatprep.subr.mxu0 0.0
      %1383 = vmatpush1.msra.mxu0 0.0
      %1384 = vmatprep.subr.mxu0 0.0
      %1385 = vmatpush1.msra.mxu0 0.0
      %1386 = vmatprep.subr.mxu0 0.0
      %1387 = vmatpush1.msra.mxu0 0.0
      %1388 = vmatprep.subr.mxu0 0.0
      %1389 = vmatpush1.msra.mxu0 0.0
      %1390 = vmatprep.subr.mxu0 0.0
      %1391 = vmatpush1.msra.mxu0 0.0
      %1392 = vmatprep.subr.mxu0 0.0
      %1393 = vmatpush1.msra.mxu0 0.0
      %1394 = vmatprep.subr.mxu0 0.0
      %1395 = vmatpush1.msra.mxu0 0.0
      %1396 = vmatprep.subr.mxu0 0.0
      %1397 = vmatpush1.msra.mxu0 0.0
      %1398 = vmatprep.subr.mxu0 0.0
      %1399 = vmatpush1.msra.mxu0 0.0
      %1400 = vmatprep.subr.mxu0 0.0
      %1401 = vmatpush1.msra.mxu0 0.0
      %1402 = vmatprep.subr.mxu0 0.0
      %1403 = vmatpush1.msra.mxu0 0.0
      %1404 = vmatprep.subr.mxu0 0.0
      %1405 = vmatpush1.msra.mxu0 0.0
      %1406 = vmatprep.subr.mxu0 0.0
      %1407 = vmatpush1.msra.mxu0 0.0
      %1408 = vmatprep.subr.mxu0 0.0
      %1409 = vmatpush1.msra.mxu0 0.0
      %1410 = vmatprep.subr.mxu0 0.0
      %1411 = vmatpush1.msra.mxu0 0.0
      %1412 = vmatprep.mubr.f32.mxu0 0.0
      %1413 = vmatmul.mubr.f32.gmra.mrb[0].mxu0 %v1241
      %v1414 = vpop.f32.mrb[0].mxu0
      %v1415 = vadd.f32 %v1062, %v1414
      %v1416 = vpop.f32.mrb[0].mxu0
      %1417 = vmatprep.mubr.f32.mxu0 0.0
      %1418 = vmatmul.mubr.f32.gmra.mrb[0].mxu0 %v1244
      %v1419 = vpop.f32.mrb[0].mxu0
      %v1420 = vadd.f32 %v1067, %v1419
      %v1421 = vpop.f32.mrb[0].mxu0
      %1422 = vmatprep.mubr.f32.mxu0 0.0
      %1423 = vmatmul.mubr.f32.gmra.mrb[0].mxu0 %v1247
      %v1424 = vpop.f32.mrb[0].mxu0
      %v1425 = vadd.f32 %v1072, %v1424
      %v1426 = vpop.f32.mrb[0].mxu0
      %1427 = vmatprep.mubr.f32.mxu0 0.0
      %1428 = vmatmul.mubr.f32.gmra.mrb[0].mxu0 %v1250
      %v1429 = vpop.f32.mrb[0].mxu0
      %v1430 = vadd.f32 %v1077, %v1429
      %v1431 = vpop.f32.mrb[0].mxu0
      %1432 = vmatprep.mubr.f32.mxu0 0.0
      %1433 = vmatmul.mubr.f32.gmra.mrb[0].mxu0 %v1253
      %v1434 = vpop.f32.mrb[0].mxu0
      %v1435 = vadd.f32 %v1082, %v1434
      %v1436 = vpop.f32.mrb[0].mxu0
      %1437 = vmatprep.mubr.f32.mxu0 0.0
      %1438 = vmatmul.mubr.f32.gmra.mrb[0].mxu0 %v1256
      %v1439 = vpop.f32.mrb[0].mxu0
      %v1440 = vadd.f32 %v1087, %v1439
      %v1441 = vpop.f32.mrb[0].mxu0
      %1442 = vmatprep.mubr.f32.mxu0 0.0
      %1443 = vmatmul.mubr.f32.gmra.mrb[0].mxu0 %v1259
      %v1444 = vpop.f32.mrb[0].mxu0
      %v1445 = vadd.f32 %v1092, %v1444
      %v1446 = vpop.f32.mrb[0].mxu0
      %1447 = vmatprep.mubr.f32.mxu0 0.0
      %1448 = vmatmul.mubr.f32.gmra.mrb[0].mxu0 %v1262
      %v1449 = vpop.f32.mrb[0].mxu0
      %v1450 = vadd.f32 %v1097, %v1449
      %v1451 = vpop.f32.mrb[0].mxu0
      %1452 = vmatprep.mubr.f32.mxu0 0.0
      %1453 = vmatmul.mubr.f32.gmra.mrb[0].mxu0 %v1265
      %v1454 = vpop.f32.mrb[0].mxu0
      %v1455 = vadd.f32 %v1102, %v1454
      %v1456 = vpop.f32.mrb[0].mxu0
      %1457 = vmatprep.mubr.f32.mxu0 0.0
      %1458 = vmatmul.mubr.f32.gmra.mrb[0].mxu0 %v1268
      %v1459 = vpop.f32.mrb[0].mxu0
      %v1460 = vadd.f32 %v1107, %v1459
      %v1461 = vpop.f32.mrb[0].mxu0
      %1462 = vmatprep.mubr.f32.mxu0 0.0
      %1463 = vmatmul.mubr.f32.gmra.mrb[0].mxu0 %v1271
      %v1464 = vpop.f32.mrb[0].mxu0
      %v1465 = vadd.f32 %v1112, %v1464
      %v1466 = vpop.f32.mrb[0].mxu0
      %1467 = vmatprep.mubr.f32.mxu0 0.0
      %1468 = vmatmul.mubr.f32.gmra.mrb[0].mxu0 %v1274
      %v1469 = vpop.f32.mrb[0].mxu0
      %v1470 = vadd.f32 %v1117, %v1469
      %v1471 = vpop.f32.mrb[0].mxu0
      %1472 = vmatprep.mubr.f32.mxu0 0.0
      %1473 = vmatmul.mubr.f32.gmra.mrb[0].mxu0 %v1277
      %v1474 = vpop.f32.mrb[0].mxu0
      %v1475 = vadd.f32 %v1122, %v1474
      %v1476 = vpop.f32.mrb[0].mxu0
      %1477 = vmatprep.mubr.f32.mxu0 0.0
      %1478 = vmatmul.mubr.f32.gmra.mrb[0].mxu0 %v1280
      %v1479 = vpop.f32.mrb[0].mxu0
      %v1480 = vadd.f32 %v1127, %v1479
      %v1481 = vpop.f32.mrb[0].mxu0
      %1482 = vmatprep.mubr.f32.mxu0 0.0
      %1483 = vmatmul.mubr.f32.gmra.mrb[0].mxu0 %v1283
      %v1484 = vpop.f32.mrb[0].mxu0
      %v1485 = vadd.f32 %v1132, %v1484
      %v1486 = vpop.f32.mrb[0].mxu0
      %1487 = vmatprep.mubr.f32.mxu0 0.0
      %1488 = vmatmul.mubr.f32.gmra.mrb[0].mxu0 %v1286
      %v1489 = vpop.f32.mrb[0].mxu0
      %v1490 = vadd.f32 %v1137, %v1489
      %v1491 = vpop.f32.mrb[0].mxu0
      %1492 = vmatprep.mubr.f32.mxu0 0.0
      %1493 = vmatmul.mubr.f32.gmra.mrb[0].mxu0 %v1289
      %v1494 = vpop.f32.mrb[0].mxu0
      %v1495 = vadd.f32 %v1142, %v1494
      %v1496 = vpop.f32.mrb[0].mxu0
      %1497 = vmatprep.mubr.f32.mxu0 0.0
      %1498 = vmatmul.mubr.f32.gmra.mrb[0].mxu0 %v1292
      %v1499 = vpop.f32.mrb[0].mxu0
      %v1500 = vadd.f32 %v1147, %v1499
      %v1501 = vpop.f32.mrb[0].mxu0
      %1502 = vmatprep.mubr.f32.mxu0 0.0
      %1503 = vmatmul.mubr.f32.gmra.mrb[0].mxu0 %v1295
      %v1504 = vpop.f32.mrb[0].mxu0
      %v1505 = vadd.f32 %v1152, %v1504
      %v1506 = vpop.f32.mrb[0].mxu0
      %1507 = vmatprep.mubr.f32.mxu0 0.0
      %1508 = vmatmul.mubr.f32.gmra.mrb[0].mxu0 %v1298
      %v1509 = vpop.f32.mrb[0].mxu0
      %v1510 = vadd.f32 %v1157, %v1509
      %v1511 = vpop.f32.mrb[0].mxu0
      %1512 = vmatprep.mubr.f32.mxu0 0.0
      %1513 = vmatmul.mubr.f32.gmra.mrb[0].mxu0 %v1301
      %v1514 = vpop.f32.mrb[0].mxu0
      %v1515 = vadd.f32 %v1162, %v1514
      %v1516 = vpop.f32.mrb[0].mxu0
      %1517 = vmatprep.mubr.f32.mxu0 0.0
      %1518 = vmatmul.mubr.f32.gmra.mrb[0].mxu0 %v1304
      %v1519 = vpop.f32.mrb[0].mxu0
      %v1520 = vadd.f32 %v1167, %v1519
      %v1521 = vpop.f32.mrb[0].mxu0
      %1522 = vmatprep.mubr.f32.mxu0 0.0
      %1523 = vmatmul.mubr.f32.gmra.mrb[0].mxu0 %v1307
      %v1524 = vpop.f32.mrb[0].mxu0
      %v1525 = vadd.f32 %v1172, %v1524
      %v1526 = vpop.f32.mrb[0].mxu0
      %1527 = vmatprep.mubr.f32.mxu0 0.0
      %1528 = vmatmul.mubr.f32.gmra.mrb[0].mxu0 %v1310
      %v1529 = vpop.f32.mrb[0].mxu0
      %v1530 = vadd.f32 %v1177, %v1529
      %v1531 = vpop.f32.mrb[0].mxu0
      %1532 = vmatprep.mubr.f32.mxu0 0.0
      %1533 = vmatmul.mubr.f32.gmra.mrb[0].mxu0 %v1313
      %v1534 = vpop.f32.mrb[0].mxu0
      %v1535 = vadd.f32 %v1182, %v1534
      %v1536 = vpop.f32.mrb[0].mxu0
      %1537 = vmatprep.mubr.f32.mxu0 0.0
      %1538 = vmatmul.mubr.f32.gmra.mrb[0].mxu0 %v1316
      %v1539 = vpop.f32.mrb[0].mxu0
      %v1540 = vadd.f32 %v1187, %v1539
      %v1541 = vpop.f32.mrb[0].mxu0
      %1542 = vmatprep.mubr.f32.mxu0 0.0
      %1543 = vmatmul.mubr.f32.gmra.mrb[0].mxu0 %v1319
      %v1544 = vpop.f32.mrb[0].mxu0
      %v1545 = vadd.f32 %v1192, %v1544
      %v1546 = vpop.f32.mrb[0].mxu0
      %1547 = vmatprep.mubr.f32.mxu0 0.0
      %1548 = vmatmul.mubr.f32.gmra.mrb[0].mxu0 %v1322
      %v1549 = vpop.f32.mrb[0].mxu0
      %v1550 = vadd.f32 %v1197, %v1549
      %v1551 = vpop.f32.mrb[0].mxu0
      %1552 = vmatprep.mubr.f32.mxu0 0.0
      %1553 = vmatmul.mubr.f32.gmra.mrb[0].mxu0 %v1325
      %v1554 = vpop.f32.mrb[0].mxu0
      %v1555 = vadd.f32 %v1202, %v1554
      %v1556 = vpop.f32.mrb[0].mxu0
      %1557 = vmatprep.mubr.f32.mxu0 0.0
      %1558 = vmatmul.mubr.f32.gmra.mrb[0].mxu0 %v1328
      %v1559 = vpop.f32.mrb[0].mxu0
      %v1560 = vadd.f32 %v1207, %v1559
      %v1561 = vpop.f32.mrb[0].mxu0
      %1562 = vmatprep.mubr.f32.mxu0 0.0
      %1563 = vmatmul.mubr.f32.gmra.mrb[0].mxu0 %v1331
      %v1564 = vpop.f32.mrb[0].mxu0
      %v1565 = vadd.f32 %v1212, %v1564
      %v1566 = vpop.f32.mrb[0].mxu0
      %1567 = vmatprep.mubr.f32.mxu0 0.0
      %1568 = vmatmul.mubr.f32.gmra.mrb[0].mxu0 %v1334
      %v1569 = vpop.f32.mrb[0].mxu0
      %v1570 = vadd.f32 %v1217, %v1569
      %v1571 = vpop.f32.mrb[0].mxu0
      %1572 = vmatprep.mubr.f32.mxu0 0.0
      %1573 = vmatmul.mubr.f32.gmra.mrb[0].mxu0 %v1337
      %v1574 = vpop.f32.mrb[0].mxu0
      %v1575 = vadd.f32 %v1222, %v1574
      %v1576 = vpop.f32.mrb[0].mxu0
      %1577 = vmatprep.mubr.f32.mxu0 0.0
      %1578 = vmatmul.mubr.f32.gmra.mrb[0].mxu0 %v1340
      %v1579 = vpop.f32.mrb[0].mxu0
      %v1580 = vadd.f32 %v1227, %v1579
      %v1581 = vpop.f32.mrb[0].mxu0
      %1582 = vmatprep.mubr.f32.mxu0 0.0
      %1583 = vmatmul.mubr.f32.gmra.mrb[0].mxu0 %v1343
      %v1584 = vpop.f32.mrb[0].mxu0
      %v1585 = vadd.f32 %v1232, %v1584
      %v1586 = vpop.f32.mrb[0].mxu0
      %1587 = vmatprep.mubr.f32.mxu0 0.0
      %1588 = vmatmul.mubr.f32.gmra.mrb[0].mxu0 %v1346
      %v1589 = vpop.f32.mrb[0].mxu0
      %v1590 = vadd.f32 %v1237, %v1589
      %v1591 = vpop.f32.mrb[0].mxu0
      %1592 = vdwg.mxu0
      %v1593 = vld [vmem:[#allocation2 + $0x7] sm:$0xff]
      %v1594 = vld [vmem:[#allocation2 + $0xf] sm:$0xff]
      %v1595 = vld [vmem:[#allocation2 + $0x17] sm:$0xff]
      %v1596 = vld [vmem:[#allocation2 + $0x1f] sm:$0xff]
      %v1597 = vld [vmem:[#allocation2 + $0x27] sm:$0xff]
      %v1598 = vld [vmem:[#allocation2 + $0x2f] sm:$0xff]
      %v1599 = vld [vmem:[#allocation2 + $0x37] sm:$0xff]
      %v1600 = vld [vmem:[#allocation2 + $0x3f] sm:$0xff]
      %v1601 = vld [vmem:[#allocation2 + $0x47] sm:$0xff]
      %v1602 = vld [vmem:[#allocation2 + $0x4f] sm:$0xff]
      %v1603 = vld [vmem:[#allocation2 + $0x57] sm:$0xff]
      %v1604 = vld [vmem:[#allocation2 + $0x5f] sm:$0xff]
      %v1605 = vld [vmem:[#allocation2 + $0x67] sm:$0xff]
      %v1606 = vld [vmem:[#allocation2 + $0x6f] sm:$0xff]
      %v1607 = vld [vmem:[#allocation2 + $0x77] sm:$0xff]
      %v1608 = vld [vmem:[#allocation2 + $0x7f] sm:$0xff]
      %v1609 = vld [vmem:[#allocation2 + $0x87] sm:$0xff]
      %v1610 = vld [vmem:[#allocation2 + $0x8f] sm:$0xff]
      %v1611 = vld [vmem:[#allocation2 + $0x97] sm:$0xff]
      %v1612 = vld [vmem:[#allocation2 + $0x9f] sm:$0xff]
      %v1613 = vld [vmem:[#allocation2 + $0xa7] sm:$0xff]
      %v1614 = vld [vmem:[#allocation2 + $0xaf] sm:$0xff]
      %v1615 = vld [vmem:[#allocation2 + $0xb7] sm:$0xff]
      %v1616 = vld [vmem:[#allocation2 + $0xbf] sm:$0xff]
      %v1617 = vld [vmem:[#allocation2 + $0xc7] sm:$0xff]
      %v1618 = vld [vmem:[#allocation2 + $0xcf] sm:$0xff]
      %v1619 = vld [vmem:[#allocation2 + $0xd7] sm:$0xff]
      %v1620 = vld [vmem:[#allocation2 + $0xdf] sm:$0xff]
      %v1621 = vld [vmem:[#allocation2 + $0xe7] sm:$0xff]
      %v1622 = vld [vmem:[#allocation2 + $0xef] sm:$0xff]
      %v1623 = vld [vmem:[#allocation2 + $0xf7] sm:$0xff]
      %v1624 = vld [vmem:[#allocation2 + $0xff] sm:$0xff]
      %v1625 = vld [vmem:[#allocation2 + $0x107] sm:$0xff]
      %v1626 = vld [vmem:[#allocation2 + $0x10f] sm:$0xff]
      %v1627 = vld [vmem:[#allocation2 + $0x117] sm:$0xff]
      %v1628 = vld [vmem:[#allocation2 + $0x11f] sm:$0xff]
      %s1629 = scalar_lea.vmem %s4, 16
      %v1630 = vld [vmem:[%s1629] sm:$0xff]
      %v1632 = vsel %vm733, %v1593, 0
      %v1635 = vsel %vm733, %v1594, 0
      %v1638 = vsel %vm733, %v1595, 0
      %v1641 = vsel %vm733, %v1596, 0
      %v1644 = vsel %vm733, %v1597, 0
      %v1647 = vsel %vm733, %v1598, 0
      %v1650 = vsel %vm733, %v1599, 0
      %v1653 = vsel %vm733, %v1600, 0
      %v1656 = vsel %vm733, %v1601, 0
      %v1659 = vsel %vm733, %v1602, 0
      %v1662 = vsel %vm733, %v1603, 0
      %v1665 = vsel %vm733, %v1604, 0
      %v1668 = vsel %vm733, %v1605, 0
      %v1671 = vsel %vm733, %v1606, 0
      %v1674 = vsel %vm733, %v1607, 0
      %v1677 = vsel %vm733, %v1608, 0
      %v1680 = vsel %vm733, %v1609, 0
      %v1683 = vsel %vm733, %v1610, 0
      %v1686 = vsel %vm733, %v1611, 0
      %v1689 = vsel %vm733, %v1612, 0
      %v1692 = vsel %vm733, %v1613, 0
      %v1695 = vsel %vm733, %v1614, 0
      %v1698 = vsel %vm733, %v1615, 0
      %v1701 = vsel %vm733, %v1616, 0
      %v1704 = vsel %vm733, %v1617, 0
      %v1707 = vsel %vm733, %v1618, 0
      %v1710 = vsel %vm733, %v1619, 0
      %v1713 = vsel %vm733, %v1620, 0
      %v1716 = vsel %vm733, %v1621, 0
      %v1719 = vsel %vm733, %v1622, 0
      %v1722 = vsel %vm733, %v1623, 0
      %v1725 = vsel %vm733, %v1624, 0
      %v1728 = vsel %vm733, %v1625, 0
      %v1731 = vsel %vm733, %v1626, 0
      %v1734 = vsel %vm733, %v1627, 0
      %v1737 = vsel %vm733, %v1628, 0
      %1739 = vmatprep.subr.mxu0 0.0
      %1740 = vmatpush1.msra.mxu0 %v1630
      %1741 = vmatprep.subr.mxu0 0.0
      %1742 = vmatpush1.msra.mxu0 0.0
      %1743 = vmatprep.subr.mxu0 0.0
      %1744 = vmatpush1.msra.mxu0 0.0
      %1745 = vmatprep.subr.mxu0 0.0
      %1746 = vmatpush1.msra.mxu0 0.0
      %1747 = vmatprep.subr.mxu0 0.0
      %1748 = vmatpush1.msra.mxu0 0.0
      %1749 = vmatprep.subr.mxu0 0.0
      %1750 = vmatpush1.msra.mxu0 0.0
      %1751 = vmatprep.subr.mxu0 0.0
      %1752 = vmatpush1.msra.mxu0 0.0
      %1753 = vmatprep.subr.mxu0 0.0
      %1754 = vmatpush1.msra.mxu0 0.0
      %1755 = vmatprep.subr.mxu0 0.0
      %1756 = vmatpush1.msra.mxu0 0.0
      %1757 = vmatprep.subr.mxu0 0.0
      %1758 = vmatpush1.msra.mxu0 0.0
      %1759 = vmatprep.subr.mxu0 0.0
      %1760 = vmatpush1.msra.mxu0 0.0
      %1761 = vmatprep.subr.mxu0 0.0
      %1762 = vmatpush1.msra.mxu0 0.0
      %1763 = vmatprep.subr.mxu0 0.0
      %1764 = vmatpush1.msra.mxu0 0.0
      %1765 = vmatprep.subr.mxu0 0.0
      %1766 = vmatpush1.msra.mxu0 0.0
      %1767 = vmatprep.subr.mxu0 0.0
      %1768 = vmatpush1.msra.mxu0 0.0
      %1769 = vmatprep.subr.mxu0 0.0
      %1770 = vmatpush1.msra.mxu0 0.0
      %1771 = vmatprep.subr.mxu0 0.0
      %1772 = vmatpush1.msra.mxu0 0.0
      %1773 = vmatprep.subr.mxu0 0.0
      %1774 = vmatpush1.msra.mxu0 0.0
      %1775 = vmatprep.subr.mxu0 0.0
      %1776 = vmatpush1.msra.mxu0 0.0
      %1777 = vmatprep.subr.mxu0 0.0
      %1778 = vmatpush1.msra.mxu0 0.0
      %1779 = vmatprep.subr.mxu0 0.0
      %1780 = vmatpush1.msra.mxu0 0.0
      %1781 = vmatprep.subr.mxu0 0.0
      %1782 = vmatpush1.msra.mxu0 0.0
      %1783 = vmatprep.subr.mxu0 0.0
      %1784 = vmatpush1.msra.mxu0 0.0
      %1785 = vmatprep.subr.mxu0 0.0
      %1786 = vmatpush1.msra.mxu0 0.0
      %1787 = vmatprep.subr.mxu0 0.0
      %1788 = vmatpush1.msra.mxu0 0.0
      %1789 = vmatprep.subr.mxu0 0.0
      %1790 = vmatpush1.msra.mxu0 0.0
      %1791 = vmatprep.subr.mxu0 0.0
      %1792 = vmatpush1.msra.mxu0 0.0
      %1793 = vmatprep.subr.mxu0 0.0
      %1794 = vmatpush1.msra.mxu0 0.0
      %1795 = vmatprep.subr.mxu0 0.0
      %1796 = vmatpush1.msra.mxu0 0.0
      %1797 = vmatprep.subr.mxu0 0.0
      %1798 = vmatpush1.msra.mxu0 0.0
      %1799 = vmatprep.subr.mxu0 0.0
      %1800 = vmatpush1.msra.mxu0 0.0
      %1801 = vmatprep.subr.mxu0 0.0
      %1802 = vmatpush1.msra.mxu0 0.0
      %1803 = vmatprep.mubr.f32.mxu0 0.0
      %1804 = vmatmul.mubr.f32.gmra.mrb[0].mxu0 %v1632
      %v1805 = vpop.f32.mrb[0].mxu0
      %v1806 = vadd.f32 0.0, %v1805
      %v1807 = vpop.f32.mrb[0].mxu0
      %1808 = vmatprep.mubr.f32.mxu0 0.0
      %1809 = vmatmul.mubr.f32.gmra.mrb[0].mxu0 %v1635
      %v1810 = vpop.f32.mrb[0].mxu0
      %v1811 = vadd.f32 0.0, %v1810
      %v1812 = vpop.f32.mrb[0].mxu0
      %1813 = vmatprep.mubr.f32.mxu0 0.0
      %1814 = vmatmul.mubr.f32.gmra.mrb[0].mxu0 %v1638
      %v1815 = vpop.f32.mrb[0].mxu0
      %v1816 = vadd.f32 0.0, %v1815
      %v1817 = vpop.f32.mrb[0].mxu0
      %1818 = vmatprep.mubr.f32.mxu0 0.0
      %1819 = vmatmul.mubr.f32.gmra.mrb[0].mxu0 %v1641
      %v1820 = vpop.f32.mrb[0].mxu0
      %v1821 = vadd.f32 0.0, %v1820
      %v1822 = vpop.f32.mrb[0].mxu0
      %1823 = vmatprep.mubr.f32.mxu0 0.0
      %1824 = vmatmul.mubr.f32.gmra.mrb[0].mxu0 %v1644
      %v1825 = vpop.f32.mrb[0].mxu0
      %v1826 = vadd.f32 0.0, %v1825
      %v1827 = vpop.f32.mrb[0].mxu0
      %1828 = vmatprep.mubr.f32.mxu0 0.0
      %1829 = vmatmul.mubr.f32.gmra.mrb[0].mxu0 %v1647
      %v1830 = vpop.f32.mrb[0].mxu0
      %v1831 = vadd.f32 0.0, %v1830
      %v1832 = vpop.f32.mrb[0].mxu0
      %1833 = vmatprep.mubr.f32.mxu0 0.0
      %1834 = vmatmul.mubr.f32.gmra.mrb[0].mxu0 %v1650
      %v1835 = vpop.f32.mrb[0].mxu0
      %v1836 = vadd.f32 0.0, %v1835
      %v1837 = vpop.f32.mrb[0].mxu0
      %1838 = vmatprep.mubr.f32.mxu0 0.0
      %1839 = vmatmul.mubr.f32.gmra.mrb[0].mxu0 %v1653
      %v1840 = vpop.f32.mrb[0].mxu0
      %v1841 = vadd.f32 0.0, %v1840
      %v1842 = vpop.f32.mrb[0].mxu0
      %1843 = vmatprep.mubr.f32.mxu0 0.0
      %1844 = vmatmul.mubr.f32.gmra.mrb[0].mxu0 %v1656
      %v1845 = vpop.f32.mrb[0].mxu0
      %v1846 = vadd.f32 0.0, %v1845
      %v1847 = vpop.f32.mrb[0].mxu0
      %1848 = vmatprep.mubr.f32.mxu0 0.0
      %1849 = vmatmul.mubr.f32.gmra.mrb[0].mxu0 %v1659
      %v1850 = vpop.f32.mrb[0].mxu0
      %v1851 = vadd.f32 0.0, %v1850
      %v1852 = vpop.f32.mrb[0].mxu0
      %1853 = vmatprep.mubr.f32.mxu0 0.0
      %1854 = vmatmul.mubr.f32.gmra.mrb[0].mxu0 %v1662
      %v1855 = vpop.f32.mrb[0].mxu0
      %v1856 = vadd.f32 0.0, %v1855
      %v1857 = vpop.f32.mrb[0].mxu0
      %1858 = vmatprep.mubr.f32.mxu0 0.0
      %1859 = vmatmul.mubr.f32.gmra.mrb[0].mxu0 %v1665
      %v1860 = vpop.f32.mrb[0].mxu0
      %v1861 = vadd.f32 0.0, %v1860
      %v1862 = vpop.f32.mrb[0].mxu0
      %1863 = vmatprep.mubr.f32.mxu0 0.0
      %1864 = vmatmul.mubr.f32.gmra.mrb[0].mxu0 %v1668
      %v1865 = vpop.f32.mrb[0].mxu0
      %v1866 = vadd.f32 0.0, %v1865
      %v1867 = vpop.f32.mrb[0].mxu0
      %1868 = vmatprep.mubr.f32.mxu0 0.0
      %1869 = vmatmul.mubr.f32.gmra.mrb[0].mxu0 %v1671
      %v1870 = vpop.f32.mrb[0].mxu0
      %v1871 = vadd.f32 0.0, %v1870
      %v1872 = vpop.f32.mrb[0].mxu0
      %1873 = vmatprep.mubr.f32.mxu0 0.0
      %1874 = vmatmul.mubr.f32.gmra.mrb[0].mxu0 %v1674
      %v1875 = vpop.f32.mrb[0].mxu0
      %v1876 = vadd.f32 0.0, %v1875
      %v1877 = vpop.f32.mrb[0].mxu0
      %1878 = vmatprep.mubr.f32.mxu0 0.0
      %1879 = vmatmul.mubr.f32.gmra.mrb[0].mxu0 %v1677
      %v1880 = vpop.f32.mrb[0].mxu0
      %v1881 = vadd.f32 0.0, %v1880
      %v1882 = vpop.f32.mrb[0].mxu0
      %1883 = vmatprep.mubr.f32.mxu0 0.0
      %1884 = vmatmul.mubr.f32.gmra.mrb[0].mxu0 %v1680
      %v1885 = vpop.f32.mrb[0].mxu0
      %v1886 = vadd.f32 0.0, %v1885
      %v1887 = vpop.f32.mrb[0].mxu0
      %1888 = vmatprep.mubr.f32.mxu0 0.0
      %1889 = vmatmul.mubr.f32.gmra.mrb[0].mxu0 %v1683
      %v1890 = vpop.f32.mrb[0].mxu0
      %v1891 = vadd.f32 0.0, %v1890
      %v1892 = vpop.f32.mrb[0].mxu0
      %1893 = vmatprep.mubr.f32.mxu0 0.0
      %1894 = vmatmul.mubr.f32.gmra.mrb[0].mxu0 %v1686
      %v1895 = vpop.f32.mrb[0].mxu0
      %v1896 = vadd.f32 0.0, %v1895
      %v1897 = vpop.f32.mrb[0].mxu0
      %1898 = vmatprep.mubr.f32.mxu0 0.0
      %1899 = vmatmul.mubr.f32.gmra.mrb[0].mxu0 %v1689
      %v1900 = vpop.f32.mrb[0].mxu0
      %v1901 = vadd.f32 0.0, %v1900
      %v1902 = vpop.f32.mrb[0].mxu0
      %1903 = vmatprep.mubr.f32.mxu0 0.0
      %1904 = vmatmul.mubr.f32.gmra.mrb[0].mxu0 %v1692
      %v1905 = vpop.f32.mrb[0].mxu0
      %v1906 = vadd.f32 0.0, %v1905
      %v1907 = vpop.f32.mrb[0].mxu0
      %1908 = vmatprep.mubr.f32.mxu0 0.0
      %1909 = vmatmul.mubr.f32.gmra.mrb[0].mxu0 %v1695
      %v1910 = vpop.f32.mrb[0].mxu0
      %v1911 = vadd.f32 0.0, %v1910
      %v1912 = vpop.f32.mrb[0].mxu0
      %1913 = vmatprep.mubr.f32.mxu0 0.0
      %1914 = vmatmul.mubr.f32.gmra.mrb[0].mxu0 %v1698
      %v1915 = vpop.f32.mrb[0].mxu0
      %v1916 = vadd.f32 0.0, %v1915
      %v1917 = vpop.f32.mrb[0].mxu0
      %1918 = vmatprep.mubr.f32.mxu0 0.0
      %1919 = vmatmul.mubr.f32.gmra.mrb[0].mxu0 %v1701
      %v1920 = vpop.f32.mrb[0].mxu0
      %v1921 = vadd.f32 0.0, %v1920
      %v1922 = vpop.f32.mrb[0].mxu0
      %1923 = vmatprep.mubr.f32.mxu0 0.0
      %1924 = vmatmul.mubr.f32.gmra.mrb[0].mxu0 %v1704
      %v1925 = vpop.f32.mrb[0].mxu0
      %v1926 = vadd.f32 0.0, %v1925
      %v1927 = vpop.f32.mrb[0].mxu0
      %1928 = vmatprep.mubr.f32.mxu0 0.0
      %1929 = vmatmul.mubr.f32.gmra.mrb[0].mxu0 %v1707
      %v1930 = vpop.f32.mrb[0].mxu0
      %v1931 = vadd.f32 0.0, %v1930
      %v1932 = vpop.f32.mrb[0].mxu0
      %1933 = vmatprep.mubr.f32.mxu0 0.0
      %1934 = vmatmul.mubr.f32.gmra.mrb[0].mxu0 %v1710
      %v1935 = vpop.f32.mrb[0].mxu0
      %v1936 = vadd.f32 0.0, %v1935
      %v1937 = vpop.f32.mrb[0].mxu0
      %1938 = vmatprep.mubr.f32.mxu0 0.0
      %1939 = vmatmul.mubr.f32.gmra.mrb[0].mxu0 %v1713
      %v1940 = vpop.f32.mrb[0].mxu0
      %v1941 = vadd.f32 0.0, %v1940
      %v1942 = vpop.f32.mrb[0].mxu0
      %1943 = vmatprep.mubr.f32.mxu0 0.0
      %1944 = vmatmul.mubr.f32.gmra.mrb[0].mxu0 %v1716
      %v1945 = vpop.f32.mrb[0].mxu0
      %v1946 = vadd.f32 0.0, %v1945
      %v1947 = vpop.f32.mrb[0].mxu0
      %1948 = vmatprep.mubr.f32.mxu0 0.0
      %1949 = vmatmul.mubr.f32.gmra.mrb[0].mxu0 %v1719
      %v1950 = vpop.f32.mrb[0].mxu0
      %v1951 = vadd.f32 0.0, %v1950
      %v1952 = vpop.f32.mrb[0].mxu0
      %1953 = vmatprep.mubr.f32.mxu0 0.0
      %1954 = vmatmul.mubr.f32.gmra.mrb[0].mxu0 %v1722
      %v1955 = vpop.f32.mrb[0].mxu0
      %v1956 = vadd.f32 0.0, %v1955
      %v1957 = vpop.f32.mrb[0].mxu0
      %1958 = vmatprep.mubr.f32.mxu0 0.0
      %1959 = vmatmul.mubr.f32.gmra.mrb[0].mxu0 %v1725
      %v1960 = vpop.f32.mrb[0].mxu0
      %v1961 = vadd.f32 0.0, %v1960
      %v1962 = vpop.f32.mrb[0].mxu0
      %1963 = vmatprep.mubr.f32.mxu0 0.0
      %1964 = vmatmul.mubr.f32.gmra.mrb[0].mxu0 %v1728
      %v1965 = vpop.f32.mrb[0].mxu0
      %v1966 = vadd.f32 0.0, %v1965
      %v1967 = vpop.f32.mrb[0].mxu0
      %1968 = vmatprep.mubr.f32.mxu0 0.0
      %1969 = vmatmul.mubr.f32.gmra.mrb[0].mxu0 %v1731
      %v1970 = vpop.f32.mrb[0].mxu0
      %v1971 = vadd.f32 0.0, %v1970
      %v1972 = vpop.f32.mrb[0].mxu0
      %1973 = vmatprep.mubr.f32.mxu0 0.0
      %1974 = vmatmul.mubr.f32.gmra.mrb[0].mxu0 %v1734
      %v1975 = vpop.f32.mrb[0].mxu0
      %v1976 = vadd.f32 0.0, %v1975
      %v1977 = vpop.f32.mrb[0].mxu0
      %1978 = vmatprep.mubr.f32.mxu0 0.0
      %1979 = vmatmul.mubr.f32.gmra.mrb[0].mxu0 %v1737
      %v1980 = vpop.f32.mrb[0].mxu0
      %v1981 = vadd.f32 0.0, %v1980
      %v1982 = vpop.f32.mrb[0].mxu0
      %1983 = vdwg.mxu0
      %v1984 = vadd.f32 %v1415, %v1806
      %v1985 = vadd.f32 %v1420, %v1811
      %v1986 = vadd.f32 %v1425, %v1816
      %v1987 = vadd.f32 %v1430, %v1821
      %v1988 = vadd.f32 %v1435, %v1826
      %v1989 = vadd.f32 %v1440, %v1831
      %v1990 = vadd.f32 %v1445, %v1836
      %v1991 = vadd.f32 %v1450, %v1841
      %v1992 = vadd.f32 %v1455, %v1846
      %v1993 = vadd.f32 %v1460, %v1851
      %v1994 = vadd.f32 %v1465, %v1856
      %v1995 = vadd.f32 %v1470, %v1861
      %v1996 = vadd.f32 %v1475, %v1866
      %v1997 = vadd.f32 %v1480, %v1871
      %v1998 = vadd.f32 %v1485, %v1876
      %v1999 = vadd.f32 %v1490, %v1881
      %v2000 = vadd.f32 %v1495, %v1886
      %v2001 = vadd.f32 %v1500, %v1891
      %v2002 = vadd.f32 %v1505, %v1896
      %v2003 = vadd.f32 %v1510, %v1901
      %v2004 = vadd.f32 %v1515, %v1906
      %v2005 = vadd.f32 %v1520, %v1911
      %v2006 = vadd.f32 %v1525, %v1916
      %v2007 = vadd.f32 %v1530, %v1921
      %v2008 = vadd.f32 %v1535, %v1926
      %v2009 = vadd.f32 %v1540, %v1931
      %v2010 = vadd.f32 %v1545, %v1936
      %v2011 = vadd.f32 %v1550, %v1941
      %v2012 = vadd.f32 %v1555, %v1946
      %v2013 = vadd.f32 %v1560, %v1951
      %v2014 = vadd.f32 %v1565, %v1956
      %v2015 = vadd.f32 %v1570, %v1961
      %v2016 = vadd.f32 %v1575, %v1966
      %v2017 = vadd.f32 %v1580, %v1971
      %v2018 = vadd.f32 %v1585, %v1976
      %v2019 = vadd.f32 %v1590, %v1981
      %v2020 = vld [vmem:[#allocation2 + $0x17] sm:$0xff]
      %v2021 = vld [vmem:[#allocation2 + $0x1f] sm:$0xff]
      %v2022 = vld [vmem:[#allocation2 + $0x27] sm:$0xff]
      %v2023 = vld [vmem:[#allocation2 + $0x2f] sm:$0xff]
      %v2024 = vld [vmem:[#allocation2 + $0x37] sm:$0xff]
      %v2025 = vld [vmem:[#allocation2 + $0x3f] sm:$0xff]
      %v2026 = vld [vmem:[#allocation2 + $0x47] sm:$0xff]
      %v2027 = vld [vmem:[#allocation2 + $0x4f] sm:$0xff]
      %v2028 = vld [vmem:[#allocation2 + $0x57] sm:$0xff]
      %v2029 = vld [vmem:[#allocation2 + $0x5f] sm:$0xff]
      %v2030 = vld [vmem:[#allocation2 + $0x67] sm:$0xff]
      %v2031 = vld [vmem:[#allocation2 + $0x6f] sm:$0xff]
      %v2032 = vld [vmem:[#allocation2 + $0x77] sm:$0xff]
      %v2033 = vld [vmem:[#allocation2 + $0x7f] sm:$0xff]
      %v2034 = vld [vmem:[#allocation2 + $0x87] sm:$0xff]
      %v2035 = vld [vmem:[#allocation2 + $0x8f] sm:$0xff]
      %v2036 = vld [vmem:[#allocation2 + $0x97] sm:$0xff]
      %v2037 = vld [vmem:[#allocation2 + $0x9f] sm:$0xff]
      %v2038 = vld [vmem:[#allocation2 + $0xa7] sm:$0xff]
      %v2039 = vld [vmem:[#allocation2 + $0xaf] sm:$0xff]
      %v2040 = vld [vmem:[#allocation2 + $0xb7] sm:$0xff]
      %v2041 = vld [vmem:[#allocation2 + $0xbf] sm:$0xff]
      %v2042 = vld [vmem:[#allocation2 + $0xc7] sm:$0xff]
      %v2043 = vld [vmem:[#allocation2 + $0xcf] sm:$0xff]
      %v2044 = vld [vmem:[#allocation2 + $0xd7] sm:$0xff]
      %v2045 = vld [vmem:[#allocation2 + $0xdf] sm:$0xff]
      %v2046 = vld [vmem:[#allocation2 + $0xe7] sm:$0xff]
      %v2047 = vld [vmem:[#allocation2 + $0xef] sm:$0xff]
      %v2048 = vld [vmem:[#allocation2 + $0xf7] sm:$0xff]
      %v2049 = vld [vmem:[#allocation2 + $0xff] sm:$0xff]
      %v2050 = vld [vmem:[#allocation2 + $0x107] sm:$0xff]
      %v2051 = vld [vmem:[#allocation2 + $0x10f] sm:$0xff]
      %v2052 = vld [vmem:[#allocation2 + $0x117] sm:$0xff]
      %v2053 = vld [vmem:[#allocation2 + $0x11f] sm:$0xff]
      %v2054 = vld [vmem:[#allocation2 + $0x127] sm:$0xff]
      %v2055 = vld [vmem:[#allocation2 + $0x12f] sm:$0xff]
      %s2056 = scalar_lea.vmem %s4, 24
      %v2057 = vld [vmem:[%s2056] sm:$0xff]
      %v2059 = vsel %vm733, %v2020, 0
      %v2062 = vsel %vm733, %v2021, 0
      %v2065 = vsel %vm733, %v2022, 0
      %v2068 = vsel %vm733, %v2023, 0
      %v2071 = vsel %vm733, %v2024, 0
      %v2074 = vsel %vm733, %v2025, 0
      %v2077 = vsel %vm733, %v2026, 0
      %v2080 = vsel %vm733, %v2027, 0
      %v2083 = vsel %vm733, %v2028, 0
      %v2086 = vsel %vm733, %v2029, 0
      %v2089 = vsel %vm733, %v2030, 0
      %v2092 = vsel %vm733, %v2031, 0
      %v2095 = vsel %vm733, %v2032, 0
      %v2098 = vsel %vm733, %v2033, 0
      %v2101 = vsel %vm733, %v2034, 0
      %v2104 = vsel %vm733, %v2035, 0
      %v2107 = vsel %vm733, %v2036, 0
      %v2110 = vsel %vm733, %v2037, 0
      %v2113 = vsel %vm733, %v2038, 0
      %v2116 = vsel %vm733, %v2039, 0
      %v2119 = vsel %vm733, %v2040, 0
      %v2122 = vsel %vm733, %v2041, 0
      %v2125 = vsel %vm733, %v2042, 0
      %v2128 = vsel %vm733, %v2043, 0
      %v2131 = vsel %vm733, %v2044, 0
      %v2134 = vsel %vm733, %v2045, 0
      %v2137 = vsel %vm733, %v2046, 0
      %v2140 = vsel %vm733, %v2047, 0
      %v2143 = vsel %vm733, %v2048, 0
      %v2146 = vsel %vm733, %v2049, 0
      %v2149 = vsel %vm733, %v2050, 0
      %v2152 = vsel %vm733, %v2051, 0
      %v2155 = vsel %vm733, %v2052, 0
      %v2158 = vsel %vm733, %v2053, 0
      %v2161 = vsel %vm733, %v2054, 0
      %v2164 = vsel %vm733, %v2055, 0
      %2166 = vmatprep.subr.mxu0 0.0
      %2167 = vmatpush1.msra.mxu0 %v2057
      %2168 = vmatprep.subr.mxu0 0.0
      %2169 = vmatpush1.msra.mxu0 0.0
      %2170 = vmatprep.subr.mxu0 0.0
      %2171 = vmatpush1.msra.mxu0 0.0
      %2172 = vmatprep.subr.mxu0 0.0
      %2173 = vmatpush1.msra.mxu0 0.0
      %2174 = vmatprep.subr.mxu0 0.0
      %2175 = vmatpush1.msra.mxu0 0.0
      %2176 = vmatprep.subr.mxu0 0.0
      %2177 = vmatpush1.msra.mxu0 0.0
      %2178 = vmatprep.subr.mxu0 0.0
      %2179 = vmatpush1.msra.mxu0 0.0
      %2180 = vmatprep.subr.mxu0 0.0
      %2181 = vmatpush1.msra.mxu0 0.0
      %2182 = vmatprep.subr.mxu0 0.0
      %2183 = vmatpush1.msra.mxu0 0.0
      %2184 = vmatprep.subr.mxu0 0.0
      %2185 = vmatpush1.msra.mxu0 0.0
      %2186 = vmatprep.subr.mxu0 0.0
      %2187 = vmatpush1.msra.mxu0 0.0
      %2188 = vmatprep.subr.mxu0 0.0
      %2189 = vmatpush1.msra.mxu0 0.0
      %2190 = vmatprep.subr.mxu0 0.0
      %2191 = vmatpush1.msra.mxu0 0.0
      %2192 = vmatprep.subr.mxu0 0.0
      %2193 = vmatpush1.msra.mxu0 0.0
      %2194 = vmatprep.subr.mxu0 0.0
      %2195 = vmatpush1.msra.mxu0 0.0
      %2196 = vmatprep.subr.mxu0 0.0
      %2197 = vmatpush1.msra.mxu0 0.0
      %2198 = vmatprep.subr.mxu0 0.0
      %2199 = vmatpush1.msra.mxu0 0.0
      %2200 = vmatprep.subr.mxu0 0.0
      %2201 = vmatpush1.msra.mxu0 0.0
      %2202 = vmatprep.subr.mxu0 0.0
      %2203 = vmatpush1.msra.mxu0 0.0
      %2204 = vmatprep.subr.mxu0 0.0
      %2205 = vmatpush1.msra.mxu0 0.0
      %2206 = vmatprep.subr.mxu0 0.0
      %2207 = vmatpush1.msra.mxu0 0.0
      %2208 = vmatprep.subr.mxu0 0.0
      %2209 = vmatpush1.msra.mxu0 0.0
      %2210 = vmatprep.subr.mxu0 0.0
      %2211 = vmatpush1.msra.mxu0 0.0
      %2212 = vmatprep.subr.mxu0 0.0
      %2213 = vmatpush1.msra.mxu0 0.0
      %2214 = vmatprep.subr.mxu0 0.0
      %2215 = vmatpush1.msra.mxu0 0.0
      %2216 = vmatprep.subr.mxu0 0.0
      %2217 = vmatpush1.msra.mxu0 0.0
      %2218 = vmatprep.subr.mxu0 0.0
      %2219 = vmatpush1.msra.mxu0 0.0
      %2220 = vmatprep.subr.mxu0 0.0
      %2221 = vmatpush1.msra.mxu0 0.0
      %2222 = vmatprep.subr.mxu0 0.0
      %2223 = vmatpush1.msra.mxu0 0.0
      %2224 = vmatprep.subr.mxu0 0.0
      %2225 = vmatpush1.msra.mxu0 0.0
      %2226 = vmatprep.subr.mxu0 0.0
      %2227 = vmatpush1.msra.mxu0 0.0
      %2228 = vmatprep.subr.mxu0 0.0
      %2229 = vmatpush1.msra.mxu0 0.0
      %2230 = vmatprep.mubr.f32.mxu0 0.0
      %2231 = vmatmul.mubr.f32.gmra.mrb[0].mxu0 %v2059
      %v2232 = vpop.f32.mrb[0].mxu0
      %v2233 = vadd.f32 0.0, %v2232
      %v2234 = vpop.f32.mrb[0].mxu0
      %2235 = vmatprep.mubr.f32.mxu0 0.0
      %2236 = vmatmul.mubr.f32.gmra.mrb[0].mxu0 %v2062
      %v2237 = vpop.f32.mrb[0].mxu0
      %v2238 = vadd.f32 0.0, %v2237
      %v2239 = vpop.f32.mrb[0].mxu0
      %2240 = vmatprep.mubr.f32.mxu0 0.0
      %2241 = vmatmul.mubr.f32.gmra.mrb[0].mxu0 %v2065
      %v2242 = vpop.f32.mrb[0].mxu0
      %v2243 = vadd.f32 0.0, %v2242
      %v2244 = vpop.f32.mrb[0].mxu0
      %2245 = vmatprep.mubr.f32.mxu0 0.0
      %2246 = vmatmul.mubr.f32.gmra.mrb[0].mxu0 %v2068
      %v2247 = vpop.f32.mrb[0].mxu0
      %v2248 = vadd.f32 0.0, %v2247
      %v2249 = vpop.f32.mrb[0].mxu0
      %2250 = vmatprep.mubr.f32.mxu0 0.0
      %2251 = vmatmul.mubr.f32.gmra.mrb[0].mxu0 %v2071
      %v2252 = vpop.f32.mrb[0].mxu0
      %v2253 = vadd.f32 0.0, %v2252
      %v2254 = vpop.f32.mrb[0].mxu0
      %2255 = vmatprep.mubr.f32.mxu0 0.0
      %2256 = vmatmul.mubr.f32.gmra.mrb[0].mxu0 %v2074
      %v2257 = vpop.f32.mrb[0].mxu0
      %v2258 = vadd.f32 0.0, %v2257
      %v2259 = vpop.f32.mrb[0].mxu0
      %2260 = vmatprep.mubr.f32.mxu0 0.0
      %2261 = vmatmul.mubr.f32.gmra.mrb[0].mxu0 %v2077
      %v2262 = vpop.f32.mrb[0].mxu0
      %v2263 = vadd.f32 0.0, %v2262
      %v2264 = vpop.f32.mrb[0].mxu0
      %2265 = vmatprep.mubr.f32.mxu0 0.0
      %2266 = vmatmul.mubr.f32.gmra.mrb[0].mxu0 %v2080
      %v2267 = vpop.f32.mrb[0].mxu0
      %v2268 = vadd.f32 0.0, %v2267
      %v2269 = vpop.f32.mrb[0].mxu0
      %2270 = vmatprep.mubr.f32.mxu0 0.0
      %2271 = vmatmul.mubr.f32.gmra.mrb[0].mxu0 %v2083
      %v2272 = vpop.f32.mrb[0].mxu0
      %v2273 = vadd.f32 0.0, %v2272
      %v2274 = vpop.f32.mrb[0].mxu0
      %2275 = vmatprep.mubr.f32.mxu0 0.0
      %2276 = vmatmul.mubr.f32.gmra.mrb[0].mxu0 %v2086
      %v2277 = vpop.f32.mrb[0].mxu0
      %v2278 = vadd.f32 0.0, %v2277
      %v2279 = vpop.f32.mrb[0].mxu0
      %2280 = vmatprep.mubr.f32.mxu0 0.0
      %2281 = vmatmul.mubr.f32.gmra.mrb[0].mxu0 %v2089
      %v2282 = vpop.f32.mrb[0].mxu0
      %v2283 = vadd.f32 0.0, %v2282
      %v2284 = vpop.f32.mrb[0].mxu0
      %2285 = vmatprep.mubr.f32.mxu0 0.0
      %2286 = vmatmul.mubr.f32.gmra.mrb[0].mxu0 %v2092
      %v2287 = vpop.f32.mrb[0].mxu0
      %v2288 = vadd.f32 0.0, %v2287
      %v2289 = vpop.f32.mrb[0].mxu0
      %2290 = vmatprep.mubr.f32.mxu0 0.0
      %2291 = vmatmul.mubr.f32.gmra.mrb[0].mxu0 %v2095
      %v2292 = vpop.f32.mrb[0].mxu0
      %v2293 = vadd.f32 0.0, %v2292
      %v2294 = vpop.f32.mrb[0].mxu0
      %2295 = vmatprep.mubr.f32.mxu0 0.0
      %2296 = vmatmul.mubr.f32.gmra.mrb[0].mxu0 %v2098
      %v2297 = vpop.f32.mrb[0].mxu0
      %v2298 = vadd.f32 0.0, %v2297
      %v2299 = vpop.f32.mrb[0].mxu0
      %2300 = vmatprep.mubr.f32.mxu0 0.0
      %2301 = vmatmul.mubr.f32.gmra.mrb[0].mxu0 %v2101
      %v2302 = vpop.f32.mrb[0].mxu0
      %v2303 = vadd.f32 0.0, %v2302
      %v2304 = vpop.f32.mrb[0].mxu0
      %2305 = vmatprep.mubr.f32.mxu0 0.0
      %2306 = vmatmul.mubr.f32.gmra.mrb[0].mxu0 %v2104
      %v2307 = vpop.f32.mrb[0].mxu0
      %v2308 = vadd.f32 0.0, %v2307
      %v2309 = vpop.f32.mrb[0].mxu0
      %2310 = vmatprep.mubr.f32.mxu0 0.0
      %2311 = vmatmul.mubr.f32.gmra.mrb[0].mxu0 %v2107
      %v2312 = vpop.f32.mrb[0].mxu0
      %v2313 = vadd.f32 0.0, %v2312
      %v2314 = vpop.f32.mrb[0].mxu0
      %2315 = vmatprep.mubr.f32.mxu0 0.0
      %2316 = vmatmul.mubr.f32.gmra.mrb[0].mxu0 %v2110
      %v2317 = vpop.f32.mrb[0].mxu0
      %v2318 = vadd.f32 0.0, %v2317
      %v2319 = vpop.f32.mrb[0].mxu0
      %2320 = vmatprep.mubr.f32.mxu0 0.0
      %2321 = vmatmul.mubr.f32.gmra.mrb[0].mxu0 %v2113
      %v2322 = vpop.f32.mrb[0].mxu0
      %v2323 = vadd.f32 0.0, %v2322
      %v2324 = vpop.f32.mrb[0].mxu0
      %2325 = vmatprep.mubr.f32.mxu0 0.0
      %2326 = vmatmul.mubr.f32.gmra.mrb[0].mxu0 %v2116
      %v2327 = vpop.f32.mrb[0].mxu0
      %v2328 = vadd.f32 0.0, %v2327
      %v2329 = vpop.f32.mrb[0].mxu0
      %2330 = vmatprep.mubr.f32.mxu0 0.0
      %2331 = vmatmul.mubr.f32.gmra.mrb[0].mxu0 %v2119
      %v2332 = vpop.f32.mrb[0].mxu0
      %v2333 = vadd.f32 0.0, %v2332
      %v2334 = vpop.f32.mrb[0].mxu0
      %2335 = vmatprep.mubr.f32.mxu0 0.0
      %2336 = vmatmul.mubr.f32.gmra.mrb[0].mxu0 %v2122
      %v2337 = vpop.f32.mrb[0].mxu0
      %v2338 = vadd.f32 0.0, %v2337
      %v2339 = vpop.f32.mrb[0].mxu0
      %2340 = vmatprep.mubr.f32.mxu0 0.0
      %2341 = vmatmul.mubr.f32.gmra.mrb[0].mxu0 %v2125
      %v2342 = vpop.f32.mrb[0].mxu0
      %v2343 = vadd.f32 0.0, %v2342
      %v2344 = vpop.f32.mrb[0].mxu0
      %2345 = vmatprep.mubr.f32.mxu0 0.0
      %2346 = vmatmul.mubr.f32.gmra.mrb[0].mxu0 %v2128
      %v2347 = vpop.f32.mrb[0].mxu0
      %v2348 = vadd.f32 0.0, %v2347
      %v2349 = vpop.f32.mrb[0].mxu0
      %2350 = vmatprep.mubr.f32.mxu0 0.0
      %2351 = vmatmul.mubr.f32.gmra.mrb[0].mxu0 %v2131
      %v2352 = vpop.f32.mrb[0].mxu0
      %v2353 = vadd.f32 0.0, %v2352
      %v2354 = vpop.f32.mrb[0].mxu0
      %2355 = vmatprep.mubr.f32.mxu0 0.0
      %2356 = vmatmul.mubr.f32.gmra.mrb[0].mxu0 %v2134
      %v2357 = vpop.f32.mrb[0].mxu0
      %v2358 = vadd.f32 0.0, %v2357
      %v2359 = vpop.f32.mrb[0].mxu0
      %2360 = vmatprep.mubr.f32.mxu0 0.0
      %2361 = vmatmul.mubr.f32.gmra.mrb[0].mxu0 %v2137
      %v2362 = vpop.f32.mrb[0].mxu0
      %v2363 = vadd.f32 0.0, %v2362
      %v2364 = vpop.f32.mrb[0].mxu0
      %2365 = vmatprep.mubr.f32.mxu0 0.0
      %2366 = vmatmul.mubr.f32.gmra.mrb[0].mxu0 %v2140
      %v2367 = vpop.f32.mrb[0].mxu0
      %v2368 = vadd.f32 0.0, %v2367
      %v2369 = vpop.f32.mrb[0].mxu0
      %2370 = vmatprep.mubr.f32.mxu0 0.0
      %2371 = vmatmul.mubr.f32.gmra.mrb[0].mxu0 %v2143
      %v2372 = vpop.f32.mrb[0].mxu0
      %v2373 = vadd.f32 0.0, %v2372
      %v2374 = vpop.f32.mrb[0].mxu0
      %2375 = vmatprep.mubr.f32.mxu0 0.0
      %2376 = vmatmul.mubr.f32.gmra.mrb[0].mxu0 %v2146
      %v2377 = vpop.f32.mrb[0].mxu0
      %v2378 = vadd.f32 0.0, %v2377
      %v2379 = vpop.f32.mrb[0].mxu0
      %2380 = vmatprep.mubr.f32.mxu0 0.0
      %2381 = vmatmul.mubr.f32.gmra.mrb[0].mxu0 %v2149
      %v2382 = vpop.f32.mrb[0].mxu0
      %v2383 = vadd.f32 0.0, %v2382
      %v2384 = vpop.f32.mrb[0].mxu0
      %2385 = vmatprep.mubr.f32.mxu0 0.0
      %2386 = vmatmul.mubr.f32.gmra.mrb[0].mxu0 %v2152
      %v2387 = vpop.f32.mrb[0].mxu0
      %v2388 = vadd.f32 0.0, %v2387
      %v2389 = vpop.f32.mrb[0].mxu0
      %2390 = vmatprep.mubr.f32.mxu0 0.0
      %2391 = vmatmul.mubr.f32.gmra.mrb[0].mxu0 %v2155
      %v2392 = vpop.f32.mrb[0].mxu0
      %v2393 = vadd.f32 0.0, %v2392
      %v2394 = vpop.f32.mrb[0].mxu0
      %2395 = vmatprep.mubr.f32.mxu0 0.0
      %2396 = vmatmul.mubr.f32.gmra.mrb[0].mxu0 %v2158
      %v2397 = vpop.f32.mrb[0].mxu0
      %v2398 = vadd.f32 0.0, %v2397
      %v2399 = vpop.f32.mrb[0].mxu0
      %2400 = vmatprep.mubr.f32.mxu0 0.0
      %2401 = vmatmul.mubr.f32.gmra.mrb[0].mxu0 %v2161
      %v2402 = vpop.f32.mrb[0].mxu0
      %v2403 = vadd.f32 0.0, %v2402
      %v2404 = vpop.f32.mrb[0].mxu0
      %2405 = vmatprep.mubr.f32.mxu0 0.0
      %2406 = vmatmul.mubr.f32.gmra.mrb[0].mxu0 %v2164
      %v2407 = vpop.f32.mrb[0].mxu0
      %v2408 = vadd.f32 0.0, %v2407
      %v2409 = vpop.f32.mrb[0].mxu0
      %2410 = vdwg.mxu0
      %v2411 = vadd.f32 %v1984, %v2233
      %v2412 = vadd.f32 %v1985, %v2238
      %v2413 = vadd.f32 %v1986, %v2243
      %v2414 = vadd.f32 %v1987, %v2248
      %v2415 = vadd.f32 %v1988, %v2253
      %v2416 = vadd.f32 %v1989, %v2258
      %v2417 = vadd.f32 %v1990, %v2263
      %v2418 = vadd.f32 %v1991, %v2268
      %v2419 = vadd.f32 %v1992, %v2273
      %v2420 = vadd.f32 %v1993, %v2278
      %v2421 = vadd.f32 %v1994, %v2283
      %v2422 = vadd.f32 %v1995, %v2288
      %v2423 = vadd.f32 %v1996, %v2293
      %v2424 = vadd.f32 %v1997, %v2298
      %v2425 = vadd.f32 %v1998, %v2303
      %v2426 = vadd.f32 %v1999, %v2308
      %v2427 = vadd.f32 %v2000, %v2313
      %v2428 = vadd.f32 %v2001, %v2318
      %v2429 = vadd.f32 %v2002, %v2323
      %v2430 = vadd.f32 %v2003, %v2328
      %v2431 = vadd.f32 %v2004, %v2333
      %v2432 = vadd.f32 %v2005, %v2338
      %v2433 = vadd.f32 %v2006, %v2343
      %v2434 = vadd.f32 %v2007, %v2348
      %v2435 = vadd.f32 %v2008, %v2353
      %v2436 = vadd.f32 %v2009, %v2358
      %v2437 = vadd.f32 %v2010, %v2363
      %v2438 = vadd.f32 %v2011, %v2368
      %v2439 = vadd.f32 %v2012, %v2373
      %v2440 = vadd.f32 %v2013, %v2378
      %v2441 = vadd.f32 %v2014, %v2383
      %v2442 = vadd.f32 %v2015, %v2388
      %v2443 = vadd.f32 %v2016, %v2393
      %v2444 = vadd.f32 %v2017, %v2398
      %v2445 = vadd.f32 %v2018, %v2403
      %v2446 = vadd.f32 %v2019, %v2408
      %v2447 = vld [vmem:[#allocation2 + $0x18] sm:$0xff]
      %v2448 = vld [vmem:[#allocation2 + $0x20] sm:$0xff]
      %v2449 = vld [vmem:[#allocation2 + $0x28] sm:$0xff]
      %v2450 = vld [vmem:[#allocation2 + $0x30] sm:$0xff]
      %v2451 = vld [vmem:[#allocation2 + $0x38] sm:$0xff]
      %v2452 = vld [vmem:[#allocation2 + $0x40] sm:$0xff]
      %v2453 = vld [vmem:[#allocation2 + $0x48] sm:$0xff]
      %v2454 = vld [vmem:[#allocation2 + $0x50] sm:$0xff]
      %v2455 = vld [vmem:[#allocation2 + $0x58] sm:$0xff]
      %v2456 = vld [vmem:[#allocation2 + $0x60] sm:$0xff]
      %v2457 = vld [vmem:[#allocation2 + $0x68] sm:$0xff]
      %v2458 = vld [vmem:[#allocation2 + $0x70] sm:$0xff]
      %v2459 = vld [vmem:[#allocation2 + $0x78] sm:$0xff]
      %v2460 = vld [vmem:[#allocation2 + $0x80] sm:$0xff]
      %v2461 = vld [vmem:[#allocation2 + $0x88] sm:$0xff]
      %v2462 = vld [vmem:[#allocation2 + $0x90] sm:$0xff]
      %v2463 = vld [vmem:[#allocation2 + $0x98] sm:$0xff]
      %v2464 = vld [vmem:[#allocation2 + $0xa0] sm:$0xff]
      %v2465 = vld [vmem:[#allocation2 + $0xa8] sm:$0xff]
      %v2466 = vld [vmem:[#allocation2 + $0xb0] sm:$0xff]
      %v2467 = vld [vmem:[#allocation2 + $0xb8] sm:$0xff]
      %v2468 = vld [vmem:[#allocation2 + $0xc0] sm:$0xff]
      %v2469 = vld [vmem:[#allocation2 + $0xc8] sm:$0xff]
      %v2470 = vld [vmem:[#allocation2 + $0xd0] sm:$0xff]
      %v2471 = vld [vmem:[#allocation2 + $0xd8] sm:$0xff]
      %v2472 = vld [vmem:[#allocation2 + $0xe0] sm:$0xff]
      %v2473 = vld [vmem:[#allocation2 + $0xe8] sm:$0xff]
      %v2474 = vld [vmem:[#allocation2 + $0xf0] sm:$0xff]
      %v2475 = vld [vmem:[#allocation2 + $0xf8] sm:$0xff]
      %v2476 = vld [vmem:[#allocation2 + $0x100] sm:$0xff]
      %v2477 = vld [vmem:[#allocation2 + $0x108] sm:$0xff]
      %v2478 = vld [vmem:[#allocation2 + $0x110] sm:$0xff]
      %v2479 = vld [vmem:[#allocation2 + $0x118] sm:$0xff]
      %v2480 = vld [vmem:[#allocation2 + $0x120] sm:$0xff]
      %v2481 = vld [vmem:[#allocation2 + $0x128] sm:$0xff]
      %v2482 = vld [vmem:[#allocation2 + $0x130] sm:$0xff]
      %s2483 = scalar_lea.vmem %s4, 32
      %v2484 = vld [vmem:[%s2483] sm:$0xff]
      %v2486 = vsel %vm733, %v2447, 0
      %v2489 = vsel %vm733, %v2448, 0
      %v2492 = vsel %vm733, %v2449, 0
      %v2495 = vsel %vm733, %v2450, 0
      %v2498 = vsel %vm733, %v2451, 0
      %v2501 = vsel %vm733, %v2452, 0
      %v2504 = vsel %vm733, %v2453, 0
      %v2507 = vsel %vm733, %v2454, 0
      %v2510 = vsel %vm733, %v2455, 0
      %v2513 = vsel %vm733, %v2456, 0
      %v2516 = vsel %vm733, %v2457, 0
      %v2519 = vsel %vm733, %v2458, 0
      %v2522 = vsel %vm733, %v2459, 0
      %v2525 = vsel %vm733, %v2460, 0
      %v2528 = vsel %vm733, %v2461, 0
      %v2531 = vsel %vm733, %v2462, 0
      %v2534 = vsel %vm733, %v2463, 0
      %v2537 = vsel %vm733, %v2464, 0
      %v2540 = vsel %vm733, %v2465, 0
      %v2543 = vsel %vm733, %v2466, 0
      %v2546 = vsel %vm733, %v2467, 0
      %v2549 = vsel %vm733, %v2468, 0
      %v2552 = vsel %vm733, %v2469, 0
      %v2555 = vsel %vm733, %v2470, 0
      %v2558 = vsel %vm733, %v2471, 0
      %v2561 = vsel %vm733, %v2472, 0
      %v2564 = vsel %vm733, %v2473, 0
      %v2567 = vsel %vm733, %v2474, 0
      %v2570 = vsel %vm733, %v2475, 0
      %v2573 = vsel %vm733, %v2476, 0
      %v2576 = vsel %vm733, %v2477, 0
      %v2579 = vsel %vm733, %v2478, 0
      %v2582 = vsel %vm733, %v2479, 0
      %v2585 = vsel %vm733, %v2480, 0
      %v2588 = vsel %vm733, %v2481, 0
      %v2591 = vsel %vm733, %v2482, 0
      %2593 = vmatprep.subr.mxu0 0.0
      %2594 = vmatpush1.msra.mxu0 %v2484
      %2595 = vmatprep.subr.mxu0 0.0
      %2596 = vmatpush1.msra.mxu0 0.0
      %2597 = vmatprep.subr.mxu0 0.0
      %2598 = vmatpush1.msra.mxu0 0.0
      %2599 = vmatprep.subr.mxu0 0.0
      %2600 = vmatpush1.msra.mxu0 0.0
      %2601 = vmatprep.subr.mxu0 0.0
      %2602 = vmatpush1.msra.mxu0 0.0
      %2603 = vmatprep.subr.mxu0 0.0
      %2604 = vmatpush1.msra.mxu0 0.0
      %2605 = vmatprep.subr.mxu0 0.0
      %2606 = vmatpush1.msra.mxu0 0.0
      %2607 = vmatprep.subr.mxu0 0.0
      %2608 = vmatpush1.msra.mxu0 0.0
      %2609 = vmatprep.subr.mxu0 0.0
      %2610 = vmatpush1.msra.mxu0 0.0
      %2611 = vmatprep.subr.mxu0 0.0
      %2612 = vmatpush1.msra.mxu0 0.0
      %2613 = vmatprep.subr.mxu0 0.0
      %2614 = vmatpush1.msra.mxu0 0.0
      %2615 = vmatprep.subr.mxu0 0.0
      %2616 = vmatpush1.msra.mxu0 0.0
      %2617 = vmatprep.subr.mxu0 0.0
      %2618 = vmatpush1.msra.mxu0 0.0
      %2619 = vmatprep.subr.mxu0 0.0
      %2620 = vmatpush1.msra.mxu0 0.0
      %2621 = vmatprep.subr.mxu0 0.0
      %2622 = vmatpush1.msra.mxu0 0.0
      %2623 = vmatprep.subr.mxu0 0.0
      %2624 = vmatpush1.msra.mxu0 0.0
      %2625 = vmatprep.subr.mxu0 0.0
      %2626 = vmatpush1.msra.mxu0 0.0
      %2627 = vmatprep.subr.mxu0 0.0
      %2628 = vmatpush1.msra.mxu0 0.0
      %2629 = vmatprep.subr.mxu0 0.0
      %2630 = vmatpush1.msra.mxu0 0.0
      %2631 = vmatprep.subr.mxu0 0.0
      %2632 = vmatpush1.msra.mxu0 0.0
      %2633 = vmatprep.subr.mxu0 0.0
      %2634 = vmatpush1.msra.mxu0 0.0
      %2635 = vmatprep.subr.mxu0 0.0
      %2636 = vmatpush1.msra.mxu0 0.0
      %2637 = vmatprep.subr.mxu0 0.0
      %2638 = vmatpush1.msra.mxu0 0.0
      %2639 = vmatprep.subr.mxu0 0.0
      %2640 = vmatpush1.msra.mxu0 0.0
      %2641 = vmatprep.subr.mxu0 0.0
      %2642 = vmatpush1.msra.mxu0 0.0
      %2643 = vmatprep.subr.mxu0 0.0
      %2644 = vmatpush1.msra.mxu0 0.0
      %2645 = vmatprep.subr.mxu0 0.0
      %2646 = vmatpush1.msra.mxu0 0.0
      %2647 = vmatprep.subr.mxu0 0.0
      %2648 = vmatpush1.msra.mxu0 0.0
      %2649 = vmatprep.subr.mxu0 0.0
      %2650 = vmatpush1.msra.mxu0 0.0
      %2651 = vmatprep.subr.mxu0 0.0
      %2652 = vmatpush1.msra.mxu0 0.0
      %2653 = vmatprep.subr.mxu0 0.0
      %2654 = vmatpush1.msra.mxu0 0.0
      %2655 = vmatprep.subr.mxu0 0.0
      %2656 = vmatpush1.msra.mxu0 0.0
      %2657 = vmatprep.mubr.f32.mxu0 0.0
      %2658 = vmatmul.mubr.f32.gmra.mrb[0].mxu0 %v2486
      %v2659 = vpop.f32.mrb[0].mxu0
      %v2660 = vadd.f32 0.0, %v2659
      %v2661 = vpop.f32.mrb[0].mxu0
      %2662 = vmatprep.mubr.f32.mxu0 0.0
      %2663 = vmatmul.mubr.f32.gmra.mrb[0].mxu0 %v2489
      %v2664 = vpop.f32.mrb[0].mxu0
      %v2665 = vadd.f32 0.0, %v2664
      %v2666 = vpop.f32.mrb[0].mxu0
      %2667 = vmatprep.mubr.f32.mxu0 0.0
      %2668 = vmatmul.mubr.f32.gmra.mrb[0].mxu0 %v2492
      %v2669 = vpop.f32.mrb[0].mxu0
      %v2670 = vadd.f32 0.0, %v2669
      %v2671 = vpop.f32.mrb[0].mxu0
      %2672 = vmatprep.mubr.f32.mxu0 0.0
      %2673 = vmatmul.mubr.f32.gmra.mrb[0].mxu0 %v2495
      %v2674 = vpop.f32.mrb[0].mxu0
      %v2675 = vadd.f32 0.0, %v2674
      %v2676 = vpop.f32.mrb[0].mxu0
      %2677 = vmatprep.mubr.f32.mxu0 0.0
      %2678 = vmatmul.mubr.f32.gmra.mrb[0].mxu0 %v2498
      %v2679 = vpop.f32.mrb[0].mxu0
      %v2680 = vadd.f32 0.0, %v2679
      %v2681 = vpop.f32.mrb[0].mxu0
      %2682 = vmatprep.mubr.f32.mxu0 0.0
      %2683 = vmatmul.mubr.f32.gmra.mrb[0].mxu0 %v2501
      %v2684 = vpop.f32.mrb[0].mxu0
      %v2685 = vadd.f32 0.0, %v2684
      %v2686 = vpop.f32.mrb[0].mxu0
      %2687 = vmatprep.mubr.f32.mxu0 0.0
      %2688 = vmatmul.mubr.f32.gmra.mrb[0].mxu0 %v2504
      %v2689 = vpop.f32.mrb[0].mxu0
      %v2690 = vadd.f32 0.0, %v2689
      %v2691 = vpop.f32.mrb[0].mxu0
      %2692 = vmatprep.mubr.f32.mxu0 0.0
      %2693 = vmatmul.mubr.f32.gmra.mrb[0].mxu0 %v2507
      %v2694 = vpop.f32.mrb[0].mxu0
      %v2695 = vadd.f32 0.0, %v2694
      %v2696 = vpop.f32.mrb[0].mxu0
      %2697 = vmatprep.mubr.f32.mxu0 0.0
      %2698 = vmatmul.mubr.f32.gmra.mrb[0].mxu0 %v2510
      %v2699 = vpop.f32.mrb[0].mxu0
      %v2700 = vadd.f32 0.0, %v2699
      %v2701 = vpop.f32.mrb[0].mxu0
      %2702 = vmatprep.mubr.f32.mxu0 0.0
      %2703 = vmatmul.mubr.f32.gmra.mrb[0].mxu0 %v2513
      %v2704 = vpop.f32.mrb[0].mxu0
      %v2705 = vadd.f32 0.0, %v2704
      %v2706 = vpop.f32.mrb[0].mxu0
      %2707 = vmatprep.mubr.f32.mxu0 0.0
      %2708 = vmatmul.mubr.f32.gmra.mrb[0].mxu0 %v2516
      %v2709 = vpop.f32.mrb[0].mxu0
      %v2710 = vadd.f32 0.0, %v2709
      %v2711 = vpop.f32.mrb[0].mxu0
      %2712 = vmatprep.mubr.f32.mxu0 0.0
      %2713 = vmatmul.mubr.f32.gmra.mrb[0].mxu0 %v2519
      %v2714 = vpop.f32.mrb[0].mxu0
      %v2715 = vadd.f32 0.0, %v2714
      %v2716 = vpop.f32.mrb[0].mxu0
      %2717 = vmatprep.mubr.f32.mxu0 0.0
      %2718 = vmatmul.mubr.f32.gmra.mrb[0].mxu0 %v2522
      %v2719 = vpop.f32.mrb[0].mxu0
      %v2720 = vadd.f32 0.0, %v2719
      %v2721 = vpop.f32.mrb[0].mxu0
      %2722 = vmatprep.mubr.f32.mxu0 0.0
      %2723 = vmatmul.mubr.f32.gmra.mrb[0].mxu0 %v2525
      %v2724 = vpop.f32.mrb[0].mxu0
      %v2725 = vadd.f32 0.0, %v2724
      %v2726 = vpop.f32.mrb[0].mxu0
      %2727 = vmatprep.mubr.f32.mxu0 0.0
      %2728 = vmatmul.mubr.f32.gmra.mrb[0].mxu0 %v2528
      %v2729 = vpop.f32.mrb[0].mxu0
      %v2730 = vadd.f32 0.0, %v2729
      %v2731 = vpop.f32.mrb[0].mxu0
      %2732 = vmatprep.mubr.f32.mxu0 0.0
      %2733 = vmatmul.mubr.f32.gmra.mrb[0].mxu0 %v2531
      %v2734 = vpop.f32.mrb[0].mxu0
      %v2735 = vadd.f32 0.0, %v2734
      %v2736 = vpop.f32.mrb[0].mxu0
      %2737 = vmatprep.mubr.f32.mxu0 0.0
      %2738 = vmatmul.mubr.f32.gmra.mrb[0].mxu0 %v2534
      %v2739 = vpop.f32.mrb[0].mxu0
      %v2740 = vadd.f32 0.0, %v2739
      %v2741 = vpop.f32.mrb[0].mxu0
      %2742 = vmatprep.mubr.f32.mxu0 0.0
      %2743 = vmatmul.mubr.f32.gmra.mrb[0].mxu0 %v2537
      %v2744 = vpop.f32.mrb[0].mxu0
      %v2745 = vadd.f32 0.0, %v2744
      %v2746 = vpop.f32.mrb[0].mxu0
      %2747 = vmatprep.mubr.f32.mxu0 0.0
      %2748 = vmatmul.mubr.f32.gmra.mrb[0].mxu0 %v2540
      %v2749 = vpop.f32.mrb[0].mxu0
      %v2750 = vadd.f32 0.0, %v2749
      %v2751 = vpop.f32.mrb[0].mxu0
      %2752 = vmatprep.mubr.f32.mxu0 0.0
      %2753 = vmatmul.mubr.f32.gmra.mrb[0].mxu0 %v2543
      %v2754 = vpop.f32.mrb[0].mxu0
      %v2755 = vadd.f32 0.0, %v2754
      %v2756 = vpop.f32.mrb[0].mxu0
      %2757 = vmatprep.mubr.f32.mxu0 0.0
      %2758 = vmatmul.mubr.f32.gmra.mrb[0].mxu0 %v2546
      %v2759 = vpop.f32.mrb[0].mxu0
      %v2760 = vadd.f32 0.0, %v2759
      %v2761 = vpop.f32.mrb[0].mxu0
      %2762 = vmatprep.mubr.f32.mxu0 0.0
      %2763 = vmatmul.mubr.f32.gmra.mrb[0].mxu0 %v2549
      %v2764 = vpop.f32.mrb[0].mxu0
      %v2765 = vadd.f32 0.0, %v2764
      %v2766 = vpop.f32.mrb[0].mxu0
      %2767 = vmatprep.mubr.f32.mxu0 0.0
      %2768 = vmatmul.mubr.f32.gmra.mrb[0].mxu0 %v2552
      %v2769 = vpop.f32.mrb[0].mxu0
      %v2770 = vadd.f32 0.0, %v2769
      %v2771 = vpop.f32.mrb[0].mxu0
      %2772 = vmatprep.mubr.f32.mxu0 0.0
      %2773 = vmatmul.mubr.f32.gmra.mrb[0].mxu0 %v2555
      %v2774 = vpop.f32.mrb[0].mxu0
      %v2775 = vadd.f32 0.0, %v2774
      %v2776 = vpop.f32.mrb[0].mxu0
      %2777 = vmatprep.mubr.f32.mxu0 0.0
      %2778 = vmatmul.mubr.f32.gmra.mrb[0].mxu0 %v2558
      %v2779 = vpop.f32.mrb[0].mxu0
      %v2780 = vadd.f32 0.0, %v2779
      %v2781 = vpop.f32.mrb[0].mxu0
      %2782 = vmatprep.mubr.f32.mxu0 0.0
      %2783 = vmatmul.mubr.f32.gmra.mrb[0].mxu0 %v2561
      %v2784 = vpop.f32.mrb[0].mxu0
      %v2785 = vadd.f32 0.0, %v2784
      %v2786 = vpop.f32.mrb[0].mxu0
      %2787 = vmatprep.mubr.f32.mxu0 0.0
      %2788 = vmatmul.mubr.f32.gmra.mrb[0].mxu0 %v2564
      %v2789 = vpop.f32.mrb[0].mxu0
      %v2790 = vadd.f32 0.0, %v2789
      %v2791 = vpop.f32.mrb[0].mxu0
      %2792 = vmatprep.mubr.f32.mxu0 0.0
      %2793 = vmatmul.mubr.f32.gmra.mrb[0].mxu0 %v2567
      %v2794 = vpop.f32.mrb[0].mxu0
      %v2795 = vadd.f32 0.0, %v2794
      %v2796 = vpop.f32.mrb[0].mxu0
      %2797 = vmatprep.mubr.f32.mxu0 0.0
      %2798 = vmatmul.mubr.f32.gmra.mrb[0].mxu0 %v2570
      %v2799 = vpop.f32.mrb[0].mxu0
      %v2800 = vadd.f32 0.0, %v2799
      %v2801 = vpop.f32.mrb[0].mxu0
      %2802 = vmatprep.mubr.f32.mxu0 0.0
      %2803 = vmatmul.mubr.f32.gmra.mrb[0].mxu0 %v2573
      %v2804 = vpop.f32.mrb[0].mxu0
      %v2805 = vadd.f32 0.0, %v2804
      %v2806 = vpop.f32.mrb[0].mxu0
      %2807 = vmatprep.mubr.f32.mxu0 0.0
      %2808 = vmatmul.mubr.f32.gmra.mrb[0].mxu0 %v2576
      %v2809 = vpop.f32.mrb[0].mxu0
      %v2810 = vadd.f32 0.0, %v2809
      %v2811 = vpop.f32.mrb[0].mxu0
      %2812 = vmatprep.mubr.f32.mxu0 0.0
      %2813 = vmatmul.mubr.f32.gmra.mrb[0].mxu0 %v2579
      %v2814 = vpop.f32.mrb[0].mxu0
      %v2815 = vadd.f32 0.0, %v2814
      %v2816 = vpop.f32.mrb[0].mxu0
      %2817 = vmatprep.mubr.f32.mxu0 0.0
      %2818 = vmatmul.mubr.f32.gmra.mrb[0].mxu0 %v2582
      %v2819 = vpop.f32.mrb[0].mxu0
      %v2820 = vadd.f32 0.0, %v2819
      %v2821 = vpop.f32.mrb[0].mxu0
      %2822 = vmatprep.mubr.f32.mxu0 0.0
      %2823 = vmatmul.mubr.f32.gmra.mrb[0].mxu0 %v2585
      %v2824 = vpop.f32.mrb[0].mxu0
      %v2825 = vadd.f32 0.0, %v2824
      %v2826 = vpop.f32.mrb[0].mxu0
      %2827 = vmatprep.mubr.f32.mxu0 0.0
      %2828 = vmatmul.mubr.f32.gmra.mrb[0].mxu0 %v2588
      %v2829 = vpop.f32.mrb[0].mxu0
      %v2830 = vadd.f32 0.0, %v2829
      %v2831 = vpop.f32.mrb[0].mxu0
      %2832 = vmatprep.mubr.f32.mxu0 0.0
      %2833 = vmatmul.mubr.f32.gmra.mrb[0].mxu0 %v2591
      %v2834 = vpop.f32.mrb[0].mxu0
      %v2835 = vadd.f32 0.0, %v2834
      %v2836 = vpop.f32.mrb[0].mxu0
      %2837 = vdwg.mxu0
      %v2838 = vadd.f32 %v2411, %v2660
      %v2839 = vadd.f32 %v2412, %v2665
      %v2840 = vadd.f32 %v2413, %v2670
      %v2841 = vadd.f32 %v2414, %v2675
      %v2842 = vadd.f32 %v2415, %v2680
      %v2843 = vadd.f32 %v2416, %v2685
      %v2844 = vadd.f32 %v2417, %v2690
      %v2845 = vadd.f32 %v2418, %v2695
      %v2846 = vadd.f32 %v2419, %v2700
      %v2847 = vadd.f32 %v2420, %v2705
      %v2848 = vadd.f32 %v2421, %v2710
      %v2849 = vadd.f32 %v2422, %v2715
      %v2850 = vadd.f32 %v2423, %v2720
      %v2851 = vadd.f32 %v2424, %v2725
      %v2852 = vadd.f32 %v2425, %v2730
      %v2853 = vadd.f32 %v2426, %v2735
      %v2854 = vadd.f32 %v2427, %v2740
      %v2855 = vadd.f32 %v2428, %v2745
      %v2856 = vadd.f32 %v2429, %v2750
      %v2857 = vadd.f32 %v2430, %v2755
      %v2858 = vadd.f32 %v2431, %v2760
      %v2859 = vadd.f32 %v2432, %v2765
      %v2860 = vadd.f32 %v2433, %v2770
      %v2861 = vadd.f32 %v2434, %v2775
      %v2862 = vadd.f32 %v2435, %v2780
      %v2863 = vadd.f32 %v2436, %v2785
      %v2864 = vadd.f32 %v2437, %v2790
      %v2865 = vadd.f32 %v2438, %v2795
      %v2866 = vadd.f32 %v2439, %v2800
      %v2867 = vadd.f32 %v2440, %v2805
      %v2868 = vadd.f32 %v2441, %v2810
      %v2869 = vadd.f32 %v2442, %v2815
      %v2870 = vadd.f32 %v2443, %v2820
      %v2871 = vadd.f32 %v2444, %v2825
      %v2872 = vadd.f32 %v2445, %v2830
      %v2873 = vadd.f32 %v2446, %v2835
      %v2874 = vld [vmem:[#allocation2 + $0x19] sm:$0xff]
      %v2875 = vld [vmem:[#allocation2 + $0x21] sm:$0xff]
      %v2876 = vld [vmem:[#allocation2 + $0x29] sm:$0xff]
      %v2877 = vld [vmem:[#allocation2 + $0x31] sm:$0xff]
      %v2878 = vld [vmem:[#allocation2 + $0x39] sm:$0xff]
      %v2879 = vld [vmem:[#allocation2 + $0x41] sm:$0xff]
      %v2880 = vld [vmem:[#allocation2 + $0x49] sm:$0xff]
      %v2881 = vld [vmem:[#allocation2 + $0x51] sm:$0xff]
      %v2882 = vld [vmem:[#allocation2 + $0x59] sm:$0xff]
      %v2883 = vld [vmem:[#allocation2 + $0x61] sm:$0xff]
      %v2884 = vld [vmem:[#allocation2 + $0x69] sm:$0xff]
      %v2885 = vld [vmem:[#allocation2 + $0x71] sm:$0xff]
      %v2886 = vld [vmem:[#allocation2 + $0x79] sm:$0xff]
      %v2887 = vld [vmem:[#allocation2 + $0x81] sm:$0xff]
      %v2888 = vld [vmem:[#allocation2 + $0x89] sm:$0xff]
      %v2889 = vld [vmem:[#allocation2 + $0x91] sm:$0xff]
      %v2890 = vld [vmem:[#allocation2 + $0x99] sm:$0xff]
      %v2891 = vld [vmem:[#allocation2 + $0xa1] sm:$0xff]
      %v2892 = vld [vmem:[#allocation2 + $0xa9] sm:$0xff]
      %v2893 = vld [vmem:[#allocation2 + $0xb1] sm:$0xff]
      %v2894 = vld [vmem:[#allocation2 + $0xb9] sm:$0xff]
      %v2895 = vld [vmem:[#allocation2 + $0xc1] sm:$0xff]
      %v2896 = vld [vmem:[#allocation2 + $0xc9] sm:$0xff]
      %v2897 = vld [vmem:[#allocation2 + $0xd1] sm:$0xff]
      %v2898 = vld [vmem:[#allocation2 + $0xd9] sm:$0xff]
      %v2899 = vld [vmem:[#allocation2 + $0xe1] sm:$0xff]
      %v2900 = vld [vmem:[#allocation2 + $0xe9] sm:$0xff]
      %v2901 = vld [vmem:[#allocation2 + $0xf1] sm:$0xff]
      %v2902 = vld [vmem:[#allocation2 + $0xf9] sm:$0xff]
      %v2903 = vld [vmem:[#allocation2 + $0x101] sm:$0xff]
      %v2904 = vld [vmem:[#allocation2 + $0x109] sm:$0xff]
      %v2905 = vld [vmem:[#allocation2 + $0x111] sm:$0xff]
      %v2906 = vld [vmem:[#allocation2 + $0x119] sm:$0xff]
      %v2907 = vld [vmem:[#allocation2 + $0x121] sm:$0xff]
      %v2908 = vld [vmem:[#allocation2 + $0x129] sm:$0xff]
      %v2909 = vld [vmem:[#allocation2 + $0x131] sm:$0xff]
      %s2910 = scalar_lea.vmem %s4, 40
      %v2911 = vld [vmem:[%s2910] sm:$0xff]
      %v2913 = vsel %vm733, %v2874, 0
      %v2916 = vsel %vm733, %v2875, 0
      %v2919 = vsel %vm733, %v2876, 0
      %v2922 = vsel %vm733, %v2877, 0
      %v2925 = vsel %vm733, %v2878, 0
      %v2928 = vsel %vm733, %v2879, 0
      %v2931 = vsel %vm733, %v2880, 0
      %v2934 = vsel %vm733, %v2881, 0
      %v2937 = vsel %vm733, %v2882, 0
      %v2940 = vsel %vm733, %v2883, 0
      %v2943 = vsel %vm733, %v2884, 0
      %v2946 = vsel %vm733, %v2885, 0
      %v2949 = vsel %vm733, %v2886, 0
      %v2952 = vsel %vm733, %v2887, 0
      %v2955 = vsel %vm733, %v2888, 0
      %v2958 = vsel %vm733, %v2889, 0
      %v2961 = vsel %vm733, %v2890, 0
      %v2964 = vsel %vm733, %v2891, 0
      %v2967 = vsel %vm733, %v2892, 0
      %v2970 = vsel %vm733, %v2893, 0
      %v2973 = vsel %vm733, %v2894, 0
      %v2976 = vsel %vm733, %v2895, 0
      %v2979 = vsel %vm733, %v2896, 0
      %v2982 = vsel %vm733, %v2897, 0
      %v2985 = vsel %vm733, %v2898, 0
      %v2988 = vsel %vm733, %v2899, 0
      %v2991 = vsel %vm733, %v2900, 0
      %v2994 = vsel %vm733, %v2901, 0
      %v2997 = vsel %vm733, %v2902, 0
      %v3000 = vsel %vm733, %v2903, 0
      %v3003 = vsel %vm733, %v2904, 0
      %v3006 = vsel %vm733, %v2905, 0
      %v3009 = vsel %vm733, %v2906, 0
      %v3012 = vsel %vm733, %v2907, 0
      %v3015 = vsel %vm733, %v2908, 0
      %v3018 = vsel %vm733, %v2909, 0
      %3020 = vmatprep.subr.mxu0 0.0
      %3021 = vmatpush1.msra.mxu0 %v2911
      %3022 = vmatprep.subr.mxu0 0.0
      %3023 = vmatpush1.msra.mxu0 0.0
      %3024 = vmatprep.subr.mxu0 0.0
      %3025 = vmatpush1.msra.mxu0 0.0
      %3026 = vmatprep.subr.mxu0 0.0
      %3027 = vmatpush1.msra.mxu0 0.0
      %3028 = vmatprep.subr.mxu0 0.0
      %3029 = vmatpush1.msra.mxu0 0.0
      %3030 = vmatprep.subr.mxu0 0.0
      %3031 = vmatpush1.msra.mxu0 0.0
      %3032 = vmatprep.subr.mxu0 0.0
      %3033 = vmatpush1.msra.mxu0 0.0
      %3034 = vmatprep.subr.mxu0 0.0
      %3035 = vmatpush1.msra.mxu0 0.0
      %3036 = vmatprep.subr.mxu0 0.0
      %3037 = vmatpush1.msra.mxu0 0.0
      %3038 = vmatprep.subr.mxu0 0.0
      %3039 = vmatpush1.msra.mxu0 0.0
      %3040 = vmatprep.subr.mxu0 0.0
      %3041 = vmatpush1.msra.mxu0 0.0
      %3042 = vmatprep.subr.mxu0 0.0
      %3043 = vmatpush1.msra.mxu0 0.0
      %3044 = vmatprep.subr.mxu0 0.0
      %3045 = vmatpush1.msra.mxu0 0.0
      %3046 = vmatprep.subr.mxu0 0.0
      %3047 = vmatpush1.msra.mxu0 0.0
      %3048 = vmatprep.subr.mxu0 0.0
      %3049 = vmatpush1.msra.mxu0 0.0
      %3050 = vmatprep.subr.mxu0 0.0
      %3051 = vmatpush1.msra.mxu0 0.0
      %3052 = vmatprep.subr.mxu0 0.0
      %3053 = vmatpush1.msra.mxu0 0.0
      %3054 = vmatprep.subr.mxu0 0.0
      %3055 = vmatpush1.msra.mxu0 0.0
      %3056 = vmatprep.subr.mxu0 0.0
      %3057 = vmatpush1.msra.mxu0 0.0
      %3058 = vmatprep.subr.mxu0 0.0
      %3059 = vmatpush1.msra.mxu0 0.0
      %3060 = vmatprep.subr.mxu0 0.0
      %3061 = vmatpush1.msra.mxu0 0.0
      %3062 = vmatprep.subr.mxu0 0.0
      %3063 = vmatpush1.msra.mxu0 0.0
      %3064 = vmatprep.subr.mxu0 0.0
      %3065 = vmatpush1.msra.mxu0 0.0
      %3066 = vmatprep.subr.mxu0 0.0
      %3067 = vmatpush1.msra.mxu0 0.0
      %3068 = vmatprep.subr.mxu0 0.0
      %3069 = vmatpush1.msra.mxu0 0.0
      %3070 = vmatprep.subr.mxu0 0.0
      %3071 = vmatpush1.msra.mxu0 0.0
      %3072 = vmatprep.subr.mxu0 0.0
      %3073 = vmatpush1.msra.mxu0 0.0
      %3074 = vmatprep.subr.mxu0 0.0
      %3075 = vmatpush1.msra.mxu0 0.0
      %3076 = vmatprep.subr.mxu0 0.0
      %3077 = vmatpush1.msra.mxu0 0.0
      %3078 = vmatprep.subr.mxu0 0.0
      %3079 = vmatpush1.msra.mxu0 0.0
      %3080 = vmatprep.subr.mxu0 0.0
      %3081 = vmatpush1.msra.mxu0 0.0
      %3082 = vmatprep.subr.mxu0 0.0
      %3083 = vmatpush1.msra.mxu0 0.0
      %3084 = vmatprep.mubr.f32.mxu0 0.0
      %3085 = vmatmul.mubr.f32.gmra.mrb[0].mxu0 %v2913
      %v3086 = vpop.f32.mrb[0].mxu0
      %v3087 = vadd.f32 0.0, %v3086
      %v3088 = vpop.f32.mrb[0].mxu0
      %3089 = vmatprep.mubr.f32.mxu0 0.0
      %3090 = vmatmul.mubr.f32.gmra.mrb[0].mxu0 %v2916
      %v3091 = vpop.f32.mrb[0].mxu0
      %v3092 = vadd.f32 0.0, %v3091
      %v3093 = vpop.f32.mrb[0].mxu0
      %3094 = vmatprep.mubr.f32.mxu0 0.0
      %3095 = vmatmul.mubr.f32.gmra.mrb[0].mxu0 %v2919
      %v3096 = vpop.f32.mrb[0].mxu0
      %v3097 = vadd.f32 0.0, %v3096
      %v3098 = vpop.f32.mrb[0].mxu0
      %3099 = vmatprep.mubr.f32.mxu0 0.0
      %3100 = vmatmul.mubr.f32.gmra.mrb[0].mxu0 %v2922
      %v3101 = vpop.f32.mrb[0].mxu0
      %v3102 = vadd.f32 0.0, %v3101
      %v3103 = vpop.f32.mrb[0].mxu0
      %3104 = vmatprep.mubr.f32.mxu0 0.0
      %3105 = vmatmul.mubr.f32.gmra.mrb[0].mxu0 %v2925
      %v3106 = vpop.f32.mrb[0].mxu0
      %v3107 = vadd.f32 0.0, %v3106
      %v3108 = vpop.f32.mrb[0].mxu0
      %3109 = vmatprep.mubr.f32.mxu0 0.0
      %3110 = vmatmul.mubr.f32.gmra.mrb[0].mxu0 %v2928
      %v3111 = vpop.f32.mrb[0].mxu0
      %v3112 = vadd.f32 0.0, %v3111
      %v3113 = vpop.f32.mrb[0].mxu0
      %3114 = vmatprep.mubr.f32.mxu0 0.0
      %3115 = vmatmul.mubr.f32.gmra.mrb[0].mxu0 %v2931
      %v3116 = vpop.f32.mrb[0].mxu0
      %v3117 = vadd.f32 0.0, %v3116
      %v3118 = vpop.f32.mrb[0].mxu0
      %3119 = vmatprep.mubr.f32.mxu0 0.0
      %3120 = vmatmul.mubr.f32.gmra.mrb[0].mxu0 %v2934
      %v3121 = vpop.f32.mrb[0].mxu0
      %v3122 = vadd.f32 0.0, %v3121
      %v3123 = vpop.f32.mrb[0].mxu0
      %3124 = vmatprep.mubr.f32.mxu0 0.0
      %3125 = vmatmul.mubr.f32.gmra.mrb[0].mxu0 %v2937
      %v3126 = vpop.f32.mrb[0].mxu0
      %v3127 = vadd.f32 0.0, %v3126
      %v3128 = vpop.f32.mrb[0].mxu0
      %3129 = vmatprep.mubr.f32.mxu0 0.0
      %3130 = vmatmul.mubr.f32.gmra.mrb[0].mxu0 %v2940
      %v3131 = vpop.f32.mrb[0].mxu0
      %v3132 = vadd.f32 0.0, %v3131
      %v3133 = vpop.f32.mrb[0].mxu0
      %3134 = vmatprep.mubr.f32.mxu0 0.0
      %3135 = vmatmul.mubr.f32.gmra.mrb[0].mxu0 %v2943
      %v3136 = vpop.f32.mrb[0].mxu0
      %v3137 = vadd.f32 0.0, %v3136
      %v3138 = vpop.f32.mrb[0].mxu0
      %3139 = vmatprep.mubr.f32.mxu0 0.0
      %3140 = vmatmul.mubr.f32.gmra.mrb[0].mxu0 %v2946
      %v3141 = vpop.f32.mrb[0].mxu0
      %v3142 = vadd.f32 0.0, %v3141
      %v3143 = vpop.f32.mrb[0].mxu0
      %3144 = vmatprep.mubr.f32.mxu0 0.0
      %3145 = vmatmul.mubr.f32.gmra.mrb[0].mxu0 %v2949
      %v3146 = vpop.f32.mrb[0].mxu0
      %v3147 = vadd.f32 0.0, %v3146
      %v3148 = vpop.f32.mrb[0].mxu0
      %3149 = vmatprep.mubr.f32.mxu0 0.0
      %3150 = vmatmul.mubr.f32.gmra.mrb[0].mxu0 %v2952
      %v3151 = vpop.f32.mrb[0].mxu0
      %v3152 = vadd.f32 0.0, %v3151
      %v3153 = vpop.f32.mrb[0].mxu0
      %3154 = vmatprep.mubr.f32.mxu0 0.0
      %3155 = vmatmul.mubr.f32.gmra.mrb[0].mxu0 %v2955
      %v3156 = vpop.f32.mrb[0].mxu0
      %v3157 = vadd.f32 0.0, %v3156
      %v3158 = vpop.f32.mrb[0].mxu0
      %3159 = vmatprep.mubr.f32.mxu0 0.0
      %3160 = vmatmul.mubr.f32.gmra.mrb[0].mxu0 %v2958
      %v3161 = vpop.f32.mrb[0].mxu0
      %v3162 = vadd.f32 0.0, %v3161
      %v3163 = vpop.f32.mrb[0].mxu0
      %3164 = vmatprep.mubr.f32.mxu0 0.0
      %3165 = vmatmul.mubr.f32.gmra.mrb[0].mxu0 %v2961
      %v3166 = vpop.f32.mrb[0].mxu0
      %v3167 = vadd.f32 0.0, %v3166
      %v3168 = vpop.f32.mrb[0].mxu0
      %3169 = vmatprep.mubr.f32.mxu0 0.0
      %3170 = vmatmul.mubr.f32.gmra.mrb[0].mxu0 %v2964
      %v3171 = vpop.f32.mrb[0].mxu0
      %v3172 = vadd.f32 0.0, %v3171
      %v3173 = vpop.f32.mrb[0].mxu0
      %3174 = vmatprep.mubr.f32.mxu0 0.0
      %3175 = vmatmul.mubr.f32.gmra.mrb[0].mxu0 %v2967
      %v3176 = vpop.f32.mrb[0].mxu0
      %v3177 = vadd.f32 0.0, %v3176
      %v3178 = vpop.f32.mrb[0].mxu0
      %3179 = vmatprep.mubr.f32.mxu0 0.0
      %3180 = vmatmul.mubr.f32.gmra.mrb[0].mxu0 %v2970
      %v3181 = vpop.f32.mrb[0].mxu0
      %v3182 = vadd.f32 0.0, %v3181
      %v3183 = vpop.f32.mrb[0].mxu0
      %3184 = vmatprep.mubr.f32.mxu0 0.0
      %3185 = vmatmul.mubr.f32.gmra.mrb[0].mxu0 %v2973
      %v3186 = vpop.f32.mrb[0].mxu0
      %v3187 = vadd.f32 0.0, %v3186
      %v3188 = vpop.f32.mrb[0].mxu0
      %3189 = vmatprep.mubr.f32.mxu0 0.0
      %3190 = vmatmul.mubr.f32.gmra.mrb[0].mxu0 %v2976
      %v3191 = vpop.f32.mrb[0].mxu0
      %v3192 = vadd.f32 0.0, %v3191
      %v3193 = vpop.f32.mrb[0].mxu0
      %3194 = vmatprep.mubr.f32.mxu0 0.0
      %3195 = vmatmul.mubr.f32.gmra.mrb[0].mxu0 %v2979
      %v3196 = vpop.f32.mrb[0].mxu0
      %v3197 = vadd.f32 0.0, %v3196
      %v3198 = vpop.f32.mrb[0].mxu0
      %3199 = vmatprep.mubr.f32.mxu0 0.0
      %3200 = vmatmul.mubr.f32.gmra.mrb[0].mxu0 %v2982
      %v3201 = vpop.f32.mrb[0].mxu0
      %v3202 = vadd.f32 0.0, %v3201
      %v3203 = vpop.f32.mrb[0].mxu0
      %3204 = vmatprep.mubr.f32.mxu0 0.0
      %3205 = vmatmul.mubr.f32.gmra.mrb[0].mxu0 %v2985
      %v3206 = vpop.f32.mrb[0].mxu0
      %v3207 = vadd.f32 0.0, %v3206
      %v3208 = vpop.f32.mrb[0].mxu0
      %3209 = vmatprep.mubr.f32.mxu0 0.0
      %3210 = vmatmul.mubr.f32.gmra.mrb[0].mxu0 %v2988
      %v3211 = vpop.f32.mrb[0].mxu0
      %v3212 = vadd.f32 0.0, %v3211
      %v3213 = vpop.f32.mrb[0].mxu0
      %3214 = vmatprep.mubr.f32.mxu0 0.0
      %3215 = vmatmul.mubr.f32.gmra.mrb[0].mxu0 %v2991
      %v3216 = vpop.f32.mrb[0].mxu0
      %v3217 = vadd.f32 0.0, %v3216
      %v3218 = vpop.f32.mrb[0].mxu0
      %3219 = vmatprep.mubr.f32.mxu0 0.0
      %3220 = vmatmul.mubr.f32.gmra.mrb[0].mxu0 %v2994
      %v3221 = vpop.f32.mrb[0].mxu0
      %v3222 = vadd.f32 0.0, %v3221
      %v3223 = vpop.f32.mrb[0].mxu0
      %3224 = vmatprep.mubr.f32.mxu0 0.0
      %3225 = vmatmul.mubr.f32.gmra.mrb[0].mxu0 %v2997
      %v3226 = vpop.f32.mrb[0].mxu0
      %v3227 = vadd.f32 0.0, %v3226
      %v3228 = vpop.f32.mrb[0].mxu0
      %3229 = vmatprep.mubr.f32.mxu0 0.0
      %3230 = vmatmul.mubr.f32.gmra.mrb[0].mxu0 %v3000
      %v3231 = vpop.f32.mrb[0].mxu0
      %v3232 = vadd.f32 0.0, %v3231
      %v3233 = vpop.f32.mrb[0].mxu0
      %3234 = vmatprep.mubr.f32.mxu0 0.0
      %3235 = vmatmul.mubr.f32.gmra.mrb[0].mxu0 %v3003
      %v3236 = vpop.f32.mrb[0].mxu0
      %v3237 = vadd.f32 0.0, %v3236
      %v3238 = vpop.f32.mrb[0].mxu0
      %3239 = vmatprep.mubr.f32.mxu0 0.0
      %3240 = vmatmul.mubr.f32.gmra.mrb[0].mxu0 %v3006
      %v3241 = vpop.f32.mrb[0].mxu0
      %v3242 = vadd.f32 0.0, %v3241
      %v3243 = vpop.f32.mrb[0].mxu0
      %3244 = vmatprep.mubr.f32.mxu0 0.0
      %3245 = vmatmul.mubr.f32.gmra.mrb[0].mxu0 %v3009
      %v3246 = vpop.f32.mrb[0].mxu0
      %v3247 = vadd.f32 0.0, %v3246
      %v3248 = vpop.f32.mrb[0].mxu0
      %3249 = vmatprep.mubr.f32.mxu0 0.0
      %3250 = vmatmul.mubr.f32.gmra.mrb[0].mxu0 %v3012
      %v3251 = vpop.f32.mrb[0].mxu0
      %v3252 = vadd.f32 0.0, %v3251
      %v3253 = vpop.f32.mrb[0].mxu0
      %3254 = vmatprep.mubr.f32.mxu0 0.0
      %3255 = vmatmul.mubr.f32.gmra.mrb[0].mxu0 %v3015
      %v3256 = vpop.f32.mrb[0].mxu0
      %v3257 = vadd.f32 0.0, %v3256
      %v3258 = vpop.f32.mrb[0].mxu0
      %3259 = vmatprep.mubr.f32.mxu0 0.0
      %3260 = vmatmul.mubr.f32.gmra.mrb[0].mxu0 %v3018
      %v3261 = vpop.f32.mrb[0].mxu0
      %v3262 = vadd.f32 0.0, %v3261
      %v3263 = vpop.f32.mrb[0].mxu0
      %3264 = vdwg.mxu0
      %v3265 = vadd.f32 %v2838, %v3087
      %v3266 = vadd.f32 %v2839, %v3092
      %v3267 = vadd.f32 %v2840, %v3097
      %v3268 = vadd.f32 %v2841, %v3102
      %v3269 = vadd.f32 %v2842, %v3107
      %v3270 = vadd.f32 %v2843, %v3112
      %v3271 = vadd.f32 %v2844, %v3117
      %v3272 = vadd.f32 %v2845, %v3122
      %v3273 = vadd.f32 %v2846, %v3127
      %v3274 = vadd.f32 %v2847, %v3132
      %v3275 = vadd.f32 %v2848, %v3137
      %v3276 = vadd.f32 %v2849, %v3142
      %v3277 = vadd.f32 %v2850, %v3147
      %v3278 = vadd.f32 %v2851, %v3152
      %v3279 = vadd.f32 %v2852, %v3157
      %v3280 = vadd.f32 %v2853, %v3162
      %v3281 = vadd.f32 %v2854, %v3167
      %v3282 = vadd.f32 %v2855, %v3172
      %v3283 = vadd.f32 %v2856, %v3177
      %v3284 = vadd.f32 %v2857, %v3182
      %v3285 = vadd.f32 %v2858, %v3187
      %v3286 = vadd.f32 %v2859, %v3192
      %v3287 = vadd.f32 %v2860, %v3197
      %v3288 = vadd.f32 %v2861, %v3202
      %v3289 = vadd.f32 %v2862, %v3207
      %v3290 = vadd.f32 %v2863, %v3212
      %v3291 = vadd.f32 %v2864, %v3217
      %v3292 = vadd.f32 %v2865, %v3222
      %v3293 = vadd.f32 %v2866, %v3227
      %v3294 = vadd.f32 %v2867, %v3232
      %v3295 = vadd.f32 %v2868, %v3237
      %v3296 = vadd.f32 %v2869, %v3242
      %v3297 = vadd.f32 %v2870, %v3247
      %v3298 = vadd.f32 %v2871, %v3252
      %v3299 = vadd.f32 %v2872, %v3257
      %v3300 = vadd.f32 %v2873, %v3262
      %v3301 = vld [vmem:[#allocation2 + $0x29] sm:$0xff]
      %v3302 = vld [vmem:[#allocation2 + $0x31] sm:$0xff]
      %v3303 = vld [vmem:[#allocation2 + $0x39] sm:$0xff]
      %v3304 = vld [vmem:[#allocation2 + $0x41] sm:$0xff]
      %v3305 = vld [vmem:[#allocation2 + $0x49] sm:$0xff]
      %v3306 = vld [vmem:[#allocation2 + $0x51] sm:$0xff]
      %v3307 = vld [vmem:[#allocation2 + $0x59] sm:$0xff]
      %v3308 = vld [vmem:[#allocation2 + $0x61] sm:$0xff]
      %v3309 = vld [vmem:[#allocation2 + $0x69] sm:$0xff]
      %v3310 = vld [vmem:[#allocation2 + $0x71] sm:$0xff]
      %v3311 = vld [vmem:[#allocation2 + $0x79] sm:$0xff]
      %v3312 = vld [vmem:[#allocation2 + $0x81] sm:$0xff]
      %v3313 = vld [vmem:[#allocation2 + $0x89] sm:$0xff]
      %v3314 = vld [vmem:[#allocation2 + $0x91] sm:$0xff]
      %v3315 = vld [vmem:[#allocation2 + $0x99] sm:$0xff]
      %v3316 = vld [vmem:[#allocation2 + $0xa1] sm:$0xff]
      %v3317 = vld [vmem:[#allocation2 + $0xa9] sm:$0xff]
      %v3318 = vld [vmem:[#allocation2 + $0xb1] sm:$0xff]
      %v3319 = vld [vmem:[#allocation2 + $0xb9] sm:$0xff]
      %v3320 = vld [vmem:[#allocation2 + $0xc1] sm:$0xff]
      %v3321 = vld [vmem:[#allocation2 + $0xc9] sm:$0xff]
      %v3322 = vld [vmem:[#allocation2 + $0xd1] sm:$0xff]
      %v3323 = vld [vmem:[#allocation2 + $0xd9] sm:$0xff]
      %v3324 = vld [vmem:[#allocation2 + $0xe1] sm:$0xff]
      %v3325 = vld [vmem:[#allocation2 + $0xe9] sm:$0xff]
      %v3326 = vld [vmem:[#allocation2 + $0xf1] sm:$0xff]
      %v3327 = vld [vmem:[#allocation2 + $0xf9] sm:$0xff]
      %v3328 = vld [vmem:[#allocation2 + $0x101] sm:$0xff]
      %v3329 = vld [vmem:[#allocation2 + $0x109] sm:$0xff]
      %v3330 = vld [vmem:[#allocation2 + $0x111] sm:$0xff]
      %v3331 = vld [vmem:[#allocation2 + $0x119] sm:$0xff]
      %v3332 = vld [vmem:[#allocation2 + $0x121] sm:$0xff]
      %v3333 = vld [vmem:[#allocation2 + $0x129] sm:$0xff]
      %v3334 = vld [vmem:[#allocation2 + $0x131] sm:$0xff]
      %v3335 = vld [vmem:[#allocation2 + $0x139] sm:$0xff]
      %v3336 = vld [vmem:[#allocation2 + $0x141] sm:$0xff]
      %s3337 = scalar_lea.vmem %s4, 48
      %v3338 = vld [vmem:[%s3337] sm:$0xff]
      %v3340 = vsel %vm733, %v3301, 0
      %v3343 = vsel %vm733, %v3302, 0
      %v3346 = vsel %vm733, %v3303, 0
      %v3349 = vsel %vm733, %v3304, 0
      %v3352 = vsel %vm733, %v3305, 0
      %v3355 = vsel %vm733, %v3306, 0
      %v3358 = vsel %vm733, %v3307, 0
      %v3361 = vsel %vm733, %v3308, 0
      %v3364 = vsel %vm733, %v3309, 0
      %v3367 = vsel %vm733, %v3310, 0
      %v3370 = vsel %vm733, %v3311, 0
      %v3373 = vsel %vm733, %v3312, 0
      %v3376 = vsel %vm733, %v3313, 0
      %v3379 = vsel %vm733, %v3314, 0
      %v3382 = vsel %vm733, %v3315, 0
      %v3385 = vsel %vm733, %v3316, 0
      %v3388 = vsel %vm733, %v3317, 0
      %v3391 = vsel %vm733, %v3318, 0
      %v3394 = vsel %vm733, %v3319, 0
      %v3397 = vsel %vm733, %v3320, 0
      %v3400 = vsel %vm733, %v3321, 0
      %v3403 = vsel %vm733, %v3322, 0
      %v3406 = vsel %vm733, %v3323, 0
      %v3409 = vsel %vm733, %v3324, 0
      %v3412 = vsel %vm733, %v3325, 0
      %v3415 = vsel %vm733, %v3326, 0
      %v3418 = vsel %vm733, %v3327, 0
      %v3421 = vsel %vm733, %v3328, 0
      %v3424 = vsel %vm733, %v3329, 0
      %v3427 = vsel %vm733, %v3330, 0
      %v3430 = vsel %vm733, %v3331, 0
      %v3433 = vsel %vm733, %v3332, 0
      %v3436 = vsel %vm733, %v3333, 0
      %v3439 = vsel %vm733, %v3334, 0
      %v3442 = vsel %vm733, %v3335, 0
      %v3445 = vsel %vm733, %v3336, 0
      %3447 = vmatprep.subr.mxu0 0.0
      %3448 = vmatpush1.msra.mxu0 %v3338
      %3449 = vmatprep.subr.mxu0 0.0
      %3450 = vmatpush1.msra.mxu0 0.0
      %3451 = vmatprep.subr.mxu0 0.0
      %3452 = vmatpush1.msra.mxu0 0.0
      %3453 = vmatprep.subr.mxu0 0.0
      %3454 = vmatpush1.msra.mxu0 0.0
      %3455 = vmatprep.subr.mxu0 0.0
      %3456 = vmatpush1.msra.mxu0 0.0
      %3457 = vmatprep.subr.mxu0 0.0
      %3458 = vmatpush1.msra.mxu0 0.0
      %3459 = vmatprep.subr.mxu0 0.0
      %3460 = vmatpush1.msra.mxu0 0.0
      %3461 = vmatprep.subr.mxu0 0.0
      %3462 = vmatpush1.msra.mxu0 0.0
      %3463 = vmatprep.subr.mxu0 0.0
      %3464 = vmatpush1.msra.mxu0 0.0
      %3465 = vmatprep.subr.mxu0 0.0
      %3466 = vmatpush1.msra.mxu0 0.0
      %3467 = vmatprep.subr.mxu0 0.0
      %3468 = vmatpush1.msra.mxu0 0.0
      %3469 = vmatprep.subr.mxu0 0.0
      %3470 = vmatpush1.msra.mxu0 0.0
      %3471 = vmatprep.subr.mxu0 0.0
      %3472 = vmatpush1.msra.mxu0 0.0
      %3473 = vmatprep.subr.mxu0 0.0
      %3474 = vmatpush1.msra.mxu0 0.0
      %3475 = vmatprep.subr.mxu0 0.0
      %3476 = vmatpush1.msra.mxu0 0.0
      %3477 = vmatprep.subr.mxu0 0.0
      %3478 = vmatpush1.msra.mxu0 0.0
      %3479 = vmatprep.subr.mxu0 0.0
      %3480 = vmatpush1.msra.mxu0 0.0
      %3481 = vmatprep.subr.mxu0 0.0
      %3482 = vmatpush1.msra.mxu0 0.0
      %3483 = vmatprep.subr.mxu0 0.0
      %3484 = vmatpush1.msra.mxu0 0.0
      %3485 = vmatprep.subr.mxu0 0.0
      %3486 = vmatpush1.msra.mxu0 0.0
      %3487 = vmatprep.subr.mxu0 0.0
      %3488 = vmatpush1.msra.mxu0 0.0
      %3489 = vmatprep.subr.mxu0 0.0
      %3490 = vmatpush1.msra.mxu0 0.0
      %3491 = vmatprep.subr.mxu0 0.0
      %3492 = vmatpush1.msra.mxu0 0.0
      %3493 = vmatprep.subr.mxu0 0.0
      %3494 = vmatpush1.msra.mxu0 0.0
      %3495 = vmatprep.subr.mxu0 0.0
      %3496 = vmatpush1.msra.mxu0 0.0
      %3497 = vmatprep.subr.mxu0 0.0
      %3498 = vmatpush1.msra.mxu0 0.0
      %3499 = vmatprep.subr.mxu0 0.0
      %3500 = vmatpush1.msra.mxu0 0.0
      %3501 = vmatprep.subr.mxu0 0.0
      %3502 = vmatpush1.msra.mxu0 0.0
      %3503 = vmatprep.subr.mxu0 0.0
      %3504 = vmatpush1.msra.mxu0 0.0
      %3505 = vmatprep.subr.mxu0 0.0
      %3506 = vmatpush1.msra.mxu0 0.0
      %3507 = vmatprep.subr.mxu0 0.0
      %3508 = vmatpush1.msra.mxu0 0.0
      %3509 = vmatprep.subr.mxu0 0.0
      %3510 = vmatpush1.msra.mxu0 0.0
      %3511 = vmatprep.mubr.f32.mxu0 0.0
      %3512 = vmatmul.mubr.f32.gmra.mrb[0].mxu0 %v3340
      %v3513 = vpop.f32.mrb[0].mxu0
      %v3514 = vadd.f32 0.0, %v3513
      %v3515 = vpop.f32.mrb[0].mxu0
      %3516 = vmatprep.mubr.f32.mxu0 0.0
      %3517 = vmatmul.mubr.f32.gmra.mrb[0].mxu0 %v3343
      %v3518 = vpop.f32.mrb[0].mxu0
      %v3519 = vadd.f32 0.0, %v3518
      %v3520 = vpop.f32.mrb[0].mxu0
      %3521 = vmatprep.mubr.f32.mxu0 0.0
      %3522 = vmatmul.mubr.f32.gmra.mrb[0].mxu0 %v3346
      %v3523 = vpop.f32.mrb[0].mxu0
      %v3524 = vadd.f32 0.0, %v3523
      %v3525 = vpop.f32.mrb[0].mxu0
      %3526 = vmatprep.mubr.f32.mxu0 0.0
      %3527 = vmatmul.mubr.f32.gmra.mrb[0].mxu0 %v3349
      %v3528 = vpop.f32.mrb[0].mxu0
      %v3529 = vadd.f32 0.0, %v3528
      %v3530 = vpop.f32.mrb[0].mxu0
      %3531 = vmatprep.mubr.f32.mxu0 0.0
      %3532 = vmatmul.mubr.f32.gmra.mrb[0].mxu0 %v3352
      %v3533 = vpop.f32.mrb[0].mxu0
      %v3534 = vadd.f32 0.0, %v3533
      %v3535 = vpop.f32.mrb[0].mxu0
      %3536 = vmatprep.mubr.f32.mxu0 0.0
      %3537 = vmatmul.mubr.f32.gmra.mrb[0].mxu0 %v3355
      %v3538 = vpop.f32.mrb[0].mxu0
      %v3539 = vadd.f32 0.0, %v3538
      %v3540 = vpop.f32.mrb[0].mxu0
      %3541 = vmatprep.mubr.f32.mxu0 0.0
      %3542 = vmatmul.mubr.f32.gmra.mrb[0].mxu0 %v3358
      %v3543 = vpop.f32.mrb[0].mxu0
      %v3544 = vadd.f32 0.0, %v3543
      %v3545 = vpop.f32.mrb[0].mxu0
      %3546 = vmatprep.mubr.f32.mxu0 0.0
      %3547 = vmatmul.mubr.f32.gmra.mrb[0].mxu0 %v3361
      %v3548 = vpop.f32.mrb[0].mxu0
      %v3549 = vadd.f32 0.0, %v3548
      %v3550 = vpop.f32.mrb[0].mxu0
      %3551 = vmatprep.mubr.f32.mxu0 0.0
      %3552 = vmatmul.mubr.f32.gmra.mrb[0].mxu0 %v3364
      %v3553 = vpop.f32.mrb[0].mxu0
      %v3554 = vadd.f32 0.0, %v3553
      %v3555 = vpop.f32.mrb[0].mxu0
      %3556 = vmatprep.mubr.f32.mxu0 0.0
      %3557 = vmatmul.mubr.f32.gmra.mrb[0].mxu0 %v3367
      %v3558 = vpop.f32.mrb[0].mxu0
      %v3559 = vadd.f32 0.0, %v3558
      %v3560 = vpop.f32.mrb[0].mxu0
      %3561 = vmatprep.mubr.f32.mxu0 0.0
      %3562 = vmatmul.mubr.f32.gmra.mrb[0].mxu0 %v3370
      %v3563 = vpop.f32.mrb[0].mxu0
      %v3564 = vadd.f32 0.0, %v3563
      %v3565 = vpop.f32.mrb[0].mxu0
      %3566 = vmatprep.mubr.f32.mxu0 0.0
      %3567 = vmatmul.mubr.f32.gmra.mrb[0].mxu0 %v3373
      %v3568 = vpop.f32.mrb[0].mxu0
      %v3569 = vadd.f32 0.0, %v3568
      %v3570 = vpop.f32.mrb[0].mxu0
      %3571 = vmatprep.mubr.f32.mxu0 0.0
      %3572 = vmatmul.mubr.f32.gmra.mrb[0].mxu0 %v3376
      %v3573 = vpop.f32.mrb[0].mxu0
      %v3574 = vadd.f32 0.0, %v3573
      %v3575 = vpop.f32.mrb[0].mxu0
      %3576 = vmatprep.mubr.f32.mxu0 0.0
      %3577 = vmatmul.mubr.f32.gmra.mrb[0].mxu0 %v3379
      %v3578 = vpop.f32.mrb[0].mxu0
      %v3579 = vadd.f32 0.0, %v3578
      %v3580 = vpop.f32.mrb[0].mxu0
      %3581 = vmatprep.mubr.f32.mxu0 0.0
      %3582 = vmatmul.mubr.f32.gmra.mrb[0].mxu0 %v3382
      %v3583 = vpop.f32.mrb[0].mxu0
      %v3584 = vadd.f32 0.0, %v3583
      %v3585 = vpop.f32.mrb[0].mxu0
      %3586 = vmatprep.mubr.f32.mxu0 0.0
      %3587 = vmatmul.mubr.f32.gmra.mrb[0].mxu0 %v3385
      %v3588 = vpop.f32.mrb[0].mxu0
      %v3589 = vadd.f32 0.0, %v3588
      %v3590 = vpop.f32.mrb[0].mxu0
      %3591 = vmatprep.mubr.f32.mxu0 0.0
      %3592 = vmatmul.mubr.f32.gmra.mrb[0].mxu0 %v3388
      %v3593 = vpop.f32.mrb[0].mxu0
      %v3594 = vadd.f32 0.0, %v3593
      %v3595 = vpop.f32.mrb[0].mxu0
      %3596 = vmatprep.mubr.f32.mxu0 0.0
      %3597 = vmatmul.mubr.f32.gmra.mrb[0].mxu0 %v3391
      %v3598 = vpop.f32.mrb[0].mxu0
      %v3599 = vadd.f32 0.0, %v3598
      %v3600 = vpop.f32.mrb[0].mxu0
      %3601 = vmatprep.mubr.f32.mxu0 0.0
      %3602 = vmatmul.mubr.f32.gmra.mrb[0].mxu0 %v3394
      %v3603 = vpop.f32.mrb[0].mxu0
      %v3604 = vadd.f32 0.0, %v3603
      %v3605 = vpop.f32.mrb[0].mxu0
      %3606 = vmatprep.mubr.f32.mxu0 0.0
      %3607 = vmatmul.mubr.f32.gmra.mrb[0].mxu0 %v3397
      %v3608 = vpop.f32.mrb[0].mxu0
      %v3609 = vadd.f32 0.0, %v3608
      %v3610 = vpop.f32.mrb[0].mxu0
      %3611 = vmatprep.mubr.f32.mxu0 0.0
      %3612 = vmatmul.mubr.f32.gmra.mrb[0].mxu0 %v3400
      %v3613 = vpop.f32.mrb[0].mxu0
      %v3614 = vadd.f32 0.0, %v3613
      %v3615 = vpop.f32.mrb[0].mxu0
      %3616 = vmatprep.mubr.f32.mxu0 0.0
      %3617 = vmatmul.mubr.f32.gmra.mrb[0].mxu0 %v3403
      %v3618 = vpop.f32.mrb[0].mxu0
      %v3619 = vadd.f32 0.0, %v3618
      %v3620 = vpop.f32.mrb[0].mxu0
      %3621 = vmatprep.mubr.f32.mxu0 0.0
      %3622 = vmatmul.mubr.f32.gmra.mrb[0].mxu0 %v3406
      %v3623 = vpop.f32.mrb[0].mxu0
      %v3624 = vadd.f32 0.0, %v3623
      %v3625 = vpop.f32.mrb[0].mxu0
      %3626 = vmatprep.mubr.f32.mxu0 0.0
      %3627 = vmatmul.mubr.f32.gmra.mrb[0].mxu0 %v3409
      %v3628 = vpop.f32.mrb[0].mxu0
      %v3629 = vadd.f32 0.0, %v3628
      %v3630 = vpop.f32.mrb[0].mxu0
      %3631 = vmatprep.mubr.f32.mxu0 0.0
      %3632 = vmatmul.mubr.f32.gmra.mrb[0].mxu0 %v3412
      %v3633 = vpop.f32.mrb[0].mxu0
      %v3634 = vadd.f32 0.0, %v3633
      %v3635 = vpop.f32.mrb[0].mxu0
      %3636 = vmatprep.mubr.f32.mxu0 0.0
      %3637 = vmatmul.mubr.f32.gmra.mrb[0].mxu0 %v3415
      %v3638 = vpop.f32.mrb[0].mxu0
      %v3639 = vadd.f32 0.0, %v3638
      %v3640 = vpop.f32.mrb[0].mxu0
      %3641 = vmatprep.mubr.f32.mxu0 0.0
      %3642 = vmatmul.mubr.f32.gmra.mrb[0].mxu0 %v3418
      %v3643 = vpop.f32.mrb[0].mxu0
      %v3644 = vadd.f32 0.0, %v3643
      %v3645 = vpop.f32.mrb[0].mxu0
      %3646 = vmatprep.mubr.f32.mxu0 0.0
      %3647 = vmatmul.mubr.f32.gmra.mrb[0].mxu0 %v3421
      %v3648 = vpop.f32.mrb[0].mxu0
      %v3649 = vadd.f32 0.0, %v3648
      %v3650 = vpop.f32.mrb[0].mxu0
      %3651 = vmatprep.mubr.f32.mxu0 0.0
      %3652 = vmatmul.mubr.f32.gmra.mrb[0].mxu0 %v3424
      %v3653 = vpop.f32.mrb[0].mxu0
      %v3654 = vadd.f32 0.0, %v3653
      %v3655 = vpop.f32.mrb[0].mxu0
      %3656 = vmatprep.mubr.f32.mxu0 0.0
      %3657 = vmatmul.mubr.f32.gmra.mrb[0].mxu0 %v3427
      %v3658 = vpop.f32.mrb[0].mxu0
      %v3659 = vadd.f32 0.0, %v3658
      %v3660 = vpop.f32.mrb[0].mxu0
      %3661 = vmatprep.mubr.f32.mxu0 0.0
      %3662 = vmatmul.mubr.f32.gmra.mrb[0].mxu0 %v3430
      %v3663 = vpop.f32.mrb[0].mxu0
      %v3664 = vadd.f32 0.0, %v3663
      %v3665 = vpop.f32.mrb[0].mxu0
      %3666 = vmatprep.mubr.f32.mxu0 0.0
      %3667 = vmatmul.mubr.f32.gmra.mrb[0].mxu0 %v3433
      %v3668 = vpop.f32.mrb[0].mxu0
      %v3669 = vadd.f32 0.0, %v3668
      %v3670 = vpop.f32.mrb[0].mxu0
      %3671 = vmatprep.mubr.f32.mxu0 0.0
      %3672 = vmatmul.mubr.f32.gmra.mrb[0].mxu0 %v3436
      %v3673 = vpop.f32.mrb[0].mxu0
      %v3674 = vadd.f32 0.0, %v3673
      %v3675 = vpop.f32.mrb[0].mxu0
      %3676 = vmatprep.mubr.f32.mxu0 0.0
      %3677 = vmatmul.mubr.f32.gmra.mrb[0].mxu0 %v3439
      %v3678 = vpop.f32.mrb[0].mxu0
      %v3679 = vadd.f32 0.0, %v3678
      %v3680 = vpop.f32.mrb[0].mxu0
      %3681 = vmatprep.mubr.f32.mxu0 0.0
      %3682 = vmatmul.mubr.f32.gmra.mrb[0].mxu0 %v3442
      %v3683 = vpop.f32.mrb[0].mxu0
      %v3684 = vadd.f32 0.0, %v3683
      %v3685 = vpop.f32.mrb[0].mxu0
      %3686 = vmatprep.mubr.f32.mxu0 0.0
      %3687 = vmatmul.mubr.f32.gmra.mrb[0].mxu0 %v3445
      %v3688 = vpop.f32.mrb[0].mxu0
      %v3689 = vadd.f32 0.0, %v3688
      %v3690 = vpop.f32.mrb[0].mxu0
      %3691 = vdwg.mxu0
      %v3692 = vadd.f32 %v3265, %v3514
      %v3693 = vadd.f32 %v3266, %v3519
      %v3694 = vadd.f32 %v3267, %v3524
      %v3695 = vadd.f32 %v3268, %v3529
      %v3696 = vadd.f32 %v3269, %v3534
      %v3697 = vadd.f32 %v3270, %v3539
      %v3698 = vadd.f32 %v3271, %v3544
      %v3699 = vadd.f32 %v3272, %v3549
      %v3700 = vadd.f32 %v3273, %v3554
      %v3701 = vadd.f32 %v3274, %v3559
      %v3702 = vadd.f32 %v3275, %v3564
      %v3703 = vadd.f32 %v3276, %v3569
      %v3704 = vadd.f32 %v3277, %v3574
      %v3705 = vadd.f32 %v3278, %v3579
      %v3706 = vadd.f32 %v3279, %v3584
      %v3707 = vadd.f32 %v3280, %v3589
      %v3708 = vadd.f32 %v3281, %v3594
      %v3709 = vadd.f32 %v3282, %v3599
      %v3710 = vadd.f32 %v3283, %v3604
      %v3711 = vadd.f32 %v3284, %v3609
      %v3712 = vadd.f32 %v3285, %v3614
      %v3713 = vadd.f32 %v3286, %v3619
      %v3714 = vadd.f32 %v3287, %v3624
      %v3715 = vadd.f32 %v3288, %v3629
      %v3716 = vadd.f32 %v3289, %v3634
      %v3717 = vadd.f32 %v3290, %v3639
      %v3718 = vadd.f32 %v3291, %v3644
      %v3719 = vadd.f32 %v3292, %v3649
      %v3720 = vadd.f32 %v3293, %v3654
      %v3721 = vadd.f32 %v3294, %v3659
      %v3722 = vadd.f32 %v3295, %v3664
      %v3723 = vadd.f32 %v3296, %v3669
      %v3724 = vadd.f32 %v3297, %v3674
      %v3725 = vadd.f32 %v3298, %v3679
      %v3726 = vadd.f32 %v3299, %v3684
      %v3727 = vadd.f32 %v3300, %v3689
      %v3728 = vld [vmem:[#allocation2 + $0x2a] sm:$0xff]
      %v3729 = vld [vmem:[#allocation2 + $0x32] sm:$0xff]
      %v3730 = vld [vmem:[#allocation2 + $0x3a] sm:$0xff]
      %v3731 = vld [vmem:[#allocation2 + $0x42] sm:$0xff]
      %v3732 = vld [vmem:[#allocation2 + $0x4a] sm:$0xff]
      %v3733 = vld [vmem:[#allocation2 + $0x52] sm:$0xff]
      %v3734 = vld [vmem:[#allocation2 + $0x5a] sm:$0xff]
      %v3735 = vld [vmem:[#allocation2 + $0x62] sm:$0xff]
      %v3736 = vld [vmem:[#allocation2 + $0x6a] sm:$0xff]
      %v3737 = vld [vmem:[#allocation2 + $0x72] sm:$0xff]
      %v3738 = vld [vmem:[#allocation2 + $0x7a] sm:$0xff]
      %v3739 = vld [vmem:[#allocation2 + $0x82] sm:$0xff]
      %v3740 = vld [vmem:[#allocation2 + $0x8a] sm:$0xff]
      %v3741 = vld [vmem:[#allocation2 + $0x92] sm:$0xff]
      %v3742 = vld [vmem:[#allocation2 + $0x9a] sm:$0xff]
      %v3743 = vld [vmem:[#allocation2 + $0xa2] sm:$0xff]
      %v3744 = vld [vmem:[#allocation2 + $0xaa] sm:$0xff]
      %v3745 = vld [vmem:[#allocation2 + $0xb2] sm:$0xff]
      %v3746 = vld [vmem:[#allocation2 + $0xba] sm:$0xff]
      %v3747 = vld [vmem:[#allocation2 + $0xc2] sm:$0xff]
      %v3748 = vld [vmem:[#allocation2 + $0xca] sm:$0xff]
      %v3749 = vld [vmem:[#allocation2 + $0xd2] sm:$0xff]
      %v3750 = vld [vmem:[#allocation2 + $0xda] sm:$0xff]
      %v3751 = vld [vmem:[#allocation2 + $0xe2] sm:$0xff]
      %v3752 = vld [vmem:[#allocation2 + $0xea] sm:$0xff]
      %v3753 = vld [vmem:[#allocation2 + $0xf2] sm:$0xff]
      %v3754 = vld [vmem:[#allocation2 + $0xfa] sm:$0xff]
      %v3755 = vld [vmem:[#allocation2 + $0x102] sm:$0xff]
      %v3756 = vld [vmem:[#allocation2 + $0x10a] sm:$0xff]
      %v3757 = vld [vmem:[#allocation2 + $0x112] sm:$0xff]
      %v3758 = vld [vmem:[#allocation2 + $0x11a] sm:$0xff]
      %v3759 = vld [vmem:[#allocation2 + $0x122] sm:$0xff]
      %v3760 = vld [vmem:[#allocation2 + $0x12a] sm:$0xff]
      %v3761 = vld [vmem:[#allocation2 + $0x132] sm:$0xff]
      %v3762 = vld [vmem:[#allocation2 + $0x13a] sm:$0xff]
      %v3763 = vld [vmem:[#allocation2 + $0x142] sm:$0xff]
      %s3764 = scalar_lea.vmem %s4, 56
      %v3765 = vld [vmem:[%s3764] sm:$0xff]
      %v3767 = vsel %vm733, %v3728, 0
      %v3770 = vsel %vm733, %v3729, 0
      %v3773 = vsel %vm733, %v3730, 0
      %v3776 = vsel %vm733, %v3731, 0
      %v3779 = vsel %vm733, %v3732, 0
      %v3782 = vsel %vm733, %v3733, 0
      %v3785 = vsel %vm733, %v3734, 0
      %v3788 = vsel %vm733, %v3735, 0
      %v3791 = vsel %vm733, %v3736, 0
      %v3794 = vsel %vm733, %v3737, 0
      %v3797 = vsel %vm733, %v3738, 0
      %v3800 = vsel %vm733, %v3739, 0
      %v3803 = vsel %vm733, %v3740, 0
      %v3806 = vsel %vm733, %v3741, 0
      %v3809 = vsel %vm733, %v3742, 0
      %v3812 = vsel %vm733, %v3743, 0
      %v3815 = vsel %vm733, %v3744, 0
      %v3818 = vsel %vm733, %v3745, 0
      %v3821 = vsel %vm733, %v3746, 0
      %v3824 = vsel %vm733, %v3747, 0
      %v3827 = vsel %vm733, %v3748, 0
      %v3830 = vsel %vm733, %v3749, 0
      %v3833 = vsel %vm733, %v3750, 0
      %v3836 = vsel %vm733, %v3751, 0
      %v3839 = vsel %vm733, %v3752, 0
      %v3842 = vsel %vm733, %v3753, 0
      %v3845 = vsel %vm733, %v3754, 0
      %v3848 = vsel %vm733, %v3755, 0
      %v3851 = vsel %vm733, %v3756, 0
      %v3854 = vsel %vm733, %v3757, 0
      %v3857 = vsel %vm733, %v3758, 0
      %v3860 = vsel %vm733, %v3759, 0
      %v3863 = vsel %vm733, %v3760, 0
      %v3866 = vsel %vm733, %v3761, 0
      %v3869 = vsel %vm733, %v3762, 0
      %v3872 = vsel %vm733, %v3763, 0
      %3874 = vmatprep.subr.mxu0 0.0
      %3875 = vmatpush1.msra.mxu0 %v3765
      %3876 = vmatprep.subr.mxu0 0.0
      %3877 = vmatpush1.msra.mxu0 0.0
      %3878 = vmatprep.subr.mxu0 0.0
      %3879 = vmatpush1.msra.mxu0 0.0
      %3880 = vmatprep.subr.mxu0 0.0
      %3881 = vmatpush1.msra.mxu0 0.0
      %3882 = vmatprep.subr.mxu0 0.0
      %3883 = vmatpush1.msra.mxu0 0.0
      %3884 = vmatprep.subr.mxu0 0.0
      %3885 = vmatpush1.msra.mxu0 0.0
      %3886 = vmatprep.subr.mxu0 0.0
      %3887 = vmatpush1.msra.mxu0 0.0
      %3888 = vmatprep.subr.mxu0 0.0
      %3889 = vmatpush1.msra.mxu0 0.0
      %3890 = vmatprep.subr.mxu0 0.0
      %3891 = vmatpush1.msra.mxu0 0.0
      %3892 = vmatprep.subr.mxu0 0.0
      %3893 = vmatpush1.msra.mxu0 0.0
      %3894 = vmatprep.subr.mxu0 0.0
      %3895 = vmatpush1.msra.mxu0 0.0
      %3896 = vmatprep.subr.mxu0 0.0
      %3897 = vmatpush1.msra.mxu0 0.0
      %3898 = vmatprep.subr.mxu0 0.0
      %3899 = vmatpush1.msra.mxu0 0.0
      %3900 = vmatprep.subr.mxu0 0.0
      %3901 = vmatpush1.msra.mxu0 0.0
      %3902 = vmatprep.subr.mxu0 0.0
      %3903 = vmatpush1.msra.mxu0 0.0
      %3904 = vmatprep.subr.mxu0 0.0
      %3905 = vmatpush1.msra.mxu0 0.0
      %3906 = vmatprep.subr.mxu0 0.0
      %3907 = vmatpush1.msra.mxu0 0.0
      %3908 = vmatprep.subr.mxu0 0.0
      %3909 = vmatpush1.msra.mxu0 0.0
      %3910 = vmatprep.subr.mxu0 0.0
      %3911 = vmatpush1.msra.mxu0 0.0
      %3912 = vmatprep.subr.mxu0 0.0
      %3913 = vmatpush1.msra.mxu0 0.0
      %3914 = vmatprep.subr.mxu0 0.0
      %3915 = vmatpush1.msra.mxu0 0.0
      %3916 = vmatprep.subr.mxu0 0.0
      %3917 = vmatpush1.msra.mxu0 0.0
      %3918 = vmatprep.subr.mxu0 0.0
      %3919 = vmatpush1.msra.mxu0 0.0
      %3920 = vmatprep.subr.mxu0 0.0
      %3921 = vmatpush1.msra.mxu0 0.0
      %3922 = vmatprep.subr.mxu0 0.0
      %3923 = vmatpush1.msra.mxu0 0.0
      %3924 = vmatprep.subr.mxu0 0.0
      %3925 = vmatpush1.msra.mxu0 0.0
      %3926 = vmatprep.subr.mxu0 0.0
      %3927 = vmatpush1.msra.mxu0 0.0
      %3928 = vmatprep.subr.mxu0 0.0
      %3929 = vmatpush1.msra.mxu0 0.0
      %3930 = vmatprep.subr.mxu0 0.0
      %3931 = vmatpush1.msra.mxu0 0.0
      %3932 = vmatprep.subr.mxu0 0.0
      %3933 = vmatpush1.msra.mxu0 0.0
      %3934 = vmatprep.subr.mxu0 0.0
      %3935 = vmatpush1.msra.mxu0 0.0
      %3936 = vmatprep.subr.mxu0 0.0
      %3937 = vmatpush1.msra.mxu0 0.0
      %3938 = vmatprep.mubr.f32.mxu0 0.0
      %3939 = vmatmul.mubr.f32.gmra.mrb[0].mxu0 %v3767
      %v3940 = vpop.f32.mrb[0].mxu0
      %v3941 = vadd.f32 0.0, %v3940
      %v3942 = vpop.f32.mrb[0].mxu0
      %3943 = vmatprep.mubr.f32.mxu0 0.0
      %3944 = vmatmul.mubr.f32.gmra.mrb[0].mxu0 %v3770
      %v3945 = vpop.f32.mrb[0].mxu0
      %v3946 = vadd.f32 0.0, %v3945
      %v3947 = vpop.f32.mrb[0].mxu0
      %3948 = vmatprep.mubr.f32.mxu0 0.0
      %3949 = vmatmul.mubr.f32.gmra.mrb[0].mxu0 %v3773
      %v3950 = vpop.f32.mrb[0].mxu0
      %v3951 = vadd.f32 0.0, %v3950
      %v3952 = vpop.f32.mrb[0].mxu0
      %3953 = vmatprep.mubr.f32.mxu0 0.0
      %3954 = vmatmul.mubr.f32.gmra.mrb[0].mxu0 %v3776
      %v3955 = vpop.f32.mrb[0].mxu0
      %v3956 = vadd.f32 0.0, %v3955
      %v3957 = vpop.f32.mrb[0].mxu0
      %3958 = vmatprep.mubr.f32.mxu0 0.0
      %3959 = vmatmul.mubr.f32.gmra.mrb[0].mxu0 %v3779
      %v3960 = vpop.f32.mrb[0].mxu0
      %v3961 = vadd.f32 0.0, %v3960
      %v3962 = vpop.f32.mrb[0].mxu0
      %3963 = vmatprep.mubr.f32.mxu0 0.0
      %3964 = vmatmul.mubr.f32.gmra.mrb[0].mxu0 %v3782
      %v3965 = vpop.f32.mrb[0].mxu0
      %v3966 = vadd.f32 0.0, %v3965
      %v3967 = vpop.f32.mrb[0].mxu0
      %3968 = vmatprep.mubr.f32.mxu0 0.0
      %3969 = vmatmul.mubr.f32.gmra.mrb[0].mxu0 %v3785
      %v3970 = vpop.f32.mrb[0].mxu0
      %v3971 = vadd.f32 0.0, %v3970
      %v3972 = vpop.f32.mrb[0].mxu0
      %3973 = vmatprep.mubr.f32.mxu0 0.0
      %3974 = vmatmul.mubr.f32.gmra.mrb[0].mxu0 %v3788
      %v3975 = vpop.f32.mrb[0].mxu0
      %v3976 = vadd.f32 0.0, %v3975
      %v3977 = vpop.f32.mrb[0].mxu0
      %3978 = vmatprep.mubr.f32.mxu0 0.0
      %3979 = vmatmul.mubr.f32.gmra.mrb[0].mxu0 %v3791
      %v3980 = vpop.f32.mrb[0].mxu0
      %v3981 = vadd.f32 0.0, %v3980
      %v3982 = vpop.f32.mrb[0].mxu0
      %3983 = vmatprep.mubr.f32.mxu0 0.0
      %3984 = vmatmul.mubr.f32.gmra.mrb[0].mxu0 %v3794
      %v3985 = vpop.f32.mrb[0].mxu0
      %v3986 = vadd.f32 0.0, %v3985
      %v3987 = vpop.f32.mrb[0].mxu0
      %3988 = vmatprep.mubr.f32.mxu0 0.0
      %3989 = vmatmul.mubr.f32.gmra.mrb[0].mxu0 %v3797
      %v3990 = vpop.f32.mrb[0].mxu0
      %v3991 = vadd.f32 0.0, %v3990
      %v3992 = vpop.f32.mrb[0].mxu0
      %3993 = vmatprep.mubr.f32.mxu0 0.0
      %3994 = vmatmul.mubr.f32.gmra.mrb[0].mxu0 %v3800
      %v3995 = vpop.f32.mrb[0].mxu0
      %v3996 = vadd.f32 0.0, %v3995
      %v3997 = vpop.f32.mrb[0].mxu0
      %3998 = vmatprep.mubr.f32.mxu0 0.0
      %3999 = vmatmul.mubr.f32.gmra.mrb[0].mxu0 %v3803
      %v4000 = vpop.f32.mrb[0].mxu0
      %v4001 = vadd.f32 0.0, %v4000
      %v4002 = vpop.f32.mrb[0].mxu0
      %4003 = vmatprep.mubr.f32.mxu0 0.0
      %4004 = vmatmul.mubr.f32.gmra.mrb[0].mxu0 %v3806
      %v4005 = vpop.f32.mrb[0].mxu0
      %v4006 = vadd.f32 0.0, %v4005
      %v4007 = vpop.f32.mrb[0].mxu0
      %4008 = vmatprep.mubr.f32.mxu0 0.0
      %4009 = vmatmul.mubr.f32.gmra.mrb[0].mxu0 %v3809
      %v4010 = vpop.f32.mrb[0].mxu0
      %v4011 = vadd.f32 0.0, %v4010
      %v4012 = vpop.f32.mrb[0].mxu0
      %4013 = vmatprep.mubr.f32.mxu0 0.0
      %4014 = vmatmul.mubr.f32.gmra.mrb[0].mxu0 %v3812
      %v4015 = vpop.f32.mrb[0].mxu0
      %v4016 = vadd.f32 0.0, %v4015
      %v4017 = vpop.f32.mrb[0].mxu0
      %4018 = vmatprep.mubr.f32.mxu0 0.0
      %4019 = vmatmul.mubr.f32.gmra.mrb[0].mxu0 %v3815
      %v4020 = vpop.f32.mrb[0].mxu0
      %v4021 = vadd.f32 0.0, %v4020
      %v4022 = vpop.f32.mrb[0].mxu0
      %4023 = vmatprep.mubr.f32.mxu0 0.0
      %4024 = vmatmul.mubr.f32.gmra.mrb[0].mxu0 %v3818
      %v4025 = vpop.f32.mrb[0].mxu0
      %v4026 = vadd.f32 0.0, %v4025
      %v4027 = vpop.f32.mrb[0].mxu0
      %4028 = vmatprep.mubr.f32.mxu0 0.0
      %4029 = vmatmul.mubr.f32.gmra.mrb[0].mxu0 %v3821
      %v4030 = vpop.f32.mrb[0].mxu0
      %v4031 = vadd.f32 0.0, %v4030
      %v4032 = vpop.f32.mrb[0].mxu0
      %4033 = vmatprep.mubr.f32.mxu0 0.0
      %4034 = vmatmul.mubr.f32.gmra.mrb[0].mxu0 %v3824
      %v4035 = vpop.f32.mrb[0].mxu0
      %v4036 = vadd.f32 0.0, %v4035
      %v4037 = vpop.f32.mrb[0].mxu0
      %4038 = vmatprep.mubr.f32.mxu0 0.0
      %4039 = vmatmul.mubr.f32.gmra.mrb[0].mxu0 %v3827
      %v4040 = vpop.f32.mrb[0].mxu0
      %v4041 = vadd.f32 0.0, %v4040
      %v4042 = vpop.f32.mrb[0].mxu0
      %4043 = vmatprep.mubr.f32.mxu0 0.0
      %4044 = vmatmul.mubr.f32.gmra.mrb[0].mxu0 %v3830
      %v4045 = vpop.f32.mrb[0].mxu0
      %v4046 = vadd.f32 0.0, %v4045
      %v4047 = vpop.f32.mrb[0].mxu0
      %4048 = vmatprep.mubr.f32.mxu0 0.0
      %4049 = vmatmul.mubr.f32.gmra.mrb[0].mxu0 %v3833
      %v4050 = vpop.f32.mrb[0].mxu0
      %v4051 = vadd.f32 0.0, %v4050
      %v4052 = vpop.f32.mrb[0].mxu0
      %4053 = vmatprep.mubr.f32.mxu0 0.0
      %4054 = vmatmul.mubr.f32.gmra.mrb[0].mxu0 %v3836
      %v4055 = vpop.f32.mrb[0].mxu0
      %v4056 = vadd.f32 0.0, %v4055
      %v4057 = vpop.f32.mrb[0].mxu0
      %4058 = vmatprep.mubr.f32.mxu0 0.0
      %4059 = vmatmul.mubr.f32.gmra.mrb[0].mxu0 %v3839
      %v4060 = vpop.f32.mrb[0].mxu0
      %v4061 = vadd.f32 0.0, %v4060
      %v4062 = vpop.f32.mrb[0].mxu0
      %4063 = vmatprep.mubr.f32.mxu0 0.0
      %4064 = vmatmul.mubr.f32.gmra.mrb[0].mxu0 %v3842
      %v4065 = vpop.f32.mrb[0].mxu0
      %v4066 = vadd.f32 0.0, %v4065
      %v4067 = vpop.f32.mrb[0].mxu0
      %4068 = vmatprep.mubr.f32.mxu0 0.0
      %4069 = vmatmul.mubr.f32.gmra.mrb[0].mxu0 %v3845
      %v4070 = vpop.f32.mrb[0].mxu0
      %v4071 = vadd.f32 0.0, %v4070
      %v4072 = vpop.f32.mrb[0].mxu0
      %4073 = vmatprep.mubr.f32.mxu0 0.0
      %4074 = vmatmul.mubr.f32.gmra.mrb[0].mxu0 %v3848
      %v4075 = vpop.f32.mrb[0].mxu0
      %v4076 = vadd.f32 0.0, %v4075
      %v4077 = vpop.f32.mrb[0].mxu0
      %4078 = vmatprep.mubr.f32.mxu0 0.0
      %4079 = vmatmul.mubr.f32.gmra.mrb[0].mxu0 %v3851
      %v4080 = vpop.f32.mrb[0].mxu0
      %v4081 = vadd.f32 0.0, %v4080
      %v4082 = vpop.f32.mrb[0].mxu0
      %4083 = vmatprep.mubr.f32.mxu0 0.0
      %4084 = vmatmul.mubr.f32.gmra.mrb[0].mxu0 %v3854
      %v4085 = vpop.f32.mrb[0].mxu0
      %v4086 = vadd.f32 0.0, %v4085
      %v4087 = vpop.f32.mrb[0].mxu0
      %4088 = vmatprep.mubr.f32.mxu0 0.0
      %4089 = vmatmul.mubr.f32.gmra.mrb[0].mxu0 %v3857
      %v4090 = vpop.f32.mrb[0].mxu0
      %v4091 = vadd.f32 0.0, %v4090
      %v4092 = vpop.f32.mrb[0].mxu0
      %4093 = vmatprep.mubr.f32.mxu0 0.0
      %4094 = vmatmul.mubr.f32.gmra.mrb[0].mxu0 %v3860
      %v4095 = vpop.f32.mrb[0].mxu0
      %v4096 = vadd.f32 0.0, %v4095
      %v4097 = vpop.f32.mrb[0].mxu0
      %4098 = vmatprep.mubr.f32.mxu0 0.0
      %4099 = vmatmul.mubr.f32.gmra.mrb[0].mxu0 %v3863
      %v4100 = vpop.f32.mrb[0].mxu0
      %v4101 = vadd.f32 0.0, %v4100
      %v4102 = vpop.f32.mrb[0].mxu0
      %4103 = vmatprep.mubr.f32.mxu0 0.0
      %4104 = vmatmul.mubr.f32.gmra.mrb[0].mxu0 %v3866
      %v4105 = vpop.f32.mrb[0].mxu0
      %v4106 = vadd.f32 0.0, %v4105
      %v4107 = vpop.f32.mrb[0].mxu0
      %4108 = vmatprep.mubr.f32.mxu0 0.0
      %4109 = vmatmul.mubr.f32.gmra.mrb[0].mxu0 %v3869
      %v4110 = vpop.f32.mrb[0].mxu0
      %v4111 = vadd.f32 0.0, %v4110
      %v4112 = vpop.f32.mrb[0].mxu0
      %4113 = vmatprep.mubr.f32.mxu0 0.0
      %4114 = vmatmul.mubr.f32.gmra.mrb[0].mxu0 %v3872
      %v4115 = vpop.f32.mrb[0].mxu0
      %v4116 = vadd.f32 0.0, %v4115
      %v4117 = vpop.f32.mrb[0].mxu0
      %4118 = vdwg.mxu0
      %v4119 = vadd.f32 %v3692, %v3941
      %v4120 = vadd.f32 %v3693, %v3946
      %v4121 = vadd.f32 %v3694, %v3951
      %v4122 = vadd.f32 %v3695, %v3956
      %v4123 = vadd.f32 %v3696, %v3961
      %v4124 = vadd.f32 %v3697, %v3966
      %v4125 = vadd.f32 %v3698, %v3971
      %v4126 = vadd.f32 %v3699, %v3976
      %v4127 = vadd.f32 %v3700, %v3981
      %v4128 = vadd.f32 %v3701, %v3986
      %v4129 = vadd.f32 %v3702, %v3991
      %v4130 = vadd.f32 %v3703, %v3996
      %v4131 = vadd.f32 %v3704, %v4001
      %v4132 = vadd.f32 %v3705, %v4006
      %v4133 = vadd.f32 %v3706, %v4011
      %v4134 = vadd.f32 %v3707, %v4016
      %v4135 = vadd.f32 %v3708, %v4021
      %v4136 = vadd.f32 %v3709, %v4026
      %v4137 = vadd.f32 %v3710, %v4031
      %v4138 = vadd.f32 %v3711, %v4036
      %v4139 = vadd.f32 %v3712, %v4041
      %v4140 = vadd.f32 %v3713, %v4046
      %v4141 = vadd.f32 %v3714, %v4051
      %v4142 = vadd.f32 %v3715, %v4056
      %v4143 = vadd.f32 %v3716, %v4061
      %v4144 = vadd.f32 %v3717, %v4066
      %v4145 = vadd.f32 %v3718, %v4071
      %v4146 = vadd.f32 %v3719, %v4076
      %v4147 = vadd.f32 %v3720, %v4081
      %v4148 = vadd.f32 %v3721, %v4086
      %v4149 = vadd.f32 %v3722, %v4091
      %v4150 = vadd.f32 %v3723, %v4096
      %v4151 = vadd.f32 %v3724, %v4101
      %v4152 = vadd.f32 %v3725, %v4106
      %v4153 = vadd.f32 %v3726, %v4111
      %v4154 = vadd.f32 %v3727, %v4116
      %v4155 = vld [vmem:[#allocation2 + $0x2b] sm:$0xff]
      %v4156 = vld [vmem:[#allocation2 + $0x33] sm:$0xff]
      %v4157 = vld [vmem:[#allocation2 + $0x3b] sm:$0xff]
      %v4158 = vld [vmem:[#allocation2 + $0x43] sm:$0xff]
      %v4159 = vld [vmem:[#allocation2 + $0x4b] sm:$0xff]
      %v4160 = vld [vmem:[#allocation2 + $0x53] sm:$0xff]
      %v4161 = vld [vmem:[#allocation2 + $0x5b] sm:$0xff]
      %v4162 = vld [vmem:[#allocation2 + $0x63] sm:$0xff]
      %v4163 = vld [vmem:[#allocation2 + $0x6b] sm:$0xff]
      %v4164 = vld [vmem:[#allocation2 + $0x73] sm:$0xff]
      %v4165 = vld [vmem:[#allocation2 + $0x7b] sm:$0xff]
      %v4166 = vld [vmem:[#allocation2 + $0x83] sm:$0xff]
      %v4167 = vld [vmem:[#allocation2 + $0x8b] sm:$0xff]
      %v4168 = vld [vmem:[#allocation2 + $0x93] sm:$0xff]
      %v4169 = vld [vmem:[#allocation2 + $0x9b] sm:$0xff]
      %v4170 = vld [vmem:[#allocation2 + $0xa3] sm:$0xff]
      %v4171 = vld [vmem:[#allocation2 + $0xab] sm:$0xff]
      %v4172 = vld [vmem:[#allocation2 + $0xb3] sm:$0xff]
      %v4173 = vld [vmem:[#allocation2 + $0xbb] sm:$0xff]
      %v4174 = vld [vmem:[#allocation2 + $0xc3] sm:$0xff]
      %v4175 = vld [vmem:[#allocation2 + $0xcb] sm:$0xff]
      %v4176 = vld [vmem:[#allocation2 + $0xd3] sm:$0xff]
      %v4177 = vld [vmem:[#allocation2 + $0xdb] sm:$0xff]
      %v4178 = vld [vmem:[#allocation2 + $0xe3] sm:$0xff]
      %v4179 = vld [vmem:[#allocation2 + $0xeb] sm:$0xff]
      %v4180 = vld [vmem:[#allocation2 + $0xf3] sm:$0xff]
      %v4181 = vld [vmem:[#allocation2 + $0xfb] sm:$0xff]
      %v4182 = vld [vmem:[#allocation2 + $0x103] sm:$0xff]
      %v4183 = vld [vmem:[#allocation2 + $0x10b] sm:$0xff]
      %v4184 = vld [vmem:[#allocation2 + $0x113] sm:$0xff]
      %v4185 = vld [vmem:[#allocation2 + $0x11b] sm:$0xff]
      %v4186 = vld [vmem:[#allocation2 + $0x123] sm:$0xff]
      %v4187 = vld [vmem:[#allocation2 + $0x12b] sm:$0xff]
      %v4188 = vld [vmem:[#allocation2 + $0x133] sm:$0xff]
      %v4189 = vld [vmem:[#allocation2 + $0x13b] sm:$0xff]
      %v4190 = vld [vmem:[#allocation2 + $0x143] sm:$0xff]
      %s4191 = scalar_lea.vmem %s4, 64
      %v4192 = vld [vmem:[%s4191] sm:$0xff]
      %v4194 = vsel %vm733, %v4155, 0
      %v4197 = vsel %vm733, %v4156, 0
      %v4200 = vsel %vm733, %v4157, 0
      %v4203 = vsel %vm733, %v4158, 0
      %v4206 = vsel %vm733, %v4159, 0
      %v4209 = vsel %vm733, %v4160, 0
      %v4212 = vsel %vm733, %v4161, 0
      %v4215 = vsel %vm733, %v4162, 0
      %v4218 = vsel %vm733, %v4163, 0
      %v4221 = vsel %vm733, %v4164, 0
      %v4224 = vsel %vm733, %v4165, 0
      %v4227 = vsel %vm733, %v4166, 0
      %v4230 = vsel %vm733, %v4167, 0
      %v4233 = vsel %vm733, %v4168, 0
      %v4236 = vsel %vm733, %v4169, 0
      %v4239 = vsel %vm733, %v4170, 0
      %v4242 = vsel %vm733, %v4171, 0
      %v4245 = vsel %vm733, %v4172, 0
      %v4248 = vsel %vm733, %v4173, 0
      %v4251 = vsel %vm733, %v4174, 0
      %v4254 = vsel %vm733, %v4175, 0
      %v4257 = vsel %vm733, %v4176, 0
      %v4260 = vsel %vm733, %v4177, 0
      %v4263 = vsel %vm733, %v4178, 0
      %v4266 = vsel %vm733, %v4179, 0
      %v4269 = vsel %vm733, %v4180, 0
      %v4272 = vsel %vm733, %v4181, 0
      %v4275 = vsel %vm733, %v4182, 0
      %v4278 = vsel %vm733, %v4183, 0
      %v4281 = vsel %vm733, %v4184, 0
      %v4284 = vsel %vm733, %v4185, 0
      %v4287 = vsel %vm733, %v4186, 0
      %v4290 = vsel %vm733, %v4187, 0
      %v4293 = vsel %vm733, %v4188, 0
      %v4296 = vsel %vm733, %v4189, 0
      %v4299 = vsel %vm733, %v4190, 0
      %4301 = vmatprep.subr.mxu0 0.0
      %4302 = vmatpush1.msra.mxu0 %v4192
      %4303 = vmatprep.subr.mxu0 0.0
      %4304 = vmatpush1.msra.mxu0 0.0
      %4305 = vmatprep.subr.mxu0 0.0
      %4306 = vmatpush1.msra.mxu0 0.0
      %4307 = vmatprep.subr.mxu0 0.0
      %4308 = vmatpush1.msra.mxu0 0.0
      %4309 = vmatprep.subr.mxu0 0.0
      %4310 = vmatpush1.msra.mxu0 0.0
      %4311 = vmatprep.subr.mxu0 0.0
      %4312 = vmatpush1.msra.mxu0 0.0
      %4313 = vmatprep.subr.mxu0 0.0
      %4314 = vmatpush1.msra.mxu0 0.0
      %4315 = vmatprep.subr.mxu0 0.0
      %4316 = vmatpush1.msra.mxu0 0.0
      %4317 = vmatprep.subr.mxu0 0.0
      %4318 = vmatpush1.msra.mxu0 0.0
      %4319 = vmatprep.subr.mxu0 0.0
      %4320 = vmatpush1.msra.mxu0 0.0
      %4321 = vmatprep.subr.mxu0 0.0
      %4322 = vmatpush1.msra.mxu0 0.0
      %4323 = vmatprep.subr.mxu0 0.0
      %4324 = vmatpush1.msra.mxu0 0.0
      %4325 = vmatprep.subr.mxu0 0.0
      %4326 = vmatpush1.msra.mxu0 0.0
      %4327 = vmatprep.subr.mxu0 0.0
      %4328 = vmatpush1.msra.mxu0 0.0
      %4329 = vmatprep.subr.mxu0 0.0
      %4330 = vmatpush1.msra.mxu0 0.0
      %4331 = vmatprep.subr.mxu0 0.0
      %4332 = vmatpush1.msra.mxu0 0.0
      %4333 = vmatprep.subr.mxu0 0.0
      %4334 = vmatpush1.msra.mxu0 0.0
      %4335 = vmatprep.subr.mxu0 0.0
      %4336 = vmatpush1.msra.mxu0 0.0
      %4337 = vmatprep.subr.mxu0 0.0
      %4338 = vmatpush1.msra.mxu0 0.0
      %4339 = vmatprep.subr.mxu0 0.0
      %4340 = vmatpush1.msra.mxu0 0.0
      %4341 = vmatprep.subr.mxu0 0.0
      %4342 = vmatpush1.msra.mxu0 0.0
      %4343 = vmatprep.subr.mxu0 0.0
      %4344 = vmatpush1.msra.mxu0 0.0
      %4345 = vmatprep.subr.mxu0 0.0
      %4346 = vmatpush1.msra.mxu0 0.0
      %4347 = vmatprep.subr.mxu0 0.0
      %4348 = vmatpush1.msra.mxu0 0.0
      %4349 = vmatprep.subr.mxu0 0.0
      %4350 = vmatpush1.msra.mxu0 0.0
      %4351 = vmatprep.subr.mxu0 0.0
      %4352 = vmatpush1.msra.mxu0 0.0
      %4353 = vmatprep.subr.mxu0 0.0
      %4354 = vmatpush1.msra.mxu0 0.0
      %4355 = vmatprep.subr.mxu0 0.0
      %4356 = vmatpush1.msra.mxu0 0.0
      %4357 = vmatprep.subr.mxu0 0.0
      %4358 = vmatpush1.msra.mxu0 0.0
      %4359 = vmatprep.subr.mxu0 0.0
      %4360 = vmatpush1.msra.mxu0 0.0
      %4361 = vmatprep.subr.mxu0 0.0
      %4362 = vmatpush1.msra.mxu0 0.0
      %4363 = vmatprep.subr.mxu0 0.0
      %4364 = vmatpush1.msra.mxu0 0.0
      %4365 = vmatprep.mubr.f32.mxu0 0.0
      %4366 = vmatmul.mubr.f32.gmra.mrb[0].mxu0 %v4194
      %v4367 = vpop.f32.mrb[0].mxu0
      %v4368 = vadd.f32 0.0, %v4367
      %v4369 = vpop.f32.mrb[0].mxu0
      %4370 = vmatprep.mubr.f32.mxu0 0.0
      %4371 = vmatmul.mubr.f32.gmra.mrb[0].mxu0 %v4197
      %v4372 = vpop.f32.mrb[0].mxu0
      %v4373 = vadd.f32 0.0, %v4372
      %v4374 = vpop.f32.mrb[0].mxu0
      %4375 = vmatprep.mubr.f32.mxu0 0.0
      %4376 = vmatmul.mubr.f32.gmra.mrb[0].mxu0 %v4200
      %v4377 = vpop.f32.mrb[0].mxu0
      %v4378 = vadd.f32 0.0, %v4377
      %v4379 = vpop.f32.mrb[0].mxu0
      %4380 = vmatprep.mubr.f32.mxu0 0.0
      %4381 = vmatmul.mubr.f32.gmra.mrb[0].mxu0 %v4203
      %v4382 = vpop.f32.mrb[0].mxu0
      %v4383 = vadd.f32 0.0, %v4382
      %v4384 = vpop.f32.mrb[0].mxu0
      %4385 = vmatprep.mubr.f32.mxu0 0.0
      %4386 = vmatmul.mubr.f32.gmra.mrb[0].mxu0 %v4206
      %v4387 = vpop.f32.mrb[0].mxu0
      %v4388 = vadd.f32 0.0, %v4387
      %v4389 = vpop.f32.mrb[0].mxu0
      %4390 = vmatprep.mubr.f32.mxu0 0.0
      %4391 = vmatmul.mubr.f32.gmra.mrb[0].mxu0 %v4209
      %v4392 = vpop.f32.mrb[0].mxu0
      %v4393 = vadd.f32 0.0, %v4392
      %v4394 = vpop.f32.mrb[0].mxu0
      %4395 = vmatprep.mubr.f32.mxu0 0.0
      %4396 = vmatmul.mubr.f32.gmra.mrb[0].mxu0 %v4212
      %v4397 = vpop.f32.mrb[0].mxu0
      %v4398 = vadd.f32 0.0, %v4397
      %v4399 = vpop.f32.mrb[0].mxu0
      %4400 = vmatprep.mubr.f32.mxu0 0.0
      %4401 = vmatmul.mubr.f32.gmra.mrb[0].mxu0 %v4215
      %v4402 = vpop.f32.mrb[0].mxu0
      %v4403 = vadd.f32 0.0, %v4402
      %v4404 = vpop.f32.mrb[0].mxu0
      %4405 = vmatprep.mubr.f32.mxu0 0.0
      %4406 = vmatmul.mubr.f32.gmra.mrb[0].mxu0 %v4218
      %v4407 = vpop.f32.mrb[0].mxu0
      %v4408 = vadd.f32 0.0, %v4407
      %v4409 = vpop.f32.mrb[0].mxu0
      %4410 = vmatprep.mubr.f32.mxu0 0.0
      %4411 = vmatmul.mubr.f32.gmra.mrb[0].mxu0 %v4221
      %v4412 = vpop.f32.mrb[0].mxu0
      %v4413 = vadd.f32 0.0, %v4412
      %v4414 = vpop.f32.mrb[0].mxu0
      %4415 = vmatprep.mubr.f32.mxu0 0.0
      %4416 = vmatmul.mubr.f32.gmra.mrb[0].mxu0 %v4224
      %v4417 = vpop.f32.mrb[0].mxu0
      %v4418 = vadd.f32 0.0, %v4417
      %v4419 = vpop.f32.mrb[0].mxu0
      %4420 = vmatprep.mubr.f32.mxu0 0.0
      %4421 = vmatmul.mubr.f32.gmra.mrb[0].mxu0 %v4227
      %v4422 = vpop.f32.mrb[0].mxu0
      %v4423 = vadd.f32 0.0, %v4422
      %v4424 = vpop.f32.mrb[0].mxu0
      %4425 = vmatprep.mubr.f32.mxu0 0.0
      %4426 = vmatmul.mubr.f32.gmra.mrb[0].mxu0 %v4230
      %v4427 = vpop.f32.mrb[0].mxu0
      %v4428 = vadd.f32 0.0, %v4427
      %v4429 = vpop.f32.mrb[0].mxu0
      %4430 = vmatprep.mubr.f32.mxu0 0.0
      %4431 = vmatmul.mubr.f32.gmra.mrb[0].mxu0 %v4233
      %v4432 = vpop.f32.mrb[0].mxu0
      %v4433 = vadd.f32 0.0, %v4432
      %v4434 = vpop.f32.mrb[0].mxu0
      %4435 = vmatprep.mubr.f32.mxu0 0.0
      %4436 = vmatmul.mubr.f32.gmra.mrb[0].mxu0 %v4236
      %v4437 = vpop.f32.mrb[0].mxu0
      %v4438 = vadd.f32 0.0, %v4437
      %v4439 = vpop.f32.mrb[0].mxu0
      %4440 = vmatprep.mubr.f32.mxu0 0.0
      %4441 = vmatmul.mubr.f32.gmra.mrb[0].mxu0 %v4239
      %v4442 = vpop.f32.mrb[0].mxu0
      %v4443 = vadd.f32 0.0, %v4442
      %v4444 = vpop.f32.mrb[0].mxu0
      %4445 = vmatprep.mubr.f32.mxu0 0.0
      %4446 = vmatmul.mubr.f32.gmra.mrb[0].mxu0 %v4242
      %v4447 = vpop.f32.mrb[0].mxu0
      %v4448 = vadd.f32 0.0, %v4447
      %v4449 = vpop.f32.mrb[0].mxu0
      %4450 = vmatprep.mubr.f32.mxu0 0.0
      %4451 = vmatmul.mubr.f32.gmra.mrb[0].mxu0 %v4245
      %v4452 = vpop.f32.mrb[0].mxu0
      %v4453 = vadd.f32 0.0, %v4452
      %v4454 = vpop.f32.mrb[0].mxu0
      %4455 = vmatprep.mubr.f32.mxu0 0.0
      %4456 = vmatmul.mubr.f32.gmra.mrb[0].mxu0 %v4248
      %v4457 = vpop.f32.mrb[0].mxu0
      %v4458 = vadd.f32 0.0, %v4457
      %v4459 = vpop.f32.mrb[0].mxu0
      %4460 = vmatprep.mubr.f32.mxu0 0.0
      %4461 = vmatmul.mubr.f32.gmra.mrb[0].mxu0 %v4251
      %v4462 = vpop.f32.mrb[0].mxu0
      %v4463 = vadd.f32 0.0, %v4462
      %v4464 = vpop.f32.mrb[0].mxu0
      %4465 = vmatprep.mubr.f32.mxu0 0.0
      %4466 = vmatmul.mubr.f32.gmra.mrb[0].mxu0 %v4254
      %v4467 = vpop.f32.mrb[0].mxu0
      %v4468 = vadd.f32 0.0, %v4467
      %v4469 = vpop.f32.mrb[0].mxu0
      %4470 = vmatprep.mubr.f32.mxu0 0.0
      %4471 = vmatmul.mubr.f32.gmra.mrb[0].mxu0 %v4257
      %v4472 = vpop.f32.mrb[0].mxu0
      %v4473 = vadd.f32 0.0, %v4472
      %v4474 = vpop.f32.mrb[0].mxu0
      %4475 = vmatprep.mubr.f32.mxu0 0.0
      %4476 = vmatmul.mubr.f32.gmra.mrb[0].mxu0 %v4260
      %v4477 = vpop.f32.mrb[0].mxu0
      %v4478 = vadd.f32 0.0, %v4477
      %v4479 = vpop.f32.mrb[0].mxu0
      %4480 = vmatprep.mubr.f32.mxu0 0.0
      %4481 = vmatmul.mubr.f32.gmra.mrb[0].mxu0 %v4263
      %v4482 = vpop.f32.mrb[0].mxu0
      %v4483 = vadd.f32 0.0, %v4482
      %v4484 = vpop.f32.mrb[0].mxu0
      %4485 = vmatprep.mubr.f32.mxu0 0.0
      %4486 = vmatmul.mubr.f32.gmra.mrb[0].mxu0 %v4266
      %v4487 = vpop.f32.mrb[0].mxu0
      %v4488 = vadd.f32 0.0, %v4487
      %v4489 = vpop.f32.mrb[0].mxu0
      %4490 = vmatprep.mubr.f32.mxu0 0.0
      %4491 = vmatmul.mubr.f32.gmra.mrb[0].mxu0 %v4269
      %v4492 = vpop.f32.mrb[0].mxu0
      %v4493 = vadd.f32 0.0, %v4492
      %v4494 = vpop.f32.mrb[0].mxu0
      %4495 = vmatprep.mubr.f32.mxu0 0.0
      %4496 = vmatmul.mubr.f32.gmra.mrb[0].mxu0 %v4272
      %v4497 = vpop.f32.mrb[0].mxu0
      %v4498 = vadd.f32 0.0, %v4497
      %v4499 = vpop.f32.mrb[0].mxu0
      %4500 = vmatprep.mubr.f32.mxu0 0.0
      %4501 = vmatmul.mubr.f32.gmra.mrb[0].mxu0 %v4275
      %v4502 = vpop.f32.mrb[0].mxu0
      %v4503 = vadd.f32 0.0, %v4502
      %v4504 = vpop.f32.mrb[0].mxu0
      %4505 = vmatprep.mubr.f32.mxu0 0.0
      %4506 = vmatmul.mubr.f32.gmra.mrb[0].mxu0 %v4278
      %v4507 = vpop.f32.mrb[0].mxu0
      %v4508 = vadd.f32 0.0, %v4507
      %v4509 = vpop.f32.mrb[0].mxu0
      %4510 = vmatprep.mubr.f32.mxu0 0.0
      %4511 = vmatmul.mubr.f32.gmra.mrb[0].mxu0 %v4281
      %v4512 = vpop.f32.mrb[0].mxu0
      %v4513 = vadd.f32 0.0, %v4512
      %v4514 = vpop.f32.mrb[0].mxu0
      %4515 = vmatprep.mubr.f32.mxu0 0.0
      %4516 = vmatmul.mubr.f32.gmra.mrb[0].mxu0 %v4284
      %v4517 = vpop.f32.mrb[0].mxu0
      %v4518 = vadd.f32 0.0, %v4517
      %v4519 = vpop.f32.mrb[0].mxu0
      %4520 = vmatprep.mubr.f32.mxu0 0.0
      %4521 = vmatmul.mubr.f32.gmra.mrb[0].mxu0 %v4287
      %v4522 = vpop.f32.mrb[0].mxu0
      %v4523 = vadd.f32 0.0, %v4522
      %v4524 = vpop.f32.mrb[0].mxu0
      %4525 = vmatprep.mubr.f32.mxu0 0.0
      %4526 = vmatmul.mubr.f32.gmra.mrb[0].mxu0 %v4290
      %v4527 = vpop.f32.mrb[0].mxu0
      %v4528 = vadd.f32 0.0, %v4527
      %v4529 = vpop.f32.mrb[0].mxu0
      %4530 = vmatprep.mubr.f32.mxu0 0.0
      %4531 = vmatmul.mubr.f32.gmra.mrb[0].mxu0 %v4293
      %v4532 = vpop.f32.mrb[0].mxu0
      %v4533 = vadd.f32 0.0, %v4532
      %v4534 = vpop.f32.mrb[0].mxu0
      %4535 = vmatprep.mubr.f32.mxu0 0.0
      %4536 = vmatmul.mubr.f32.gmra.mrb[0].mxu0 %v4296
      %v4537 = vpop.f32.mrb[0].mxu0
      %v4538 = vadd.f32 0.0, %v4537
      %v4539 = vpop.f32.mrb[0].mxu0
      %4540 = vmatprep.mubr.f32.mxu0 0.0
      %4541 = vmatmul.mubr.f32.gmra.mrb[0].mxu0 %v4299
      %v4542 = vpop.f32.mrb[0].mxu0
      %v4543 = vadd.f32 0.0, %v4542
      %v4544 = vpop.f32.mrb[0].mxu0
      %4545 = vdwg.mxu0
      %v4546 = vadd.f32 %v4119, %v4368
      %v4547 = vadd.f32 %v4120, %v4373
      %v4548 = vadd.f32 %v4121, %v4378
      %v4549 = vadd.f32 %v4122, %v4383
      %v4550 = vadd.f32 %v4123, %v4388
      %v4551 = vadd.f32 %v4124, %v4393
      %v4552 = vadd.f32 %v4125, %v4398
      %v4553 = vadd.f32 %v4126, %v4403
      %v4554 = vadd.f32 %v4127, %v4408
      %v4555 = vadd.f32 %v4128, %v4413
      %v4556 = vadd.f32 %v4129, %v4418
      %v4557 = vadd.f32 %v4130, %v4423
      %v4558 = vadd.f32 %v4131, %v4428
      %v4559 = vadd.f32 %v4132, %v4433
      %v4560 = vadd.f32 %v4133, %v4438
      %v4561 = vadd.f32 %v4134, %v4443
      %v4562 = vadd.f32 %v4135, %v4448
      %v4563 = vadd.f32 %v4136, %v4453
      %v4564 = vadd.f32 %v4137, %v4458
      %v4565 = vadd.f32 %v4138, %v4463
      %v4566 = vadd.f32 %v4139, %v4468
      %v4567 = vadd.f32 %v4140, %v4473
      %v4568 = vadd.f32 %v4141, %v4478
      %v4569 = vadd.f32 %v4142, %v4483
      %v4570 = vadd.f32 %v4143, %v4488
      %v4571 = vadd.f32 %v4144, %v4493
      %v4572 = vadd.f32 %v4145, %v4498
      %v4573 = vadd.f32 %v4146, %v4503
      %v4574 = vadd.f32 %v4147, %v4508
      %v4575 = vadd.f32 %v4148, %v4513
      %v4576 = vadd.f32 %v4149, %v4518
      %v4577 = vadd.f32 %v4150, %v4523
      %v4578 = vadd.f32 %v4151, %v4528
      %v4579 = vadd.f32 %v4152, %v4533
      %v4580 = vadd.f32 %v4153, %v4538
      %v4581 = vadd.f32 %v4154, %v4543
      %v4582 = vld [vmem:[%s5] sm:$0x1]
      %v4584 = vlaneseq
      %v4585 = vshrl.u32 %v4584, 7
      %v4586 = vsub.s32 0, %v4585
      %v4587 = vrot.slane %v4582, %v4586
      %v4589 = vadd.f32 %v4546, %v4587
      %v4590 = vadd.f32 %v4547, %v4587
      %v4591 = vadd.f32 %v4548, %v4587
      %v4592 = vadd.f32 %v4549, %v4587
      %v4593 = vadd.f32 %v4550, %v4587
      %v4594 = vadd.f32 %v4551, %v4587
      %v4595 = vadd.f32 %v4552, %v4587
      %v4596 = vadd.f32 %v4553, %v4587
      %v4597 = vadd.f32 %v4554, %v4587
      %v4598 = vadd.f32 %v4555, %v4587
      %v4599 = vadd.f32 %v4556, %v4587
      %v4600 = vadd.f32 %v4557, %v4587
      %v4601 = vadd.f32 %v4558, %v4587
      %v4602 = vadd.f32 %v4559, %v4587
      %v4603 = vadd.f32 %v4560, %v4587
      %v4604 = vadd.f32 %v4561, %v4587
      %v4605 = vadd.f32 %v4562, %v4587
      %v4606 = vadd.f32 %v4563, %v4587
      %v4607 = vadd.f32 %v4564, %v4587
      %v4608 = vadd.f32 %v4565, %v4587
      %v4609 = vadd.f32 %v4566, %v4587
      %v4610 = vadd.f32 %v4567, %v4587
      %v4611 = vadd.f32 %v4568, %v4587
      %v4612 = vadd.f32 %v4569, %v4587
      %v4613 = vadd.f32 %v4570, %v4587
      %v4614 = vadd.f32 %v4571, %v4587
      %v4615 = vadd.f32 %v4572, %v4587
      %v4616 = vadd.f32 %v4573, %v4587
      %v4617 = vadd.f32 %v4574, %v4587
      %v4618 = vadd.f32 %v4575, %v4587
      %v4619 = vadd.f32 %v4576, %v4587
      %v4620 = vadd.f32 %v4577, %v4587
      %v4621 = vadd.f32 %v4578, %v4587
      %v4622 = vadd.f32 %v4579, %v4587
      %v4623 = vadd.f32 %v4580, %v4587
      %v4624 = vadd.f32 %v4581, %v4587
      %4625 = vst.msk [vmem:[%s316] sm:$0xff] %vm733, %v4589
      %4626 = vst.msk [vmem:[%s316 + $0x8] sm:$0xff] %vm733, %v4590
      %4627 = vst.msk [vmem:[%s316 + $0x10] sm:$0xff] %vm733, %v4591
      %4628 = vst.msk [vmem:[%s316 + $0x18] sm:$0xff] %vm733, %v4592
      %4629 = vst.msk [vmem:[%s316 + $0x20] sm:$0xff] %vm733, %v4593
      %4630 = vst.msk [vmem:[%s316 + $0x28] sm:$0xff] %vm733, %v4594
      %4631 = vst.msk [vmem:[%s316 + $0x30] sm:$0xff] %vm733, %v4595
      %4632 = vst.msk [vmem:[%s316 + $0x38] sm:$0xff] %vm733, %v4596
      %4633 = vst.msk [vmem:[%s316 + $0x40] sm:$0xff] %vm733, %v4597
      %4634 = vst.msk [vmem:[%s316 + $0x48] sm:$0xff] %vm733, %v4598
      %4635 = vst.msk [vmem:[%s316 + $0x50] sm:$0xff] %vm733, %v4599
      %4636 = vst.msk [vmem:[%s316 + $0x58] sm:$0xff] %vm733, %v4600
      %4637 = vst.msk [vmem:[%s316 + $0x60] sm:$0xff] %vm733, %v4601
      %4638 = vst.msk [vmem:[%s316 + $0x68] sm:$0xff] %vm733, %v4602
      %4639 = vst.msk [vmem:[%s316 + $0x70] sm:$0xff] %vm733, %v4603
      %4640 = vst.msk [vmem:[%s316 + $0x78] sm:$0xff] %vm733, %v4604
      %4641 = vst.msk [vmem:[%s316 + $0x80] sm:$0xff] %vm733, %v4605
      %4642 = vst.msk [vmem:[%s316 + $0x88] sm:$0xff] %vm733, %v4606
      %4643 = vst.msk [vmem:[%s316 + $0x90] sm:$0xff] %vm733, %v4607
      %4644 = vst.msk [vmem:[%s316 + $0x98] sm:$0xff] %vm733, %v4608
      %4645 = vst.msk [vmem:[%s316 + $0xa0] sm:$0xff] %vm733, %v4609
      %4646 = vst.msk [vmem:[%s316 + $0xa8] sm:$0xff] %vm733, %v4610
      %4647 = vst.msk [vmem:[%s316 + $0xb0] sm:$0xff] %vm733, %v4611
      %4648 = vst.msk [vmem:[%s316 + $0xb8] sm:$0xff] %vm733, %v4612
      %4649 = vst.msk [vmem:[%s316 + $0xc0] sm:$0xff] %vm733, %v4613
      %4650 = vst.msk [vmem:[%s316 + $0xc8] sm:$0xff] %vm733, %v4614
      %4651 = vst.msk [vmem:[%s316 + $0xd0] sm:$0xff] %vm733, %v4615
      %4652 = vst.msk [vmem:[%s316 + $0xd8] sm:$0xff] %vm733, %v4616
      %4653 = vst.msk [vmem:[%s316 + $0xe0] sm:$0xff] %vm733, %v4617
      %4654 = vst.msk [vmem:[%s316 + $0xe8] sm:$0xff] %vm733, %v4618
      %4655 = vst.msk [vmem:[%s316 + $0xf0] sm:$0xff] %vm733, %v4619
      %4656 = vst.msk [vmem:[%s316 + $0xf8] sm:$0xff] %vm733, %v4620
      %4657 = vst.msk [vmem:[%s316 + $0x100] sm:$0xff] %vm733, %v4621
      %4658 = vst.msk [vmem:[%s316 + $0x108] sm:$0xff] %vm733, %v4622
      %4659 = vst.msk [vmem:[%s316 + $0x110] sm:$0xff] %vm733, %v4623
      %4660 = vst.msk [vmem:[%s316 + $0x118] sm:$0xff] %vm733, %v4624
      %v4661 = vld [vmem:[%s1] sm:$0xff]
      %v4662 = vld [vmem:[%s1 + $0x8] sm:$0xff]
      %v4663 = vld [vmem:[%s1 + $0x10] sm:$0xff]
      %v4664 = vld [vmem:[%s1 + $0x18] sm:$0xff]
      %v4665 = vld [vmem:[%s1 + $0x20] sm:$0xff]
      %v4666 = vld [vmem:[%s1 + $0x28] sm:$0xff]
      %v4667 = vld [vmem:[%s1 + $0x30] sm:$0xff]
      %v4668 = vld [vmem:[%s1 + $0x38] sm:$0xff]
      %v4669 = vld [vmem:[%s1 + $0x40] sm:$0xff]
      %v4670 = vld [vmem:[%s1 + $0x48] sm:$0xff]
      %v4671 = vld [vmem:[%s1 + $0x50] sm:$0xff]
      %v4672 = vld [vmem:[%s1 + $0x58] sm:$0xff]
      %v4673 = vld [vmem:[%s1 + $0x60] sm:$0xff]
      %v4674 = vld [vmem:[%s1 + $0x68] sm:$0xff]
      %v4675 = vld [vmem:[%s1 + $0x70] sm:$0xff]
      %v4676 = vld [vmem:[%s1 + $0x78] sm:$0xff]
      %v4677 = vld [vmem:[%s1 + $0x80] sm:$0xff]
      %v4678 = vld [vmem:[%s1 + $0x88] sm:$0xff]
      %v4679 = vld [vmem:[%s1 + $0x90] sm:$0xff]
      %v4680 = vld [vmem:[%s1 + $0x98] sm:$0xff]
      %v4681 = vld [vmem:[%s1 + $0xa0] sm:$0xff]
      %v4682 = vld [vmem:[%s1 + $0xa8] sm:$0xff]
      %v4683 = vld [vmem:[%s1 + $0xb0] sm:$0xff]
      %v4684 = vld [vmem:[%s1 + $0xb8] sm:$0xff]
      %v4685 = vld [vmem:[%s1 + $0xc0] sm:$0xff]
      %v4686 = vld [vmem:[%s1 + $0xc8] sm:$0xff]
      %v4687 = vld [vmem:[%s1 + $0xd0] sm:$0xff]
      %v4688 = vld [vmem:[%s1 + $0xd8] sm:$0xff]
      %v4689 = vld [vmem:[%s1 + $0xe0] sm:$0xff]
      %v4690 = vld [vmem:[%s1 + $0xe8] sm:$0xff]
      %v4691 = vld [vmem:[%s1 + $0xf0] sm:$0xff]
      %v4692 = vld [vmem:[%s1 + $0xf8] sm:$0xff]
      %v4693 = vld [vmem:[%s1 + $0x100] sm:$0xff]
      %v4694 = vld [vmem:[%s1 + $0x108] sm:$0xff]
      %v4695 = vld [vmem:[%s1 + $0x110] sm:$0xff]
      %v4696 = vld [vmem:[%s1 + $0x118] sm:$0xff]
      %4698 = vset.pattern.permute.xlu0 0
      %4699 = vperm.xlu0 %4698, %v4661
      %v4700 = vpop.permute.xlu0 %4699
      %4703 = vset.pattern.permute.xlu0 0
      %4704 = vperm.xlu0 %4703, %v4662
      %v4705 = vpop.permute.xlu0 %4704
      %4708 = vset.pattern.permute.xlu0 0
      %4709 = vperm.xlu0 %4708, %v4663
      %v4710 = vpop.permute.xlu0 %4709
      %4713 = vset.pattern.permute.xlu0 0
      %4714 = vperm.xlu0 %4713, %v4664
      %v4715 = vpop.permute.xlu0 %4714
      %4718 = vset.pattern.permute.xlu0 0
      %4719 = vperm.xlu0 %4718, %v4665
      %v4720 = vpop.permute.xlu0 %4719
      %4723 = vset.pattern.permute.xlu0 0
      %4724 = vperm.xlu0 %4723, %v4666
      %v4725 = vpop.permute.xlu0 %4724
      %4728 = vset.pattern.permute.xlu0 0
      %4729 = vperm.xlu0 %4728, %v4667
      %v4730 = vpop.permute.xlu0 %4729
      %4733 = vset.pattern.permute.xlu0 0
      %4734 = vperm.xlu0 %4733, %v4668
      %v4735 = vpop.permute.xlu0 %4734
      %4738 = vset.pattern.permute.xlu0 0
      %4739 = vperm.xlu0 %4738, %v4669
      %v4740 = vpop.permute.xlu0 %4739
      %4743 = vset.pattern.permute.xlu0 0
      %4744 = vperm.xlu0 %4743, %v4670
      %v4745 = vpop.permute.xlu0 %4744
      %4748 = vset.pattern.permute.xlu0 0
      %4749 = vperm.xlu0 %4748, %v4671
      %v4750 = vpop.permute.xlu0 %4749
      %4753 = vset.pattern.permute.xlu0 0
      %4754 = vperm.xlu0 %4753, %v4672
      %v4755 = vpop.permute.xlu0 %4754
      %4758 = vset.pattern.permute.xlu0 0
      %4759 = vperm.xlu0 %4758, %v4673
      %v4760 = vpop.permute.xlu0 %4759
      %4763 = vset.pattern.permute.xlu0 0
      %4764 = vperm.xlu0 %4763, %v4674
      %v4765 = vpop.permute.xlu0 %4764
      %4768 = vset.pattern.permute.xlu0 0
      %4769 = vperm.xlu0 %4768, %v4675
      %v4770 = vpop.permute.xlu0 %4769
      %4773 = vset.pattern.permute.xlu0 0
      %4774 = vperm.xlu0 %4773, %v4676
      %v4775 = vpop.permute.xlu0 %4774
      %4778 = vset.pattern.permute.xlu0 0
      %4779 = vperm.xlu0 %4778, %v4677
      %v4780 = vpop.permute.xlu0 %4779
      %4783 = vset.pattern.permute.xlu0 0
      %4784 = vperm.xlu0 %4783, %v4678
      %v4785 = vpop.permute.xlu0 %4784
      %4788 = vset.pattern.permute.xlu0 0
      %4789 = vperm.xlu0 %4788, %v4679
      %v4790 = vpop.permute.xlu0 %4789
      %4793 = vset.pattern.permute.xlu0 0
      %4794 = vperm.xlu0 %4793, %v4680
      %v4795 = vpop.permute.xlu0 %4794
      %4798 = vset.pattern.permute.xlu0 0
      %4799 = vperm.xlu0 %4798, %v4681
      %v4800 = vpop.permute.xlu0 %4799
      %4803 = vset.pattern.permute.xlu0 0
      %4804 = vperm.xlu0 %4803, %v4682
      %v4805 = vpop.permute.xlu0 %4804
      %4808 = vset.pattern.permute.xlu0 0
      %4809 = vperm.xlu0 %4808, %v4683
      %v4810 = vpop.permute.xlu0 %4809
      %4813 = vset.pattern.permute.xlu0 0
      %4814 = vperm.xlu0 %4813, %v4684
      %v4815 = vpop.permute.xlu0 %4814
      %4818 = vset.pattern.permute.xlu0 0
      %4819 = vperm.xlu0 %4818, %v4685
      %v4820 = vpop.permute.xlu0 %4819
      %4823 = vset.pattern.permute.xlu0 0
      %4824 = vperm.xlu0 %4823, %v4686
      %v4825 = vpop.permute.xlu0 %4824
      %4828 = vset.pattern.permute.xlu0 0
      %4829 = vperm.xlu0 %4828, %v4687
      %v4830 = vpop.permute.xlu0 %4829
      %4833 = vset.pattern.permute.xlu0 0
      %4834 = vperm.xlu0 %4833, %v4688
      %v4835 = vpop.permute.xlu0 %4834
      %4838 = vset.pattern.permute.xlu0 0
      %4839 = vperm.xlu0 %4838, %v4689
      %v4840 = vpop.permute.xlu0 %4839
      %4843 = vset.pattern.permute.xlu0 0
      %4844 = vperm.xlu0 %4843, %v4690
      %v4845 = vpop.permute.xlu0 %4844
      %4848 = vset.pattern.permute.xlu0 0
      %4849 = vperm.xlu0 %4848, %v4691
      %v4850 = vpop.permute.xlu0 %4849
      %4853 = vset.pattern.permute.xlu0 0
      %4854 = vperm.xlu0 %4853, %v4692
      %v4855 = vpop.permute.xlu0 %4854
      %4858 = vset.pattern.permute.xlu0 0
      %4859 = vperm.xlu0 %4858, %v4693
      %v4860 = vpop.permute.xlu0 %4859
      %4863 = vset.pattern.permute.xlu0 0
      %4864 = vperm.xlu0 %4863, %v4694
      %v4865 = vpop.permute.xlu0 %4864
      %4868 = vset.pattern.permute.xlu0 0
      %4869 = vperm.xlu0 %4868, %v4695
      %v4870 = vpop.permute.xlu0 %4869
      %4873 = vset.pattern.permute.xlu0 0
      %4874 = vperm.xlu0 %4873, %v4696
      %v4875 = vpop.permute.xlu0 %4874
      %v4877 = vmul.f32 %v4589, %v4700
      %v4878 = vmul.f32 %v4590, %v4705
      %v4879 = vmul.f32 %v4591, %v4710
      %v4880 = vmul.f32 %v4592, %v4715
      %v4881 = vmul.f32 %v4593, %v4720
      %v4882 = vmul.f32 %v4594, %v4725
      %v4883 = vmul.f32 %v4595, %v4730
      %v4884 = vmul.f32 %v4596, %v4735
      %v4885 = vmul.f32 %v4597, %v4740
      %v4886 = vmul.f32 %v4598, %v4745
      %v4887 = vmul.f32 %v4599, %v4750
      %v4888 = vmul.f32 %v4600, %v4755
      %v4889 = vmul.f32 %v4601, %v4760
      %v4890 = vmul.f32 %v4602, %v4765
      %v4891 = vmul.f32 %v4603, %v4770
      %v4892 = vmul.f32 %v4604, %v4775
      %v4893 = vmul.f32 %v4605, %v4780
      %v4894 = vmul.f32 %v4606, %v4785
      %v4895 = vmul.f32 %v4607, %v4790
      %v4896 = vmul.f32 %v4608, %v4795
      %v4897 = vmul.f32 %v4609, %v4800
      %v4898 = vmul.f32 %v4610, %v4805
      %v4899 = vmul.f32 %v4611, %v4810
      %v4900 = vmul.f32 %v4612, %v4815
      %v4901 = vmul.f32 %v4613, %v4820
      %v4902 = vmul.f32 %v4614, %v4825
      %v4903 = vmul.f32 %v4615, %v4830
      %v4904 = vmul.f32 %v4616, %v4835
      %v4905 = vmul.f32 %v4617, %v4840
      %v4906 = vmul.f32 %v4618, %v4845
      %v4907 = vmul.f32 %v4619, %v4850
      %v4908 = vmul.f32 %v4620, %v4855
      %v4909 = vmul.f32 %v4621, %v4860
      %v4910 = vmul.f32 %v4622, %v4865
      %v4911 = vmul.f32 %v4623, %v4870
      %v4912 = vmul.f32 %v4624, %v4875
      %v4913 = vsel %vm733, %v4877, 0.0
      %v4914 = vsel %vm733, %v4878, 0.0
      %v4915 = vadd.f32 %v4913, %v4914
      %v4916 = vsel %vm733, %v4879, 0.0
      %v4917 = vadd.f32 %v4915, %v4916
      %v4918 = vsel %vm733, %v4880, 0.0
      %v4919 = vadd.f32 %v4917, %v4918
      %v4920 = vsel %vm733, %v4881, 0.0
      %v4921 = vadd.f32 %v4919, %v4920
      %v4922 = vsel %vm733, %v4882, 0.0
      %v4923 = vadd.f32 %v4921, %v4922
      %v4924 = vsel %vm733, %v4883, 0.0
      %v4925 = vadd.f32 %v4923, %v4924
      %v4926 = vsel %vm733, %v4884, 0.0
      %v4927 = vadd.f32 %v4925, %v4926
      %v4928 = vsel %vm733, %v4885, 0.0
      %v4929 = vadd.f32 %v4927, %v4928
      %v4930 = vsel %vm733, %v4886, 0.0
      %v4931 = vadd.f32 %v4929, %v4930
      %v4932 = vsel %vm733, %v4887, 0.0
      %v4933 = vadd.f32 %v4931, %v4932
      %v4934 = vsel %vm733, %v4888, 0.0
      %v4935 = vadd.f32 %v4933, %v4934
      %v4936 = vsel %vm733, %v4889, 0.0
      %v4937 = vadd.f32 %v4935, %v4936
      %v4938 = vsel %vm733, %v4890, 0.0
      %v4939 = vadd.f32 %v4937, %v4938
      %v4940 = vsel %vm733, %v4891, 0.0
      %v4941 = vadd.f32 %v4939, %v4940
      %v4942 = vsel %vm733, %v4892, 0.0
      %v4943 = vadd.f32 %v4941, %v4942
      %v4944 = vsel %vm733, %v4893, 0.0
      %v4945 = vadd.f32 %v4943, %v4944
      %v4946 = vsel %vm733, %v4894, 0.0
      %v4947 = vadd.f32 %v4945, %v4946
      %v4948 = vsel %vm733, %v4895, 0.0
      %v4949 = vadd.f32 %v4947, %v4948
      %v4950 = vsel %vm733, %v4896, 0.0
      %v4951 = vadd.f32 %v4949, %v4950
      %v4952 = vsel %vm733, %v4897, 0.0
      %v4953 = vadd.f32 %v4951, %v4952
      %v4954 = vsel %vm733, %v4898, 0.0
      %v4955 = vadd.f32 %v4953, %v4954
      %v4956 = vsel %vm733, %v4899, 0.0
      %v4957 = vadd.f32 %v4955, %v4956
      %v4958 = vsel %vm733, %v4900, 0.0
      %v4959 = vadd.f32 %v4957, %v4958
      %v4960 = vsel %vm733, %v4901, 0.0
      %v4961 = vadd.f32 %v4959, %v4960
      %v4962 = vsel %vm733, %v4902, 0.0
      %v4963 = vadd.f32 %v4961, %v4962
      %v4964 = vsel %vm733, %v4903, 0.0
      %v4965 = vadd.f32 %v4963, %v4964
      %v4966 = vsel %vm733, %v4904, 0.0
      %v4967 = vadd.f32 %v4965, %v4966
      %v4968 = vsel %vm733, %v4905, 0.0
      %v4969 = vadd.f32 %v4967, %v4968
      %v4970 = vsel %vm733, %v4906, 0.0
      %v4971 = vadd.f32 %v4969, %v4970
      %v4972 = vsel %vm733, %v4907, 0.0
      %v4973 = vadd.f32 %v4971, %v4972
      %v4974 = vsel %vm733, %v4908, 0.0
      %v4975 = vadd.f32 %v4973, %v4974
      %v4976 = vsel %vm733, %v4909, 0.0
      %v4977 = vadd.f32 %v4975, %v4976
      %v4978 = vsel %vm733, %v4910, 0.0
      %v4979 = vadd.f32 %v4977, %v4978
      %v4980 = vsel %vm733, %v4911, 0.0
      %v4981 = vadd.f32 %v4979, %v4980
      %v4982 = vsel %vm733, %v4912, 0.0
      %v4983 = vadd.f32 %v4981, %v4982
      %v4984 = vrot.slane %v4983, 4
      %v4985 = vadd.f32 %v4983, %v4984
      %v4986 = vrot.slane %v4985, 2
      %v4987 = vadd.f32 %v4985, %v4986
      %v4988 = vrot.slane %v4987, 1
      %v4989 = vadd.f32 %v4987, %v4988
      %vm4990 = vcmask 57344
      %4991 = vst.msk [vmem:[%s319] sm:$0x1] %vm4990, %v4989
      %v4992 = vmul.f32 %v4877, %v4589
      %v4993 = vmul.f32 %v4878, %v4590
      %v4994 = vmul.f32 %v4879, %v4591
      %v4995 = vmul.f32 %v4880, %v4592
      %v4996 = vmul.f32 %v4881, %v4593
      %v4997 = vmul.f32 %v4882, %v4594
      %v4998 = vmul.f32 %v4883, %v4595
      %v4999 = vmul.f32 %v4884, %v4596
      %v5000 = vmul.f32 %v4885, %v4597
      %v5001 = vmul.f32 %v4886, %v4598
      %v5002 = vmul.f32 %v4887, %v4599
      %v5003 = vmul.f32 %v4888, %v4600
      %v5004 = vmul.f32 %v4889, %v4601
      %v5005 = vmul.f32 %v4890, %v4602
      %v5006 = vmul.f32 %v4891, %v4603
      %v5007 = vmul.f32 %v4892, %v4604
      %v5008 = vmul.f32 %v4893, %v4605
      %v5009 = vmul.f32 %v4894, %v4606
      %v5010 = vmul.f32 %v4895, %v4607
      %v5011 = vmul.f32 %v4896, %v4608
      %v5012 = vmul.f32 %v4897, %v4609
      %v5013 = vmul.f32 %v4898, %v4610
      %v5014 = vmul.f32 %v4899, %v4611
      %v5015 = vmul.f32 %v4900, %v4612
      %v5016 = vmul.f32 %v4901, %v4613
      %v5017 = vmul.f32 %v4902, %v4614
      %v5018 = vmul.f32 %v4903, %v4615
      %v5019 = vmul.f32 %v4904, %v4616
      %v5020 = vmul.f32 %v4905, %v4617
      %v5021 = vmul.f32 %v4906, %v4618
      %v5022 = vmul.f32 %v4907, %v4619
      %v5023 = vmul.f32 %v4908, %v4620
      %v5024 = vmul.f32 %v4909, %v4621
      %v5025 = vmul.f32 %v4910, %v4622
      %v5026 = vmul.f32 %v4911, %v4623
      %v5027 = vmul.f32 %v4912, %v4624
      %v5028 = vsel %vm733, %v4992, 0.0
      %v5029 = vsel %vm733, %v4993, 0.0
      %v5030 = vadd.f32 %v5028, %v5029
      %v5031 = vsel %vm733, %v4994, 0.0
      %v5032 = vadd.f32 %v5030, %v5031
      %v5033 = vsel %vm733, %v4995, 0.0
      %v5034 = vadd.f32 %v5032, %v5033
      %v5035 = vsel %vm733, %v4996, 0.0
      %v5036 = vadd.f32 %v5034, %v5035
      %v5037 = vsel %vm733, %v4997, 0.0
      %v5038 = vadd.f32 %v5036, %v5037
      %v5039 = vsel %vm733, %v4998, 0.0
      %v5040 = vadd.f32 %v5038, %v5039
      %v5041 = vsel %vm733, %v4999, 0.0
      %v5042 = vadd.f32 %v5040, %v5041
      %v5043 = vsel %vm733, %v5000, 0.0
      %v5044 = vadd.f32 %v5042, %v5043
      %v5045 = vsel %vm733, %v5001, 0.0
      %v5046 = vadd.f32 %v5044, %v5045
      %v5047 = vsel %vm733, %v5002, 0.0
      %v5048 = vadd.f32 %v5046, %v5047
      %v5049 = vsel %vm733, %v5003, 0.0
      %v5050 = vadd.f32 %v5048, %v5049
      %v5051 = vsel %vm733, %v5004, 0.0
      %v5052 = vadd.f32 %v5050, %v5051
      %v5053 = vsel %vm733, %v5005, 0.0
      %v5054 = vadd.f32 %v5052, %v5053
      %v5055 = vsel %vm733, %v5006, 0.0
      %v5056 = vadd.f32 %v5054, %v5055
      %v5057 = vsel %vm733, %v5007, 0.0
      %v5058 = vadd.f32 %v5056, %v5057
      %v5059 = vsel %vm733, %v5008, 0.0
      %v5060 = vadd.f32 %v5058, %v5059
      %v5061 = vsel %vm733, %v5009, 0.0
      %v5062 = vadd.f32 %v5060, %v5061
      %v5063 = vsel %vm733, %v5010, 0.0
      %v5064 = vadd.f32 %v5062, %v5063
      %v5065 = vsel %vm733, %v5011, 0.0
      %v5066 = vadd.f32 %v5064, %v5065
      %v5067 = vsel %vm733, %v5012, 0.0
      %v5068 = vadd.f32 %v5066, %v5067
      %v5069 = vsel %vm733, %v5013, 0.0
      %v5070 = vadd.f32 %v5068, %v5069
      %v5071 = vsel %vm733, %v5014, 0.0
      %v5072 = vadd.f32 %v5070, %v5071
      %v5073 = vsel %vm733, %v5015, 0.0
      %v5074 = vadd.f32 %v5072, %v5073
      %v5075 = vsel %vm733, %v5016, 0.0
      %v5076 = vadd.f32 %v5074, %v5075
      %v5077 = vsel %vm733, %v5017, 0.0
      %v5078 = vadd.f32 %v5076, %v5077
      %v5079 = vsel %vm733, %v5018, 0.0
      %v5080 = vadd.f32 %v5078, %v5079
      %v5081 = vsel %vm733, %v5019, 0.0
      %v5082 = vadd.f32 %v5080, %v5081
      %v5083 = vsel %vm733, %v5020, 0.0
      %v5084 = vadd.f32 %v5082, %v5083
      %v5085 = vsel %vm733, %v5021, 0.0
      %v5086 = vadd.f32 %v5084, %v5085
      %v5087 = vsel %vm733, %v5022, 0.0
      %v5088 = vadd.f32 %v5086, %v5087
      %v5089 = vsel %vm733, %v5023, 0.0
      %v5090 = vadd.f32 %v5088, %v5089
      %v5091 = vsel %vm733, %v5024, 0.0
      %v5092 = vadd.f32 %v5090, %v5091
      %v5093 = vsel %vm733, %v5025, 0.0
      %v5094 = vadd.f32 %v5092, %v5093
      %v5095 = vsel %vm733, %v5026, 0.0
      %v5096 = vadd.f32 %v5094, %v5095
      %v5097 = vsel %vm733, %v5027, 0.0
      %v5098 = vadd.f32 %v5096, %v5097
      %v5099 = vrot.slane %v5098, 4
      %v5100 = vadd.f32 %v5098, %v5099
      %v5101 = vrot.slane %v5100, 2
      %v5102 = vadd.f32 %v5100, %v5101
      %v5103 = vrot.slane %v5102, 1
      %v5104 = vadd.f32 %v5102, %v5103
      %5105 = vst.msk [vmem:[%s322] sm:$0x1] %vm4990, %v5104
      %p5106 = scmp.lt.s32.totalorder %s20, 1
      %s5107 = scalar_select %p5106, %s20, 1
      %s5108 = smul.addr %s5107, 36
      %s5109 = smul.addr %s5108, 8
      %s5110 = scalar_lea.vmem %s6, %s5109
      %p5111 = scmp.lt.s32.totalorder %s20, 1
      %s5112 = scalar_select %p5111, %s20, 1
      %s5113 = scalar_lea.vmem %s7, %s5112
      %p5114 = scmp.lt.s32.totalorder %s20, 1
      %s5115 = scalar_select %p5114, %s20, 1
      %s5116 = scalar_lea.vmem %s8, %s5115
      // Predicated region
      $region45: #{conv_block_forward.3} parent=43 // pred_check
        %p5117 = pneg %p169
      $region46: #{conv_block_forward.3} parent=43 // pred_check_branch
        %5119 = sbr.rel (%p5117) target = $region48
      $region47: #{conv_block_forward.3} parent=43 // pred_region
        _
      $region48: #{conv_block_forward.3} parent=43 // pred_fallthru
        _
      // Predicated region
      $region49: #{conv_block_forward.3} parent=43 // pred_check
        %p5120 = pneg %p195
      $region50: #{conv_block_forward.3} parent=43 // pred_check_branch
        %5122 = sbr.rel (%p5120) target = $region52
      $region51: #{conv_block_forward.3} parent=43 // pred_region
        _
      $region52: #{conv_block_forward.3} parent=43 // pred_fallthru
        _
      // Predicated region
      $region53: #{conv_block_forward.3} parent=43 // pred_check
        %p5123 = pneg %p221
      $region54: #{conv_block_forward.3} parent=43 // pred_check_branch
        %5125 = sbr.rel (%p5123) target = $region56
      $region55: #{conv_block_forward.3} parent=43 // pred_region
        _
      $region56: #{conv_block_forward.3} parent=43 // pred_fallthru
        _
    $region44: #{conv_block_forward.3} parent=5 // pred_fallthru
      _
    %p5126 = scmp.le.s32.totalorder 2, %s15
    // Predicated region
    $region57: #{conv_block_forward.3} parent=5 // pred_check
      %p5127 = pneg %p5126
    $region58: #{conv_block_forward.3} parent=5 // pred_check_branch
      %5129 = sbr.rel (%p5127) target = $region60
    $region59: #{conv_block_forward.3} parent=5 // pred_region
      %s5130 = ssub.s32 %s15, 2
      // Predicated region
      $region61: #{conv_block_forward.3} parent=59 // pred_check
        %p5131 = pneg %p175
      $region62: #{conv_block_forward.3} parent=59 // pred_check_branch
        %5133 = sbr.rel (%p5131) target = $region64
      $region63: #{conv_block_forward.3} parent=59 // pred_region
        %p5134 = scmp.lt.s32.totalorder %s21, 1
        %s5135 = scalar_select %p5134, %s21, 1
        %s5136 = smul.addr %s5135, 36
        %s5137 = smul.addr %s5136, 8
        %s5138 = scalar_lea.vmem %s6, %s5137
      $region64: #{conv_block_forward.3} parent=59 // pred_fallthru
        _
      // Predicated region
      $region65: #{conv_block_forward.3} parent=59 // pred_check
        %p5139 = pneg %p201
      $region66: #{conv_block_forward.3} parent=59 // pred_check_branch
        %5141 = sbr.rel (%p5139) target = $region68
      $region67: #{conv_block_forward.3} parent=59 // pred_region
        %p5142 = scmp.lt.s32.totalorder %s21, 1
        %s5143 = scalar_select %p5142, %s21, 1
        %s5144 = scalar_lea.vmem %s7, %s5143
      $region68: #{conv_block_forward.3} parent=59 // pred_fallthru
        _
      // Predicated region
      $region69: #{conv_block_forward.3} parent=59 // pred_check
        %p5145 = pneg %p227
      $region70: #{conv_block_forward.3} parent=59 // pred_check_branch
        %5147 = sbr.rel (%p5145) target = $region72
      $region71: #{conv_block_forward.3} parent=59 // pred_region
        %p5148 = scmp.lt.s32.totalorder %s21, 1
        %s5149 = scalar_select %p5148, %s21, 1
        %s5150 = scalar_lea.vmem %s8, %s5149
      $region72: #{conv_block_forward.3} parent=59 // pred_fallthru
        _
    $region60: #{conv_block_forward.3} parent=5 // pred_fallthru
      _
  $region6: #{conv_block_forward.3} parent=0 // loop_footer
    %s19 = sadd.s32 1, %s15
  $region7: #{conv_block_forward.3} parent=0 // loop_footer_branch
    %14 = sbr.rel target = $region3
  $region8: #{conv_block_forward.3} parent=0 // loop_exit
    _

</llo_original>
